<compile_context>
chip_gen: v7x
topology: tpu7x:2x2x1
jax: 0.10.0
libtpu: 0.0.40
codegen_flags: <defaults>
</compile_context>

<pallas_src>
import functools

import jax
import jax.numpy as jnp
from jax.experimental import pallas as pl
from jax.experimental.pallas import tpu as pltpu

NEG_SLOPE = 0.01          # LeakyReLU(0.01)
BN_EPS = 1e-5
_VMEM_LIMIT = 48 * 1024 * 1024   # safe on v5e/v6e (128 MiB) and v7x (64 MiB)
_TM_MAX = 1024                   # M-tile for the matmul kernel


def _round_up(x, m):
    return ((x + m - 1) // m) * m


def _full_spec(shape):
    # Whole-array block, grid=() -> zero-arg index_map.
    return pl.BlockSpec(shape, lambda: (0,) * len(shape))


# ---------------------------------------------------------------------------
# Kernel A: M-tiled matmul + specialized epilogue
#   acc = patches @ W
#   acc = acc*scale + shift        (scale optional; shift holds folded bias)
#   acc = LeakyReLU(acc)           (optional)
#   acc = acc + res                (optional residual)
#   acc = LeakyReLU(acc*ps + pt)   (optional post-residual BN+LeakyReLU)
# ---------------------------------------------------------------------------
def _mm_kernel(*refs, has_scale, use_lrelu, has_res, has_post):
    it = iter(refs)
    x_ref = next(it)
    w_ref = next(it)
    shift_ref = next(it)
    scale_ref = next(it) if has_scale else None
    res_ref = next(it) if has_res else None
    pscale_ref = next(it) if has_post else None
    pshift_ref = next(it) if has_post else None
    o_ref = next(it)

    acc = jnp.dot(x_ref[...], w_ref[...], preferred_element_type=jnp.float32)
    if has_scale:
        acc = acc * scale_ref[...] + shift_ref[...]
    else:
        acc = acc + shift_ref[...]
    if use_lrelu:
        acc = jnp.where(acc >= 0, acc, NEG_SLOPE * acc)
    if has_res:
        acc = acc + res_ref[...]
    if has_post:
        acc = acc * pscale_ref[...] + pshift_ref[...]
        acc = jnp.where(acc >= 0, acc, NEG_SLOPE * acc)
    o_ref[...] = acc.astype(o_ref.dtype)


def _mm_epilogue(patches, wmat, shift, *, scale=None, res=None, post=None,
                 use_lrelu=False):
    M, K = patches.shape
    N = wmat.shape[1]

    # choose an M-tile (multiple of 8), pad rows so the grid divides evenly
    M8 = _round_up(M, 8)
    TM = min(_TM_MAX, M8)
    Mp = _round_up(M8, TM)
    if Mp != M:
        patches = jnp.pad(patches, ((0, Mp - M), (0, 0)))
        if res is not None:
            res = jnp.pad(res, ((0, Mp - M), (0, 0)))
    grid = (Mp // TM,)

    row_spec = pl.BlockSpec((TM, K), lambda i: (i, 0))
    out_row_spec = pl.BlockSpec((TM, N), lambda i: (i, 0))

    def bcast(shape):
        return pl.BlockSpec(shape, lambda i: (0, 0))

    args = [patches, wmat, shift.reshape(1, N)]
    in_specs = [row_spec, bcast((K, N)), bcast((1, N))]
    if scale is not None:
        args.append(scale.reshape(1, N))
        in_specs.append(bcast((1, N)))
    if res is not None:
        args.append(res)
        in_specs.append(out_row_spec)
    if post is not None:
        pscale, pshift = post
        args += [pscale.reshape(1, N), pshift.reshape(1, N)]
        in_specs += [bcast((1, N)), bcast((1, N))]

    kernel = functools.partial(
        _mm_kernel,
        has_scale=scale is not None,
        use_lrelu=use_lrelu,
        has_res=res is not None,
        has_post=post is not None)

    out = pl.pallas_call(
        kernel,
        out_shape=jax.ShapeDtypeStruct((Mp, N), jnp.float32),
        grid=grid,
        in_specs=in_specs,
        out_specs=pl.BlockSpec((TM, N), lambda i: (i, 0)),
        compiler_params=pltpu.CompilerParams(
            dimension_semantics=("parallel",),
            vmem_limit_bytes=_VMEM_LIMIT),
    )(*args)
    return out[:M] if Mp != M else out


# ---------------------------------------------------------------------------
# Kernel B: stride-1 3x3 conv (pad=1) with in-kernel tap formation + fused
# (bias+BN) affine + LeakyReLU.  One grid step per batch element.
# The 9 taps are lane-concatenated in VMEM so the MXU contracts a single
# K = 9*Cin dimension (far better systolic-array fill than 9 K=Cin dots).
# ---------------------------------------------------------------------------
def _conv_s1_kernel(xp_ref, w_ref, scale_ref, shift_ref, o_ref, *, OH, OW, Cin):
    cout = o_ref.shape[-1]
    taps = []
    for kh in range(3):
        for kw in range(3):
            taps.append(
                xp_ref[0, kh:kh + OH, kw:kw + OW, :].reshape(OH * OW, Cin))
    x_cat = jnp.concatenate(taps, axis=-1)          # (OH*OW, 9*Cin) in VMEM
    acc = jnp.dot(x_cat, w_ref[...], preferred_element_type=jnp.float32)
    acc = acc * scale_ref[...] + shift_ref[...]
    acc = jnp.where(acc >= 0, acc, NEG_SLOPE * acc)
    o_ref[...] = acc.reshape(1, OH, OW, cout).astype(o_ref.dtype)


def conv_s1_bn_lrelu(x, w, scale, shift):
    """x: (B,H,W,Cin) NHWC; w: (3,3,Cin,Cout); scale/shift fold bias+BN."""
    B, H, W, Cin = x.shape
    Cout = w.shape[-1]
    xp = jnp.pad(x, ((0, 0), (1, 1), (1, 1), (0, 0)))
    wmat = w.reshape(9 * Cin, Cout)

    # Fallback for images too large to double-buffer per-batch in VMEM
    # (padded input + im2col operand + output, all f32).
    per_image = ((H + 2) * (W + 2) * Cin + H * W * (9 * Cin + Cout)) * 4
    if 2 * per_image > 24 * 1024 * 1024:
        patches = _im2col(xp, H, W, 1)
        out = _mm_epilogue(patches, wmat, shift, scale=scale, use_lrelu=True)
        return out.reshape(B, H, W, Cout)

    kernel = functools.partial(_conv_s1_kernel, OH=H, OW=W, Cin=Cin)
    return pl.pallas_call(
        kernel,
        out_shape=jax.ShapeDtypeStruct((B, H, W, Cout), jnp.float32),
        grid=(B,),
        in_specs=[
            pl.BlockSpec((1, H + 2, W + 2, Cin), lambda b: (b, 0, 0, 0)),
            pl.BlockSpec((9 * Cin, Cout), lambda b: (0, 0)),
            pl.BlockSpec((1, Cout), lambda b: (0, 0)),
            pl.BlockSpec((1, Cout), lambda b: (0, 0)),
        ],
        out_specs=pl.BlockSpec((1, H, W, Cout), lambda b: (b, 0, 0, 0)),
        compiler_params=pltpu.CompilerParams(
            dimension_semantics=("parallel",),
            vmem_limit_bytes=_VMEM_LIMIT),
    )(xp, wmat, scale.reshape(1, Cout), shift.reshape(1, Cout))


# ---------------------------------------------------------------------------
# JAX-side patch gather (used for stride-3 convs, where it has no blow-up, and
# for the tiny Cin=1 first conv).
# ---------------------------------------------------------------------------
def _im2col(xp, OH, OW, stride):
    B = xp.shape[0]
    Cin = xp.shape[-1]
    cols = []
    for kh in range(3):
        for kw in range(3):
            cols.append(xp[:, kh:kh + (OH - 1) * stride + 1:stride,
                            kw:kw + (OW - 1) * stride + 1:stride, :])
    return jnp.concatenate(cols, axis=-1).reshape(B * OH * OW, 9 * Cin)


def conv_s3(x, w, b, res=None, post=None):
    """3x3 conv, stride 3, pad 1. Optional residual add and post BN+LeakyReLU."""
    B, H, W, Cin = x.shape
    Cout = w.shape[-1]
    OH = (H - 1) // 3 + 1
    OW = (W - 1) // 3 + 1
    xp = jnp.pad(x, ((0, 0), (1, 1), (1, 1), (0, 0)))
    patches = _im2col(xp, OH, OW, 3)
    res_flat = None if res is None else res.reshape(B * OH * OW, Cout)
    out = _mm_epilogue(patches, w.reshape(9 * Cin, Cout), b,
                       res=res_flat, post=post)
    return out.reshape(B, OH, OW, Cout)


def conv_first(x, w, b):
    """Top conv: 3x3, stride 1, pad 1, Cin=1 (im2col is tiny: K=9)."""
    B, H, W, Cin = x.shape
    Cout = w.shape[-1]
    xp = jnp.pad(x, ((0, 0), (1, 1), (1, 1), (0, 0)))
    patches = _im2col(xp, H, W, 1)
    out = _mm_epilogue(patches, w.reshape(9 * Cin, Cout), b)
    return out.reshape(B, H, W, Cout)


# ---------------------------------------------------------------------------
# MaxPool2d(3, stride=3, padding=1) — plain JAX 9-tap max (XLA fuses the
# shifted strided slices; no 9x intermediate, no extra kernel launches).
# ---------------------------------------------------------------------------
def maxpool3(x):
    B, H, W, C = x.shape
    OH = (H - 1) // 3 + 1
    OW = (W - 1) // 3 + 1
    xp = jnp.pad(x, ((0, 0), (1, 1), (1, 1), (0, 0)),
                 constant_values=-jnp.inf)
    out = None
    for kh in range(3):
        for kw in range(3):
            s = xp[:, kh:kh + (OH - 1) * 3 + 1:3,
                   kw:kw + (OW - 1) * 3 + 1:3, :]
            out = s if out is None else jnp.maximum(out, s)
    return out


# ---------------------------------------------------------------------------
# Classifier head: fc1 + LeakyReLU + fc2 + LogSoftmax(dim=1), one kernel.
# ---------------------------------------------------------------------------
def _head_kernel(x_ref, w1_ref, b1_ref, w2_ref, b2_ref, o_ref):
    h = jnp.dot(x_ref[...], w1_ref[...],
                preferred_element_type=jnp.float32) + b1_ref[...]
    h = jnp.where(h >= 0, h, NEG_SLOPE * h)
    logits = jnp.dot(h, w2_ref[...],
                     preferred_element_type=jnp.float32) + b2_ref[...]
    m = jnp.max(logits, axis=1, keepdims=True)
    z = logits - m
    lse = jnp.log(jnp.sum(jnp.exp(z), axis=1, keepdims=True))
    o_ref[...] = (z - lse).astype(o_ref.dtype)


def head_pallas(feat, fc1, fc2):
    B, D = feat.shape
    Hd = fc1["w"].shape[1]
    O = fc2["w"].shape[1]
    return pl.pallas_call(
        _head_kernel,
        out_shape=jax.ShapeDtypeStruct((B, O), jnp.float32),
        in_specs=[_full_spec((B, D)), _full_spec((D, Hd)), _full_spec((1, Hd)),
                  _full_spec((Hd, O)), _full_spec((1, O))],
        out_specs=_full_spec((B, O)),
    )(feat, fc1["w"], fc1["b"].reshape(1, Hd), fc2["w"], fc2["b"].reshape(1, O))


# ---------------------------------------------------------------------------
# Model glue
# ---------------------------------------------------------------------------
def _fold_bn(bn, bias=None):
    scale = bn["gamma"] / jnp.sqrt(bn["var"] + BN_EPS)
    shift = bn["beta"] - bn["mean"] * scale
    if bias is not None:
        shift = shift + bias * scale    # fold conv bias: (x@w + b)*s + t
    return scale, shift


def resblock_forward(x, p, final_bn=None):
    # shortcut: conv11 (stride 3, bias only)
    prev_mp = conv_s3(x, p["conv11"]["w"], p["conv11"]["b"])
    # NOTE: reference's pre_bn/lrelu branch is dead code (overwritten) -> skipped.
    scale, shift = _fold_bn(p["bn1"], bias=p["conv1"]["b"])
    out = conv_s1_bn_lrelu(x, p["conv1"]["w"], scale, shift)
    # dropout: eval-mode identity
    post = _fold_bn(final_bn) if final_bn is not None else None
    out = conv_s3(out, p["conv2"]["w"], p["conv2"]["b"], res=prev_mp, post=post)
    return out


def cqcc_forward(x, params):
    # x: (B, H, W) float32 -> channel dim (C=1, NHWC)
    x = x[..., None]
    out = conv_first(x, params["conv1"]["w"], params["conv1"]["b"])
    out = resblock_forward(out, params["block1"])
    out = resblock_forward(out, params["block3"])
    out = maxpool3(out)
    out = resblock_forward(out, params["block5"])
    out = maxpool3(out)
    out = resblock_forward(out, params["block7"])
    out = maxpool3(out)
    out = resblock_forward(out, params["block9"])
    out = maxpool3(out)
    # model-level bn + lrelu fused into block11's conv2 epilogue
    out = resblock_forward(out, params["block11"], final_bn=params["bn"])
    out = maxpool3(out)
    B, H, W, C = out.shape
    assert H == 1 and W == 1, "fc1 expects 32 features => final spatial must be 1x1"
    feat = out.reshape(B, C)
    # TODO(synk): nn.Dropout in training mode not implemented (eval: identity).
    return head_pallas(feat, params["fc1"], params["fc2"])


def init_params(key):
    keys = iter(jax.random.split(key, 64))

    def conv_p(cin, cout):
        w = jax.random.normal(next(keys), (3, 3, cin, cout), jnp.float32) * 0.05
        b = jax.random.normal(next(keys), (cout,), jnp.float32) * 0.05
        return {"w": w, "b": b}

    def bn_p(c):
        # PyTorch BatchNorm2d defaults (eval): gamma=1, beta=0, mean=0, var=1
        return {"gamma": jnp.ones((c,), jnp.float32),
                "beta": jnp.zeros((c,), jnp.float32),
                "mean": jnp.zeros((c,), jnp.float32),
                "var": jnp.ones((c,), jnp.float32)}

    def block_p(cin, c):
        return {"conv1": conv_p(cin, c), "conv2": conv_p(c, c),
                "conv11": conv_p(cin, c), "bn1": bn_p(c)}

    params = {"conv1": conv_p(1, 32)}
    for name in ("block1", "block3", "block5", "block7", "block9", "block11"):
        params[name] = block_p(32, 32)
    params["bn"] = bn_p(32)
    params["fc1"] = {"w": jax.random.normal(next(keys), (32, 128), jnp.float32) * 0.05,
                     "b": jax.random.normal(next(keys), (128,), jnp.float32) * 0.05}
    params["fc2"] = {"w": jax.random.normal(next(keys), (128, 2), jnp.float32) * 0.05,
                     "b": jax.random.normal(next(keys), (2,), jnp.float32) * 0.05}
    return params


if __name__ == "__main__":
    root = jax.random.PRNGKey(0)
    pkey, xkey = jax.random.split(root)
    params = init_params(pkey)
    # small shapes: batch=2, spectrogram 16x16 (unsqueezed to NCHW (2,1,16,16)
    # in the reference); after the stride/pool-3 stages the spatial dims hit 1x1.
    x = jax.random.normal(xkey, (2, 16, 16), jnp.float32)

    out = jax.jit(cqcc_forward)(x, params)
    out = jax.block_until_ready(out)
    assert out.shape == (2, 2) and out.dtype == jnp.float32
    # log-softmax rows must sum to 1 in probability space
    assert bool(jnp.all(jnp.abs(jnp.sum(jnp.exp(out), axis=1) - 1.0) < 1e-4))
    print("KERNEL_OK")
</pallas_src>

<mosaic_0001>
module attributes {stable_mosaic.version = 11 : i64} {
  func.func @_mm_kernel(%arg0: i32, %arg1: memref<512x9xf32, #tpu.memory_space<vmem>>, %arg2: memref<9x32xf32, #tpu.memory_space<vmem>>, %arg3: memref<1x32xf32, #tpu.memory_space<vmem>>, %arg4: memref<512x32xf32, #tpu.memory_space<vmem>>) attributes {dimension_semantics = [#tpu.dimension_semantics<parallel>], iteration_bounds = array<i64: 1>, scalar_prefetch = 0 : i64, scratch_operands = 0 : i64, tpu.core_type = #tpu.core_type<tc>, window_params = [{transform_indices = @transform_0, window_bounds = array<i64: 512, 9>}, {pipeline_mode = #tpu.pipeline_mode<synchronous>, transform_indices = @transform_1, window_bounds = array<i64: 9, 32>}, {pipeline_mode = #tpu.pipeline_mode<synchronous>, transform_indices = @transform_2, window_bounds = array<i64: 1, 32>}, {transform_indices = @transform_3, window_bounds = array<i64: 512, 32>}]} {
    %c0 = arith.constant 0 : index
    %c0_0 = arith.constant 0 : index
    %0 = vector.load %arg1[%c0, %c0_0] : memref<512x9xf32, #tpu.memory_space<vmem>>, vector<512x9xf32>
    %c0_1 = arith.constant 0 : index
    %c0_2 = arith.constant 0 : index
    %1 = vector.load %arg2[%c0_1, %c0_2] : memref<9x32xf32, #tpu.memory_space<vmem>>, vector<9x32xf32>
    %cst = arith.constant dense<0.000000e+00> : vector<512x32xf32>
    %2 = tpu.matmul %0, %1, %cst {dimension_numbers = #tpu.dot_dimension_numbers<[1], [0], [0], [1], [0, 0, 1, 1], [], []>} : vector<512x9xf32>, vector<9x32xf32>, vector<512x32xf32> -> vector<512x32xf32>
    %c0_3 = arith.constant 0 : index
    %c0_4 = arith.constant 0 : index
    %3 = vector.load %arg3[%c0_3, %c0_4] : memref<1x32xf32, #tpu.memory_space<vmem>>, vector<1x32xf32>
    %4 = vector.broadcast %3 : vector<1x32xf32> to vector<512x32xf32>
    %5 = arith.addf %2, %4 : vector<512x32xf32>
    %c0_5 = arith.constant 0 : index
    %c0_6 = arith.constant 0 : index
    %6 = vector.load %arg4[%c0_5, %c0_6] : memref<512x32xf32, #tpu.memory_space<vmem>>, vector<512x32xf32>
    tpu.vector_store %arg4[%c0_5, %c0_6], %5 {strides = array<i32>} : memref<512x32xf32, #tpu.memory_space<vmem>>, vector<512x32xf32>,
    return
  }
  func.func @transform_0(%arg0: i32) -> (i32, i32) {
    %c0_i32 = arith.constant 0 : i32
    %c0_i32_0 = arith.constant 0 : i32
    return %arg0, %c0_i32 : i32, i32
  }
  func.func @transform_1(%arg0: i32) -> (i32, i32) {
    %c0_i32 = arith.constant 0 : i32
    %c0_i32_0 = arith.constant 0 : i32
    %c0_i32_1 = arith.constant 0 : i32
    return %c0_i32, %c0_i32_0 : i32, i32
  }
  func.func @transform_2(%arg0: i32) -> (i32, i32) {
    %c0_i32 = arith.constant 0 : i32
    %c0_i32_0 = arith.constant 0 : i32
    %c0_i32_1 = arith.constant 0 : i32
    return %c0_i32, %c0_i32_0 : i32, i32
  }
  func.func @transform_3(%arg0: i32) -> (i32, i32) {
    %c0_i32 = arith.constant 0 : i32
    %c0_i32_0 = arith.constant 0 : i32
    return %arg0, %c0_i32 : i32, i32
  }
}

module attributes {stable_mosaic.version = 11 : i64} {
  func.func @_mm_kernel(%arg0: i32, %arg1: memref<72x288xf32, #tpu.memory_space<vmem>>, %arg2: memref<288x32xf32, #tpu.memory_space<vmem>>, %arg3: memref<1x32xf32, #tpu.memory_space<vmem>>, %arg4: memref<72x32xf32, #tpu.memory_space<vmem>>) attributes {dimension_semantics = [#tpu.dimension_semantics<parallel>], iteration_bounds = array<i64: 1>, scalar_prefetch = 0 : i64, scratch_operands = 0 : i64, tpu.core_type = #tpu.core_type<tc>, window_params = [{transform_indices = @transform_0, window_bounds = array<i64: 72, 288>}, {pipeline_mode = #tpu.pipeline_mode<synchronous>, transform_indices = @transform_1, window_bounds = array<i64: 288, 32>}, {pipeline_mode = #tpu.pipeline_mode<synchronous>, transform_indices = @transform_2, window_bounds = array<i64: 1, 32>}, {transform_indices = @transform_3, window_bounds = array<i64: 72, 32>}]} {
    %c0 = arith.constant 0 : index
    %c0_0 = arith.constant 0 : index
    %0 = vector.load %arg1[%c0, %c0_0] : memref<72x288xf32, #tpu.memory_space<vmem>>, vector<72x288xf32>
    %c0_1 = arith.constant 0 : index
    %c0_2 = arith.constant 0 : index
    %1 = vector.load %arg2[%c0_1, %c0_2] : memref<288x32xf32, #tpu.memory_space<vmem>>, vector<288x32xf32>
    %cst = arith.constant dense<0.000000e+00> : vector<72x32xf32>
    %2 = tpu.matmul %0, %1, %cst {dimension_numbers = #tpu.dot_dimension_numbers<[1], [0], [0], [1], [0, 0, 1, 1], [], []>} : vector<72x288xf32>, vector<288x32xf32>, vector<72x32xf32> -> vector<72x32xf32>
    %c0_3 = arith.constant 0 : index
    %c0_4 = arith.constant 0 : index
    %3 = vector.load %arg3[%c0_3, %c0_4] : memref<1x32xf32, #tpu.memory_space<vmem>>, vector<1x32xf32>
    %4 = vector.broadcast %3 : vector<1x32xf32> to vector<72x32xf32>
    %5 = arith.addf %2, %4 : vector<72x32xf32>
    %c0_5 = arith.constant 0 : index
    %c0_6 = arith.constant 0 : index
    %6 = vector.load %arg4[%c0_5, %c0_6] : memref<72x32xf32, #tpu.memory_space<vmem>>, vector<72x32xf32>
    tpu.vector_store %arg4[%c0_5, %c0_6], %5 {strides = array<i32>} : memref<72x32xf32, #tpu.memory_space<vmem>>, vector<72x32xf32>,
    return
  }
  func.func @transform_0(%arg0: i32) -> (i32, i32) {
    %c0_i32 = arith.constant 0 : i32
    %c0_i32_0 = arith.constant 0 : i32
    return %arg0, %c0_i32 : i32, i32
  }
  func.func @transform_1(%arg0: i32) -> (i32, i32) {
    %c0_i32 = arith.constant 0 : i32
    %c0_i32_0 = arith.constant 0 : i32
    %c0_i32_1 = arith.constant 0 : i32
    return %c0_i32, %c0_i32_0 : i32, i32
  }
  func.func @transform_2(%arg0: i32) -> (i32, i32) {
    %c0_i32 = arith.constant 0 : i32
    %c0_i32_0 = arith.constant 0 : i32
    %c0_i32_1 = arith.constant 0 : i32
    return %c0_i32, %c0_i32_0 : i32, i32
  }
  func.func @transform_3(%arg0: i32) -> (i32, i32) {
    %c0_i32 = arith.constant 0 : i32
    %c0_i32_0 = arith.constant 0 : i32
    return %arg0, %c0_i32 : i32, i32
  }
}

module attributes {stable_mosaic.version = 11 : i64} {
  func.func @_conv_s1_kernel(%arg0: i32, %arg1: memref<1x18x18x32xf32, #tpu.memory_space<vmem>>, %arg2: memref<288x32xf32, #tpu.memory_space<vmem>>, %arg3: memref<1x32xf32, #tpu.memory_space<vmem>>, %arg4: memref<1x32xf32, #tpu.memory_space<vmem>>, %arg5: memref<1x16x16x32xf32, #tpu.memory_space<vmem>>) attributes {dimension_semantics = [#tpu.dimension_semantics<parallel>], iteration_bounds = array<i64: 2>, scalar_prefetch = 0 : i64, scratch_operands = 0 : i64, tpu.core_type = #tpu.core_type<tc>, window_params = [{transform_indices = @transform_0, window_bounds = array<i64: 1, 18, 18, 32>}, {pipeline_mode = #tpu.pipeline_mode<synchronous>, transform_indices = @transform_1, window_bounds = array<i64: 288, 32>}, {pipeline_mode = #tpu.pipeline_mode<synchronous>, transform_indices = @transform_2, window_bounds = array<i64: 1, 32>}, {pipeline_mode = #tpu.pipeline_mode<synchronous>, transform_indices = @transform_3, window_bounds = array<i64: 1, 32>}, {transform_indices = @transform_4, window_bounds = array<i64: 1, 16, 16, 32>}]} {
    %c0 = arith.constant 0 : index
    %c0_0 = arith.constant 0 : index
    %c0_1 = arith.constant 0 : index
    %c0_2 = arith.constant 0 : index
    %0 = vector.load %arg1[%c0, %c0_0, %c0_1, %c0_2] : memref<1x18x18x32xf32, #tpu.memory_space<vmem>>, vector<1x16x16x32xf32>
    %1 = vector.shape_cast %0 : vector<1x16x16x32xf32> to vector<16x16x32xf32>
    %2 = vector.shape_cast %1 : vector<16x16x32xf32> to vector<256x32xf32>
    %c0_3 = arith.constant 0 : index
    %c0_4 = arith.constant 0 : index
    %c1 = arith.constant 1 : index
    %c0_5 = arith.constant 0 : index
    %3 = vector.load %arg1[%c0_3, %c0_4, %c1, %c0_5] : memref<1x18x18x32xf32, #tpu.memory_space<vmem>>, vector<1x16x16x32xf32>
    %4 = vector.shape_cast %3 : vector<1x16x16x32xf32> to vector<16x16x32xf32>
    %5 = vector.shape_cast %4 : vector<16x16x32xf32> to vector<256x32xf32>
    %c0_6 = arith.constant 0 : index
    %c0_7 = arith.constant 0 : index
    %c2 = arith.constant 2 : index
    %c0_8 = arith.constant 0 : index
    %6 = vector.load %arg1[%c0_6, %c0_7, %c2, %c0_8] : memref<1x18x18x32xf32, #tpu.memory_space<vmem>>, vector<1x16x16x32xf32>
    %7 = vector.shape_cast %6 : vector<1x16x16x32xf32> to vector<16x16x32xf32>
    %8 = vector.shape_cast %7 : vector<16x16x32xf32> to vector<256x32xf32>
    %c0_9 = arith.constant 0 : index
    %c1_10 = arith.constant 1 : index
    %c0_11 = arith.constant 0 : index
    %c0_12 = arith.constant 0 : index
    %9 = vector.load %arg1[%c0_9, %c1_10, %c0_11, %c0_12] : memref<1x18x18x32xf32, #tpu.memory_space<vmem>>, vector<1x16x16x32xf32>
    %10 = vector.shape_cast %9 : vector<1x16x16x32xf32> to vector<16x16x32xf32>
    %11 = vector.shape_cast %10 : vector<16x16x32xf32> to vector<256x32xf32>
    %c0_13 = arith.constant 0 : index
    %c1_14 = arith.constant 1 : index
    %c1_15 = arith.constant 1 : index
    %c0_16 = arith.constant 0 : index
    %12 = vector.load %arg1[%c0_13, %c1_14, %c1_15, %c0_16] : memref<1x18x18x32xf32, #tpu.memory_space<vmem>>, vector<1x16x16x32xf32>
    %13 = vector.shape_cast %12 : vector<1x16x16x32xf32> to vector<16x16x32xf32>
    %14 = vector.shape_cast %13 : vector<16x16x32xf32> to vector<256x32xf32>
    %c0_17 = arith.constant 0 : index
    %c1_18 = arith.constant 1 : index
    %c2_19 = arith.constant 2 : index
    %c0_20 = arith.constant 0 : index
    %15 = vector.load %arg1[%c0_17, %c1_18, %c2_19, %c0_20] : memref<1x18x18x32xf32, #tpu.memory_space<vmem>>, vector<1x16x16x32xf32>
    %16 = vector.shape_cast %15 : vector<1x16x16x32xf32> to vector<16x16x32xf32>
    %17 = vector.shape_cast %16 : vector<16x16x32xf32> to vector<256x32xf32>
    %c0_21 = arith.constant 0 : index
    %c2_22 = arith.constant 2 : index
    %c0_23 = arith.constant 0 : index
    %c0_24 = arith.constant 0 : index
    %18 = vector.load %arg1[%c0_21, %c2_22, %c0_23, %c0_24] : memref<1x18x18x32xf32, #tpu.memory_space<vmem>>, vector<1x16x16x32xf32>
    %19 = vector.shape_cast %18 : vector<1x16x16x32xf32> to vector<16x16x32xf32>
    %20 = vector.shape_cast %19 : vector<16x16x32xf32> to vector<256x32xf32>
    %c0_25 = arith.constant 0 : index
    %c2_26 = arith.constant 2 : index
    %c1_27 = arith.constant 1 : index
    %c0_28 = arith.constant 0 : index
    %21 = vector.load %arg1[%c0_25, %c2_26, %c1_27, %c0_28] : memref<1x18x18x32xf32, #tpu.memory_space<vmem>>, vector<1x16x16x32xf32>
    %22 = vector.shape_cast %21 : vector<1x16x16x32xf32> to vector<16x16x32xf32>
    %23 = vector.shape_cast %22 : vector<16x16x32xf32> to vector<256x32xf32>
    %c0_29 = arith.constant 0 : index
    %c2_30 = arith.constant 2 : index
    %c2_31 = arith.constant 2 : index
    %c0_32 = arith.constant 0 : index
    %24 = vector.load %arg1[%c0_29, %c2_30, %c2_31, %c0_32] : memref<1x18x18x32xf32, #tpu.memory_space<vmem>>, vector<1x16x16x32xf32>
    %25 = vector.shape_cast %24 : vector<1x16x16x32xf32> to vector<16x16x32xf32>
    %26 = vector.shape_cast %25 : vector<16x16x32xf32> to vector<256x32xf32>
    %27 = tpu.concatenate %2, %5, %8, %11, %14, %17, %20, %23, %26 in 1 : vector<256x32xf32>, vector<256x32xf32>, vector<256x32xf32>, vector<256x32xf32>, vector<256x32xf32>, vector<256x32xf32>, vector<256x32xf32>, vector<256x32xf32>, vector<256x32xf32> -> vector<256x288xf32>
    %c0_33 = arith.constant 0 : index
    %c0_34 = arith.constant 0 : index
    %28 = vector.load %arg2[%c0_33, %c0_34] : memref<288x32xf32, #tpu.memory_space<vmem>>, vector<288x32xf32>
    %cst = arith.constant dense<0.000000e+00> : vector<256x32xf32>
    %29 = tpu.matmul %27, %28, %cst {dimension_numbers = #tpu.dot_dimension_numbers<[1], [0], [0], [1], [0, 0, 1, 1], [], []>} : vector<256x288xf32>, vector<288x32xf32>, vector<256x32xf32> -> vector<256x32xf32>
    %c0_35 = arith.constant 0 : index
    %c0_36 = arith.constant 0 : index
    %30 = vector.load %arg3[%c0_35, %c0_36] : memref<1x32xf32, #tpu.memory_space<vmem>>, vector<1x32xf32>
    %31 = vector.broadcast %30 : vector<1x32xf32> to vector<256x32xf32>
    %32 = arith.mulf %29, %31 : vector<256x32xf32>
    %c0_37 = arith.constant 0 : index
    %c0_38 = arith.constant 0 : index
    %33 = vector.load %arg4[%c0_37, %c0_38] : memref<1x32xf32, #tpu.memory_space<vmem>>, vector<1x32xf32>
    %34 = vector.broadcast %33 : vector<1x32xf32> to vector<256x32xf32>
    %35 = arith.addf %32, %34 : vector<256x32xf32>
    %cst_39 = arith.constant 0.000000e+00 : f32
    %36 = vector.broadcast %cst_39 : f32 to vector<256x32xf32>
    %37 = arith.cmpf oge, %35, %36 : vector<256x32xf32>
    %cst_40 = arith.constant 0.00999999977 : f32
    %38 = vector.broadcast %cst_40 : f32 to vector<256x32xf32>
    %39 = arith.mulf %38, %35 : vector<256x32xf32>
    %40 = arith.select %37, %35, %39 : vector<256x32xi1>, vector<256x32xf32>
    %41 = vector.shape_cast %40 : vector<256x32xf32> to vector<1x16x16x32xf32>
    %c0_41 = arith.constant 0 : index
    %c0_42 = arith.constant 0 : index
    %c0_43 = arith.constant 0 : index
    %c0_44 = arith.constant 0 : index
    %42 = vector.load %arg5[%c0_41, %c0_42, %c0_43, %c0_44] : memref<1x16x16x32xf32, #tpu.memory_space<vmem>>, vector<1x16x16x32xf32>
    tpu.vector_store %arg5[%c0_41, %c0_42, %c0_43, %c0_44], %41 {strides = array<i32>} : memref<1x16x16x32xf32, #tpu.memory_space<vmem>>, vector<1x16x16x32xf32>,
    return
  }
  func.func @transform_0(%arg0: i32) -> (i32, i32, i32, i32) {
    %c0_i32 = arith.constant 0 : i32
    %c0_i32_0 = arith.constant 0 : i32
    %c0_i32_1 = arith.constant 0 : i32
    %c0_i32_2 = arith.constant 0 : i32
    return %arg0, %c0_i32, %c0_i32_0, %c0_i32_1 : i32, i32, i32, i32
  }
  func.func @transform_1(%arg0: i32) -> (i32, i32) {
    %c0_i32 = arith.constant 0 : i32
    %c0_i32_0 = arith.constant 0 : i32
    %c0_i32_1 = arith.constant 0 : i32
    return %c0_i32, %c0_i32_0 : i32, i32
  }
  func.func @transform_2(%arg0: i32) -> (i32, i32) {
    %c0_i32 = arith.constant 0 : i32
    %c0_i32_0 = arith.constant 0 : i32
    %c0_i32_1 = arith.constant 0 : i32
    return %c0_i32, %c0_i32_0 : i32, i32
  }
  func.func @transform_3(%arg0: i32) -> (i32, i32) {
    %c0_i32 = arith.constant 0 : i32
    %c0_i32_0 = arith.constant 0 : i32
    %c0_i32_1 = arith.constant 0 : i32
    return %c0_i32, %c0_i32_0 : i32, i32
  }
  func.func @transform_4(%arg0: i32) -> (i32, i32, i32, i32) {
    %c0_i32 = arith.constant 0 : i32
    %c0_i32_0 = arith.constant 0 : i32
    %c0_i32_1 = arith.constant 0 : i32
    %c0_i32_2 = arith.constant 0 : i32
    return %arg0, %c0_i32, %c0_i32_0, %c0_i32_1 : i32, i32, i32, i32
  }
}

module attributes {stable_mosaic.version = 11 : i64} {
  func.func @_mm_kernel(%arg0: i32, %arg1: memref<72x288xf32, #tpu.memory_space<vmem>>, %arg2: memref<288x32xf32, #tpu.memory_space<vmem>>, %arg3: memref<1x32xf32, #tpu.memory_space<vmem>>, %arg4: memref<72x32xf32, #tpu.memory_space<vmem>>, %arg5: memref<72x32xf32, #tpu.memory_space<vmem>>) attributes {dimension_semantics = [#tpu.dimension_semantics<parallel>], iteration_bounds = array<i64: 1>, scalar_prefetch = 0 : i64, scratch_operands = 0 : i64, tpu.core_type = #tpu.core_type<tc>, window_params = [{transform_indices = @transform_0, window_bounds = array<i64: 72, 288>}, {pipeline_mode = #tpu.pipeline_mode<synchronous>, transform_indices = @transform_1, window_bounds = array<i64: 288, 32>}, {pipeline_mode = #tpu.pipeline_mode<synchronous>, transform_indices = @transform_2, window_bounds = array<i64: 1, 32>}, {transform_indices = @transform_3, window_bounds = array<i64: 72, 32>}, {transform_indices = @transform_4, window_bounds = array<i64: 72, 32>}]} {
    %c0 = arith.constant 0 : index
    %c0_0 = arith.constant 0 : index
    %0 = vector.load %arg1[%c0, %c0_0] : memref<72x288xf32, #tpu.memory_space<vmem>>, vector<72x288xf32>
    %c0_1 = arith.constant 0 : index
    %c0_2 = arith.constant 0 : index
    %1 = vector.load %arg2[%c0_1, %c0_2] : memref<288x32xf32, #tpu.memory_space<vmem>>, vector<288x32xf32>
    %cst = arith.constant dense<0.000000e+00> : vector<72x32xf32>
    %2 = tpu.matmul %0, %1, %cst {dimension_numbers = #tpu.dot_dimension_numbers<[1], [0], [0], [1], [0, 0, 1, 1], [], []>} : vector<72x288xf32>, vector<288x32xf32>, vector<72x32xf32> -> vector<72x32xf32>
    %c0_3 = arith.constant 0 : index
    %c0_4 = arith.constant 0 : index
    %3 = vector.load %arg3[%c0_3, %c0_4] : memref<1x32xf32, #tpu.memory_space<vmem>>, vector<1x32xf32>
    %4 = vector.broadcast %3 : vector<1x32xf32> to vector<72x32xf32>
    %5 = arith.addf %2, %4 : vector<72x32xf32>
    %c0_5 = arith.constant 0 : index
    %c0_6 = arith.constant 0 : index
    %6 = vector.load %arg4[%c0_5, %c0_6] : memref<72x32xf32, #tpu.memory_space<vmem>>, vector<72x32xf32>
    %7 = arith.addf %5, %6 : vector<72x32xf32>
    %c0_7 = arith.constant 0 : index
    %c0_8 = arith.constant 0 : index
    %8 = vector.load %arg5[%c0_7, %c0_8] : memref<72x32xf32, #tpu.memory_space<vmem>>, vector<72x32xf32>
    tpu.vector_store %arg5[%c0_7, %c0_8], %7 {strides = array<i32>} : memref<72x32xf32, #tpu.memory_space<vmem>>, vector<72x32xf32>,
    return
  }
  func.func @transform_0(%arg0: i32) -> (i32, i32) {
    %c0_i32 = arith.constant 0 : i32
    %c0_i32_0 = arith.constant 0 : i32
    return %arg0, %c0_i32 : i32, i32
  }
  func.func @transform_1(%arg0: i32) -> (i32, i32) {
    %c0_i32 = arith.constant 0 : i32
    %c0_i32_0 = arith.constant 0 : i32
    %c0_i32_1 = arith.constant 0 : i32
    return %c0_i32, %c0_i32_0 : i32, i32
  }
  func.func @transform_2(%arg0: i32) -> (i32, i32) {
    %c0_i32 = arith.constant 0 : i32
    %c0_i32_0 = arith.constant 0 : i32
    %c0_i32_1 = arith.constant 0 : i32
    return %c0_i32, %c0_i32_0 : i32, i32
  }
  func.func @transform_3(%arg0: i32) -> (i32, i32) {
    %c0_i32 = arith.constant 0 : i32
    %c0_i32_0 = arith.constant 0 : i32
    return %arg0, %c0_i32 : i32, i32
  }
  func.func @transform_4(%arg0: i32) -> (i32, i32) {
    %c0_i32 = arith.constant 0 : i32
    %c0_i32_0 = arith.constant 0 : i32
    return %arg0, %c0_i32 : i32, i32
  }
}

module attributes {stable_mosaic.version = 11 : i64} {
  func.func @_conv_s1_kernel(%arg0: i32, %arg1: memref<1x8x8x32xf32, #tpu.memory_space<vmem>>, %arg2: memref<288x32xf32, #tpu.memory_space<vmem>>, %arg3: memref<1x32xf32, #tpu.memory_space<vmem>>, %arg4: memref<1x32xf32, #tpu.memory_space<vmem>>, %arg5: memref<1x6x6x32xf32, #tpu.memory_space<vmem>>) attributes {dimension_semantics = [#tpu.dimension_semantics<parallel>], iteration_bounds = array<i64: 2>, scalar_prefetch = 0 : i64, scratch_operands = 0 : i64, tpu.core_type = #tpu.core_type<tc>, window_params = [{transform_indices = @transform_0, window_bounds = array<i64: 1, 8, 8, 32>}, {pipeline_mode = #tpu.pipeline_mode<synchronous>, transform_indices = @transform_1, window_bounds = array<i64: 288, 32>}, {pipeline_mode = #tpu.pipeline_mode<synchronous>, transform_indices = @transform_2, window_bounds = array<i64: 1, 32>}, {pipeline_mode = #tpu.pipeline_mode<synchronous>, transform_indices = @transform_3, window_bounds = array<i64: 1, 32>}, {transform_indices = @transform_4, window_bounds = array<i64: 1, 6, 6, 32>}]} {
    %c0 = arith.constant 0 : index
    %c0_0 = arith.constant 0 : index
    %c0_1 = arith.constant 0 : index
    %c0_2 = arith.constant 0 : index
    %0 = vector.load %arg1[%c0, %c0_0, %c0_1, %c0_2] : memref<1x8x8x32xf32, #tpu.memory_space<vmem>>, vector<1x6x6x32xf32>
    %1 = vector.shape_cast %0 : vector<1x6x6x32xf32> to vector<6x6x32xf32>
    %2 = vector.shape_cast %1 : vector<6x6x32xf32> to vector<36x32xf32>
    %c0_3 = arith.constant 0 : index
    %c0_4 = arith.constant 0 : index
    %c1 = arith.constant 1 : index
    %c0_5 = arith.constant 0 : index
    %3 = vector.load %arg1[%c0_3, %c0_4, %c1, %c0_5] : memref<1x8x8x32xf32, #tpu.memory_space<vmem>>, vector<1x6x6x32xf32>
    %4 = vector.shape_cast %3 : vector<1x6x6x32xf32> to vector<6x6x32xf32>
    %5 = vector.shape_cast %4 : vector<6x6x32xf32> to vector<36x32xf32>
    %c0_6 = arith.constant 0 : index
    %c0_7 = arith.constant 0 : index
    %c2 = arith.constant 2 : index
    %c0_8 = arith.constant 0 : index
    %6 = vector.load %arg1[%c0_6, %c0_7, %c2, %c0_8] : memref<1x8x8x32xf32, #tpu.memory_space<vmem>>, vector<1x6x6x32xf32>
    %7 = vector.shape_cast %6 : vector<1x6x6x32xf32> to vector<6x6x32xf32>
    %8 = vector.shape_cast %7 : vector<6x6x32xf32> to vector<36x32xf32>
    %c0_9 = arith.constant 0 : index
    %c1_10 = arith.constant 1 : index
    %c0_11 = arith.constant 0 : index
    %c0_12 = arith.constant 0 : index
    %9 = vector.load %arg1[%c0_9, %c1_10, %c0_11, %c0_12] : memref<1x8x8x32xf32, #tpu.memory_space<vmem>>, vector<1x6x6x32xf32>
    %10 = vector.shape_cast %9 : vector<1x6x6x32xf32> to vector<6x6x32xf32>
    %11 = vector.shape_cast %10 : vector<6x6x32xf32> to vector<36x32xf32>
    %c0_13 = arith.constant 0 : index
    %c1_14 = arith.constant 1 : index
    %c1_15 = arith.constant 1 : index
    %c0_16 = arith.constant 0 : index
    %12 = vector.load %arg1[%c0_13, %c1_14, %c1_15, %c0_16] : memref<1x8x8x32xf32, #tpu.memory_space<vmem>>, vector<1x6x6x32xf32>
    %13 = vector.shape_cast %12 : vector<1x6x6x32xf32> to vector<6x6x32xf32>
    %14 = vector.shape_cast %13 : vector<6x6x32xf32> to vector<36x32xf32>
    %c0_17 = arith.constant 0 : index
    %c1_18 = arith.constant 1 : index
    %c2_19 = arith.constant 2 : index
    %c0_20 = arith.constant 0 : index
    %15 = vector.load %arg1[%c0_17, %c1_18, %c2_19, %c0_20] : memref<1x8x8x32xf32, #tpu.memory_space<vmem>>, vector<1x6x6x32xf32>
    %16 = vector.shape_cast %15 : vector<1x6x6x32xf32> to vector<6x6x32xf32>
    %17 = vector.shape_cast %16 : vector<6x6x32xf32> to vector<36x32xf32>
    %c0_21 = arith.constant 0 : index
    %c2_22 = arith.constant 2 : index
    %c0_23 = arith.constant 0 : index
    %c0_24 = arith.constant 0 : index
    %18 = vector.load %arg1[%c0_21, %c2_22, %c0_23, %c0_24] : memref<1x8x8x32xf32, #tpu.memory_space<vmem>>, vector<1x6x6x32xf32>
    %19 = vector.shape_cast %18 : vector<1x6x6x32xf32> to vector<6x6x32xf32>
    %20 = vector.shape_cast %19 : vector<6x6x32xf32> to vector<36x32xf32>
    %c0_25 = arith.constant 0 : index
    %c2_26 = arith.constant 2 : index
    %c1_27 = arith.constant 1 : index
    %c0_28 = arith.constant 0 : index
    %21 = vector.load %arg1[%c0_25, %c2_26, %c1_27, %c0_28] : memref<1x8x8x32xf32, #tpu.memory_space<vmem>>, vector<1x6x6x32xf32>
    %22 = vector.shape_cast %21 : vector<1x6x6x32xf32> to vector<6x6x32xf32>
    %23 = vector.shape_cast %22 : vector<6x6x32xf32> to vector<36x32xf32>
    %c0_29 = arith.constant 0 : index
    %c2_30 = arith.constant 2 : index
    %c2_31 = arith.constant 2 : index
    %c0_32 = arith.constant 0 : index
    %24 = vector.load %arg1[%c0_29, %c2_30, %c2_31, %c0_32] : memref<1x8x8x32xf32, #tpu.memory_space<vmem>>, vector<1x6x6x32xf32>
    %25 = vector.shape_cast %24 : vector<1x6x6x32xf32> to vector<6x6x32xf32>
    %26 = vector.shape_cast %25 : vector<6x6x32xf32> to vector<36x32xf32>
    %27 = tpu.concatenate %2, %5, %8, %11, %14, %17, %20, %23, %26 in 1 : vector<36x32xf32>, vector<36x32xf32>, vector<36x32xf32>, vector<36x32xf32>, vector<36x32xf32>, vector<36x32xf32>, vector<36x32xf32>, vector<36x32xf32>, vector<36x32xf32> -> vector<36x288xf32>
    %c0_33 = arith.constant 0 : index
    %c0_34 = arith.constant 0 : index
    %28 = vector.load %arg2[%c0_33, %c0_34] : memref<288x32xf32, #tpu.memory_space<vmem>>, vector<288x32xf32>
    %cst = arith.constant dense<0.000000e+00> : vector<36x32xf32>
    %29 = tpu.matmul %27, %28, %cst {dimension_numbers = #tpu.dot_dimension_numbers<[1], [0], [0], [1], [0, 0, 1, 1], [], []>} : vector<36x288xf32>, vector<288x32xf32>, vector<36x32xf32> -> vector<36x32xf32>
    %c0_35 = arith.constant 0 : index
    %c0_36 = arith.constant 0 : index
    %30 = vector.load %arg3[%c0_35, %c0_36] : memref<1x32xf32, #tpu.memory_space<vmem>>, vector<1x32xf32>
    %31 = vector.broadcast %30 : vector<1x32xf32> to vector<36x32xf32>
    %32 = arith.mulf %29, %31 : vector<36x32xf32>
    %c0_37 = arith.constant 0 : index
    %c0_38 = arith.constant 0 : index
    %33 = vector.load %arg4[%c0_37, %c0_38] : memref<1x32xf32, #tpu.memory_space<vmem>>, vector<1x32xf32>
    %34 = vector.broadcast %33 : vector<1x32xf32> to vector<36x32xf32>
    %35 = arith.addf %32, %34 : vector<36x32xf32>
    %cst_39 = arith.constant 0.000000e+00 : f32
    %36 = vector.broadcast %cst_39 : f32 to vector<36x32xf32>
    %37 = arith.cmpf oge, %35, %36 : vector<36x32xf32>
    %cst_40 = arith.constant 0.00999999977 : f32
    %38 = vector.broadcast %cst_40 : f32 to vector<36x32xf32>
    %39 = arith.mulf %38, %35 : vector<36x32xf32>
    %40 = arith.select %37, %35, %39 : vector<36x32xi1>, vector<36x32xf32>
    %41 = vector.shape_cast %40 : vector<36x32xf32> to vector<1x6x6x32xf32>
    %c0_41 = arith.constant 0 : index
    %c0_42 = arith.constant 0 : index
    %c0_43 = arith.constant 0 : index
    %c0_44 = arith.constant 0 : index
    %42 = vector.load %arg5[%c0_41, %c0_42, %c0_43, %c0_44] : memref<1x6x6x32xf32, #tpu.memory_space<vmem>>, vector<1x6x6x32xf32>
    tpu.vector_store %arg5[%c0_41, %c0_42, %c0_43, %c0_44], %41 {strides = array<i32>} : memref<1x6x6x32xf32, #tpu.memory_space<vmem>>, vector<1x6x6x32xf32>,
    return
  }
  func.func @transform_0(%arg0: i32) -> (i32, i32, i32, i32) {
    %c0_i32 = arith.constant 0 : i32
    %c0_i32_0 = arith.constant 0 : i32
    %c0_i32_1 = arith.constant 0 : i32
    %c0_i32_2 = arith.constant 0 : i32
    return %arg0, %c0_i32, %c0_i32_0, %c0_i32_1 : i32, i32, i32, i32
  }
  func.func @transform_1(%arg0: i32) -> (i32, i32) {
    %c0_i32 = arith.constant 0 : i32
    %c0_i32_0 = arith.constant 0 : i32
    %c0_i32_1 = arith.constant 0 : i32
    return %c0_i32, %c0_i32_0 : i32, i32
  }
  func.func @transform_2(%arg0: i32) -> (i32, i32) {
    %c0_i32 = arith.constant 0 : i32
    %c0_i32_0 = arith.constant 0 : i32
    %c0_i32_1 = arith.constant 0 : i32
    return %c0_i32, %c0_i32_0 : i32, i32
  }
  func.func @transform_3(%arg0: i32) -> (i32, i32) {
    %c0_i32 = arith.constant 0 : i32
    %c0_i32_0 = arith.constant 0 : i32
    %c0_i32_1 = arith.constant 0 : i32
    return %c0_i32, %c0_i32_0 : i32, i32
  }
  func.func @transform_4(%arg0: i32) -> (i32, i32, i32, i32) {
    %c0_i32 = arith.constant 0 : i32
    %c0_i32_0 = arith.constant 0 : i32
    %c0_i32_1 = arith.constant 0 : i32
    %c0_i32_2 = arith.constant 0 : i32
    return %arg0, %c0_i32, %c0_i32_0, %c0_i32_1 : i32, i32, i32, i32
  }
}

module attributes {stable_mosaic.version = 11 : i64} {
  func.func @_mm_kernel(%arg0: i32, %arg1: memref<8x288xf32, #tpu.memory_space<vmem>>, %arg2: memref<288x32xf32, #tpu.memory_space<vmem>>, %arg3: memref<1x32xf32, #tpu.memory_space<vmem>>, %arg4: memref<8x32xf32, #tpu.memory_space<vmem>>) attributes {dimension_semantics = [#tpu.dimension_semantics<parallel>], iteration_bounds = array<i64: 1>, scalar_prefetch = 0 : i64, scratch_operands = 0 : i64, tpu.core_type = #tpu.core_type<tc>, window_params = [{transform_indices = @transform_0, window_bounds = array<i64: 8, 288>}, {pipeline_mode = #tpu.pipeline_mode<synchronous>, transform_indices = @transform_1, window_bounds = array<i64: 288, 32>}, {pipeline_mode = #tpu.pipeline_mode<synchronous>, transform_indices = @transform_2, window_bounds = array<i64: 1, 32>}, {transform_indices = @transform_3, window_bounds = array<i64: 8, 32>}]} {
    %c0 = arith.constant 0 : index
    %c0_0 = arith.constant 0 : index
    %0 = vector.load %arg1[%c0, %c0_0] : memref<8x288xf32, #tpu.memory_space<vmem>>, vector<8x288xf32>
    %c0_1 = arith.constant 0 : index
    %c0_2 = arith.constant 0 : index
    %1 = vector.load %arg2[%c0_1, %c0_2] : memref<288x32xf32, #tpu.memory_space<vmem>>, vector<288x32xf32>
    %cst = arith.constant dense<0.000000e+00> : vector<8x32xf32>
    %2 = tpu.matmul %0, %1, %cst {dimension_numbers = #tpu.dot_dimension_numbers<[1], [0], [0], [1], [0, 0, 1, 1], [], []>} : vector<8x288xf32>, vector<288x32xf32>, vector<8x32xf32> -> vector<8x32xf32>
    %c0_3 = arith.constant 0 : index
    %c0_4 = arith.constant 0 : index
    %3 = vector.load %arg3[%c0_3, %c0_4] : memref<1x32xf32, #tpu.memory_space<vmem>>, vector<1x32xf32>
    %4 = vector.broadcast %3 : vector<1x32xf32> to vector<8x32xf32>
    %5 = arith.addf %2, %4 : vector<8x32xf32>
    %c0_5 = arith.constant 0 : index
    %c0_6 = arith.constant 0 : index
    %6 = vector.load %arg4[%c0_5, %c0_6] : memref<8x32xf32, #tpu.memory_space<vmem>>, vector<8x32xf32>
    tpu.vector_store %arg4[%c0_5, %c0_6], %5 {strides = array<i32>} : memref<8x32xf32, #tpu.memory_space<vmem>>, vector<8x32xf32>,
    return
  }
  func.func @transform_0(%arg0: i32) -> (i32, i32) {
    %c0_i32 = arith.constant 0 : i32
    %c0_i32_0 = arith.constant 0 : i32
    return %arg0, %c0_i32 : i32, i32
  }
  func.func @transform_1(%arg0: i32) -> (i32, i32) {
    %c0_i32 = arith.constant 0 : i32
    %c0_i32_0 = arith.constant 0 : i32
    %c0_i32_1 = arith.constant 0 : i32
    return %c0_i32, %c0_i32_0 : i32, i32
  }
  func.func @transform_2(%arg0: i32) -> (i32, i32) {
    %c0_i32 = arith.constant 0 : i32
    %c0_i32_0 = arith.constant 0 : i32
    %c0_i32_1 = arith.constant 0 : i32
    return %c0_i32, %c0_i32_0 : i32, i32
  }
  func.func @transform_3(%arg0: i32) -> (i32, i32) {
    %c0_i32 = arith.constant 0 : i32
    %c0_i32_0 = arith.constant 0 : i32
    return %arg0, %c0_i32 : i32, i32
  }
}

module attributes {stable_mosaic.version = 11 : i64} {
  func.func @_mm_kernel(%arg0: i32, %arg1: memref<8x288xf32, #tpu.memory_space<vmem>>, %arg2: memref<288x32xf32, #tpu.memory_space<vmem>>, %arg3: memref<1x32xf32, #tpu.memory_space<vmem>>, %arg4: memref<8x32xf32, #tpu.memory_space<vmem>>, %arg5: memref<8x32xf32, #tpu.memory_space<vmem>>) attributes {dimension_semantics = [#tpu.dimension_semantics<parallel>], iteration_bounds = array<i64: 1>, scalar_prefetch = 0 : i64, scratch_operands = 0 : i64, tpu.core_type = #tpu.core_type<tc>, window_params = [{transform_indices = @transform_0, window_bounds = array<i64: 8, 288>}, {pipeline_mode = #tpu.pipeline_mode<synchronous>, transform_indices = @transform_1, window_bounds = array<i64: 288, 32>}, {pipeline_mode = #tpu.pipeline_mode<synchronous>, transform_indices = @transform_2, window_bounds = array<i64: 1, 32>}, {transform_indices = @transform_3, window_bounds = array<i64: 8, 32>}, {transform_indices = @transform_4, window_bounds = array<i64: 8, 32>}]} {
    %c0 = arith.constant 0 : index
    %c0_0 = arith.constant 0 : index
    %0 = vector.load %arg1[%c0, %c0_0] : memref<8x288xf32, #tpu.memory_space<vmem>>, vector<8x288xf32>
    %c0_1 = arith.constant 0 : index
    %c0_2 = arith.constant 0 : index
    %1 = vector.load %arg2[%c0_1, %c0_2] : memref<288x32xf32, #tpu.memory_space<vmem>>, vector<288x32xf32>
    %cst = arith.constant dense<0.000000e+00> : vector<8x32xf32>
    %2 = tpu.matmul %0, %1, %cst {dimension_numbers = #tpu.dot_dimension_numbers<[1], [0], [0], [1], [0, 0, 1, 1], [], []>} : vector<8x288xf32>, vector<288x32xf32>, vector<8x32xf32> -> vector<8x32xf32>
    %c0_3 = arith.constant 0 : index
    %c0_4 = arith.constant 0 : index
    %3 = vector.load %arg3[%c0_3, %c0_4] : memref<1x32xf32, #tpu.memory_space<vmem>>, vector<1x32xf32>
    %4 = vector.broadcast %3 : vector<1x32xf32> to vector<8x32xf32>
    %5 = arith.addf %2, %4 : vector<8x32xf32>
    %c0_5 = arith.constant 0 : index
    %c0_6 = arith.constant 0 : index
    %6 = vector.load %arg4[%c0_5, %c0_6] : memref<8x32xf32, #tpu.memory_space<vmem>>, vector<8x32xf32>
    %7 = arith.addf %5, %6 : vector<8x32xf32>
    %c0_7 = arith.constant 0 : index
    %c0_8 = arith.constant 0 : index
    %8 = vector.load %arg5[%c0_7, %c0_8] : memref<8x32xf32, #tpu.memory_space<vmem>>, vector<8x32xf32>
    tpu.vector_store %arg5[%c0_7, %c0_8], %7 {strides = array<i32>} : memref<8x32xf32, #tpu.memory_space<vmem>>, vector<8x32xf32>,
    return
  }
  func.func @transform_0(%arg0: i32) -> (i32, i32) {
    %c0_i32 = arith.constant 0 : i32
    %c0_i32_0 = arith.constant 0 : i32
    return %arg0, %c0_i32 : i32, i32
  }
  func.func @transform_1(%arg0: i32) -> (i32, i32) {
    %c0_i32 = arith.constant 0 : i32
    %c0_i32_0 = arith.constant 0 : i32
    %c0_i32_1 = arith.constant 0 : i32
    return %c0_i32, %c0_i32_0 : i32, i32
  }
  func.func @transform_2(%arg0: i32) -> (i32, i32) {
    %c0_i32 = arith.constant 0 : i32
    %c0_i32_0 = arith.constant 0 : i32
    %c0_i32_1 = arith.constant 0 : i32
    return %c0_i32, %c0_i32_0 : i32, i32
  }
  func.func @transform_3(%arg0: i32) -> (i32, i32) {
    %c0_i32 = arith.constant 0 : i32
    %c0_i32_0 = arith.constant 0 : i32
    return %arg0, %c0_i32 : i32, i32
  }
  func.func @transform_4(%arg0: i32) -> (i32, i32) {
    %c0_i32 = arith.constant 0 : i32
    %c0_i32_0 = arith.constant 0 : i32
    return %arg0, %c0_i32 : i32, i32
  }
}

module attributes {stable_mosaic.version = 11 : i64} {
  func.func @_conv_s1_kernel(%arg0: i32, %arg1: memref<1x3x3x32xf32, #tpu.memory_space<vmem>>, %arg2: memref<288x32xf32, #tpu.memory_space<vmem>>, %arg3: memref<1x32xf32, #tpu.memory_space<vmem>>, %arg4: memref<1x32xf32, #tpu.memory_space<vmem>>, %arg5: memref<1x1x1x32xf32, #tpu.memory_space<vmem>>) attributes {dimension_semantics = [#tpu.dimension_semantics<parallel>], iteration_bounds = array<i64: 2>, scalar_prefetch = 0 : i64, scratch_operands = 0 : i64, tpu.core_type = #tpu.core_type<tc>, window_params = [{transform_indices = @transform_0, window_bounds = array<i64: 1, 3, 3, 32>}, {pipeline_mode = #tpu.pipeline_mode<synchronous>, transform_indices = @transform_1, window_bounds = array<i64: 288, 32>}, {pipeline_mode = #tpu.pipeline_mode<synchronous>, transform_indices = @transform_2, window_bounds = array<i64: 1, 32>}, {pipeline_mode = #tpu.pipeline_mode<synchronous>, transform_indices = @transform_3, window_bounds = array<i64: 1, 32>}, {transform_indices = @transform_4, window_bounds = array<i64: 1, 1, 1, 32>}]} {
    %c0 = arith.constant 0 : index
    %c0_0 = arith.constant 0 : index
    %c0_1 = arith.constant 0 : index
    %c0_2 = arith.constant 0 : index
    %0 = vector.load %arg1[%c0, %c0_0, %c0_1, %c0_2] : memref<1x3x3x32xf32, #tpu.memory_space<vmem>>, vector<1x1x1x32xf32>
    %1 = vector.shape_cast %0 : vector<1x1x1x32xf32> to vector<1x1x32xf32>
    %2 = vector.shape_cast %1 : vector<1x1x32xf32> to vector<1x32xf32>
    %c0_3 = arith.constant 0 : index
    %c0_4 = arith.constant 0 : index
    %c1 = arith.constant 1 : index
    %c0_5 = arith.constant 0 : index
    %3 = vector.load %arg1[%c0_3, %c0_4, %c1, %c0_5] : memref<1x3x3x32xf32, #tpu.memory_space<vmem>>, vector<1x1x1x32xf32>
    %4 = vector.shape_cast %3 : vector<1x1x1x32xf32> to vector<1x1x32xf32>
    %5 = vector.shape_cast %4 : vector<1x1x32xf32> to vector<1x32xf32>
    %c0_6 = arith.constant 0 : index
    %c0_7 = arith.constant 0 : index
    %c2 = arith.constant 2 : index
    %c0_8 = arith.constant 0 : index
    %6 = vector.load %arg1[%c0_6, %c0_7, %c2, %c0_8] : memref<1x3x3x32xf32, #tpu.memory_space<vmem>>, vector<1x1x1x32xf32>
    %7 = vector.shape_cast %6 : vector<1x1x1x32xf32> to vector<1x1x32xf32>
    %8 = vector.shape_cast %7 : vector<1x1x32xf32> to vector<1x32xf32>
    %c0_9 = arith.constant 0 : index
    %c1_10 = arith.constant 1 : index
    %c0_11 = arith.constant 0 : index
    %c0_12 = arith.constant 0 : index
    %9 = vector.load %arg1[%c0_9, %c1_10, %c0_11, %c0_12] : memref<1x3x3x32xf32, #tpu.memory_space<vmem>>, vector<1x1x1x32xf32>
    %10 = vector.shape_cast %9 : vector<1x1x1x32xf32> to vector<1x1x32xf32>
    %11 = vector.shape_cast %10 : vector<1x1x32xf32> to vector<1x32xf32>
    %c0_13 = arith.constant 0 : index
    %c1_14 = arith.constant 1 : index
    %c1_15 = arith.constant 1 : index
    %c0_16 = arith.constant 0 : index
    %12 = vector.load %arg1[%c0_13, %c1_14, %c1_15, %c0_16] : memref<1x3x3x32xf32, #tpu.memory_space<vmem>>, vector<1x1x1x32xf32>
    %13 = vector.shape_cast %12 : vector<1x1x1x32xf32> to vector<1x1x32xf32>
    %14 = vector.shape_cast %13 : vector<1x1x32xf32> to vector<1x32xf32>
    %c0_17 = arith.constant 0 : index
    %c1_18 = arith.constant 1 : index
    %c2_19 = arith.constant 2 : index
    %c0_20 = arith.constant 0 : index
    %15 = vector.load %arg1[%c0_17, %c1_18, %c2_19, %c0_20] : memref<1x3x3x32xf32, #tpu.memory_space<vmem>>, vector<1x1x1x32xf32>
    %16 = vector.shape_cast %15 : vector<1x1x1x32xf32> to vector<1x1x32xf32>
    %17 = vector.shape_cast %16 : vector<1x1x32xf32> to vector<1x32xf32>
    %c0_21 = arith.constant 0 : index
    %c2_22 = arith.constant 2 : index
    %c0_23 = arith.constant 0 : index
    %c0_24 = arith.constant 0 : index
    %18 = vector.load %arg1[%c0_21, %c2_22, %c0_23, %c0_24] : memref<1x3x3x32xf32, #tpu.memory_space<vmem>>, vector<1x1x1x32xf32>
    %19 = vector.shape_cast %18 : vector<1x1x1x32xf32> to vector<1x1x32xf32>
    %20 = vector.shape_cast %19 : vector<1x1x32xf32> to vector<1x32xf32>
    %c0_25 = arith.constant 0 : index
    %c2_26 = arith.constant 2 : index
    %c1_27 = arith.constant 1 : index
    %c0_28 = arith.constant 0 : index
    %21 = vector.load %arg1[%c0_25, %c2_26, %c1_27, %c0_28] : memref<1x3x3x32xf32, #tpu.memory_space<vmem>>, vector<1x1x1x32xf32>
    %22 = vector.shape_cast %21 : vector<1x1x1x32xf32> to vector<1x1x32xf32>
    %23 = vector.shape_cast %22 : vector<1x1x32xf32> to vector<1x32xf32>
    %c0_29 = arith.constant 0 : index
    %c2_30 = arith.constant 2 : index
    %c2_31 = arith.constant 2 : index
    %c0_32 = arith.constant 0 : index
    %24 = vector.load %arg1[%c0_29, %c2_30, %c2_31, %c0_32] : memref<1x3x3x32xf32, #tpu.memory_space<vmem>>, vector<1x1x1x32xf32>
    %25 = vector.shape_cast %24 : vector<1x1x1x32xf32> to vector<1x1x32xf32>
    %26 = vector.shape_cast %25 : vector<1x1x32xf32> to vector<1x32xf32>
    %27 = tpu.concatenate %2, %5, %8, %11, %14, %17, %20, %23, %26 in 1 : vector<1x32xf32>, vector<1x32xf32>, vector<1x32xf32>, vector<1x32xf32>, vector<1x32xf32>, vector<1x32xf32>, vector<1x32xf32>, vector<1x32xf32>, vector<1x32xf32> -> vector<1x288xf32>
    %c0_33 = arith.constant 0 : index
    %c0_34 = arith.constant 0 : index
    %28 = vector.load %arg2[%c0_33, %c0_34] : memref<288x32xf32, #tpu.memory_space<vmem>>, vector<288x32xf32>
    %cst = arith.constant dense<0.000000e+00> : vector<1x32xf32>
    %29 = tpu.matmul %27, %28, %cst {dimension_numbers = #tpu.dot_dimension_numbers<[1], [0], [0], [1], [0, 0, 1, 1], [], []>} : vector<1x288xf32>, vector<288x32xf32>, vector<1x32xf32> -> vector<1x32xf32>
    %c0_35 = arith.constant 0 : index
    %c0_36 = arith.constant 0 : index
    %30 = vector.load %arg3[%c0_35, %c0_36] : memref<1x32xf32, #tpu.memory_space<vmem>>, vector<1x32xf32>
    %31 = arith.mulf %29, %30 : vector<1x32xf32>
    %c0_37 = arith.constant 0 : index
    %c0_38 = arith.constant 0 : index
    %32 = vector.load %arg4[%c0_37, %c0_38] : memref<1x32xf32, #tpu.memory_space<vmem>>, vector<1x32xf32>
    %33 = arith.addf %31, %32 : vector<1x32xf32>
    %cst_39 = arith.constant 0.000000e+00 : f32
    %34 = vector.broadcast %cst_39 : f32 to vector<1x32xf32>
    %35 = arith.cmpf oge, %33, %34 : vector<1x32xf32>
    %cst_40 = arith.constant 0.00999999977 : f32
    %36 = vector.broadcast %cst_40 : f32 to vector<1x32xf32>
    %37 = arith.mulf %36, %33 : vector<1x32xf32>
    %38 = arith.select %35, %33, %37 : vector<1x32xi1>, vector<1x32xf32>
    %39 = vector.shape_cast %38 : vector<1x32xf32> to vector<1x1x1x32xf32>
    %c0_41 = arith.constant 0 : index
    %c0_42 = arith.constant 0 : index
    %c0_43 = arith.constant 0 : index
    %c0_44 = arith.constant 0 : index
    %40 = vector.load %arg5[%c0_41, %c0_42, %c0_43, %c0_44] : memref<1x1x1x32xf32, #tpu.memory_space<vmem>>, vector<1x1x1x32xf32>
    tpu.vector_store %arg5[%c0_41, %c0_42, %c0_43, %c0_44], %39 {strides = array<i32>} : memref<1x1x1x32xf32, #tpu.memory_space<vmem>>, vector<1x1x1x32xf32>,
    return
  }
  func.func @transform_0(%arg0: i32) -> (i32, i32, i32, i32) {
    %c0_i32 = arith.constant 0 : i32
    %c0_i32_0 = arith.constant 0 : i32
    %c0_i32_1 = arith.constant 0 : i32
    %c0_i32_2 = arith.constant 0 : i32
    return %arg0, %c0_i32, %c0_i32_0, %c0_i32_1 : i32, i32, i32, i32
  }
  func.func @transform_1(%arg0: i32) -> (i32, i32) {
    %c0_i32 = arith.constant 0 : i32
    %c0_i32_0 = arith.constant 0 : i32
    %c0_i32_1 = arith.constant 0 : i32
    return %c0_i32, %c0_i32_0 : i32, i32
  }
  func.func @transform_2(%arg0: i32) -> (i32, i32) {
    %c0_i32 = arith.constant 0 : i32
    %c0_i32_0 = arith.constant 0 : i32
    %c0_i32_1 = arith.constant 0 : i32
    return %c0_i32, %c0_i32_0 : i32, i32
  }
  func.func @transform_3(%arg0: i32) -> (i32, i32) {
    %c0_i32 = arith.constant 0 : i32
    %c0_i32_0 = arith.constant 0 : i32
    %c0_i32_1 = arith.constant 0 : i32
    return %c0_i32, %c0_i32_0 : i32, i32
  }
  func.func @transform_4(%arg0: i32) -> (i32, i32, i32, i32) {
    %c0_i32 = arith.constant 0 : i32
    %c0_i32_0 = arith.constant 0 : i32
    %c0_i32_1 = arith.constant 0 : i32
    %c0_i32_2 = arith.constant 0 : i32
    return %arg0, %c0_i32, %c0_i32_0, %c0_i32_1 : i32, i32, i32, i32
  }
}

module attributes {stable_mosaic.version = 11 : i64} {
  func.func @_mm_kernel(%arg0: i32, %arg1: memref<8x288xf32, #tpu.memory_space<vmem>>, %arg2: memref<288x32xf32, #tpu.memory_space<vmem>>, %arg3: memref<1x32xf32, #tpu.memory_space<vmem>>, %arg4: memref<8x32xf32, #tpu.memory_space<vmem>>, %arg5: memref<1x32xf32, #tpu.memory_space<vmem>>, %arg6: memref<1x32xf32, #tpu.memory_space<vmem>>, %arg7: memref<8x32xf32, #tpu.memory_space<vmem>>) attributes {dimension_semantics = [#tpu.dimension_semantics<parallel>], iteration_bounds = array<i64: 1>, scalar_prefetch = 0 : i64, scratch_operands = 0 : i64, tpu.core_type = #tpu.core_type<tc>, window_params = [{transform_indices = @transform_0, window_bounds = array<i64: 8, 288>}, {pipeline_mode = #tpu.pipeline_mode<synchronous>, transform_indices = @transform_1, window_bounds = array<i64: 288, 32>}, {pipeline_mode = #tpu.pipeline_mode<synchronous>, transform_indices = @transform_2, window_bounds = array<i64: 1, 32>}, {transform_indices = @transform_3, window_bounds = array<i64: 8, 32>}, {pipeline_mode = #tpu.pipeline_mode<synchronous>, transform_indices = @transform_4, window_bounds = array<i64: 1, 32>}, {pipeline_mode = #tpu.pipeline_mode<synchronous>, transform_indices = @transform_5, window_bounds = array<i64: 1, 32>}, {transform_indices = @transform_6, window_bounds = array<i64: 8, 32>}]} {
    %c0 = arith.constant 0 : index
    %c0_0 = arith.constant 0 : index
    %0 = vector.load %arg1[%c0, %c0_0] : memref<8x288xf32, #tpu.memory_space<vmem>>, vector<8x288xf32>
    %c0_1 = arith.constant 0 : index
    %c0_2 = arith.constant 0 : index
    %1 = vector.load %arg2[%c0_1, %c0_2] : memref<288x32xf32, #tpu.memory_space<vmem>>, vector<288x32xf32>
    %cst = arith.constant dense<0.000000e+00> : vector<8x32xf32>
    %2 = tpu.matmul %0, %1, %cst {dimension_numbers = #tpu.dot_dimension_numbers<[1], [0], [0], [1], [0, 0, 1, 1], [], []>} : vector<8x288xf32>, vector<288x32xf32>, vector<8x32xf32> -> vector<8x32xf32>
    %c0_3 = arith.constant 0 : index
    %c0_4 = arith.constant 0 : index
    %3 = vector.load %arg3[%c0_3, %c0_4] : memref<1x32xf32, #tpu.memory_space<vmem>>, vector<1x32xf32>
    %4 = vector.broadcast %3 : vector<1x32xf32> to vector<8x32xf32>
    %5 = arith.addf %2, %4 : vector<8x32xf32>
    %c0_5 = arith.constant 0 : index
    %c0_6 = arith.constant 0 : index
    %6 = vector.load %arg4[%c0_5, %c0_6] : memref<8x32xf32, #tpu.memory_space<vmem>>, vector<8x32xf32>
    %7 = arith.addf %5, %6 : vector<8x32xf32>
    %c0_7 = arith.constant 0 : index
    %c0_8 = arith.constant 0 : index
    %8 = vector.load %arg5[%c0_7, %c0_8] : memref<1x32xf32, #tpu.memory_space<vmem>>, vector<1x32xf32>
    %9 = vector.broadcast %8 : vector<1x32xf32> to vector<8x32xf32>
    %10 = arith.mulf %7, %9 : vector<8x32xf32>
    %c0_9 = arith.constant 0 : index
    %c0_10 = arith.constant 0 : index
    %11 = vector.load %arg6[%c0_9, %c0_10] : memref<1x32xf32, #tpu.memory_space<vmem>>, vector<1x32xf32>
    %12 = vector.broadcast %11 : vector<1x32xf32> to vector<8x32xf32>
    %13 = arith.addf %10, %12 : vector<8x32xf32>
    %cst_11 = arith.constant 0.000000e+00 : f32
    %14 = vector.broadcast %cst_11 : f32 to vector<8x32xf32>
    %15 = arith.cmpf oge, %13, %14 : vector<8x32xf32>
    %cst_12 = arith.constant 0.00999999977 : f32
    %16 = vector.broadcast %cst_12 : f32 to vector<8x32xf32>
    %17 = arith.mulf %16, %13 : vector<8x32xf32>
    %18 = arith.select %15, %13, %17 : vector<8x32xi1>, vector<8x32xf32>
    %c0_13 = arith.constant 0 : index
    %c0_14 = arith.constant 0 : index
    %19 = vector.load %arg7[%c0_13, %c0_14] : memref<8x32xf32, #tpu.memory_space<vmem>>, vector<8x32xf32>
    tpu.vector_store %arg7[%c0_13, %c0_14], %18 {strides = array<i32>} : memref<8x32xf32, #tpu.memory_space<vmem>>, vector<8x32xf32>,
    return
  }
  func.func @transform_0(%arg0: i32) -> (i32, i32) {
    %c0_i32 = arith.constant 0 : i32
    %c0_i32_0 = arith.constant 0 : i32
    return %arg0, %c0_i32 : i32, i32
  }
  func.func @transform_1(%arg0: i32) -> (i32, i32) {
    %c0_i32 = arith.constant 0 : i32
    %c0_i32_0 = arith.constant 0 : i32
    %c0_i32_1 = arith.constant 0 : i32
    return %c0_i32, %c0_i32_0 : i32, i32
  }
  func.func @transform_2(%arg0: i32) -> (i32, i32) {
    %c0_i32 = arith.constant 0 : i32
    %c0_i32_0 = arith.constant 0 : i32
    %c0_i32_1 = arith.constant 0 : i32
    return %c0_i32, %c0_i32_0 : i32, i32
  }
  func.func @transform_3(%arg0: i32) -> (i32, i32) {
    %c0_i32 = arith.constant 0 : i32
    %c0_i32_0 = arith.constant 0 : i32
    return %arg0, %c0_i32 : i32, i32
  }
  func.func @transform_4(%arg0: i32) -> (i32, i32) {
    %c0_i32 = arith.constant 0 : i32
    %c0_i32_0 = arith.constant 0 : i32
    %c0_i32_1 = arith.constant 0 : i32
    return %c0_i32, %c0_i32_0 : i32, i32
  }
  func.func @transform_5(%arg0: i32) -> (i32, i32) {
    %c0_i32 = arith.constant 0 : i32
    %c0_i32_0 = arith.constant 0 : i32
    %c0_i32_1 = arith.constant 0 : i32
    return %c0_i32, %c0_i32_0 : i32, i32
  }
  func.func @transform_6(%arg0: i32) -> (i32, i32) {
    %c0_i32 = arith.constant 0 : i32
    %c0_i32_0 = arith.constant 0 : i32
    return %arg0, %c0_i32 : i32, i32
  }
}

module attributes {stable_mosaic.version = 11 : i64} {
  func.func @_head_kernel(%arg0: memref<2x32xf32, #tpu.memory_space<vmem>>, %arg1: memref<32x128xf32, #tpu.memory_space<vmem>>, %arg2: memref<1x128xf32, #tpu.memory_space<vmem>>, %arg3: memref<128x2xf32, #tpu.memory_space<vmem>>, %arg4: memref<1x2xf32, #tpu.memory_space<vmem>>, %arg5: memref<2x2xf32, #tpu.memory_space<vmem>>) attributes {dimension_semantics = [], scalar_prefetch = 0 : i64, scratch_operands = 0 : i64, tpu.core_type = #tpu.core_type<tc>} {
    %c0 = arith.constant 0 : index
    %c0_0 = arith.constant 0 : index
    %0 = vector.load %arg0[%c0, %c0_0] : memref<2x32xf32, #tpu.memory_space<vmem>>, vector<2x32xf32>
    %c0_1 = arith.constant 0 : index
    %c0_2 = arith.constant 0 : index
    %1 = vector.load %arg1[%c0_1, %c0_2] : memref<32x128xf32, #tpu.memory_space<vmem>>, vector<32x128xf32>
    %cst = arith.constant dense<0.000000e+00> : vector<2x128xf32>
    %2 = tpu.matmul %0, %1, %cst {dimension_numbers = #tpu.dot_dimension_numbers<[1], [0], [0], [1], [0, 0, 1, 1], [], []>} : vector<2x32xf32>, vector<32x128xf32>, vector<2x128xf32> -> vector<2x128xf32>
    %c0_3 = arith.constant 0 : index
    %c0_4 = arith.constant 0 : index
    %3 = vector.load %arg2[%c0_3, %c0_4] : memref<1x128xf32, #tpu.memory_space<vmem>>, vector<1x128xf32>
    %4 = vector.broadcast %3 : vector<1x128xf32> to vector<2x128xf32>
    %5 = arith.addf %2, %4 : vector<2x128xf32>
    %cst_5 = arith.constant 0.000000e+00 : f32
    %6 = vector.broadcast %cst_5 : f32 to vector<2x128xf32>
    %7 = arith.cmpf oge, %5, %6 : vector<2x128xf32>
    %cst_6 = arith.constant 0.00999999977 : f32
    %8 = vector.broadcast %cst_6 : f32 to vector<2x128xf32>
    %9 = arith.mulf %8, %5 : vector<2x128xf32>
    %10 = arith.select %7, %5, %9 : vector<2x128xi1>, vector<2x128xf32>
    %c0_7 = arith.constant 0 : index
    %c0_8 = arith.constant 0 : index
    %11 = vector.load %arg3[%c0_7, %c0_8] : memref<128x2xf32, #tpu.memory_space<vmem>>, vector<128x2xf32>
    %cst_9 = arith.constant dense<0.000000e+00> : vector<2x2xf32>
    %12 = tpu.matmul %10, %11, %cst_9 {dimension_numbers = #tpu.dot_dimension_numbers<[1], [0], [0], [1], [0, 0, 1, 1], [], []>} : vector<2x128xf32>, vector<128x2xf32>, vector<2x2xf32> -> vector<2x2xf32>
    %c0_10 = arith.constant 0 : index
    %c0_11 = arith.constant 0 : index
    %13 = vector.load %arg4[%c0_10, %c0_11] : memref<1x2xf32, #tpu.memory_space<vmem>>, vector<1x2xf32>
    %14 = vector.broadcast %13 : vector<1x2xf32> to vector<2x2xf32>
    %15 = arith.addf %12, %14 : vector<2x2xf32>
    %cst_12 = arith.constant dense<0xFF800000> : vector<2xf32>
    %16 = vector.multi_reduction <maximumf>, %15, %cst_12 [1] : vector<2x2xf32> to vector<2xf32>
    %17 = vector.shape_cast %16 : vector<2xf32> to vector<2x1xf32>
    %18 = vector.broadcast %17 : vector<2x1xf32> to vector<2x2xf32>
    %19 = arith.subf %15, %18 : vector<2x2xf32>
    %20 = math.exp %19 : vector<2x2xf32>
    %cst_13 = arith.constant dense<0.000000e+00> : vector<2xf32>
    %21 = vector.multi_reduction <add>, %20, %cst_13 [1] : vector<2x2xf32> to vector<2xf32>
    %22 = vector.shape_cast %21 : vector<2xf32> to vector<2x1xf32>
    %23 = math.log %22 : vector<2x1xf32>
    %24 = vector.broadcast %23 : vector<2x1xf32> to vector<2x2xf32>
    %25 = arith.subf %19, %24 : vector<2x2xf32>
    %c0_14 = arith.constant 0 : index
    %c0_15 = arith.constant 0 : index
    %26 = vector.load %arg5[%c0_14, %c0_15] : memref<2x2xf32, #tpu.memory_space<vmem>>, vector<2x2xf32>
    tpu.vector_store %arg5[%c0_14, %c0_15], %25 {strides = array<i32>} : memref<2x2xf32, #tpu.memory_space<vmem>>, vector<2x2xf32>,
    return
  }
}

</mosaic_0001>

<llo_original>
// kernel: cqcc_forward.20
$region0: #{cqcc_forward.20}
  #allocation0 [shape = 'u32[]', space=smem, size = 0x4, offset = 0x4, fixed_abs, tag = 'smem constant byte address 0x4 - core index']
  #allocation1 [shape = 'u32[144,128]{1,0:T(1,128)}', space=vmem, size = 0x12000, scoped, tag = 'internal scratch']
  %s0 = inlined_call_operand.vmem [shape: f32[512,9], index: 0, kind: input, shape index: {}]
  %s1 = inlined_call_operand.vmem [shape: f32[9,32], index: 1, kind: input, shape index: {}]
  %s2 = inlined_call_operand.vmem [shape: f32[1,32], index: 2, kind: input, shape index: {}]
  %s3 = inlined_call_operand.vmem [shape: f32[512,32], index: 3, kind: output, shape index: {}]
  %s4 = sld [smem:[#allocation0]]
  $region22: #{cqcc_forward.20} parent=0
    _
  %s6 = ssub.s32 1, %s4
  %s7 = scalar_select 0, %s6, %s4
  // Predicated region
  $region2: #{cqcc_forward.20} parent=0 // pred_check
    _
  $region3: #{cqcc_forward.20} parent=0 // pred_check_branch
    %9 = sbr.rel (0) target = $region5
  $region4: #{cqcc_forward.20} parent=0 // pred_region
    _
  $region5: #{cqcc_forward.20} parent=0 // pred_fallthru
    _
  // Predicated region
  $region6: #{cqcc_forward.20} parent=0 // pred_check
    _
  $region7: #{cqcc_forward.20} parent=0 // pred_check_branch
    %11 = sbr.rel (0) target = $region9
  $region8: #{cqcc_forward.20} parent=0 // pred_region
    _
  $region9: #{cqcc_forward.20} parent=0 // pred_fallthru
    _
  // Predicated region
  $region10: #{cqcc_forward.20} parent=0 // pred_check
    _
  $region11: #{cqcc_forward.20} parent=0 // pred_check_branch
    %13 = sbr.rel (0) target = $region13
  $region12: #{cqcc_forward.20} parent=0 // pred_region
    _
  $region13: #{cqcc_forward.20} parent=0 // pred_fallthru
    _
  %v14 = vld [vmem:[%s0] sm:$0xff]
  %v15 = vld [vmem:[%s0 + $0x8] sm:$0xff]
  %v16 = vld [vmem:[%s0 + $0x10] sm:$0xff]
  %v17 = vld [vmem:[%s0 + $0x18] sm:$0xff]
  %v18 = vld [vmem:[%s0 + $0x20] sm:$0xff]
  %v19 = vld [vmem:[%s0 + $0x28] sm:$0xff]
  %v20 = vld [vmem:[%s0 + $0x30] sm:$0xff]
  %v21 = vld [vmem:[%s0 + $0x38] sm:$0xff]
  %v22 = vld [vmem:[%s0 + $0x40] sm:$0xff]
  %v23 = vld [vmem:[%s0 + $0x48] sm:$0xff]
  %v24 = vld [vmem:[%s0 + $0x50] sm:$0xff]
  %v25 = vld [vmem:[%s0 + $0x58] sm:$0xff]
  %v26 = vld [vmem:[%s0 + $0x60] sm:$0xff]
  %v27 = vld [vmem:[%s0 + $0x68] sm:$0xff]
  %v28 = vld [vmem:[%s0 + $0x70] sm:$0xff]
  %v29 = vld [vmem:[%s0 + $0x78] sm:$0xff]
  %v30 = vld [vmem:[%s0 + $0x80] sm:$0xff]
  %v31 = vld [vmem:[%s0 + $0x88] sm:$0xff]
  %v32 = vld [vmem:[%s0 + $0x90] sm:$0xff]
  %v33 = vld [vmem:[%s0 + $0x98] sm:$0xff]
  %v34 = vld [vmem:[%s0 + $0xa0] sm:$0xff]
  %v35 = vld [vmem:[%s0 + $0xa8] sm:$0xff]
  %v36 = vld [vmem:[%s0 + $0xb0] sm:$0xff]
  %v37 = vld [vmem:[%s0 + $0xb8] sm:$0xff]
  %v38 = vld [vmem:[%s0 + $0xc0] sm:$0xff]
  %v39 = vld [vmem:[%s0 + $0xc8] sm:$0xff]
  %v40 = vld [vmem:[%s0 + $0xd0] sm:$0xff]
  %v41 = vld [vmem:[%s0 + $0xd8] sm:$0xff]
  %v42 = vld [vmem:[%s0 + $0xe0] sm:$0xff]
  %v43 = vld [vmem:[%s0 + $0xe8] sm:$0xff]
  %v44 = vld [vmem:[%s0 + $0xf0] sm:$0xff]
  %v45 = vld [vmem:[%s0 + $0xf8] sm:$0xff]
  %v46 = vld [vmem:[%s0 + $0x100] sm:$0xff]
  %v47 = vld [vmem:[%s0 + $0x108] sm:$0xff]
  %v48 = vld [vmem:[%s0 + $0x110] sm:$0xff]
  %v49 = vld [vmem:[%s0 + $0x118] sm:$0xff]
  %v50 = vld [vmem:[%s0 + $0x120] sm:$0xff]
  %v51 = vld [vmem:[%s0 + $0x128] sm:$0xff]
  %v52 = vld [vmem:[%s0 + $0x130] sm:$0xff]
  %v53 = vld [vmem:[%s0 + $0x138] sm:$0xff]
  %v54 = vld [vmem:[%s0 + $0x140] sm:$0xff]
  %v55 = vld [vmem:[%s0 + $0x148] sm:$0xff]
  %v56 = vld [vmem:[%s0 + $0x150] sm:$0xff]
  %v57 = vld [vmem:[%s0 + $0x158] sm:$0xff]
  %v58 = vld [vmem:[%s0 + $0x160] sm:$0xff]
  %v59 = vld [vmem:[%s0 + $0x168] sm:$0xff]
  %v60 = vld [vmem:[%s0 + $0x170] sm:$0xff]
  %v61 = vld [vmem:[%s0 + $0x178] sm:$0xff]
  %v62 = vld [vmem:[%s0 + $0x180] sm:$0xff]
  %v63 = vld [vmem:[%s0 + $0x188] sm:$0xff]
  %v64 = vld [vmem:[%s0 + $0x190] sm:$0xff]
  %v65 = vld [vmem:[%s0 + $0x198] sm:$0xff]
  %v66 = vld [vmem:[%s0 + $0x1a0] sm:$0xff]
  %v67 = vld [vmem:[%s0 + $0x1a8] sm:$0xff]
  %v68 = vld [vmem:[%s0 + $0x1b0] sm:$0xff]
  %v69 = vld [vmem:[%s0 + $0x1b8] sm:$0xff]
  %v70 = vld [vmem:[%s0 + $0x1c0] sm:$0xff]
  %v71 = vld [vmem:[%s0 + $0x1c8] sm:$0xff]
  %v72 = vld [vmem:[%s0 + $0x1d0] sm:$0xff]
  %v73 = vld [vmem:[%s0 + $0x1d8] sm:$0xff]
  %v74 = vld [vmem:[%s0 + $0x1e0] sm:$0xff]
  %v75 = vld [vmem:[%s0 + $0x1e8] sm:$0xff]
  %v76 = vld [vmem:[%s0 + $0x1f0] sm:$0xff]
  %v77 = vld [vmem:[%s0 + $0x1f8] sm:$0xff]
  %v78 = vld [vmem:[%s1] sm:$0xff]
  %v79 = vld [vmem:[%s1 + $0x8] sm:$0x1]
  %v80 = vld [vmem:[%s2] sm:$0x1]
  %v82 = vlaneseq
  %v83 = vshrl.u32 %v82, 7
  %v84 = vsub.s32 0, %v83
  %v85 = vrot.slane %v80, %v84
  %vm87 = vcmask 72704
  %v89 = vsel %vm87, %v14, 0
  %v92 = vsel %vm87, %v15, 0
  %v95 = vsel %vm87, %v16, 0
  %v98 = vsel %vm87, %v17, 0
  %v101 = vsel %vm87, %v18, 0
  %v104 = vsel %vm87, %v19, 0
  %v107 = vsel %vm87, %v20, 0
  %v110 = vsel %vm87, %v21, 0
  %v113 = vsel %vm87, %v22, 0
  %v116 = vsel %vm87, %v23, 0
  %v119 = vsel %vm87, %v24, 0
  %v122 = vsel %vm87, %v25, 0
  %v125 = vsel %vm87, %v26, 0
  %v128 = vsel %vm87, %v27, 0
  %v131 = vsel %vm87, %v28, 0
  %v134 = vsel %vm87, %v29, 0
  %v137 = vsel %vm87, %v30, 0
  %v140 = vsel %vm87, %v31, 0
  %v143 = vsel %vm87, %v32, 0
  %v146 = vsel %vm87, %v33, 0
  %v149 = vsel %vm87, %v34, 0
  %v152 = vsel %vm87, %v35, 0
  %v155 = vsel %vm87, %v36, 0
  %v158 = vsel %vm87, %v37, 0
  %v161 = vsel %vm87, %v38, 0
  %v164 = vsel %vm87, %v39, 0
  %v167 = vsel %vm87, %v40, 0
  %v170 = vsel %vm87, %v41, 0
  %v173 = vsel %vm87, %v42, 0
  %v176 = vsel %vm87, %v43, 0
  %v179 = vsel %vm87, %v44, 0
  %v182 = vsel %vm87, %v45, 0
  %v185 = vsel %vm87, %v46, 0
  %v188 = vsel %vm87, %v47, 0
  %v191 = vsel %vm87, %v48, 0
  %v194 = vsel %vm87, %v49, 0
  %v197 = vsel %vm87, %v50, 0
  %v200 = vsel %vm87, %v51, 0
  %v203 = vsel %vm87, %v52, 0
  %v206 = vsel %vm87, %v53, 0
  %v209 = vsel %vm87, %v54, 0
  %v212 = vsel %vm87, %v55, 0
  %v215 = vsel %vm87, %v56, 0
  %v218 = vsel %vm87, %v57, 0
  %v221 = vsel %vm87, %v58, 0
  %v224 = vsel %vm87, %v59, 0
  %v227 = vsel %vm87, %v60, 0
  %v230 = vsel %vm87, %v61, 0
  %v233 = vsel %vm87, %v62, 0
  %v236 = vsel %vm87, %v63, 0
  %v239 = vsel %vm87, %v64, 0
  %v242 = vsel %vm87, %v65, 0
  %v245 = vsel %vm87, %v66, 0
  %v248 = vsel %vm87, %v67, 0
  %v251 = vsel %vm87, %v68, 0
  %v254 = vsel %vm87, %v69, 0
  %v257 = vsel %vm87, %v70, 0
  %v260 = vsel %vm87, %v71, 0
  %v263 = vsel %vm87, %v72, 0
  %v266 = vsel %vm87, %v73, 0
  %v269 = vsel %vm87, %v74, 0
  %v272 = vsel %vm87, %v75, 0
  %v275 = vsel %vm87, %v76, 0
  %v278 = vsel %vm87, %v77, 0
  %vm280 = vcmask 1040384
  %v282 = vsel %vm280, %v79, 0
  %284 = vmatprep.subr.mxu0 0.0
  %285 = vmatpush1.msra.mxu0 %v78
  %286 = vmatprep.subr.mxu0 0.0
  %287 = vmatpush1.msra.mxu0 %v282
  %288 = vmatprep.subr.mxu0 0.0
  %289 = vmatpush1.msra.mxu0 0.0
  %290 = vmatprep.subr.mxu0 0.0
  %291 = vmatpush1.msra.mxu0 0.0
  %292 = vmatprep.subr.mxu0 0.0
  %293 = vmatpush1.msra.mxu0 0.0
  %294 = vmatprep.subr.mxu0 0.0
  %295 = vmatpush1.msra.mxu0 0.0
  %296 = vmatprep.subr.mxu0 0.0
  %297 = vmatpush1.msra.mxu0 0.0
  %298 = vmatprep.subr.mxu0 0.0
  %299 = vmatpush1.msra.mxu0 0.0
  %300 = vmatprep.subr.mxu0 0.0
  %301 = vmatpush1.msra.mxu0 0.0
  %302 = vmatprep.subr.mxu0 0.0
  %303 = vmatpush1.msra.mxu0 0.0
  %304 = vmatprep.subr.mxu0 0.0
  %305 = vmatpush1.msra.mxu0 0.0
  %306 = vmatprep.subr.mxu0 0.0
  %307 = vmatpush1.msra.mxu0 0.0
  %308 = vmatprep.subr.mxu0 0.0
  %309 = vmatpush1.msra.mxu0 0.0
  %310 = vmatprep.subr.mxu0 0.0
  %311 = vmatpush1.msra.mxu0 0.0
  %312 = vmatprep.subr.mxu0 0.0
  %313 = vmatpush1.msra.mxu0 0.0
  %314 = vmatprep.subr.mxu0 0.0
  %315 = vmatpush1.msra.mxu0 0.0
  %316 = vmatprep.subr.mxu0 0.0
  %317 = vmatpush1.msra.mxu0 0.0
  %318 = vmatprep.subr.mxu0 0.0
  %319 = vmatpush1.msra.mxu0 0.0
  %320 = vmatprep.subr.mxu0 0.0
  %321 = vmatpush1.msra.mxu0 0.0
  %322 = vmatprep.subr.mxu0 0.0
  %323 = vmatpush1.msra.mxu0 0.0
  %324 = vmatprep.subr.mxu0 0.0
  %325 = vmatpush1.msra.mxu0 0.0
  %326 = vmatprep.subr.mxu0 0.0
  %327 = vmatpush1.msra.mxu0 0.0
  %328 = vmatprep.subr.mxu0 0.0
  %329 = vmatpush1.msra.mxu0 0.0
  %330 = vmatprep.subr.mxu0 0.0
  %331 = vmatpush1.msra.mxu0 0.0
  %332 = vmatprep.subr.mxu0 0.0
  %333 = vmatpush1.msra.mxu0 0.0
  %334 = vmatprep.subr.mxu0 0.0
  %335 = vmatpush1.msra.mxu0 0.0
  %336 = vmatprep.subr.mxu0 0.0
  %337 = vmatpush1.msra.mxu0 0.0
  %338 = vmatprep.subr.mxu0 0.0
  %339 = vmatpush1.msra.mxu0 0.0
  %340 = vmatprep.subr.mxu0 0.0
  %341 = vmatpush1.msra.mxu0 0.0
  %342 = vmatprep.subr.mxu0 0.0
  %343 = vmatpush1.msra.mxu0 0.0
  %344 = vmatprep.subr.mxu0 0.0
  %345 = vmatpush1.msra.mxu0 0.0
  %346 = vmatprep.subr.mxu0 0.0
  %347 = vmatpush1.msra.mxu0 0.0
  %348 = vmatprep.mubr.f32.mxu0 0.0
  %349 = vmatmul.mubr.f32.gmra.mrb[0].mxu0 %v89
  %v350 = vpop.f32.mrb[0].mxu0
  %v351 = vadd.f32 %v85, %v350
  %v352 = vpop.f32.mrb[0].mxu0
  %353 = vmatprep.mubr.f32.mxu0 0.0
  %354 = vmatmul.mubr.f32.gmra.mrb[0].mxu0 %v92
  %v355 = vpop.f32.mrb[0].mxu0
  %v356 = vadd.f32 %v85, %v355
  %v357 = vpop.f32.mrb[0].mxu0
  %358 = vmatprep.mubr.f32.mxu0 0.0
  %359 = vmatmul.mubr.f32.gmra.mrb[0].mxu0 %v95
  %v360 = vpop.f32.mrb[0].mxu0
  %v361 = vadd.f32 %v85, %v360
  %v362 = vpop.f32.mrb[0].mxu0
  %363 = vmatprep.mubr.f32.mxu0 0.0
  %364 = vmatmul.mubr.f32.gmra.mrb[0].mxu0 %v98
  %v365 = vpop.f32.mrb[0].mxu0
  %v366 = vadd.f32 %v85, %v365
  %v367 = vpop.f32.mrb[0].mxu0
  %368 = vmatprep.mubr.f32.mxu0 0.0
  %369 = vmatmul.mubr.f32.gmra.mrb[0].mxu0 %v101
  %v370 = vpop.f32.mrb[0].mxu0
  %v371 = vadd.f32 %v85, %v370
  %v372 = vpop.f32.mrb[0].mxu0
  %373 = vmatprep.mubr.f32.mxu0 0.0
  %374 = vmatmul.mubr.f32.gmra.mrb[0].mxu0 %v104
  %v375 = vpop.f32.mrb[0].mxu0
  %v376 = vadd.f32 %v85, %v375
  %v377 = vpop.f32.mrb[0].mxu0
  %378 = vmatprep.mubr.f32.mxu0 0.0
  %379 = vmatmul.mubr.f32.gmra.mrb[0].mxu0 %v107
  %v380 = vpop.f32.mrb[0].mxu0
  %v381 = vadd.f32 %v85, %v380
  %v382 = vpop.f32.mrb[0].mxu0
  %383 = vmatprep.mubr.f32.mxu0 0.0
  %384 = vmatmul.mubr.f32.gmra.mrb[0].mxu0 %v110
  %v385 = vpop.f32.mrb[0].mxu0
  %v386 = vadd.f32 %v85, %v385
  %v387 = vpop.f32.mrb[0].mxu0
  %388 = vmatprep.mubr.f32.mxu0 0.0
  %389 = vmatmul.mubr.f32.gmra.mrb[0].mxu0 %v113
  %v390 = vpop.f32.mrb[0].mxu0
  %v391 = vadd.f32 %v85, %v390
  %v392 = vpop.f32.mrb[0].mxu0
  %393 = vmatprep.mubr.f32.mxu0 0.0
  %394 = vmatmul.mubr.f32.gmra.mrb[0].mxu0 %v116
  %v395 = vpop.f32.mrb[0].mxu0
  %v396 = vadd.f32 %v85, %v395
  %v397 = vpop.f32.mrb[0].mxu0
  %398 = vmatprep.mubr.f32.mxu0 0.0
  %399 = vmatmul.mubr.f32.gmra.mrb[0].mxu0 %v119
  %v400 = vpop.f32.mrb[0].mxu0
  %v401 = vadd.f32 %v85, %v400
  %v402 = vpop.f32.mrb[0].mxu0
  %403 = vmatprep.mubr.f32.mxu0 0.0
  %404 = vmatmul.mubr.f32.gmra.mrb[0].mxu0 %v122
  %v405 = vpop.f32.mrb[0].mxu0
  %v406 = vadd.f32 %v85, %v405
  %v407 = vpop.f32.mrb[0].mxu0
  %408 = vmatprep.mubr.f32.mxu0 0.0
  %409 = vmatmul.mubr.f32.gmra.mrb[0].mxu0 %v125
  %v410 = vpop.f32.mrb[0].mxu0
  %v411 = vadd.f32 %v85, %v410
  %v412 = vpop.f32.mrb[0].mxu0
  %413 = vmatprep.mubr.f32.mxu0 0.0
  %414 = vmatmul.mubr.f32.gmra.mrb[0].mxu0 %v128
  %v415 = vpop.f32.mrb[0].mxu0
  %v416 = vadd.f32 %v85, %v415
  %v417 = vpop.f32.mrb[0].mxu0
  %418 = vmatprep.mubr.f32.mxu0 0.0
  %419 = vmatmul.mubr.f32.gmra.mrb[0].mxu0 %v131
  %v420 = vpop.f32.mrb[0].mxu0
  %v421 = vadd.f32 %v85, %v420
  %v422 = vpop.f32.mrb[0].mxu0
  %423 = vmatprep.mubr.f32.mxu0 0.0
  %424 = vmatmul.mubr.f32.gmra.mrb[0].mxu0 %v134
  %v425 = vpop.f32.mrb[0].mxu0
  %v426 = vadd.f32 %v85, %v425
  %v427 = vpop.f32.mrb[0].mxu0
  %428 = vmatprep.mubr.f32.mxu0 0.0
  %429 = vmatmul.mubr.f32.gmra.mrb[0].mxu0 %v137
  %v430 = vpop.f32.mrb[0].mxu0
  %v431 = vadd.f32 %v85, %v430
  %v432 = vpop.f32.mrb[0].mxu0
  %433 = vmatprep.mubr.f32.mxu0 0.0
  %434 = vmatmul.mubr.f32.gmra.mrb[0].mxu0 %v140
  %v435 = vpop.f32.mrb[0].mxu0
  %v436 = vadd.f32 %v85, %v435
  %v437 = vpop.f32.mrb[0].mxu0
  %438 = vmatprep.mubr.f32.mxu0 0.0
  %439 = vmatmul.mubr.f32.gmra.mrb[0].mxu0 %v143
  %v440 = vpop.f32.mrb[0].mxu0
  %v441 = vadd.f32 %v85, %v440
  %v442 = vpop.f32.mrb[0].mxu0
  %443 = vmatprep.mubr.f32.mxu0 0.0
  %444 = vmatmul.mubr.f32.gmra.mrb[0].mxu0 %v146
  %v445 = vpop.f32.mrb[0].mxu0
  %v446 = vadd.f32 %v85, %v445
  %v447 = vpop.f32.mrb[0].mxu0
  %448 = vmatprep.mubr.f32.mxu0 0.0
  %449 = vmatmul.mubr.f32.gmra.mrb[0].mxu0 %v149
  %v450 = vpop.f32.mrb[0].mxu0
  %v451 = vadd.f32 %v85, %v450
  %v452 = vpop.f32.mrb[0].mxu0
  %453 = vmatprep.mubr.f32.mxu0 0.0
  %454 = vmatmul.mubr.f32.gmra.mrb[0].mxu0 %v152
  %v455 = vpop.f32.mrb[0].mxu0
  %v456 = vadd.f32 %v85, %v455
  %v457 = vpop.f32.mrb[0].mxu0
  %458 = vmatprep.mubr.f32.mxu0 0.0
  %459 = vmatmul.mubr.f32.gmra.mrb[0].mxu0 %v155
  %v460 = vpop.f32.mrb[0].mxu0
  %v461 = vadd.f32 %v85, %v460
  %v462 = vpop.f32.mrb[0].mxu0
  %463 = vmatprep.mubr.f32.mxu0 0.0
  %464 = vmatmul.mubr.f32.gmra.mrb[0].mxu0 %v158
  %v465 = vpop.f32.mrb[0].mxu0
  %v466 = vadd.f32 %v85, %v465
  %v467 = vpop.f32.mrb[0].mxu0
  %468 = vmatprep.mubr.f32.mxu0 0.0
  %469 = vmatmul.mubr.f32.gmra.mrb[0].mxu0 %v161
  %v470 = vpop.f32.mrb[0].mxu0
  %v471 = vadd.f32 %v85, %v470
  %v472 = vpop.f32.mrb[0].mxu0
  %473 = vmatprep.mubr.f32.mxu0 0.0
  %474 = vmatmul.mubr.f32.gmra.mrb[0].mxu0 %v164
  %v475 = vpop.f32.mrb[0].mxu0
  %v476 = vadd.f32 %v85, %v475
  %v477 = vpop.f32.mrb[0].mxu0
  %478 = vmatprep.mubr.f32.mxu0 0.0
  %479 = vmatmul.mubr.f32.gmra.mrb[0].mxu0 %v167
  %v480 = vpop.f32.mrb[0].mxu0
  %v481 = vadd.f32 %v85, %v480
  %v482 = vpop.f32.mrb[0].mxu0
  %483 = vmatprep.mubr.f32.mxu0 0.0
  %484 = vmatmul.mubr.f32.gmra.mrb[0].mxu0 %v170
  %v485 = vpop.f32.mrb[0].mxu0
  %v486 = vadd.f32 %v85, %v485
  %v487 = vpop.f32.mrb[0].mxu0
  %488 = vmatprep.mubr.f32.mxu0 0.0
  %489 = vmatmul.mubr.f32.gmra.mrb[0].mxu0 %v173
  %v490 = vpop.f32.mrb[0].mxu0
  %v491 = vadd.f32 %v85, %v490
  %v492 = vpop.f32.mrb[0].mxu0
  %493 = vmatprep.mubr.f32.mxu0 0.0
  %494 = vmatmul.mubr.f32.gmra.mrb[0].mxu0 %v176
  %v495 = vpop.f32.mrb[0].mxu0
  %v496 = vadd.f32 %v85, %v495
  %v497 = vpop.f32.mrb[0].mxu0
  %498 = vmatprep.mubr.f32.mxu0 0.0
  %499 = vmatmul.mubr.f32.gmra.mrb[0].mxu0 %v179
  %v500 = vpop.f32.mrb[0].mxu0
  %v501 = vadd.f32 %v85, %v500
  %v502 = vpop.f32.mrb[0].mxu0
  %503 = vmatprep.mubr.f32.mxu0 0.0
  %504 = vmatmul.mubr.f32.gmra.mrb[0].mxu0 %v182
  %v505 = vpop.f32.mrb[0].mxu0
  %v506 = vadd.f32 %v85, %v505
  %v507 = vpop.f32.mrb[0].mxu0
  %508 = vmatprep.mubr.f32.mxu0 0.0
  %509 = vmatmul.mubr.f32.gmra.mrb[0].mxu0 %v185
  %v510 = vpop.f32.mrb[0].mxu0
  %v511 = vadd.f32 %v85, %v510
  %v512 = vpop.f32.mrb[0].mxu0
  %513 = vmatprep.mubr.f32.mxu0 0.0
  %514 = vmatmul.mubr.f32.gmra.mrb[0].mxu0 %v188
  %v515 = vpop.f32.mrb[0].mxu0
  %v516 = vadd.f32 %v85, %v515
  %v517 = vpop.f32.mrb[0].mxu0
  %518 = vmatprep.mubr.f32.mxu0 0.0
  %519 = vmatmul.mubr.f32.gmra.mrb[0].mxu0 %v191
  %v520 = vpop.f32.mrb[0].mxu0
  %v521 = vadd.f32 %v85, %v520
  %v522 = vpop.f32.mrb[0].mxu0
  %523 = vmatprep.mubr.f32.mxu0 0.0
  %524 = vmatmul.mubr.f32.gmra.mrb[0].mxu0 %v194
  %v525 = vpop.f32.mrb[0].mxu0
  %v526 = vadd.f32 %v85, %v525
  %v527 = vpop.f32.mrb[0].mxu0
  %528 = vmatprep.mubr.f32.mxu0 0.0
  %529 = vmatmul.mubr.f32.gmra.mrb[0].mxu0 %v197
  %v530 = vpop.f32.mrb[0].mxu0
  %v531 = vadd.f32 %v85, %v530
  %v532 = vpop.f32.mrb[0].mxu0
  %533 = vmatprep.mubr.f32.mxu0 0.0
  %534 = vmatmul.mubr.f32.gmra.mrb[0].mxu0 %v200
  %v535 = vpop.f32.mrb[0].mxu0
  %v536 = vadd.f32 %v85, %v535
  %v537 = vpop.f32.mrb[0].mxu0
  %538 = vmatprep.mubr.f32.mxu0 0.0
  %539 = vmatmul.mubr.f32.gmra.mrb[0].mxu0 %v203
  %v540 = vpop.f32.mrb[0].mxu0
  %v541 = vadd.f32 %v85, %v540
  %v542 = vpop.f32.mrb[0].mxu0
  %543 = vmatprep.mubr.f32.mxu0 0.0
  %544 = vmatmul.mubr.f32.gmra.mrb[0].mxu0 %v206
  %v545 = vpop.f32.mrb[0].mxu0
  %v546 = vadd.f32 %v85, %v545
  %v547 = vpop.f32.mrb[0].mxu0
  %548 = vmatprep.mubr.f32.mxu0 0.0
  %549 = vmatmul.mubr.f32.gmra.mrb[0].mxu0 %v209
  %v550 = vpop.f32.mrb[0].mxu0
  %v551 = vadd.f32 %v85, %v550
  %v552 = vpop.f32.mrb[0].mxu0
  %553 = vmatprep.mubr.f32.mxu0 0.0
  %554 = vmatmul.mubr.f32.gmra.mrb[0].mxu0 %v212
  %v555 = vpop.f32.mrb[0].mxu0
  %v556 = vadd.f32 %v85, %v555
  %v557 = vpop.f32.mrb[0].mxu0
  %558 = vmatprep.mubr.f32.mxu0 0.0
  %559 = vmatmul.mubr.f32.gmra.mrb[0].mxu0 %v215
  %v560 = vpop.f32.mrb[0].mxu0
  %v561 = vadd.f32 %v85, %v560
  %v562 = vpop.f32.mrb[0].mxu0
  %563 = vmatprep.mubr.f32.mxu0 0.0
  %564 = vmatmul.mubr.f32.gmra.mrb[0].mxu0 %v218
  %v565 = vpop.f32.mrb[0].mxu0
  %v566 = vadd.f32 %v85, %v565
  %v567 = vpop.f32.mrb[0].mxu0
  %568 = vmatprep.mubr.f32.mxu0 0.0
  %569 = vmatmul.mubr.f32.gmra.mrb[0].mxu0 %v221
  %v570 = vpop.f32.mrb[0].mxu0
  %v571 = vadd.f32 %v85, %v570
  %v572 = vpop.f32.mrb[0].mxu0
  %573 = vmatprep.mubr.f32.mxu0 0.0
  %574 = vmatmul.mubr.f32.gmra.mrb[0].mxu0 %v224
  %v575 = vpop.f32.mrb[0].mxu0
  %v576 = vadd.f32 %v85, %v575
  %v577 = vpop.f32.mrb[0].mxu0
  %578 = vmatprep.mubr.f32.mxu0 0.0
  %579 = vmatmul.mubr.f32.gmra.mrb[0].mxu0 %v227
  %v580 = vpop.f32.mrb[0].mxu0
  %v581 = vadd.f32 %v85, %v580
  %v582 = vpop.f32.mrb[0].mxu0
  %583 = vmatprep.mubr.f32.mxu0 0.0
  %584 = vmatmul.mubr.f32.gmra.mrb[0].mxu0 %v230
  %v585 = vpop.f32.mrb[0].mxu0
  %v586 = vadd.f32 %v85, %v585
  %v587 = vpop.f32.mrb[0].mxu0
  %588 = vmatprep.mubr.f32.mxu0 0.0
  %589 = vmatmul.mubr.f32.gmra.mrb[0].mxu0 %v233
  %v590 = vpop.f32.mrb[0].mxu0
  %v591 = vadd.f32 %v85, %v590
  %v592 = vpop.f32.mrb[0].mxu0
  %593 = vmatprep.mubr.f32.mxu0 0.0
  %594 = vmatmul.mubr.f32.gmra.mrb[0].mxu0 %v236
  %v595 = vpop.f32.mrb[0].mxu0
  %v596 = vadd.f32 %v85, %v595
  %v597 = vpop.f32.mrb[0].mxu0
  %598 = vmatprep.mubr.f32.mxu0 0.0
  %599 = vmatmul.mubr.f32.gmra.mrb[0].mxu0 %v239
  %v600 = vpop.f32.mrb[0].mxu0
  %v601 = vadd.f32 %v85, %v600
  %v602 = vpop.f32.mrb[0].mxu0
  %603 = vmatprep.mubr.f32.mxu0 0.0
  %604 = vmatmul.mubr.f32.gmra.mrb[0].mxu0 %v242
  %v605 = vpop.f32.mrb[0].mxu0
  %v606 = vadd.f32 %v85, %v605
  %v607 = vpop.f32.mrb[0].mxu0
  %608 = vmatprep.mubr.f32.mxu0 0.0
  %609 = vmatmul.mubr.f32.gmra.mrb[0].mxu0 %v245
  %v610 = vpop.f32.mrb[0].mxu0
  %v611 = vadd.f32 %v85, %v610
  %v612 = vpop.f32.mrb[0].mxu0
  %613 = vmatprep.mubr.f32.mxu0 0.0
  %614 = vmatmul.mubr.f32.gmra.mrb[0].mxu0 %v248
  %v615 = vpop.f32.mrb[0].mxu0
  %v616 = vadd.f32 %v85, %v615
  %v617 = vpop.f32.mrb[0].mxu0
  %618 = vmatprep.mubr.f32.mxu0 0.0
  %619 = vmatmul.mubr.f32.gmra.mrb[0].mxu0 %v251
  %v620 = vpop.f32.mrb[0].mxu0
  %v621 = vadd.f32 %v85, %v620
  %v622 = vpop.f32.mrb[0].mxu0
  %623 = vmatprep.mubr.f32.mxu0 0.0
  %624 = vmatmul.mubr.f32.gmra.mrb[0].mxu0 %v254
  %v625 = vpop.f32.mrb[0].mxu0
  %v626 = vadd.f32 %v85, %v625
  %v627 = vpop.f32.mrb[0].mxu0
  %628 = vmatprep.mubr.f32.mxu0 0.0
  %629 = vmatmul.mubr.f32.gmra.mrb[0].mxu0 %v257
  %v630 = vpop.f32.mrb[0].mxu0
  %v631 = vadd.f32 %v85, %v630
  %v632 = vpop.f32.mrb[0].mxu0
  %633 = vmatprep.mubr.f32.mxu0 0.0
  %634 = vmatmul.mubr.f32.gmra.mrb[0].mxu0 %v260
  %v635 = vpop.f32.mrb[0].mxu0
  %v636 = vadd.f32 %v85, %v635
  %v637 = vpop.f32.mrb[0].mxu0
  %638 = vmatprep.mubr.f32.mxu0 0.0
  %639 = vmatmul.mubr.f32.gmra.mrb[0].mxu0 %v263
  %v640 = vpop.f32.mrb[0].mxu0
  %v641 = vadd.f32 %v85, %v640
  %v642 = vpop.f32.mrb[0].mxu0
  %643 = vmatprep.mubr.f32.mxu0 0.0
  %644 = vmatmul.mubr.f32.gmra.mrb[0].mxu0 %v266
  %v645 = vpop.f32.mrb[0].mxu0
  %v646 = vadd.f32 %v85, %v645
  %v647 = vpop.f32.mrb[0].mxu0
  %648 = vmatprep.mubr.f32.mxu0 0.0
  %649 = vmatmul.mubr.f32.gmra.mrb[0].mxu0 %v269
  %v650 = vpop.f32.mrb[0].mxu0
  %v651 = vadd.f32 %v85, %v650
  %v652 = vpop.f32.mrb[0].mxu0
  %653 = vmatprep.mubr.f32.mxu0 0.0
  %654 = vmatmul.mubr.f32.gmra.mrb[0].mxu0 %v272
  %v655 = vpop.f32.mrb[0].mxu0
  %v656 = vadd.f32 %v85, %v655
  %v657 = vpop.f32.mrb[0].mxu0
  %658 = vmatprep.mubr.f32.mxu0 0.0
  %659 = vmatmul.mubr.f32.gmra.mrb[0].mxu0 %v275
  %v660 = vpop.f32.mrb[0].mxu0
  %v661 = vadd.f32 %v85, %v660
  %v662 = vpop.f32.mrb[0].mxu0
  %663 = vmatprep.mubr.f32.mxu0 0.0
  %664 = vmatmul.mubr.f32.gmra.mrb[0].mxu0 %v278
  %v665 = vpop.f32.mrb[0].mxu0
  %v666 = vadd.f32 %v85, %v665
  %v667 = vpop.f32.mrb[0].mxu0
  %668 = vdwg.mxu0
  %vm669 = vcmask 261120
  %670 = vst.msk [vmem:[%s3] sm:$0xff] %vm669, %v351
  %671 = vst.msk [vmem:[%s3 + $0x8] sm:$0xff] %vm669, %v356
  %672 = vst.msk [vmem:[%s3 + $0x10] sm:$0xff] %vm669, %v361
  %673 = vst.msk [vmem:[%s3 + $0x18] sm:$0xff] %vm669, %v366
  %674 = vst.msk [vmem:[%s3 + $0x20] sm:$0xff] %vm669, %v371
  %675 = vst.msk [vmem:[%s3 + $0x28] sm:$0xff] %vm669, %v376
  %676 = vst.msk [vmem:[%s3 + $0x30] sm:$0xff] %vm669, %v381
  %677 = vst.msk [vmem:[%s3 + $0x38] sm:$0xff] %vm669, %v386
  %678 = vst.msk [vmem:[%s3 + $0x40] sm:$0xff] %vm669, %v391
  %679 = vst.msk [vmem:[%s3 + $0x48] sm:$0xff] %vm669, %v396
  %680 = vst.msk [vmem:[%s3 + $0x50] sm:$0xff] %vm669, %v401
  %681 = vst.msk [vmem:[%s3 + $0x58] sm:$0xff] %vm669, %v406
  %682 = vst.msk [vmem:[%s3 + $0x60] sm:$0xff] %vm669, %v411
  %683 = vst.msk [vmem:[%s3 + $0x68] sm:$0xff] %vm669, %v416
  %684 = vst.msk [vmem:[%s3 + $0x70] sm:$0xff] %vm669, %v421
  %685 = vst.msk [vmem:[%s3 + $0x78] sm:$0xff] %vm669, %v426
  %686 = vst.msk [vmem:[%s3 + $0x80] sm:$0xff] %vm669, %v431
  %687 = vst.msk [vmem:[%s3 + $0x88] sm:$0xff] %vm669, %v436
  %688 = vst.msk [vmem:[%s3 + $0x90] sm:$0xff] %vm669, %v441
  %689 = vst.msk [vmem:[%s3 + $0x98] sm:$0xff] %vm669, %v446
  %690 = vst.msk [vmem:[%s3 + $0xa0] sm:$0xff] %vm669, %v451
  %691 = vst.msk [vmem:[%s3 + $0xa8] sm:$0xff] %vm669, %v456
  %692 = vst.msk [vmem:[%s3 + $0xb0] sm:$0xff] %vm669, %v461
  %693 = vst.msk [vmem:[%s3 + $0xb8] sm:$0xff] %vm669, %v466
  %694 = vst.msk [vmem:[%s3 + $0xc0] sm:$0xff] %vm669, %v471
  %695 = vst.msk [vmem:[%s3 + $0xc8] sm:$0xff] %vm669, %v476
  %696 = vst.msk [vmem:[%s3 + $0xd0] sm:$0xff] %vm669, %v481
  %697 = vst.msk [vmem:[%s3 + $0xd8] sm:$0xff] %vm669, %v486
  %698 = vst.msk [vmem:[%s3 + $0xe0] sm:$0xff] %vm669, %v491
  %699 = vst.msk [vmem:[%s3 + $0xe8] sm:$0xff] %vm669, %v496
  %700 = vst.msk [vmem:[%s3 + $0xf0] sm:$0xff] %vm669, %v501
  %701 = vst.msk [vmem:[%s3 + $0xf8] sm:$0xff] %vm669, %v506
  %702 = vst.msk [vmem:[%s3 + $0x100] sm:$0xff] %vm669, %v511
  %703 = vst.msk [vmem:[%s3 + $0x108] sm:$0xff] %vm669, %v516
  %704 = vst.msk [vmem:[%s3 + $0x110] sm:$0xff] %vm669, %v521
  %705 = vst.msk [vmem:[%s3 + $0x118] sm:$0xff] %vm669, %v526
  %706 = vst.msk [vmem:[%s3 + $0x120] sm:$0xff] %vm669, %v531
  %707 = vst.msk [vmem:[%s3 + $0x128] sm:$0xff] %vm669, %v536
  %708 = vst.msk [vmem:[%s3 + $0x130] sm:$0xff] %vm669, %v541
  %709 = vst.msk [vmem:[%s3 + $0x138] sm:$0xff] %vm669, %v546
  %710 = vst.msk [vmem:[%s3 + $0x140] sm:$0xff] %vm669, %v551
  %711 = vst.msk [vmem:[%s3 + $0x148] sm:$0xff] %vm669, %v556
  %712 = vst.msk [vmem:[%s3 + $0x150] sm:$0xff] %vm669, %v561
  %713 = vst.msk [vmem:[%s3 + $0x158] sm:$0xff] %vm669, %v566
  %714 = vst.msk [vmem:[%s3 + $0x160] sm:$0xff] %vm669, %v571
  %715 = vst.msk [vmem:[%s3 + $0x168] sm:$0xff] %vm669, %v576
  %716 = vst.msk [vmem:[%s3 + $0x170] sm:$0xff] %vm669, %v581
  %717 = vst.msk [vmem:[%s3 + $0x178] sm:$0xff] %vm669, %v586
  %718 = vst.msk [vmem:[%s3 + $0x180] sm:$0xff] %vm669, %v591
  %719 = vst.msk [vmem:[%s3 + $0x188] sm:$0xff] %vm669, %v596
  %720 = vst.msk [vmem:[%s3 + $0x190] sm:$0xff] %vm669, %v601
  %721 = vst.msk [vmem:[%s3 + $0x198] sm:$0xff] %vm669, %v606
  %722 = vst.msk [vmem:[%s3 + $0x1a0] sm:$0xff] %vm669, %v611
  %723 = vst.msk [vmem:[%s3 + $0x1a8] sm:$0xff] %vm669, %v616
  %724 = vst.msk [vmem:[%s3 + $0x1b0] sm:$0xff] %vm669, %v621
  %725 = vst.msk [vmem:[%s3 + $0x1b8] sm:$0xff] %vm669, %v626
  %726 = vst.msk [vmem:[%s3 + $0x1c0] sm:$0xff] %vm669, %v631
  %727 = vst.msk [vmem:[%s3 + $0x1c8] sm:$0xff] %vm669, %v636
  %728 = vst.msk [vmem:[%s3 + $0x1d0] sm:$0xff] %vm669, %v641
  %729 = vst.msk [vmem:[%s3 + $0x1d8] sm:$0xff] %vm669, %v646
  %730 = vst.msk [vmem:[%s3 + $0x1e0] sm:$0xff] %vm669, %v651
  %731 = vst.msk [vmem:[%s3 + $0x1e8] sm:$0xff] %vm669, %v656
  %732 = vst.msk [vmem:[%s3 + $0x1f0] sm:$0xff] %vm669, %v661
  %733 = vst.msk [vmem:[%s3 + $0x1f8] sm:$0xff] %vm669, %v666
  // Predicated region
  $region14: #{cqcc_forward.20} parent=0 // pred_check
    _
  $region15: #{cqcc_forward.20} parent=0 // pred_check_branch
    %735 = sbr.rel (0) target = $region17
  $region16: #{cqcc_forward.20} parent=0 // pred_region
    _
  $region17: #{cqcc_forward.20} parent=0 // pred_fallthru
    _
  // Predicated region
  $region18: #{cqcc_forward.20} parent=0 // pred_check
    _
  $region19: #{cqcc_forward.20} parent=0 // pred_check_branch
    %737 = sbr.rel (0) target = $region21
  $region20: #{cqcc_forward.20} parent=0 // pred_region
    _
  $region21: #{cqcc_forward.20} parent=0 // pred_fallthru
    _

// kernel: cqcc_forward.21
$region0: #{cqcc_forward.21}
  #allocation0 [shape = 'u32[]', space=smem, size = 0x4, offset = 0x4, fixed_abs, tag = 'smem constant byte address 0x4 - core index']
  #allocation1 [shape = 'u32[144,128]{1,0:T(1,128)}', space=vmem, size = 0x12000, scoped, tag = 'internal scratch']
  %s0 = inlined_call_operand.vmem [shape: f32[72,288], index: 0, kind: input, shape index: {}]
  %s1 = inlined_call_operand.vmem [shape: f32[288,32], index: 1, kind: input, shape index: {}]
  %s2 = inlined_call_operand.vmem [shape: f32[1,32], index: 2, kind: input, shape index: {}]
  %s3 = inlined_call_operand.vmem [shape: f32[72,32], index: 3, kind: output, shape index: {}]
  %s4 = sld [smem:[#allocation0]]
  $region22: #{cqcc_forward.21} parent=0
    _
  %s6 = ssub.s32 1, %s4
  %s7 = scalar_select 0, %s6, %s4
  // Predicated region
  $region2: #{cqcc_forward.21} parent=0 // pred_check
    _
  $region3: #{cqcc_forward.21} parent=0 // pred_check_branch
    %9 = sbr.rel (0) target = $region5
  $region4: #{cqcc_forward.21} parent=0 // pred_region
    _
  $region5: #{cqcc_forward.21} parent=0 // pred_fallthru
    _
  // Predicated region
  $region6: #{cqcc_forward.21} parent=0 // pred_check
    _
  $region7: #{cqcc_forward.21} parent=0 // pred_check_branch
    %11 = sbr.rel (0) target = $region9
  $region8: #{cqcc_forward.21} parent=0 // pred_region
    _
  $region9: #{cqcc_forward.21} parent=0 // pred_fallthru
    _
  // Predicated region
  $region10: #{cqcc_forward.21} parent=0 // pred_check
    _
  $region11: #{cqcc_forward.21} parent=0 // pred_check_branch
    %13 = sbr.rel (0) target = $region13
  $region12: #{cqcc_forward.21} parent=0 // pred_region
    _
  $region13: #{cqcc_forward.21} parent=0 // pred_fallthru
    _
  %v14 = vld [vmem:[%s0] sm:$0xff]
  %v15 = vld [vmem:[%s0 + $0x8] sm:$0xff]
  %v16 = vld [vmem:[%s0 + $0x10] sm:$0xff]
  %v17 = vld [vmem:[%s0 + $0x18] sm:$0xff]
  %v18 = vld [vmem:[%s0 + $0x20] sm:$0xff]
  %v19 = vld [vmem:[%s0 + $0x28] sm:$0xff]
  %v20 = vld [vmem:[%s0 + $0x30] sm:$0xff]
  %v21 = vld [vmem:[%s0 + $0x38] sm:$0xff]
  %v22 = vld [vmem:[%s0 + $0x40] sm:$0xff]
  %v23 = vld [vmem:[%s0 + $0x48] sm:$0xff]
  %v24 = vld [vmem:[%s0 + $0x50] sm:$0xff]
  %v25 = vld [vmem:[%s0 + $0x58] sm:$0xff]
  %v26 = vld [vmem:[%s0 + $0x60] sm:$0xff]
  %v27 = vld [vmem:[%s0 + $0x68] sm:$0xff]
  %v28 = vld [vmem:[%s0 + $0x70] sm:$0xff]
  %v29 = vld [vmem:[%s0 + $0x78] sm:$0xff]
  %v30 = vld [vmem:[%s0 + $0x80] sm:$0xff]
  %v31 = vld [vmem:[%s0 + $0x88] sm:$0xff]
  %v32 = vld [vmem:[%s0 + $0x90] sm:$0xff]
  %v33 = vld [vmem:[%s0 + $0x98] sm:$0xff]
  %v34 = vld [vmem:[%s0 + $0xa0] sm:$0xff]
  %v35 = vld [vmem:[%s0 + $0xa8] sm:$0xff]
  %v36 = vld [vmem:[%s0 + $0xb0] sm:$0xff]
  %v37 = vld [vmem:[%s0 + $0xb8] sm:$0xff]
  %v38 = vld [vmem:[%s0 + $0xc0] sm:$0xff]
  %v39 = vld [vmem:[%s0 + $0xc8] sm:$0xff]
  %v40 = vld [vmem:[%s0 + $0xd0] sm:$0xff]
  %v41 = vld [vmem:[%s1] sm:$0xff]
  %v42 = vld [vmem:[%s1 + $0x8] sm:$0xff]
  %v43 = vld [vmem:[%s1 + $0x10] sm:$0xff]
  %v44 = vld [vmem:[%s1 + $0x18] sm:$0xff]
  %v45 = vld [vmem:[%s1 + $0x20] sm:$0xff]
  %v46 = vld [vmem:[%s1 + $0x28] sm:$0xff]
  %v47 = vld [vmem:[%s1 + $0x30] sm:$0xff]
  %v48 = vld [vmem:[%s1 + $0x38] sm:$0xff]
  %v49 = vld [vmem:[%s1 + $0x40] sm:$0xff]
  %v50 = vld [vmem:[%s1 + $0x48] sm:$0xff]
  %v51 = vld [vmem:[%s1 + $0x50] sm:$0xff]
  %v52 = vld [vmem:[%s1 + $0x58] sm:$0xff]
  %v53 = vld [vmem:[%s1 + $0x60] sm:$0xff]
  %v54 = vld [vmem:[%s1 + $0x68] sm:$0xff]
  %v55 = vld [vmem:[%s1 + $0x70] sm:$0xff]
  %v56 = vld [vmem:[%s1 + $0x78] sm:$0xff]
  %v57 = vld [vmem:[%s1 + $0x80] sm:$0xff]
  %v58 = vld [vmem:[%s1 + $0x88] sm:$0xff]
  %v59 = vld [vmem:[%s1 + $0x90] sm:$0xff]
  %v60 = vld [vmem:[%s1 + $0x98] sm:$0xff]
  %v61 = vld [vmem:[%s1 + $0xa0] sm:$0xff]
  %v62 = vld [vmem:[%s1 + $0xa8] sm:$0xff]
  %v63 = vld [vmem:[%s1 + $0xb0] sm:$0xff]
  %v64 = vld [vmem:[%s1 + $0xb8] sm:$0xff]
  %v65 = vld [vmem:[%s1 + $0xc0] sm:$0xff]
  %v66 = vld [vmem:[%s1 + $0xc8] sm:$0xff]
  %v67 = vld [vmem:[%s1 + $0xd0] sm:$0xff]
  %v68 = vld [vmem:[%s1 + $0xd8] sm:$0xff]
  %v69 = vld [vmem:[%s1 + $0xe0] sm:$0xff]
  %v70 = vld [vmem:[%s1 + $0xe8] sm:$0xff]
  %v71 = vld [vmem:[%s1 + $0xf0] sm:$0xff]
  %v72 = vld [vmem:[%s1 + $0xf8] sm:$0xff]
  %v73 = vld [vmem:[%s1 + $0x100] sm:$0xff]
  %v74 = vld [vmem:[%s1 + $0x108] sm:$0xff]
  %v75 = vld [vmem:[%s1 + $0x110] sm:$0xff]
  %v76 = vld [vmem:[%s1 + $0x118] sm:$0xff]
  %v77 = vld [vmem:[%s2] sm:$0x1]
  %v79 = vlaneseq
  %v80 = vshrl.u32 %v79, 7
  %v81 = vsub.s32 0, %v80
  %v82 = vrot.slane %v77, %v81
  %vm84 = vcmask 261120
  %v86 = vsel %vm84, %v16, 0
  %v89 = vsel %vm84, %v19, 0
  %v92 = vsel %vm84, %v22, 0
  %v95 = vsel %vm84, %v25, 0
  %v98 = vsel %vm84, %v28, 0
  %v101 = vsel %vm84, %v31, 0
  %v104 = vsel %vm84, %v34, 0
  %v107 = vsel %vm84, %v37, 0
  %v110 = vsel %vm84, %v40, 0
  %112 = vmatprep.subr.mxu0 0.0
  %113 = vmatpush1.msra.mxu0 %v41
  %114 = vmatprep.subr.mxu0 0.0
  %115 = vmatpush1.msra.mxu0 %v42
  %116 = vmatprep.subr.mxu0 0.0
  %117 = vmatpush1.msra.mxu0 %v43
  %118 = vmatprep.subr.mxu0 0.0
  %119 = vmatpush1.msra.mxu0 %v44
  %120 = vmatprep.subr.mxu0 0.0
  %121 = vmatpush1.msra.mxu0 %v45
  %122 = vmatprep.subr.mxu0 0.0
  %123 = vmatpush1.msra.mxu0 %v46
  %124 = vmatprep.subr.mxu0 0.0
  %125 = vmatpush1.msra.mxu0 %v47
  %126 = vmatprep.subr.mxu0 0.0
  %127 = vmatpush1.msra.mxu0 %v48
  %128 = vmatprep.subr.mxu0 0.0
  %129 = vmatpush1.msra.mxu0 %v49
  %130 = vmatprep.subr.mxu0 0.0
  %131 = vmatpush1.msra.mxu0 %v50
  %132 = vmatprep.subr.mxu0 0.0
  %133 = vmatpush1.msra.mxu0 %v51
  %134 = vmatprep.subr.mxu0 0.0
  %135 = vmatpush1.msra.mxu0 %v52
  %136 = vmatprep.subr.mxu0 0.0
  %137 = vmatpush1.msra.mxu0 %v53
  %138 = vmatprep.subr.mxu0 0.0
  %139 = vmatpush1.msra.mxu0 %v54
  %140 = vmatprep.subr.mxu0 0.0
  %141 = vmatpush1.msra.mxu0 %v55
  %142 = vmatprep.subr.mxu0 0.0
  %143 = vmatpush1.msra.mxu0 %v56
  %144 = vmatprep.subr.mxu0 0.0
  %145 = vmatpush1.msra.mxu0 %v57
  %146 = vmatprep.subr.mxu0 0.0
  %147 = vmatpush1.msra.mxu0 %v58
  %148 = vmatprep.subr.mxu0 0.0
  %149 = vmatpush1.msra.mxu0 %v59
  %150 = vmatprep.subr.mxu0 0.0
  %151 = vmatpush1.msra.mxu0 %v60
  %152 = vmatprep.subr.mxu0 0.0
  %153 = vmatpush1.msra.mxu0 %v61
  %154 = vmatprep.subr.mxu0 0.0
  %155 = vmatpush1.msra.mxu0 %v62
  %156 = vmatprep.subr.mxu0 0.0
  %157 = vmatpush1.msra.mxu0 %v63
  %158 = vmatprep.subr.mxu0 0.0
  %159 = vmatpush1.msra.mxu0 %v64
  %160 = vmatprep.subr.mxu0 0.0
  %161 = vmatpush1.msra.mxu0 %v65
  %162 = vmatprep.subr.mxu0 0.0
  %163 = vmatpush1.msra.mxu0 %v66
  %164 = vmatprep.subr.mxu0 0.0
  %165 = vmatpush1.msra.mxu0 %v67
  %166 = vmatprep.subr.mxu0 0.0
  %167 = vmatpush1.msra.mxu0 %v68
  %168 = vmatprep.subr.mxu0 0.0
  %169 = vmatpush1.msra.mxu0 %v69
  %170 = vmatprep.subr.mxu0 0.0
  %171 = vmatpush1.msra.mxu0 %v70
  %172 = vmatprep.subr.mxu0 0.0
  %173 = vmatpush1.msra.mxu0 %v71
  %174 = vmatprep.subr.mxu0 0.0
  %175 = vmatpush1.msra.mxu0 %v72
  %176 = vmatprep.mubr.f32.mxu0 %v15
  %177 = vmatmul.mubr.f32.gmra.mrb[0].mxu0 %v14
  %v178 = vpop.f32.mrb[0].mxu0
  %v179 = vadd.f32 %v82, %v178
  %v180 = vpop.f32.mrb[0].mxu0
  %181 = vmatprep.mubr.f32.mxu0 %v18
  %182 = vmatmul.mubr.f32.gmra.mrb[0].mxu0 %v17
  %v183 = vpop.f32.mrb[0].mxu0
  %v184 = vadd.f32 %v82, %v183
  %v185 = vpop.f32.mrb[0].mxu0
  %186 = vmatprep.mubr.f32.mxu0 %v21
  %187 = vmatmul.mubr.f32.gmra.mrb[0].mxu0 %v20
  %v188 = vpop.f32.mrb[0].mxu0
  %v189 = vadd.f32 %v82, %v188
  %v190 = vpop.f32.mrb[0].mxu0
  %191 = vmatprep.mubr.f32.mxu0 %v24
  %192 = vmatmul.mubr.f32.gmra.mrb[0].mxu0 %v23
  %v193 = vpop.f32.mrb[0].mxu0
  %v194 = vadd.f32 %v82, %v193
  %v195 = vpop.f32.mrb[0].mxu0
  %196 = vmatprep.mubr.f32.mxu0 %v27
  %197 = vmatmul.mubr.f32.gmra.mrb[0].mxu0 %v26
  %v198 = vpop.f32.mrb[0].mxu0
  %v199 = vadd.f32 %v82, %v198
  %v200 = vpop.f32.mrb[0].mxu0
  %201 = vmatprep.mubr.f32.mxu0 %v30
  %202 = vmatmul.mubr.f32.gmra.mrb[0].mxu0 %v29
  %v203 = vpop.f32.mrb[0].mxu0
  %v204 = vadd.f32 %v82, %v203
  %v205 = vpop.f32.mrb[0].mxu0
  %206 = vmatprep.mubr.f32.mxu0 %v33
  %207 = vmatmul.mubr.f32.gmra.mrb[0].mxu0 %v32
  %v208 = vpop.f32.mrb[0].mxu0
  %v209 = vadd.f32 %v82, %v208
  %v210 = vpop.f32.mrb[0].mxu0
  %211 = vmatprep.mubr.f32.mxu0 %v36
  %212 = vmatmul.mubr.f32.gmra.mrb[0].mxu0 %v35
  %v213 = vpop.f32.mrb[0].mxu0
  %v214 = vadd.f32 %v82, %v213
  %v215 = vpop.f32.mrb[0].mxu0
  %216 = vmatprep.mubr.f32.mxu0 %v39
  %217 = vmatmul.mubr.f32.gmra.mrb[0].mxu0 %v38
  %v218 = vpop.f32.mrb[0].mxu0
  %v219 = vadd.f32 %v82, %v218
  %v220 = vpop.f32.mrb[0].mxu0
  %221 = vdwg.mxu0
  %222 = vmatprep.subr.mxu0 0.0
  %223 = vmatpush1.msra.mxu0 %v73
  %224 = vmatprep.subr.mxu0 0.0
  %225 = vmatpush1.msra.mxu0 %v74
  %226 = vmatprep.subr.mxu0 0.0
  %227 = vmatpush1.msra.mxu0 %v75
  %228 = vmatprep.subr.mxu0 0.0
  %229 = vmatpush1.msra.mxu0 %v76
  %230 = vmatprep.subr.mxu0 0.0
  %231 = vmatpush1.msra.mxu0 0.0
  %232 = vmatprep.subr.mxu0 0.0
  %233 = vmatpush1.msra.mxu0 0.0
  %234 = vmatprep.subr.mxu0 0.0
  %235 = vmatpush1.msra.mxu0 0.0
  %236 = vmatprep.subr.mxu0 0.0
  %237 = vmatpush1.msra.mxu0 0.0
  %238 = vmatprep.subr.mxu0 0.0
  %239 = vmatpush1.msra.mxu0 0.0
  %240 = vmatprep.subr.mxu0 0.0
  %241 = vmatpush1.msra.mxu0 0.0
  %242 = vmatprep.subr.mxu0 0.0
  %243 = vmatpush1.msra.mxu0 0.0
  %244 = vmatprep.subr.mxu0 0.0
  %245 = vmatpush1.msra.mxu0 0.0
  %246 = vmatprep.subr.mxu0 0.0
  %247 = vmatpush1.msra.mxu0 0.0
  %248 = vmatprep.subr.mxu0 0.0
  %249 = vmatpush1.msra.mxu0 0.0
  %250 = vmatprep.subr.mxu0 0.0
  %251 = vmatpush1.msra.mxu0 0.0
  %252 = vmatprep.subr.mxu0 0.0
  %253 = vmatpush1.msra.mxu0 0.0
  %254 = vmatprep.subr.mxu0 0.0
  %255 = vmatpush1.msra.mxu0 0.0
  %256 = vmatprep.subr.mxu0 0.0
  %257 = vmatpush1.msra.mxu0 0.0
  %258 = vmatprep.subr.mxu0 0.0
  %259 = vmatpush1.msra.mxu0 0.0
  %260 = vmatprep.subr.mxu0 0.0
  %261 = vmatpush1.msra.mxu0 0.0
  %262 = vmatprep.subr.mxu0 0.0
  %263 = vmatpush1.msra.mxu0 0.0
  %264 = vmatprep.subr.mxu0 0.0
  %265 = vmatpush1.msra.mxu0 0.0
  %266 = vmatprep.subr.mxu0 0.0
  %267 = vmatpush1.msra.mxu0 0.0
  %268 = vmatprep.subr.mxu0 0.0
  %269 = vmatpush1.msra.mxu0 0.0
  %270 = vmatprep.subr.mxu0 0.0
  %271 = vmatpush1.msra.mxu0 0.0
  %272 = vmatprep.subr.mxu0 0.0
  %273 = vmatpush1.msra.mxu0 0.0
  %274 = vmatprep.subr.mxu0 0.0
  %275 = vmatpush1.msra.mxu0 0.0
  %276 = vmatprep.subr.mxu0 0.0
  %277 = vmatpush1.msra.mxu0 0.0
  %278 = vmatprep.subr.mxu0 0.0
  %279 = vmatpush1.msra.mxu0 0.0
  %280 = vmatprep.subr.mxu0 0.0
  %281 = vmatpush1.msra.mxu0 0.0
  %282 = vmatprep.subr.mxu0 0.0
  %283 = vmatpush1.msra.mxu0 0.0
  %284 = vmatprep.subr.mxu0 0.0
  %285 = vmatpush1.msra.mxu0 0.0
  %286 = vmatprep.mubr.f32.mxu0 0.0
  %287 = vmatmul.mubr.f32.gmra.mrb[0].mxu0 %v86
  %v288 = vpop.f32.mrb[0].mxu0
  %v289 = vadd.f32 %v179, %v288
  %v290 = vpop.f32.mrb[0].mxu0
  %291 = vmatprep.mubr.f32.mxu0 0.0
  %292 = vmatmul.mubr.f32.gmra.mrb[0].mxu0 %v89
  %v293 = vpop.f32.mrb[0].mxu0
  %v294 = vadd.f32 %v184, %v293
  %v295 = vpop.f32.mrb[0].mxu0
  %296 = vmatprep.mubr.f32.mxu0 0.0
  %297 = vmatmul.mubr.f32.gmra.mrb[0].mxu0 %v92
  %v298 = vpop.f32.mrb[0].mxu0
  %v299 = vadd.f32 %v189, %v298
  %v300 = vpop.f32.mrb[0].mxu0
  %301 = vmatprep.mubr.f32.mxu0 0.0
  %302 = vmatmul.mubr.f32.gmra.mrb[0].mxu0 %v95
  %v303 = vpop.f32.mrb[0].mxu0
  %v304 = vadd.f32 %v194, %v303
  %v305 = vpop.f32.mrb[0].mxu0
  %306 = vmatprep.mubr.f32.mxu0 0.0
  %307 = vmatmul.mubr.f32.gmra.mrb[0].mxu0 %v98
  %v308 = vpop.f32.mrb[0].mxu0
  %v309 = vadd.f32 %v199, %v308
  %v310 = vpop.f32.mrb[0].mxu0
  %311 = vmatprep.mubr.f32.mxu0 0.0
  %312 = vmatmul.mubr.f32.gmra.mrb[0].mxu0 %v101
  %v313 = vpop.f32.mrb[0].mxu0
  %v314 = vadd.f32 %v204, %v313
  %v315 = vpop.f32.mrb[0].mxu0
  %316 = vmatprep.mubr.f32.mxu0 0.0
  %317 = vmatmul.mubr.f32.gmra.mrb[0].mxu0 %v104
  %v318 = vpop.f32.mrb[0].mxu0
  %v319 = vadd.f32 %v209, %v318
  %v320 = vpop.f32.mrb[0].mxu0
  %321 = vmatprep.mubr.f32.mxu0 0.0
  %322 = vmatmul.mubr.f32.gmra.mrb[0].mxu0 %v107
  %v323 = vpop.f32.mrb[0].mxu0
  %v324 = vadd.f32 %v214, %v323
  %v325 = vpop.f32.mrb[0].mxu0
  %326 = vmatprep.mubr.f32.mxu0 0.0
  %327 = vmatmul.mubr.f32.gmra.mrb[0].mxu0 %v110
  %v328 = vpop.f32.mrb[0].mxu0
  %v329 = vadd.f32 %v219, %v328
  %v330 = vpop.f32.mrb[0].mxu0
  %331 = vdwg.mxu0
  %332 = vst.msk [vmem:[%s3] sm:$0xff] %vm84, %v289
  %333 = vst.msk [vmem:[%s3 + $0x8] sm:$0xff] %vm84, %v294
  %334 = vst.msk [vmem:[%s3 + $0x10] sm:$0xff] %vm84, %v299
  %335 = vst.msk [vmem:[%s3 + $0x18] sm:$0xff] %vm84, %v304
  %336 = vst.msk [vmem:[%s3 + $0x20] sm:$0xff] %vm84, %v309
  %337 = vst.msk [vmem:[%s3 + $0x28] sm:$0xff] %vm84, %v314
  %338 = vst.msk [vmem:[%s3 + $0x30] sm:$0xff] %vm84, %v319
  %339 = vst.msk [vmem:[%s3 + $0x38] sm:$0xff] %vm84, %v324
  %340 = vst.msk [vmem:[%s3 + $0x40] sm:$0xff] %vm84, %v329
  // Predicated region
  $region14: #{cqcc_forward.21} parent=0 // pred_check
    _
  $region15: #{cqcc_forward.21} parent=0 // pred_check_branch
    %342 = sbr.rel (0) target = $region17
  $region16: #{cqcc_forward.21} parent=0 // pred_region
    _
  $region17: #{cqcc_forward.21} parent=0 // pred_fallthru
    _
  // Predicated region
  $region18: #{cqcc_forward.21} parent=0 // pred_check
    _
  $region19: #{cqcc_forward.21} parent=0 // pred_check_branch
    %344 = sbr.rel (0) target = $region21
  $region20: #{cqcc_forward.21} parent=0 // pred_region
    _
  $region21: #{cqcc_forward.21} parent=0 // pred_fallthru
    _

// kernel: cqcc_forward.23
$region0: #{cqcc_forward.23}
  #allocation0 [shape = 'u32[]', space=smem, size = 0x4, offset = 0x4, fixed_abs, tag = 'smem constant byte address 0x4 - core index']
  #allocation1 [shape = 'u32[144,128]{1,0:T(1,128)}', space=vmem, size = 0x12000, scoped, tag = 'internal scratch']
  %s0 = inlined_call_operand.vmem [shape: f32[72,288], index: 0, kind: input, shape index: {}]
  %s1 = inlined_call_operand.vmem [shape: f32[288,32], index: 1, kind: input, shape index: {}]
  %s2 = inlined_call_operand.vmem [shape: f32[1,32], index: 2, kind: input, shape index: {}]
  %s3 = inlined_call_operand.vmem [shape: f32[72,32], index: 3, kind: input, shape index: {}]
  %s4 = inlined_call_operand.vmem [shape: f32[72,32], index: 4, kind: output, shape index: {}]
  %s5 = sld [smem:[#allocation0]]
  $region26: #{cqcc_forward.23} parent=0
    _
  %s7 = ssub.s32 1, %s5
  %s8 = scalar_select 0, %s7, %s5
  // Predicated region
  $region2: #{cqcc_forward.23} parent=0 // pred_check
    _
  $region3: #{cqcc_forward.23} parent=0 // pred_check_branch
    %10 = sbr.rel (0) target = $region5
  $region4: #{cqcc_forward.23} parent=0 // pred_region
    _
  $region5: #{cqcc_forward.23} parent=0 // pred_fallthru
    _
  // Predicated region
  $region6: #{cqcc_forward.23} parent=0 // pred_check
    _
  $region7: #{cqcc_forward.23} parent=0 // pred_check_branch
    %12 = sbr.rel (0) target = $region9
  $region8: #{cqcc_forward.23} parent=0 // pred_region
    _
  $region9: #{cqcc_forward.23} parent=0 // pred_fallthru
    _
  // Predicated region
  $region10: #{cqcc_forward.23} parent=0 // pred_check
    _
  $region11: #{cqcc_forward.23} parent=0 // pred_check_branch
    %14 = sbr.rel (0) target = $region13
  $region12: #{cqcc_forward.23} parent=0 // pred_region
    _
  $region13: #{cqcc_forward.23} parent=0 // pred_fallthru
    _
  // Predicated region
  $region14: #{cqcc_forward.23} parent=0 // pred_check
    _
  $region15: #{cqcc_forward.23} parent=0 // pred_check_branch
    %16 = sbr.rel (0) target = $region17
  $region16: #{cqcc_forward.23} parent=0 // pred_region
    _
  $region17: #{cqcc_forward.23} parent=0 // pred_fallthru
    _
  %v17 = vld [vmem:[%s0] sm:$0xff]
  %v18 = vld [vmem:[%s0 + $0x8] sm:$0xff]
  %v19 = vld [vmem:[%s0 + $0x10] sm:$0xff]
  %v20 = vld [vmem:[%s0 + $0x18] sm:$0xff]
  %v21 = vld [vmem:[%s0 + $0x20] sm:$0xff]
  %v22 = vld [vmem:[%s0 + $0x28] sm:$0xff]
  %v23 = vld [vmem:[%s0 + $0x30] sm:$0xff]
  %v24 = vld [vmem:[%s0 + $0x38] sm:$0xff]
  %v25 = vld [vmem:[%s0 + $0x40] sm:$0xff]
  %v26 = vld [vmem:[%s0 + $0x48] sm:$0xff]
  %v27 = vld [vmem:[%s0 + $0x50] sm:$0xff]
  %v28 = vld [vmem:[%s0 + $0x58] sm:$0xff]
  %v29 = vld [vmem:[%s0 + $0x60] sm:$0xff]
  %v30 = vld [vmem:[%s0 + $0x68] sm:$0xff]
  %v31 = vld [vmem:[%s0 + $0x70] sm:$0xff]
  %v32 = vld [vmem:[%s0 + $0x78] sm:$0xff]
  %v33 = vld [vmem:[%s0 + $0x80] sm:$0xff]
  %v34 = vld [vmem:[%s0 + $0x88] sm:$0xff]
  %v35 = vld [vmem:[%s0 + $0x90] sm:$0xff]
  %v36 = vld [vmem:[%s0 + $0x98] sm:$0xff]
  %v37 = vld [vmem:[%s0 + $0xa0] sm:$0xff]
  %v38 = vld [vmem:[%s0 + $0xa8] sm:$0xff]
  %v39 = vld [vmem:[%s0 + $0xb0] sm:$0xff]
  %v40 = vld [vmem:[%s0 + $0xb8] sm:$0xff]
  %v41 = vld [vmem:[%s0 + $0xc0] sm:$0xff]
  %v42 = vld [vmem:[%s0 + $0xc8] sm:$0xff]
  %v43 = vld [vmem:[%s0 + $0xd0] sm:$0xff]
  %v44 = vld [vmem:[%s1] sm:$0xff]
  %v45 = vld [vmem:[%s1 + $0x8] sm:$0xff]
  %v46 = vld [vmem:[%s1 + $0x10] sm:$0xff]
  %v47 = vld [vmem:[%s1 + $0x18] sm:$0xff]
  %v48 = vld [vmem:[%s1 + $0x20] sm:$0xff]
  %v49 = vld [vmem:[%s1 + $0x28] sm:$0xff]
  %v50 = vld [vmem:[%s1 + $0x30] sm:$0xff]
  %v51 = vld [vmem:[%s1 + $0x38] sm:$0xff]
  %v52 = vld [vmem:[%s1 + $0x40] sm:$0xff]
  %v53 = vld [vmem:[%s1 + $0x48] sm:$0xff]
  %v54 = vld [vmem:[%s1 + $0x50] sm:$0xff]
  %v55 = vld [vmem:[%s1 + $0x58] sm:$0xff]
  %v56 = vld [vmem:[%s1 + $0x60] sm:$0xff]
  %v57 = vld [vmem:[%s1 + $0x68] sm:$0xff]
  %v58 = vld [vmem:[%s1 + $0x70] sm:$0xff]
  %v59 = vld [vmem:[%s1 + $0x78] sm:$0xff]
  %v60 = vld [vmem:[%s1 + $0x80] sm:$0xff]
  %v61 = vld [vmem:[%s1 + $0x88] sm:$0xff]
  %v62 = vld [vmem:[%s1 + $0x90] sm:$0xff]
  %v63 = vld [vmem:[%s1 + $0x98] sm:$0xff]
  %v64 = vld [vmem:[%s1 + $0xa0] sm:$0xff]
  %v65 = vld [vmem:[%s1 + $0xa8] sm:$0xff]
  %v66 = vld [vmem:[%s1 + $0xb0] sm:$0xff]
  %v67 = vld [vmem:[%s1 + $0xb8] sm:$0xff]
  %v68 = vld [vmem:[%s1 + $0xc0] sm:$0xff]
  %v69 = vld [vmem:[%s1 + $0xc8] sm:$0xff]
  %v70 = vld [vmem:[%s1 + $0xd0] sm:$0xff]
  %v71 = vld [vmem:[%s1 + $0xd8] sm:$0xff]
  %v72 = vld [vmem:[%s1 + $0xe0] sm:$0xff]
  %v73 = vld [vmem:[%s1 + $0xe8] sm:$0xff]
  %v74 = vld [vmem:[%s1 + $0xf0] sm:$0xff]
  %v75 = vld [vmem:[%s1 + $0xf8] sm:$0xff]
  %v76 = vld [vmem:[%s1 + $0x100] sm:$0xff]
  %v77 = vld [vmem:[%s1 + $0x108] sm:$0xff]
  %v78 = vld [vmem:[%s1 + $0x110] sm:$0xff]
  %v79 = vld [vmem:[%s1 + $0x118] sm:$0xff]
  %v80 = vld [vmem:[%s2] sm:$0x1]
  %v82 = vlaneseq
  %v83 = vshrl.u32 %v82, 7
  %v84 = vsub.s32 0, %v83
  %v85 = vrot.slane %v80, %v84
  %vm87 = vcmask 261120
  %v89 = vsel %vm87, %v19, 0
  %v92 = vsel %vm87, %v22, 0
  %v95 = vsel %vm87, %v25, 0
  %v98 = vsel %vm87, %v28, 0
  %v101 = vsel %vm87, %v31, 0
  %v104 = vsel %vm87, %v34, 0
  %v107 = vsel %vm87, %v37, 0
  %v110 = vsel %vm87, %v40, 0
  %v113 = vsel %vm87, %v43, 0
  %115 = vmatprep.subr.mxu0 0.0
  %116 = vmatpush1.msra.mxu0 %v44
  %117 = vmatprep.subr.mxu0 0.0
  %118 = vmatpush1.msra.mxu0 %v45
  %119 = vmatprep.subr.mxu0 0.0
  %120 = vmatpush1.msra.mxu0 %v46
  %121 = vmatprep.subr.mxu0 0.0
  %122 = vmatpush1.msra.mxu0 %v47
  %123 = vmatprep.subr.mxu0 0.0
  %124 = vmatpush1.msra.mxu0 %v48
  %125 = vmatprep.subr.mxu0 0.0
  %126 = vmatpush1.msra.mxu0 %v49
  %127 = vmatprep.subr.mxu0 0.0
  %128 = vmatpush1.msra.mxu0 %v50
  %129 = vmatprep.subr.mxu0 0.0
  %130 = vmatpush1.msra.mxu0 %v51
  %131 = vmatprep.subr.mxu0 0.0
  %132 = vmatpush1.msra.mxu0 %v52
  %133 = vmatprep.subr.mxu0 0.0
  %134 = vmatpush1.msra.mxu0 %v53
  %135 = vmatprep.subr.mxu0 0.0
  %136 = vmatpush1.msra.mxu0 %v54
  %137 = vmatprep.subr.mxu0 0.0
  %138 = vmatpush1.msra.mxu0 %v55
  %139 = vmatprep.subr.mxu0 0.0
  %140 = vmatpush1.msra.mxu0 %v56
  %141 = vmatprep.subr.mxu0 0.0
  %142 = vmatpush1.msra.mxu0 %v57
  %143 = vmatprep.subr.mxu0 0.0
  %144 = vmatpush1.msra.mxu0 %v58
  %145 = vmatprep.subr.mxu0 0.0
  %146 = vmatpush1.msra.mxu0 %v59
  %147 = vmatprep.subr.mxu0 0.0
  %148 = vmatpush1.msra.mxu0 %v60
  %149 = vmatprep.subr.mxu0 0.0
  %150 = vmatpush1.msra.mxu0 %v61
  %151 = vmatprep.subr.mxu0 0.0
  %152 = vmatpush1.msra.mxu0 %v62
  %153 = vmatprep.subr.mxu0 0.0
  %154 = vmatpush1.msra.mxu0 %v63
  %155 = vmatprep.subr.mxu0 0.0
  %156 = vmatpush1.msra.mxu0 %v64
  %157 = vmatprep.subr.mxu0 0.0
  %158 = vmatpush1.msra.mxu0 %v65
  %159 = vmatprep.subr.mxu0 0.0
  %160 = vmatpush1.msra.mxu0 %v66
  %161 = vmatprep.subr.mxu0 0.0
  %162 = vmatpush1.msra.mxu0 %v67
  %163 = vmatprep.subr.mxu0 0.0
  %164 = vmatpush1.msra.mxu0 %v68
  %165 = vmatprep.subr.mxu0 0.0
  %166 = vmatpush1.msra.mxu0 %v69
  %167 = vmatprep.subr.mxu0 0.0
  %168 = vmatpush1.msra.mxu0 %v70
  %169 = vmatprep.subr.mxu0 0.0
  %170 = vmatpush1.msra.mxu0 %v71
  %171 = vmatprep.subr.mxu0 0.0
  %172 = vmatpush1.msra.mxu0 %v72
  %173 = vmatprep.subr.mxu0 0.0
  %174 = vmatpush1.msra.mxu0 %v73
  %175 = vmatprep.subr.mxu0 0.0
  %176 = vmatpush1.msra.mxu0 %v74
  %177 = vmatprep.subr.mxu0 0.0
  %178 = vmatpush1.msra.mxu0 %v75
  %179 = vmatprep.mubr.f32.mxu0 %v18
  %180 = vmatmul.mubr.f32.gmra.mrb[0].mxu0 %v17
  %v181 = vpop.f32.mrb[0].mxu0
  %v182 = vadd.f32 %v85, %v181
  %v183 = vpop.f32.mrb[0].mxu0
  %184 = vmatprep.mubr.f32.mxu0 %v21
  %185 = vmatmul.mubr.f32.gmra.mrb[0].mxu0 %v20
  %v186 = vpop.f32.mrb[0].mxu0
  %v187 = vadd.f32 %v85, %v186
  %v188 = vpop.f32.mrb[0].mxu0
  %189 = vmatprep.mubr.f32.mxu0 %v24
  %190 = vmatmul.mubr.f32.gmra.mrb[0].mxu0 %v23
  %v191 = vpop.f32.mrb[0].mxu0
  %v192 = vadd.f32 %v85, %v191
  %v193 = vpop.f32.mrb[0].mxu0
  %194 = vmatprep.mubr.f32.mxu0 %v27
  %195 = vmatmul.mubr.f32.gmra.mrb[0].mxu0 %v26
  %v196 = vpop.f32.mrb[0].mxu0
  %v197 = vadd.f32 %v85, %v196
  %v198 = vpop.f32.mrb[0].mxu0
  %199 = vmatprep.mubr.f32.mxu0 %v30
  %200 = vmatmul.mubr.f32.gmra.mrb[0].mxu0 %v29
  %v201 = vpop.f32.mrb[0].mxu0
  %v202 = vadd.f32 %v85, %v201
  %v203 = vpop.f32.mrb[0].mxu0
  %204 = vmatprep.mubr.f32.mxu0 %v33
  %205 = vmatmul.mubr.f32.gmra.mrb[0].mxu0 %v32
  %v206 = vpop.f32.mrb[0].mxu0
  %v207 = vadd.f32 %v85, %v206
  %v208 = vpop.f32.mrb[0].mxu0
  %209 = vmatprep.mubr.f32.mxu0 %v36
  %210 = vmatmul.mubr.f32.gmra.mrb[0].mxu0 %v35
  %v211 = vpop.f32.mrb[0].mxu0
  %v212 = vadd.f32 %v85, %v211
  %v213 = vpop.f32.mrb[0].mxu0
  %214 = vmatprep.mubr.f32.mxu0 %v39
  %215 = vmatmul.mubr.f32.gmra.mrb[0].mxu0 %v38
  %v216 = vpop.f32.mrb[0].mxu0
  %v217 = vadd.f32 %v85, %v216
  %v218 = vpop.f32.mrb[0].mxu0
  %219 = vmatprep.mubr.f32.mxu0 %v42
  %220 = vmatmul.mubr.f32.gmra.mrb[0].mxu0 %v41
  %v221 = vpop.f32.mrb[0].mxu0
  %v222 = vadd.f32 %v85, %v221
  %v223 = vpop.f32.mrb[0].mxu0
  %224 = vdwg.mxu0
  %225 = vmatprep.subr.mxu0 0.0
  %226 = vmatpush1.msra.mxu0 %v76
  %227 = vmatprep.subr.mxu0 0.0
  %228 = vmatpush1.msra.mxu0 %v77
  %229 = vmatprep.subr.mxu0 0.0
  %230 = vmatpush1.msra.mxu0 %v78
  %231 = vmatprep.subr.mxu0 0.0
  %232 = vmatpush1.msra.mxu0 %v79
  %233 = vmatprep.subr.mxu0 0.0
  %234 = vmatpush1.msra.mxu0 0.0
  %235 = vmatprep.subr.mxu0 0.0
  %236 = vmatpush1.msra.mxu0 0.0
  %237 = vmatprep.subr.mxu0 0.0
  %238 = vmatpush1.msra.mxu0 0.0
  %239 = vmatprep.subr.mxu0 0.0
  %240 = vmatpush1.msra.mxu0 0.0
  %241 = vmatprep.subr.mxu0 0.0
  %242 = vmatpush1.msra.mxu0 0.0
  %243 = vmatprep.subr.mxu0 0.0
  %244 = vmatpush1.msra.mxu0 0.0
  %245 = vmatprep.subr.mxu0 0.0
  %246 = vmatpush1.msra.mxu0 0.0
  %247 = vmatprep.subr.mxu0 0.0
  %248 = vmatpush1.msra.mxu0 0.0
  %249 = vmatprep.subr.mxu0 0.0
  %250 = vmatpush1.msra.mxu0 0.0
  %251 = vmatprep.subr.mxu0 0.0
  %252 = vmatpush1.msra.mxu0 0.0
  %253 = vmatprep.subr.mxu0 0.0
  %254 = vmatpush1.msra.mxu0 0.0
  %255 = vmatprep.subr.mxu0 0.0
  %256 = vmatpush1.msra.mxu0 0.0
  %257 = vmatprep.subr.mxu0 0.0
  %258 = vmatpush1.msra.mxu0 0.0
  %259 = vmatprep.subr.mxu0 0.0
  %260 = vmatpush1.msra.mxu0 0.0
  %261 = vmatprep.subr.mxu0 0.0
  %262 = vmatpush1.msra.mxu0 0.0
  %263 = vmatprep.subr.mxu0 0.0
  %264 = vmatpush1.msra.mxu0 0.0
  %265 = vmatprep.subr.mxu0 0.0
  %266 = vmatpush1.msra.mxu0 0.0
  %267 = vmatprep.subr.mxu0 0.0
  %268 = vmatpush1.msra.mxu0 0.0
  %269 = vmatprep.subr.mxu0 0.0
  %270 = vmatpush1.msra.mxu0 0.0
  %271 = vmatprep.subr.mxu0 0.0
  %272 = vmatpush1.msra.mxu0 0.0
  %273 = vmatprep.subr.mxu0 0.0
  %274 = vmatpush1.msra.mxu0 0.0
  %275 = vmatprep.subr.mxu0 0.0
  %276 = vmatpush1.msra.mxu0 0.0
  %277 = vmatprep.subr.mxu0 0.0
  %278 = vmatpush1.msra.mxu0 0.0
  %279 = vmatprep.subr.mxu0 0.0
  %280 = vmatpush1.msra.mxu0 0.0
  %281 = vmatprep.subr.mxu0 0.0
  %282 = vmatpush1.msra.mxu0 0.0
  %283 = vmatprep.subr.mxu0 0.0
  %284 = vmatpush1.msra.mxu0 0.0
  %285 = vmatprep.subr.mxu0 0.0
  %286 = vmatpush1.msra.mxu0 0.0
  %287 = vmatprep.subr.mxu0 0.0
  %288 = vmatpush1.msra.mxu0 0.0
  %289 = vmatprep.mubr.f32.mxu0 0.0
  %290 = vmatmul.mubr.f32.gmra.mrb[0].mxu0 %v89
  %v291 = vpop.f32.mrb[0].mxu0
  %v292 = vadd.f32 %v182, %v291
  %v293 = vpop.f32.mrb[0].mxu0
  %294 = vmatprep.mubr.f32.mxu0 0.0
  %295 = vmatmul.mubr.f32.gmra.mrb[0].mxu0 %v92
  %v296 = vpop.f32.mrb[0].mxu0
  %v297 = vadd.f32 %v187, %v296
  %v298 = vpop.f32.mrb[0].mxu0
  %299 = vmatprep.mubr.f32.mxu0 0.0
  %300 = vmatmul.mubr.f32.gmra.mrb[0].mxu0 %v95
  %v301 = vpop.f32.mrb[0].mxu0
  %v302 = vadd.f32 %v192, %v301
  %v303 = vpop.f32.mrb[0].mxu0
  %304 = vmatprep.mubr.f32.mxu0 0.0
  %305 = vmatmul.mubr.f32.gmra.mrb[0].mxu0 %v98
  %v306 = vpop.f32.mrb[0].mxu0
  %v307 = vadd.f32 %v197, %v306
  %v308 = vpop.f32.mrb[0].mxu0
  %309 = vmatprep.mubr.f32.mxu0 0.0
  %310 = vmatmul.mubr.f32.gmra.mrb[0].mxu0 %v101
  %v311 = vpop.f32.mrb[0].mxu0
  %v312 = vadd.f32 %v202, %v311
  %v313 = vpop.f32.mrb[0].mxu0
  %314 = vmatprep.mubr.f32.mxu0 0.0
  %315 = vmatmul.mubr.f32.gmra.mrb[0].mxu0 %v104
  %v316 = vpop.f32.mrb[0].mxu0
  %v317 = vadd.f32 %v207, %v316
  %v318 = vpop.f32.mrb[0].mxu0
  %319 = vmatprep.mubr.f32.mxu0 0.0
  %320 = vmatmul.mubr.f32.gmra.mrb[0].mxu0 %v107
  %v321 = vpop.f32.mrb[0].mxu0
  %v322 = vadd.f32 %v212, %v321
  %v323 = vpop.f32.mrb[0].mxu0
  %324 = vmatprep.mubr.f32.mxu0 0.0
  %325 = vmatmul.mubr.f32.gmra.mrb[0].mxu0 %v110
  %v326 = vpop.f32.mrb[0].mxu0
  %v327 = vadd.f32 %v217, %v326
  %v328 = vpop.f32.mrb[0].mxu0
  %329 = vmatprep.mubr.f32.mxu0 0.0
  %330 = vmatmul.mubr.f32.gmra.mrb[0].mxu0 %v113
  %v331 = vpop.f32.mrb[0].mxu0
  %v332 = vadd.f32 %v222, %v331
  %v333 = vpop.f32.mrb[0].mxu0
  %334 = vdwg.mxu0
  %v335 = vld [vmem:[%s3] sm:$0xff]
  %v336 = vld [vmem:[%s3 + $0x8] sm:$0xff]
  %v337 = vld [vmem:[%s3 + $0x10] sm:$0xff]
  %v338 = vld [vmem:[%s3 + $0x18] sm:$0xff]
  %v339 = vld [vmem:[%s3 + $0x20] sm:$0xff]
  %v340 = vld [vmem:[%s3 + $0x28] sm:$0xff]
  %v341 = vld [vmem:[%s3 + $0x30] sm:$0xff]
  %v342 = vld [vmem:[%s3 + $0x38] sm:$0xff]
  %v343 = vld [vmem:[%s3 + $0x40] sm:$0xff]
  %v344 = vadd.f32 %v292, %v335
  %v345 = vadd.f32 %v297, %v336
  %v346 = vadd.f32 %v302, %v337
  %v347 = vadd.f32 %v307, %v338
  %v348 = vadd.f32 %v312, %v339
  %v349 = vadd.f32 %v317, %v340
  %v350 = vadd.f32 %v322, %v341
  %v351 = vadd.f32 %v327, %v342
  %v352 = vadd.f32 %v332, %v343
  %353 = vst.msk [vmem:[%s4] sm:$0xff] %vm87, %v344
  %354 = vst.msk [vmem:[%s4 + $0x8] sm:$0xff] %vm87, %v345
  %355 = vst.msk [vmem:[%s4 + $0x10] sm:$0xff] %vm87, %v346
  %356 = vst.msk [vmem:[%s4 + $0x18] sm:$0xff] %vm87, %v347
  %357 = vst.msk [vmem:[%s4 + $0x20] sm:$0xff] %vm87, %v348
  %358 = vst.msk [vmem:[%s4 + $0x28] sm:$0xff] %vm87, %v349
  %359 = vst.msk [vmem:[%s4 + $0x30] sm:$0xff] %vm87, %v350
  %360 = vst.msk [vmem:[%s4 + $0x38] sm:$0xff] %vm87, %v351
  %361 = vst.msk [vmem:[%s4 + $0x40] sm:$0xff] %vm87, %v352
  // Predicated region
  $region18: #{cqcc_forward.23} parent=0 // pred_check
    _
  $region19: #{cqcc_forward.23} parent=0 // pred_check_branch
    %363 = sbr.rel (0) target = $region21
  $region20: #{cqcc_forward.23} parent=0 // pred_region
    _
  $region21: #{cqcc_forward.23} parent=0 // pred_fallthru
    _
  // Predicated region
  $region22: #{cqcc_forward.23} parent=0 // pred_check
    _
  $region23: #{cqcc_forward.23} parent=0 // pred_check_branch
    %365 = sbr.rel (0) target = $region25
  $region24: #{cqcc_forward.23} parent=0 // pred_region
    _
  $region25: #{cqcc_forward.23} parent=0 // pred_fallthru
    _

// kernel: cqcc_forward.22
$region0: #{cqcc_forward.22}
  #allocation0 [shape = 'u32[]', space=smem, size = 0x4, offset = 0x4, fixed_abs, tag = 'smem constant byte address 0x4 - core index']
  #allocation1 [shape = 'u32[144,128]{1,0:T(1,128)}', space=vmem, size = 0x12000, scoped, tag = 'internal scratch']
  %s0 = inlined_call_operand.vmem [shape: f32[2,18,18,32], index: 0, kind: input, shape index: {}]
  %s1 = inlined_call_operand.vmem [shape: f32[288,32], index: 1, kind: input, shape index: {}]
  %s2 = inlined_call_operand.vmem [shape: f32[1,32], index: 2, kind: input, shape index: {}]
  %s3 = inlined_call_operand.vmem [shape: f32[1,32], index: 3, kind: input, shape index: {}]
  %s4 = inlined_call_operand.vmem [shape: f32[2,16,16,32], index: 4, kind: output, shape index: {}]
  %s5 = sld [smem:[#allocation0]]
  $region49: #{cqcc_forward.22} parent=0
    _
  %s7 = ssub.s32 1, %s5
  %s8 = scalar_select 0, %s7, %s5
  loop: start=0, step=1, limit=4
  $region2: #{cqcc_forward.22} parent=0 // loop_pre_header
    _
  $region3: #{cqcc_forward.22} parent=0 // loop_header
    %s10 = sphi 0, %s14
    %p11 = scmp.ge.s32.totalorder %s10, 4
    %s20 = sphi 0, %s22
    %s23 = sphi 0, %s20
    %s24 = sphi 0, %s23
    %s40 = sphi 0, %s24
    %s44 = sphi 0, %s44
    %s46 = sphi 0, %s44
    %s47 = sphi 0, %s46
    %s61 = sphi 0, %s47
    %s65 = sphi 0, %s65
    %s67 = sphi 0, %s65
    %s68 = sphi 0, %s67
    %s82 = sphi 0, %s68
    %s86 = sphi 0, %s86
    %s88 = sphi 0, %s86
    %s89 = sphi 0, %s88
    %s103 = sphi 0, %s89
    %s109 = sphi 0, %s111
    %s112 = sphi 0, %s109
    %s113 = sphi 0, %s112
    %s129 = sphi 0, %s113
  $region4: #{cqcc_forward.22} parent=0 // loop_header_branch
    %13 = sbr.rel (%p11) target = $region8
  $region5: #{cqcc_forward.22} parent=0 // loop_body
    %s15 = ssub.s32 %s10, 1
    %s16 = ssub.s32 %s10, 2
    %s17 = sadd.s32 %s10, 1
    %s18 = ssub.s32 %s10, %s17
    %p19 = scmp.eq.s32.totalorder %s18, 0
    %s21 = sadd.s32 %s20, 1
    %s22 = scalar_select %p19, %s20, %s21
    %p25 = pneg %p19
    %p26 = scmp.eq.s32.totalorder %s10, 1
    %p27 = por %p25, %p26
    %p28 = scmp.ne.s32.totalorder %s20, %s23
    %p29 = scmp.eq.s32.totalorder %s10, 0
    %p30 = por %p28, %p29
    %p31 = scmp.ne.s32.totalorder %s20, %s23
    %p32 = scmp.eq.s32.totalorder %s15, 1
    %p33 = por %p31, %p32
    %p34 = scmp.ne.s32.totalorder %s23, %s24
    %p35 = scmp.eq.s32.totalorder %s15, 0
    %p36 = por %p34, %p35
    %p37 = scmp.ne.s32.totalorder %s23, %s24
    %p38 = scmp.eq.s32.totalorder %s16, 1
    %p39 = por %p37, %p38
    %p41 = scmp.ne.s32.totalorder %s24, %s40
    %p42 = scmp.eq.s32.totalorder %s16, 0
    %p43 = por %p41, %p42
    %s45 = sadd.s32 %s44, 1
    %p48 = scmp.eq.s32.totalorder %s10, 1
    %p49 = scmp.ne.s32.totalorder %s44, %s46
    %p50 = scmp.eq.s32.totalorder %s10, 0
    %p51 = por %p49, %p50
    %p52 = scmp.ne.s32.totalorder %s44, %s46
    %p53 = scmp.eq.s32.totalorder %s15, 1
    %p54 = por %p52, %p53
    %p55 = scmp.ne.s32.totalorder %s46, %s47
    %p56 = scmp.eq.s32.totalorder %s15, 0
    %p57 = por %p55, %p56
    %p58 = scmp.ne.s32.totalorder %s46, %s47
    %p59 = scmp.eq.s32.totalorder %s16, 1
    %p60 = por %p58, %p59
    %p62 = scmp.ne.s32.totalorder %s47, %s61
    %p63 = scmp.eq.s32.totalorder %s16, 0
    %p64 = por %p62, %p63
    %s66 = sadd.s32 %s65, 1
    %p69 = scmp.eq.s32.totalorder %s10, 1
    %p70 = scmp.ne.s32.totalorder %s65, %s67
    %p71 = scmp.eq.s32.totalorder %s10, 0
    %p72 = por %p70, %p71
    %p73 = scmp.ne.s32.totalorder %s65, %s67
    %p74 = scmp.eq.s32.totalorder %s15, 1
    %p75 = por %p73, %p74
    %p76 = scmp.ne.s32.totalorder %s67, %s68
    %p77 = scmp.eq.s32.totalorder %s15, 0
    %p78 = por %p76, %p77
    %p79 = scmp.ne.s32.totalorder %s67, %s68
    %p80 = scmp.eq.s32.totalorder %s16, 1
    %p81 = por %p79, %p80
    %p83 = scmp.ne.s32.totalorder %s68, %s82
    %p84 = scmp.eq.s32.totalorder %s16, 0
    %p85 = por %p83, %p84
    %s87 = sadd.s32 %s86, 1
    %p90 = scmp.eq.s32.totalorder %s10, 1
    %p91 = scmp.ne.s32.totalorder %s86, %s88
    %p92 = scmp.eq.s32.totalorder %s10, 0
    %p93 = por %p91, %p92
    %p94 = scmp.ne.s32.totalorder %s86, %s88
    %p95 = scmp.eq.s32.totalorder %s15, 1
    %p96 = por %p94, %p95
    %p97 = scmp.ne.s32.totalorder %s88, %s89
    %p98 = scmp.eq.s32.totalorder %s15, 0
    %p99 = por %p97, %p98
    %p100 = scmp.ne.s32.totalorder %s88, %s89
    %p101 = scmp.eq.s32.totalorder %s16, 1
    %p102 = por %p100, %p101
    %p104 = scmp.ne.s32.totalorder %s89, %s103
    %p105 = scmp.eq.s32.totalorder %s16, 0
    %p106 = por %p104, %p105
    %s107 = ssub.s32 %s10, %s17
    %p108 = scmp.eq.s32.totalorder %s107, 0
    %s110 = sadd.s32 %s109, 1
    %s111 = scalar_select %p108, %s109, %s110
    %p114 = pneg %p108
    %p115 = scmp.eq.s32.totalorder %s10, 1
    %p116 = por %p114, %p115
    %p117 = scmp.ne.s32.totalorder %s109, %s112
    %p118 = scmp.eq.s32.totalorder %s10, 0
    %p119 = por %p117, %p118
    %p120 = scmp.ne.s32.totalorder %s109, %s112
    %p121 = scmp.eq.s32.totalorder %s15, 1
    %p122 = por %p120, %p121
    %p123 = scmp.ne.s32.totalorder %s112, %s113
    %p124 = scmp.eq.s32.totalorder %s15, 0
    %p125 = por %p123, %p124
    %p126 = scmp.ne.s32.totalorder %s112, %s113
    %p127 = scmp.eq.s32.totalorder %s16, 1
    %p128 = por %p126, %p127
    %p130 = scmp.ne.s32.totalorder %s113, %s129
    %p131 = scmp.eq.s32.totalorder %s16, 0
    %p132 = por %p130, %p131
    %p133 = scmp.le.s32.totalorder 1, %s10
    %p134 = scmp.lt.s32.totalorder %s10, 3
    %p135 = pnand %p133, %p134
    %p136 = pneg %p135
    // Predicated region
    $region9: #{cqcc_forward.22} parent=5 // pred_check
      _
    $region10: #{cqcc_forward.22} parent=5 // pred_check_branch
      %138 = sbr.rel (%p135) target = $region12
    $region11: #{cqcc_forward.22} parent=5 // pred_region
      %s139 = ssub.s32 %s10, 1
      // Predicated region
      $region13: #{cqcc_forward.22} parent=11 // pred_check
        %p140 = pneg %p57
      $region14: #{cqcc_forward.22} parent=11 // pred_check_branch
        %142 = sbr.rel (%p140) target = $region16
      $region15: #{cqcc_forward.22} parent=11 // pred_region
        _
      $region16: #{cqcc_forward.22} parent=11 // pred_fallthru
        _
      // Predicated region
      $region17: #{cqcc_forward.22} parent=11 // pred_check
        %p143 = pneg %p78
      $region18: #{cqcc_forward.22} parent=11 // pred_check_branch
        %145 = sbr.rel (%p143) target = $region20
      $region19: #{cqcc_forward.22} parent=11 // pred_region
        _
      $region20: #{cqcc_forward.22} parent=11 // pred_fallthru
        _
      // Predicated region
      $region21: #{cqcc_forward.22} parent=11 // pred_check
        %p146 = pneg %p99
      $region22: #{cqcc_forward.22} parent=11 // pred_check_branch
        %148 = sbr.rel (%p146) target = $region24
      $region23: #{cqcc_forward.22} parent=11 // pred_region
        _
      $region24: #{cqcc_forward.22} parent=11 // pred_fallthru
        _
    $region12: #{cqcc_forward.22} parent=5 // pred_fallthru
      _
    %p149 = scmp.lt.s32.totalorder %s10, 2
    // Predicated region
    $region25: #{cqcc_forward.22} parent=5 // pred_check
      %p150 = pneg %p149
    $region26: #{cqcc_forward.22} parent=5 // pred_check_branch
      %152 = sbr.rel (%p150) target = $region28
    $region27: #{cqcc_forward.22} parent=5 // pred_region
      // Predicated region
      $region29: #{cqcc_forward.22} parent=27 // pred_check
        %p153 = pneg %p30
      $region30: #{cqcc_forward.22} parent=27 // pred_check_branch
        %155 = sbr.rel (%p153) target = $region32
      $region31: #{cqcc_forward.22} parent=27 // pred_region
        %p156 = scmp.lt.s32.totalorder %s10, 1
        %s157 = scalar_select %p156, %s10, 1
        %s158 = smul.addr %s157, 54
        %s159 = smul.addr %s158, 8
        %s160 = scalar_lea.vmem %s0, %s159
      $region32: #{cqcc_forward.22} parent=27 // pred_fallthru
        _
    $region28: #{cqcc_forward.22} parent=5 // pred_fallthru
      _
    %p161 = scmp.le.s32.totalorder 1, %s10
    %p162 = scmp.lt.s32.totalorder %s10, 3
    %p163 = pnand %p161, %p162
    %p164 = pneg %p163
    // Predicated region
    $region33: #{cqcc_forward.22} parent=5 // pred_check
      _
    $region34: #{cqcc_forward.22} parent=5 // pred_check_branch
      %166 = sbr.rel (%p163) target = $region36
    $region35: #{cqcc_forward.22} parent=5 // pred_region
      %s167 = ssub.s32 %s10, 1
      %p168 = scmp.lt.s32.totalorder %s15, 1
      %s169 = scalar_select %p168, %s15, 1
      %s170 = smul.addr %s169, 54
      %s171 = smul.addr %s170, 8
      %s172 = scalar_lea.vmem %s0, %s171
      %p173 = pneg %p36
      %p174 = pneg %p33
      %p175 = pneg %p57
      %p176 = pneg %p54
      %p177 = pneg %p78
      %p178 = pneg %p75
      %p179 = pneg %p99
      %p180 = pneg %p96
      %p181 = pneg %p125
      %p182 = pneg %p122
      %p183 = scmp.lt.s32.totalorder %s15, 1
      %s184 = scalar_select %p183, %s15, 1
      %s185 = smul.addr %s184, 32
      %s186 = smul.addr %s185, 8
      %s187 = scalar_lea.vmem %s4, %s186
      %p188 = scmp.lt.s32.totalorder %s15, 1
      %s189 = scalar_select %p188, %s15, 1
      %s190 = smul.addr %s189, 54
      %s191 = smul.addr %s190, 8
      %s192 = scalar_lea.vmem %s0, %s191
      %p193 = scmp.lt.s32.totalorder %s15, 1
      %s194 = scalar_select %p193, %s15, 1
      %s195 = smul.addr %s194, 32
      %s196 = smul.addr %s195, 8
      %s197 = scalar_lea.vmem %s4, %s196
      %v198 = vld [vmem:[%s192] sm:$0xff]
      %v199 = vld [vmem:[%s192 + $0x8] sm:$0xff]
      %v200 = vld [vmem:[%s192 + $0x18] sm:$0xff]
      %v201 = vld [vmem:[%s192 + $0x20] sm:$0xff]
      %v202 = vld [vmem:[%s192 + $0x30] sm:$0xff]
      %v203 = vld [vmem:[%s192 + $0x38] sm:$0xff]
      %v204 = vld [vmem:[%s192 + $0x48] sm:$0xff]
      %v205 = vld [vmem:[%s192 + $0x50] sm:$0xff]
      %v206 = vld [vmem:[%s192 + $0x60] sm:$0xff]
      %v207 = vld [vmem:[%s192 + $0x68] sm:$0xff]
      %v208 = vld [vmem:[%s192 + $0x78] sm:$0xff]
      %v209 = vld [vmem:[%s192 + $0x80] sm:$0xff]
      %v210 = vld [vmem:[%s192 + $0x90] sm:$0xff]
      %v211 = vld [vmem:[%s192 + $0x98] sm:$0xff]
      %v212 = vld [vmem:[%s192 + $0xa8] sm:$0xff]
      %v213 = vld [vmem:[%s192 + $0xb0] sm:$0xff]
      %v214 = vld [vmem:[%s192 + $0xc0] sm:$0xff]
      %v215 = vld [vmem:[%s192 + $0xc8] sm:$0xff]
      %v216 = vld [vmem:[%s192 + $0xd8] sm:$0xff]
      %v217 = vld [vmem:[%s192 + $0xe0] sm:$0xff]
      %v218 = vld [vmem:[%s192 + $0xf0] sm:$0xff]
      %v219 = vld [vmem:[%s192 + $0xf8] sm:$0xff]
      %v220 = vld [vmem:[%s192 + $0x108] sm:$0xff]
      %v221 = vld [vmem:[%s192 + $0x110] sm:$0xff]
      %v222 = vld [vmem:[%s192 + $0x120] sm:$0xff]
      %v223 = vld [vmem:[%s192 + $0x128] sm:$0xff]
      %v224 = vld [vmem:[%s192 + $0x138] sm:$0xff]
      %v225 = vld [vmem:[%s192 + $0x140] sm:$0xff]
      %v226 = vld [vmem:[%s192 + $0x150] sm:$0xff]
      %v227 = vld [vmem:[%s192 + $0x158] sm:$0xff]
      %v228 = vld [vmem:[%s192 + $0x168] sm:$0xff]
      %v229 = vld [vmem:[%s192 + $0x170] sm:$0xff]
      %v230 = vld [vmem:[%s192 + $0x1] sm:$0xff]
      %v231 = vld [vmem:[%s192 + $0x9] sm:$0xff]
      %v232 = vld [vmem:[%s192 + $0x19] sm:$0xff]
      %v233 = vld [vmem:[%s192 + $0x21] sm:$0xff]
      %v234 = vld [vmem:[%s192 + $0x31] sm:$0xff]
      %v235 = vld [vmem:[%s192 + $0x39] sm:$0xff]
      %v236 = vld [vmem:[%s192 + $0x49] sm:$0xff]
      %v237 = vld [vmem:[%s192 + $0x51] sm:$0xff]
      %v238 = vld [vmem:[%s192 + $0x61] sm:$0xff]
      %v239 = vld [vmem:[%s192 + $0x69] sm:$0xff]
      %v240 = vld [vmem:[%s192 + $0x79] sm:$0xff]
      %v241 = vld [vmem:[%s192 + $0x81] sm:$0xff]
      %v242 = vld [vmem:[%s192 + $0x91] sm:$0xff]
      %v243 = vld [vmem:[%s192 + $0x99] sm:$0xff]
      %v244 = vld [vmem:[%s192 + $0xa9] sm:$0xff]
      %v245 = vld [vmem:[%s192 + $0xb1] sm:$0xff]
      %v246 = vld [vmem:[%s192 + $0xc1] sm:$0xff]
      %v247 = vld [vmem:[%s192 + $0xc9] sm:$0xff]
      %v248 = vld [vmem:[%s192 + $0xd9] sm:$0xff]
      %v249 = vld [vmem:[%s192 + $0xe1] sm:$0xff]
      %v250 = vld [vmem:[%s192 + $0xf1] sm:$0xff]
      %v251 = vld [vmem:[%s192 + $0xf9] sm:$0xff]
      %v252 = vld [vmem:[%s192 + $0x109] sm:$0xff]
      %v253 = vld [vmem:[%s192 + $0x111] sm:$0xff]
      %v254 = vld [vmem:[%s192 + $0x121] sm:$0xff]
      %v255 = vld [vmem:[%s192 + $0x129] sm:$0xff]
      %v256 = vld [vmem:[%s192 + $0x139] sm:$0xff]
      %v257 = vld [vmem:[%s192 + $0x141] sm:$0xff]
      %v258 = vld [vmem:[%s192 + $0x151] sm:$0xff]
      %v259 = vld [vmem:[%s192 + $0x159] sm:$0xff]
      %v260 = vld [vmem:[%s192 + $0x169] sm:$0xff]
      %v261 = vld [vmem:[%s192 + $0x171] sm:$0xff]
      %v262 = vld [vmem:[%s192 + $0x2] sm:$0xff]
      %v263 = vld [vmem:[%s192 + $0xa] sm:$0xff]
      %v264 = vld [vmem:[%s192 + $0x1a] sm:$0xff]
      %v265 = vld [vmem:[%s192 + $0x22] sm:$0xff]
      %v266 = vld [vmem:[%s192 + $0x32] sm:$0xff]
      %v267 = vld [vmem:[%s192 + $0x3a] sm:$0xff]
      %v268 = vld [vmem:[%s192 + $0x4a] sm:$0xff]
      %v269 = vld [vmem:[%s192 + $0x52] sm:$0xff]
      %v270 = vld [vmem:[%s192 + $0x62] sm:$0xff]
      %v271 = vld [vmem:[%s192 + $0x6a] sm:$0xff]
      %v272 = vld [vmem:[%s192 + $0x7a] sm:$0xff]
      %v273 = vld [vmem:[%s192 + $0x82] sm:$0xff]
      %v274 = vld [vmem:[%s192 + $0x92] sm:$0xff]
      %v275 = vld [vmem:[%s192 + $0x9a] sm:$0xff]
      %v276 = vld [vmem:[%s192 + $0xaa] sm:$0xff]
      %v277 = vld [vmem:[%s192 + $0xb2] sm:$0xff]
      %v278 = vld [vmem:[%s192 + $0xc2] sm:$0xff]
      %v279 = vld [vmem:[%s192 + $0xca] sm:$0xff]
      %v280 = vld [vmem:[%s192 + $0xda] sm:$0xff]
      %v281 = vld [vmem:[%s192 + $0xe2] sm:$0xff]
      %v282 = vld [vmem:[%s192 + $0xf2] sm:$0xff]
      %v283 = vld [vmem:[%s192 + $0xfa] sm:$0xff]
      %v284 = vld [vmem:[%s192 + $0x10a] sm:$0xff]
      %v285 = vld [vmem:[%s192 + $0x112] sm:$0xff]
      %v286 = vld [vmem:[%s192 + $0x122] sm:$0xff]
      %v287 = vld [vmem:[%s192 + $0x12a] sm:$0xff]
      %v288 = vld [vmem:[%s192 + $0x13a] sm:$0xff]
      %v289 = vld [vmem:[%s192 + $0x142] sm:$0xff]
      %v290 = vld [vmem:[%s192 + $0x152] sm:$0xff]
      %v291 = vld [vmem:[%s192 + $0x15a] sm:$0xff]
      %v292 = vld [vmem:[%s192 + $0x16a] sm:$0xff]
      %v293 = vld [vmem:[%s192 + $0x172] sm:$0xff]
      %s294 = scalar_lea.vmem %s192, 24
      %v295 = vld [vmem:[%s294] sm:$0xff]
      %v296 = vld [vmem:[%s294 + $0x8] sm:$0xff]
      %v297 = vld [vmem:[%s294 + $0x18] sm:$0xff]
      %v298 = vld [vmem:[%s294 + $0x20] sm:$0xff]
      %v299 = vld [vmem:[%s294 + $0x30] sm:$0xff]
      %v300 = vld [vmem:[%s294 + $0x38] sm:$0xff]
      %v301 = vld [vmem:[%s294 + $0x48] sm:$0xff]
      %v302 = vld [vmem:[%s294 + $0x50] sm:$0xff]
      %v303 = vld [vmem:[%s294 + $0x60] sm:$0xff]
      %v304 = vld [vmem:[%s294 + $0x68] sm:$0xff]
      %v305 = vld [vmem:[%s294 + $0x78] sm:$0xff]
      %v306 = vld [vmem:[%s294 + $0x80] sm:$0xff]
      %v307 = vld [vmem:[%s294 + $0x90] sm:$0xff]
      %v308 = vld [vmem:[%s294 + $0x98] sm:$0xff]
      %v309 = vld [vmem:[%s294 + $0xa8] sm:$0xff]
      %v310 = vld [vmem:[%s294 + $0xb0] sm:$0xff]
      %v311 = vld [vmem:[%s294 + $0xc0] sm:$0xff]
      %v312 = vld [vmem:[%s294 + $0xc8] sm:$0xff]
      %v313 = vld [vmem:[%s294 + $0xd8] sm:$0xff]
      %v314 = vld [vmem:[%s294 + $0xe0] sm:$0xff]
      %v315 = vld [vmem:[%s294 + $0xf0] sm:$0xff]
      %v316 = vld [vmem:[%s294 + $0xf8] sm:$0xff]
      %v317 = vld [vmem:[%s294 + $0x108] sm:$0xff]
      %v318 = vld [vmem:[%s294 + $0x110] sm:$0xff]
      %v319 = vld [vmem:[%s294 + $0x120] sm:$0xff]
      %v320 = vld [vmem:[%s294 + $0x128] sm:$0xff]
      %v321 = vld [vmem:[%s294 + $0x138] sm:$0xff]
      %v322 = vld [vmem:[%s294 + $0x140] sm:$0xff]
      %v323 = vld [vmem:[%s294 + $0x150] sm:$0xff]
      %v324 = vld [vmem:[%s294 + $0x158] sm:$0xff]
      %v325 = vld [vmem:[%s294 + $0x168] sm:$0xff]
      %v326 = vld [vmem:[%s294 + $0x170] sm:$0xff]
      %v327 = vld [vmem:[%s294 + $0x1] sm:$0xff]
      %v328 = vld [vmem:[%s294 + $0x9] sm:$0xff]
      %v329 = vld [vmem:[%s294 + $0x19] sm:$0xff]
      %v330 = vld [vmem:[%s294 + $0x21] sm:$0xff]
      %v331 = vld [vmem:[%s294 + $0x31] sm:$0xff]
      %v332 = vld [vmem:[%s294 + $0x39] sm:$0xff]
      %v333 = vld [vmem:[%s294 + $0x49] sm:$0xff]
      %v334 = vld [vmem:[%s294 + $0x51] sm:$0xff]
      %v335 = vld [vmem:[%s294 + $0x61] sm:$0xff]
      %v336 = vld [vmem:[%s294 + $0x69] sm:$0xff]
      %v337 = vld [vmem:[%s294 + $0x79] sm:$0xff]
      %v338 = vld [vmem:[%s294 + $0x81] sm:$0xff]
      %v339 = vld [vmem:[%s294 + $0x91] sm:$0xff]
      %v340 = vld [vmem:[%s294 + $0x99] sm:$0xff]
      %v341 = vld [vmem:[%s294 + $0xa9] sm:$0xff]
      %v342 = vld [vmem:[%s294 + $0xb1] sm:$0xff]
      %v343 = vld [vmem:[%s294 + $0xc1] sm:$0xff]
      %v344 = vld [vmem:[%s294 + $0xc9] sm:$0xff]
      %v345 = vld [vmem:[%s294 + $0xd9] sm:$0xff]
      %v346 = vld [vmem:[%s294 + $0xe1] sm:$0xff]
      %v347 = vld [vmem:[%s294 + $0xf1] sm:$0xff]
      %v348 = vld [vmem:[%s294 + $0xf9] sm:$0xff]
      %v349 = vld [vmem:[%s294 + $0x109] sm:$0xff]
      %v350 = vld [vmem:[%s294 + $0x111] sm:$0xff]
      %v351 = vld [vmem:[%s294 + $0x121] sm:$0xff]
      %v352 = vld [vmem:[%s294 + $0x129] sm:$0xff]
      %v353 = vld [vmem:[%s294 + $0x139] sm:$0xff]
      %v354 = vld [vmem:[%s294 + $0x141] sm:$0xff]
      %v355 = vld [vmem:[%s294 + $0x151] sm:$0xff]
      %v356 = vld [vmem:[%s294 + $0x159] sm:$0xff]
      %v357 = vld [vmem:[%s294 + $0x169] sm:$0xff]
      %v358 = vld [vmem:[%s294 + $0x171] sm:$0xff]
      %v359 = vld [vmem:[%s294 + $0x2] sm:$0xff]
      %v360 = vld [vmem:[%s294 + $0xa] sm:$0xff]
      %v361 = vld [vmem:[%s294 + $0x1a] sm:$0xff]
      %v362 = vld [vmem:[%s294 + $0x22] sm:$0xff]
      %v363 = vld [vmem:[%s294 + $0x32] sm:$0xff]
      %v364 = vld [vmem:[%s294 + $0x3a] sm:$0xff]
      %v365 = vld [vmem:[%s294 + $0x4a] sm:$0xff]
      %v366 = vld [vmem:[%s294 + $0x52] sm:$0xff]
      %v367 = vld [vmem:[%s294 + $0x62] sm:$0xff]
      %v368 = vld [vmem:[%s294 + $0x6a] sm:$0xff]
      %v369 = vld [vmem:[%s294 + $0x7a] sm:$0xff]
      %v370 = vld [vmem:[%s294 + $0x82] sm:$0xff]
      %v371 = vld [vmem:[%s294 + $0x92] sm:$0xff]
      %v372 = vld [vmem:[%s294 + $0x9a] sm:$0xff]
      %v373 = vld [vmem:[%s294 + $0xaa] sm:$0xff]
      %v374 = vld [vmem:[%s294 + $0xb2] sm:$0xff]
      %v375 = vld [vmem:[%s294 + $0xc2] sm:$0xff]
      %v376 = vld [vmem:[%s294 + $0xca] sm:$0xff]
      %v377 = vld [vmem:[%s294 + $0xda] sm:$0xff]
      %v378 = vld [vmem:[%s294 + $0xe2] sm:$0xff]
      %v379 = vld [vmem:[%s294 + $0xf2] sm:$0xff]
      %v380 = vld [vmem:[%s294 + $0xfa] sm:$0xff]
      %v381 = vld [vmem:[%s294 + $0x10a] sm:$0xff]
      %v382 = vld [vmem:[%s294 + $0x112] sm:$0xff]
      %v383 = vld [vmem:[%s294 + $0x122] sm:$0xff]
      %v384 = vld [vmem:[%s294 + $0x12a] sm:$0xff]
      %v385 = vld [vmem:[%s294 + $0x13a] sm:$0xff]
      %v386 = vld [vmem:[%s294 + $0x142] sm:$0xff]
      %v387 = vld [vmem:[%s294 + $0x152] sm:$0xff]
      %v388 = vld [vmem:[%s294 + $0x15a] sm:$0xff]
      %v389 = vld [vmem:[%s294 + $0x16a] sm:$0xff]
      %v390 = vld [vmem:[%s294 + $0x172] sm:$0xff]
      %s391 = scalar_lea.vmem %s192, 48
      %v392 = vld [vmem:[%s391] sm:$0xff]
      %v393 = vld [vmem:[%s391 + $0x8] sm:$0xff]
      %v394 = vld [vmem:[%s391 + $0x18] sm:$0xff]
      %v395 = vld [vmem:[%s391 + $0x20] sm:$0xff]
      %v396 = vld [vmem:[%s391 + $0x30] sm:$0xff]
      %v397 = vld [vmem:[%s391 + $0x38] sm:$0xff]
      %v398 = vld [vmem:[%s391 + $0x48] sm:$0xff]
      %v399 = vld [vmem:[%s391 + $0x50] sm:$0xff]
      %v400 = vld [vmem:[%s391 + $0x60] sm:$0xff]
      %v401 = vld [vmem:[%s391 + $0x68] sm:$0xff]
      %v402 = vld [vmem:[%s391 + $0x78] sm:$0xff]
      %v403 = vld [vmem:[%s391 + $0x80] sm:$0xff]
      %v404 = vld [vmem:[%s391 + $0x90] sm:$0xff]
      %v405 = vld [vmem:[%s391 + $0x98] sm:$0xff]
      %v406 = vld [vmem:[%s391 + $0xa8] sm:$0xff]
      %v407 = vld [vmem:[%s391 + $0xb0] sm:$0xff]
      %v408 = vld [vmem:[%s391 + $0xc0] sm:$0xff]
      %v409 = vld [vmem:[%s391 + $0xc8] sm:$0xff]
      %v410 = vld [vmem:[%s391 + $0xd8] sm:$0xff]
      %v411 = vld [vmem:[%s391 + $0xe0] sm:$0xff]
      %v412 = vld [vmem:[%s391 + $0xf0] sm:$0xff]
      %v413 = vld [vmem:[%s391 + $0xf8] sm:$0xff]
      %v414 = vld [vmem:[%s391 + $0x108] sm:$0xff]
      %v415 = vld [vmem:[%s391 + $0x110] sm:$0xff]
      %v416 = vld [vmem:[%s391 + $0x120] sm:$0xff]
      %v417 = vld [vmem:[%s391 + $0x128] sm:$0xff]
      %v418 = vld [vmem:[%s391 + $0x138] sm:$0xff]
      %v419 = vld [vmem:[%s391 + $0x140] sm:$0xff]
      %v420 = vld [vmem:[%s391 + $0x150] sm:$0xff]
      %v421 = vld [vmem:[%s391 + $0x158] sm:$0xff]
      %v422 = vld [vmem:[%s391 + $0x168] sm:$0xff]
      %v423 = vld [vmem:[%s391 + $0x170] sm:$0xff]
      %v424 = vld [vmem:[%s391 + $0x1] sm:$0xff]
      %v425 = vld [vmem:[%s391 + $0x9] sm:$0xff]
      %v426 = vld [vmem:[%s391 + $0x19] sm:$0xff]
      %v427 = vld [vmem:[%s391 + $0x21] sm:$0xff]
      %v428 = vld [vmem:[%s391 + $0x31] sm:$0xff]
      %v429 = vld [vmem:[%s391 + $0x39] sm:$0xff]
      %v430 = vld [vmem:[%s391 + $0x49] sm:$0xff]
      %v431 = vld [vmem:[%s391 + $0x51] sm:$0xff]
      %v432 = vld [vmem:[%s391 + $0x61] sm:$0xff]
      %v433 = vld [vmem:[%s391 + $0x69] sm:$0xff]
      %v434 = vld [vmem:[%s391 + $0x79] sm:$0xff]
      %v435 = vld [vmem:[%s391 + $0x81] sm:$0xff]
      %v436 = vld [vmem:[%s391 + $0x91] sm:$0xff]
      %v437 = vld [vmem:[%s391 + $0x99] sm:$0xff]
      %v438 = vld [vmem:[%s391 + $0xa9] sm:$0xff]
      %v439 = vld [vmem:[%s391 + $0xb1] sm:$0xff]
      %v440 = vld [vmem:[%s391 + $0xc1] sm:$0xff]
      %v441 = vld [vmem:[%s391 + $0xc9] sm:$0xff]
      %v442 = vld [vmem:[%s391 + $0xd9] sm:$0xff]
      %v443 = vld [vmem:[%s391 + $0xe1] sm:$0xff]
      %v444 = vld [vmem:[%s391 + $0xf1] sm:$0xff]
      %v445 = vld [vmem:[%s391 + $0xf9] sm:$0xff]
      %v446 = vld [vmem:[%s391 + $0x109] sm:$0xff]
      %v447 = vld [vmem:[%s391 + $0x111] sm:$0xff]
      %v448 = vld [vmem:[%s391 + $0x121] sm:$0xff]
      %v449 = vld [vmem:[%s391 + $0x129] sm:$0xff]
      %v450 = vld [vmem:[%s391 + $0x139] sm:$0xff]
      %v451 = vld [vmem:[%s391 + $0x141] sm:$0xff]
      %v452 = vld [vmem:[%s391 + $0x151] sm:$0xff]
      %v453 = vld [vmem:[%s391 + $0x159] sm:$0xff]
      %v454 = vld [vmem:[%s391 + $0x169] sm:$0xff]
      %v455 = vld [vmem:[%s391 + $0x171] sm:$0xff]
      %v456 = vld [vmem:[%s391 + $0x2] sm:$0xff]
      %v457 = vld [vmem:[%s391 + $0xa] sm:$0xff]
      %v458 = vld [vmem:[%s391 + $0x1a] sm:$0xff]
      %v459 = vld [vmem:[%s391 + $0x22] sm:$0xff]
      %v460 = vld [vmem:[%s391 + $0x32] sm:$0xff]
      %v461 = vld [vmem:[%s391 + $0x3a] sm:$0xff]
      %v462 = vld [vmem:[%s391 + $0x4a] sm:$0xff]
      %v463 = vld [vmem:[%s391 + $0x52] sm:$0xff]
      %v464 = vld [vmem:[%s391 + $0x62] sm:$0xff]
      %v465 = vld [vmem:[%s391 + $0x6a] sm:$0xff]
      %v466 = vld [vmem:[%s391 + $0x7a] sm:$0xff]
      %v467 = vld [vmem:[%s391 + $0x82] sm:$0xff]
      %v468 = vld [vmem:[%s391 + $0x92] sm:$0xff]
      %v469 = vld [vmem:[%s391 + $0x9a] sm:$0xff]
      %v470 = vld [vmem:[%s391 + $0xaa] sm:$0xff]
      %v471 = vld [vmem:[%s391 + $0xb2] sm:$0xff]
      %v472 = vld [vmem:[%s391 + $0xc2] sm:$0xff]
      %v473 = vld [vmem:[%s391 + $0xca] sm:$0xff]
      %v474 = vld [vmem:[%s391 + $0xda] sm:$0xff]
      %v475 = vld [vmem:[%s391 + $0xe2] sm:$0xff]
      %v476 = vld [vmem:[%s391 + $0xf2] sm:$0xff]
      %v477 = vld [vmem:[%s391 + $0xfa] sm:$0xff]
      %v478 = vld [vmem:[%s391 + $0x10a] sm:$0xff]
      %v479 = vld [vmem:[%s391 + $0x112] sm:$0xff]
      %v480 = vld [vmem:[%s391 + $0x122] sm:$0xff]
      %v481 = vld [vmem:[%s391 + $0x12a] sm:$0xff]
      %v482 = vld [vmem:[%s391 + $0x13a] sm:$0xff]
      %v483 = vld [vmem:[%s391 + $0x142] sm:$0xff]
      %v484 = vld [vmem:[%s391 + $0x152] sm:$0xff]
      %v485 = vld [vmem:[%s391 + $0x15a] sm:$0xff]
      %v486 = vld [vmem:[%s391 + $0x16a] sm:$0xff]
      %v487 = vld [vmem:[%s391 + $0x172] sm:$0xff]
      %520 = vrot.lane.b32.xlu0 %v230, 32
      %v521 = vpop.permute.xlu0 %520
      %522 = vrot.lane.b32.xlu0 %v231, 32
      %v523 = vpop.permute.xlu0 %522
      %524 = vrot.lane.b32.xlu0 %v232, 32
      %v525 = vpop.permute.xlu0 %524
      %526 = vrot.lane.b32.xlu0 %v233, 32
      %v527 = vpop.permute.xlu0 %526
      %528 = vrot.lane.b32.xlu0 %v234, 32
      %v529 = vpop.permute.xlu0 %528
      %530 = vrot.lane.b32.xlu0 %v235, 32
      %v531 = vpop.permute.xlu0 %530
      %532 = vrot.lane.b32.xlu0 %v236, 32
      %v533 = vpop.permute.xlu0 %532
      %534 = vrot.lane.b32.xlu0 %v237, 32
      %v535 = vpop.permute.xlu0 %534
      %536 = vrot.lane.b32.xlu0 %v238, 32
      %v537 = vpop.permute.xlu0 %536
      %538 = vrot.lane.b32.xlu0 %v239, 32
      %v539 = vpop.permute.xlu0 %538
      %540 = vrot.lane.b32.xlu0 %v240, 32
      %v541 = vpop.permute.xlu0 %540
      %542 = vrot.lane.b32.xlu0 %v241, 32
      %v543 = vpop.permute.xlu0 %542
      %544 = vrot.lane.b32.xlu0 %v242, 32
      %v545 = vpop.permute.xlu0 %544
      %546 = vrot.lane.b32.xlu0 %v243, 32
      %v547 = vpop.permute.xlu0 %546
      %548 = vrot.lane.b32.xlu0 %v244, 32
      %v549 = vpop.permute.xlu0 %548
      %550 = vrot.lane.b32.xlu0 %v245, 32
      %v551 = vpop.permute.xlu0 %550
      %552 = vrot.lane.b32.xlu0 %v246, 32
      %v553 = vpop.permute.xlu0 %552
      %554 = vrot.lane.b32.xlu0 %v247, 32
      %v555 = vpop.permute.xlu0 %554
      %556 = vrot.lane.b32.xlu0 %v248, 32
      %v557 = vpop.permute.xlu0 %556
      %558 = vrot.lane.b32.xlu0 %v249, 32
      %v559 = vpop.permute.xlu0 %558
      %560 = vrot.lane.b32.xlu0 %v250, 32
      %v561 = vpop.permute.xlu0 %560
      %562 = vrot.lane.b32.xlu0 %v251, 32
      %v563 = vpop.permute.xlu0 %562
      %564 = vrot.lane.b32.xlu0 %v252, 32
      %v565 = vpop.permute.xlu0 %564
      %566 = vrot.lane.b32.xlu0 %v253, 32
      %v567 = vpop.permute.xlu0 %566
      %568 = vrot.lane.b32.xlu0 %v254, 32
      %v569 = vpop.permute.xlu0 %568
      %570 = vrot.lane.b32.xlu0 %v255, 32
      %v571 = vpop.permute.xlu0 %570
      %572 = vrot.lane.b32.xlu0 %v256, 32
      %v573 = vpop.permute.xlu0 %572
      %574 = vrot.lane.b32.xlu0 %v257, 32
      %v575 = vpop.permute.xlu0 %574
      %576 = vrot.lane.b32.xlu0 %v258, 32
      %v577 = vpop.permute.xlu0 %576
      %578 = vrot.lane.b32.xlu0 %v259, 32
      %v579 = vpop.permute.xlu0 %578
      %580 = vrot.lane.b32.xlu0 %v260, 32
      %v581 = vpop.permute.xlu0 %580
      %582 = vrot.lane.b32.xlu0 %v261, 32
      %v583 = vpop.permute.xlu0 %582
      %648 = vrot.lane.b32.xlu0 %v262, 64
      %v649 = vpop.permute.xlu0 %648
      %650 = vrot.lane.b32.xlu0 %v263, 64
      %v651 = vpop.permute.xlu0 %650
      %652 = vrot.lane.b32.xlu0 %v264, 64
      %v653 = vpop.permute.xlu0 %652
      %654 = vrot.lane.b32.xlu0 %v265, 64
      %v655 = vpop.permute.xlu0 %654
      %656 = vrot.lane.b32.xlu0 %v266, 64
      %v657 = vpop.permute.xlu0 %656
      %658 = vrot.lane.b32.xlu0 %v267, 64
      %v659 = vpop.permute.xlu0 %658
      %660 = vrot.lane.b32.xlu0 %v268, 64
      %v661 = vpop.permute.xlu0 %660
      %662 = vrot.lane.b32.xlu0 %v269, 64
      %v663 = vpop.permute.xlu0 %662
      %664 = vrot.lane.b32.xlu0 %v270, 64
      %v665 = vpop.permute.xlu0 %664
      %666 = vrot.lane.b32.xlu0 %v271, 64
      %v667 = vpop.permute.xlu0 %666
      %668 = vrot.lane.b32.xlu0 %v272, 64
      %v669 = vpop.permute.xlu0 %668
      %670 = vrot.lane.b32.xlu0 %v273, 64
      %v671 = vpop.permute.xlu0 %670
      %672 = vrot.lane.b32.xlu0 %v274, 64
      %v673 = vpop.permute.xlu0 %672
      %674 = vrot.lane.b32.xlu0 %v275, 64
      %v675 = vpop.permute.xlu0 %674
      %676 = vrot.lane.b32.xlu0 %v276, 64
      %v677 = vpop.permute.xlu0 %676
      %678 = vrot.lane.b32.xlu0 %v277, 64
      %v679 = vpop.permute.xlu0 %678
      %680 = vrot.lane.b32.xlu0 %v278, 64
      %v681 = vpop.permute.xlu0 %680
      %682 = vrot.lane.b32.xlu0 %v279, 64
      %v683 = vpop.permute.xlu0 %682
      %684 = vrot.lane.b32.xlu0 %v280, 64
      %v685 = vpop.permute.xlu0 %684
      %686 = vrot.lane.b32.xlu0 %v281, 64
      %v687 = vpop.permute.xlu0 %686
      %688 = vrot.lane.b32.xlu0 %v282, 64
      %v689 = vpop.permute.xlu0 %688
      %690 = vrot.lane.b32.xlu0 %v283, 64
      %v691 = vpop.permute.xlu0 %690
      %692 = vrot.lane.b32.xlu0 %v284, 64
      %v693 = vpop.permute.xlu0 %692
      %694 = vrot.lane.b32.xlu0 %v285, 64
      %v695 = vpop.permute.xlu0 %694
      %696 = vrot.lane.b32.xlu0 %v286, 64
      %v697 = vpop.permute.xlu0 %696
      %698 = vrot.lane.b32.xlu0 %v287, 64
      %v699 = vpop.permute.xlu0 %698
      %700 = vrot.lane.b32.xlu0 %v288, 64
      %v701 = vpop.permute.xlu0 %700
      %702 = vrot.lane.b32.xlu0 %v289, 64
      %v703 = vpop.permute.xlu0 %702
      %704 = vrot.lane.b32.xlu0 %v290, 64
      %v705 = vpop.permute.xlu0 %704
      %706 = vrot.lane.b32.xlu0 %v291, 64
      %v707 = vpop.permute.xlu0 %706
      %708 = vrot.lane.b32.xlu0 %v292, 64
      %v709 = vpop.permute.xlu0 %708
      %710 = vrot.lane.b32.xlu0 %v293, 64
      %v711 = vpop.permute.xlu0 %710
      %776 = vrot.lane.b32.xlu0 %v295, 96
      %v777 = vpop.permute.xlu0 %776
      %778 = vrot.lane.b32.xlu0 %v296, 96
      %v779 = vpop.permute.xlu0 %778
      %780 = vrot.lane.b32.xlu0 %v297, 96
      %v781 = vpop.permute.xlu0 %780
      %782 = vrot.lane.b32.xlu0 %v298, 96
      %v783 = vpop.permute.xlu0 %782
      %784 = vrot.lane.b32.xlu0 %v299, 96
      %v785 = vpop.permute.xlu0 %784
      %786 = vrot.lane.b32.xlu0 %v300, 96
      %v787 = vpop.permute.xlu0 %786
      %788 = vrot.lane.b32.xlu0 %v301, 96
      %v789 = vpop.permute.xlu0 %788
      %790 = vrot.lane.b32.xlu0 %v302, 96
      %v791 = vpop.permute.xlu0 %790
      %792 = vrot.lane.b32.xlu0 %v303, 96
      %v793 = vpop.permute.xlu0 %792
      %794 = vrot.lane.b32.xlu0 %v304, 96
      %v795 = vpop.permute.xlu0 %794
      %796 = vrot.lane.b32.xlu0 %v305, 96
      %v797 = vpop.permute.xlu0 %796
      %798 = vrot.lane.b32.xlu0 %v306, 96
      %v799 = vpop.permute.xlu0 %798
      %800 = vrot.lane.b32.xlu0 %v307, 96
      %v801 = vpop.permute.xlu0 %800
      %802 = vrot.lane.b32.xlu0 %v308, 96
      %v803 = vpop.permute.xlu0 %802
      %804 = vrot.lane.b32.xlu0 %v309, 96
      %v805 = vpop.permute.xlu0 %804
      %806 = vrot.lane.b32.xlu0 %v310, 96
      %v807 = vpop.permute.xlu0 %806
      %808 = vrot.lane.b32.xlu0 %v311, 96
      %v809 = vpop.permute.xlu0 %808
      %810 = vrot.lane.b32.xlu0 %v312, 96
      %v811 = vpop.permute.xlu0 %810
      %812 = vrot.lane.b32.xlu0 %v313, 96
      %v813 = vpop.permute.xlu0 %812
      %814 = vrot.lane.b32.xlu0 %v314, 96
      %v815 = vpop.permute.xlu0 %814
      %816 = vrot.lane.b32.xlu0 %v315, 96
      %v817 = vpop.permute.xlu0 %816
      %818 = vrot.lane.b32.xlu0 %v316, 96
      %v819 = vpop.permute.xlu0 %818
      %820 = vrot.lane.b32.xlu0 %v317, 96
      %v821 = vpop.permute.xlu0 %820
      %822 = vrot.lane.b32.xlu0 %v318, 96
      %v823 = vpop.permute.xlu0 %822
      %824 = vrot.lane.b32.xlu0 %v319, 96
      %v825 = vpop.permute.xlu0 %824
      %826 = vrot.lane.b32.xlu0 %v320, 96
      %v827 = vpop.permute.xlu0 %826
      %828 = vrot.lane.b32.xlu0 %v321, 96
      %v829 = vpop.permute.xlu0 %828
      %830 = vrot.lane.b32.xlu0 %v322, 96
      %v831 = vpop.permute.xlu0 %830
      %832 = vrot.lane.b32.xlu0 %v323, 96
      %v833 = vpop.permute.xlu0 %832
      %834 = vrot.lane.b32.xlu0 %v324, 96
      %v835 = vpop.permute.xlu0 %834
      %836 = vrot.lane.b32.xlu0 %v325, 96
      %v837 = vpop.permute.xlu0 %836
      %838 = vrot.lane.b32.xlu0 %v326, 96
      %v839 = vpop.permute.xlu0 %838
      %904 = vrot.lane.b32.xlu0 %v359, 32
      %v905 = vpop.permute.xlu0 %904
      %906 = vrot.lane.b32.xlu0 %v360, 32
      %v907 = vpop.permute.xlu0 %906
      %908 = vrot.lane.b32.xlu0 %v361, 32
      %v909 = vpop.permute.xlu0 %908
      %910 = vrot.lane.b32.xlu0 %v362, 32
      %v911 = vpop.permute.xlu0 %910
      %912 = vrot.lane.b32.xlu0 %v363, 32
      %v913 = vpop.permute.xlu0 %912
      %914 = vrot.lane.b32.xlu0 %v364, 32
      %v915 = vpop.permute.xlu0 %914
      %916 = vrot.lane.b32.xlu0 %v365, 32
      %v917 = vpop.permute.xlu0 %916
      %918 = vrot.lane.b32.xlu0 %v366, 32
      %v919 = vpop.permute.xlu0 %918
      %920 = vrot.lane.b32.xlu0 %v367, 32
      %v921 = vpop.permute.xlu0 %920
      %922 = vrot.lane.b32.xlu0 %v368, 32
      %v923 = vpop.permute.xlu0 %922
      %924 = vrot.lane.b32.xlu0 %v369, 32
      %v925 = vpop.permute.xlu0 %924
      %926 = vrot.lane.b32.xlu0 %v370, 32
      %v927 = vpop.permute.xlu0 %926
      %928 = vrot.lane.b32.xlu0 %v371, 32
      %v929 = vpop.permute.xlu0 %928
      %930 = vrot.lane.b32.xlu0 %v372, 32
      %v931 = vpop.permute.xlu0 %930
      %932 = vrot.lane.b32.xlu0 %v373, 32
      %v933 = vpop.permute.xlu0 %932
      %934 = vrot.lane.b32.xlu0 %v374, 32
      %v935 = vpop.permute.xlu0 %934
      %936 = vrot.lane.b32.xlu0 %v375, 32
      %v937 = vpop.permute.xlu0 %936
      %938 = vrot.lane.b32.xlu0 %v376, 32
      %v939 = vpop.permute.xlu0 %938
      %940 = vrot.lane.b32.xlu0 %v377, 32
      %v941 = vpop.permute.xlu0 %940
      %942 = vrot.lane.b32.xlu0 %v378, 32
      %v943 = vpop.permute.xlu0 %942
      %944 = vrot.lane.b32.xlu0 %v379, 32
      %v945 = vpop.permute.xlu0 %944
      %946 = vrot.lane.b32.xlu0 %v380, 32
      %v947 = vpop.permute.xlu0 %946
      %948 = vrot.lane.b32.xlu0 %v381, 32
      %v949 = vpop.permute.xlu0 %948
      %950 = vrot.lane.b32.xlu0 %v382, 32
      %v951 = vpop.permute.xlu0 %950
      %952 = vrot.lane.b32.xlu0 %v383, 32
      %v953 = vpop.permute.xlu0 %952
      %954 = vrot.lane.b32.xlu0 %v384, 32
      %v955 = vpop.permute.xlu0 %954
      %956 = vrot.lane.b32.xlu0 %v385, 32
      %v957 = vpop.permute.xlu0 %956
      %958 = vrot.lane.b32.xlu0 %v386, 32
      %v959 = vpop.permute.xlu0 %958
      %960 = vrot.lane.b32.xlu0 %v387, 32
      %v961 = vpop.permute.xlu0 %960
      %962 = vrot.lane.b32.xlu0 %v388, 32
      %v963 = vpop.permute.xlu0 %962
      %964 = vrot.lane.b32.xlu0 %v389, 32
      %v965 = vpop.permute.xlu0 %964
      %966 = vrot.lane.b32.xlu0 %v390, 32
      %v967 = vpop.permute.xlu0 %966
      %1032 = vrot.lane.b32.xlu0 %v392, 64
      %v1033 = vpop.permute.xlu0 %1032
      %1034 = vrot.lane.b32.xlu0 %v393, 64
      %v1035 = vpop.permute.xlu0 %1034
      %1036 = vrot.lane.b32.xlu0 %v394, 64
      %v1037 = vpop.permute.xlu0 %1036
      %1038 = vrot.lane.b32.xlu0 %v395, 64
      %v1039 = vpop.permute.xlu0 %1038
      %1040 = vrot.lane.b32.xlu0 %v396, 64
      %v1041 = vpop.permute.xlu0 %1040
      %1042 = vrot.lane.b32.xlu0 %v397, 64
      %v1043 = vpop.permute.xlu0 %1042
      %1044 = vrot.lane.b32.xlu0 %v398, 64
      %v1045 = vpop.permute.xlu0 %1044
      %1046 = vrot.lane.b32.xlu0 %v399, 64
      %v1047 = vpop.permute.xlu0 %1046
      %1048 = vrot.lane.b32.xlu0 %v400, 64
      %v1049 = vpop.permute.xlu0 %1048
      %1050 = vrot.lane.b32.xlu0 %v401, 64
      %v1051 = vpop.permute.xlu0 %1050
      %1052 = vrot.lane.b32.xlu0 %v402, 64
      %v1053 = vpop.permute.xlu0 %1052
      %1054 = vrot.lane.b32.xlu0 %v403, 64
      %v1055 = vpop.permute.xlu0 %1054
      %1056 = vrot.lane.b32.xlu0 %v404, 64
      %v1057 = vpop.permute.xlu0 %1056
      %1058 = vrot.lane.b32.xlu0 %v405, 64
      %v1059 = vpop.permute.xlu0 %1058
      %1060 = vrot.lane.b32.xlu0 %v406, 64
      %v1061 = vpop.permute.xlu0 %1060
      %1062 = vrot.lane.b32.xlu0 %v407, 64
      %v1063 = vpop.permute.xlu0 %1062
      %1064 = vrot.lane.b32.xlu0 %v408, 64
      %v1065 = vpop.permute.xlu0 %1064
      %1066 = vrot.lane.b32.xlu0 %v409, 64
      %v1067 = vpop.permute.xlu0 %1066
      %1068 = vrot.lane.b32.xlu0 %v410, 64
      %v1069 = vpop.permute.xlu0 %1068
      %1070 = vrot.lane.b32.xlu0 %v411, 64
      %v1071 = vpop.permute.xlu0 %1070
      %1072 = vrot.lane.b32.xlu0 %v412, 64
      %v1073 = vpop.permute.xlu0 %1072
      %1074 = vrot.lane.b32.xlu0 %v413, 64
      %v1075 = vpop.permute.xlu0 %1074
      %1076 = vrot.lane.b32.xlu0 %v414, 64
      %v1077 = vpop.permute.xlu0 %1076
      %1078 = vrot.lane.b32.xlu0 %v415, 64
      %v1079 = vpop.permute.xlu0 %1078
      %1080 = vrot.lane.b32.xlu0 %v416, 64
      %v1081 = vpop.permute.xlu0 %1080
      %1082 = vrot.lane.b32.xlu0 %v417, 64
      %v1083 = vpop.permute.xlu0 %1082
      %1084 = vrot.lane.b32.xlu0 %v418, 64
      %v1085 = vpop.permute.xlu0 %1084
      %1086 = vrot.lane.b32.xlu0 %v419, 64
      %v1087 = vpop.permute.xlu0 %1086
      %1088 = vrot.lane.b32.xlu0 %v420, 64
      %v1089 = vpop.permute.xlu0 %1088
      %1090 = vrot.lane.b32.xlu0 %v421, 64
      %v1091 = vpop.permute.xlu0 %1090
      %1092 = vrot.lane.b32.xlu0 %v422, 64
      %v1093 = vpop.permute.xlu0 %1092
      %1094 = vrot.lane.b32.xlu0 %v423, 64
      %v1095 = vpop.permute.xlu0 %1094
      %1160 = vrot.lane.b32.xlu0 %v424, 96
      %v1161 = vpop.permute.xlu0 %1160
      %1162 = vrot.lane.b32.xlu0 %v425, 96
      %v1163 = vpop.permute.xlu0 %1162
      %1164 = vrot.lane.b32.xlu0 %v426, 96
      %v1165 = vpop.permute.xlu0 %1164
      %1166 = vrot.lane.b32.xlu0 %v427, 96
      %v1167 = vpop.permute.xlu0 %1166
      %1168 = vrot.lane.b32.xlu0 %v428, 96
      %v1169 = vpop.permute.xlu0 %1168
      %1170 = vrot.lane.b32.xlu0 %v429, 96
      %v1171 = vpop.permute.xlu0 %1170
      %1172 = vrot.lane.b32.xlu0 %v430, 96
      %v1173 = vpop.permute.xlu0 %1172
      %1174 = vrot.lane.b32.xlu0 %v431, 96
      %v1175 = vpop.permute.xlu0 %1174
      %1176 = vrot.lane.b32.xlu0 %v432, 96
      %v1177 = vpop.permute.xlu0 %1176
      %1178 = vrot.lane.b32.xlu0 %v433, 96
      %v1179 = vpop.permute.xlu0 %1178
      %1180 = vrot.lane.b32.xlu0 %v434, 96
      %v1181 = vpop.permute.xlu0 %1180
      %1182 = vrot.lane.b32.xlu0 %v435, 96
      %v1183 = vpop.permute.xlu0 %1182
      %1184 = vrot.lane.b32.xlu0 %v436, 96
      %v1185 = vpop.permute.xlu0 %1184
      %1186 = vrot.lane.b32.xlu0 %v437, 96
      %v1187 = vpop.permute.xlu0 %1186
      %1188 = vrot.lane.b32.xlu0 %v438, 96
      %v1189 = vpop.permute.xlu0 %1188
      %1190 = vrot.lane.b32.xlu0 %v439, 96
      %v1191 = vpop.permute.xlu0 %1190
      %1192 = vrot.lane.b32.xlu0 %v440, 96
      %v1193 = vpop.permute.xlu0 %1192
      %1194 = vrot.lane.b32.xlu0 %v441, 96
      %v1195 = vpop.permute.xlu0 %1194
      %1196 = vrot.lane.b32.xlu0 %v442, 96
      %v1197 = vpop.permute.xlu0 %1196
      %1198 = vrot.lane.b32.xlu0 %v443, 96
      %v1199 = vpop.permute.xlu0 %1198
      %1200 = vrot.lane.b32.xlu0 %v444, 96
      %v1201 = vpop.permute.xlu0 %1200
      %1202 = vrot.lane.b32.xlu0 %v445, 96
      %v1203 = vpop.permute.xlu0 %1202
      %1204 = vrot.lane.b32.xlu0 %v446, 96
      %v1205 = vpop.permute.xlu0 %1204
      %1206 = vrot.lane.b32.xlu0 %v447, 96
      %v1207 = vpop.permute.xlu0 %1206
      %1208 = vrot.lane.b32.xlu0 %v448, 96
      %v1209 = vpop.permute.xlu0 %1208
      %1210 = vrot.lane.b32.xlu0 %v449, 96
      %v1211 = vpop.permute.xlu0 %1210
      %1212 = vrot.lane.b32.xlu0 %v450, 96
      %v1213 = vpop.permute.xlu0 %1212
      %1214 = vrot.lane.b32.xlu0 %v451, 96
      %v1215 = vpop.permute.xlu0 %1214
      %1216 = vrot.lane.b32.xlu0 %v452, 96
      %v1217 = vpop.permute.xlu0 %1216
      %1218 = vrot.lane.b32.xlu0 %v453, 96
      %v1219 = vpop.permute.xlu0 %1218
      %1220 = vrot.lane.b32.xlu0 %v454, 96
      %v1221 = vpop.permute.xlu0 %1220
      %1222 = vrot.lane.b32.xlu0 %v455, 96
      %v1223 = vpop.permute.xlu0 %1222
      %vm1256 = vcmask 261120
      %v1257 = vsel %vm1256, %v198, %v521
      %v1258 = vsel %vm1256, %v199, %v523
      %v1259 = vsel %vm1256, %v200, %v525
      %v1260 = vsel %vm1256, %v201, %v527
      %v1261 = vsel %vm1256, %v202, %v529
      %v1262 = vsel %vm1256, %v203, %v531
      %v1263 = vsel %vm1256, %v204, %v533
      %v1264 = vsel %vm1256, %v205, %v535
      %v1265 = vsel %vm1256, %v206, %v537
      %v1266 = vsel %vm1256, %v207, %v539
      %v1267 = vsel %vm1256, %v208, %v541
      %v1268 = vsel %vm1256, %v209, %v543
      %v1269 = vsel %vm1256, %v210, %v545
      %v1270 = vsel %vm1256, %v211, %v547
      %v1271 = vsel %vm1256, %v212, %v549
      %v1272 = vsel %vm1256, %v213, %v551
      %v1273 = vsel %vm1256, %v214, %v553
      %v1274 = vsel %vm1256, %v215, %v555
      %v1275 = vsel %vm1256, %v216, %v557
      %v1276 = vsel %vm1256, %v217, %v559
      %v1277 = vsel %vm1256, %v218, %v561
      %v1278 = vsel %vm1256, %v219, %v563
      %v1279 = vsel %vm1256, %v220, %v565
      %v1280 = vsel %vm1256, %v221, %v567
      %v1281 = vsel %vm1256, %v222, %v569
      %v1282 = vsel %vm1256, %v223, %v571
      %v1283 = vsel %vm1256, %v224, %v573
      %v1284 = vsel %vm1256, %v225, %v575
      %v1285 = vsel %vm1256, %v226, %v577
      %v1286 = vsel %vm1256, %v227, %v579
      %v1287 = vsel %vm1256, %v228, %v581
      %v1288 = vsel %vm1256, %v229, %v583
      %vm1289 = vcmask 523264
      %v1290 = vsel %vm1289, %v1257, %v649
      %v1291 = vsel %vm1289, %v1258, %v651
      %v1292 = vsel %vm1289, %v1259, %v653
      %v1293 = vsel %vm1289, %v1260, %v655
      %v1294 = vsel %vm1289, %v1261, %v657
      %v1295 = vsel %vm1289, %v1262, %v659
      %v1296 = vsel %vm1289, %v1263, %v661
      %v1297 = vsel %vm1289, %v1264, %v663
      %v1298 = vsel %vm1289, %v1265, %v665
      %v1299 = vsel %vm1289, %v1266, %v667
      %v1300 = vsel %vm1289, %v1267, %v669
      %v1301 = vsel %vm1289, %v1268, %v671
      %v1302 = vsel %vm1289, %v1269, %v673
      %v1303 = vsel %vm1289, %v1270, %v675
      %v1304 = vsel %vm1289, %v1271, %v677
      %v1305 = vsel %vm1289, %v1272, %v679
      %v1306 = vsel %vm1289, %v1273, %v681
      %v1307 = vsel %vm1289, %v1274, %v683
      %v1308 = vsel %vm1289, %v1275, %v685
      %v1309 = vsel %vm1289, %v1276, %v687
      %v1310 = vsel %vm1289, %v1277, %v689
      %v1311 = vsel %vm1289, %v1278, %v691
      %v1312 = vsel %vm1289, %v1279, %v693
      %v1313 = vsel %vm1289, %v1280, %v695
      %v1314 = vsel %vm1289, %v1281, %v697
      %v1315 = vsel %vm1289, %v1282, %v699
      %v1316 = vsel %vm1289, %v1283, %v701
      %v1317 = vsel %vm1289, %v1284, %v703
      %v1318 = vsel %vm1289, %v1285, %v705
      %v1319 = vsel %vm1289, %v1286, %v707
      %v1320 = vsel %vm1289, %v1287, %v709
      %v1321 = vsel %vm1289, %v1288, %v711
      %vm1322 = vcmask 785408
      %v1323 = vsel %vm1322, %v1290, %v777
      %v1324 = vsel %vm1322, %v1291, %v779
      %v1325 = vsel %vm1322, %v1292, %v781
      %v1326 = vsel %vm1322, %v1293, %v783
      %v1327 = vsel %vm1322, %v1294, %v785
      %v1328 = vsel %vm1322, %v1295, %v787
      %v1329 = vsel %vm1322, %v1296, %v789
      %v1330 = vsel %vm1322, %v1297, %v791
      %v1331 = vsel %vm1322, %v1298, %v793
      %v1332 = vsel %vm1322, %v1299, %v795
      %v1333 = vsel %vm1322, %v1300, %v797
      %v1334 = vsel %vm1322, %v1301, %v799
      %v1335 = vsel %vm1322, %v1302, %v801
      %v1336 = vsel %vm1322, %v1303, %v803
      %v1337 = vsel %vm1322, %v1304, %v805
      %v1338 = vsel %vm1322, %v1305, %v807
      %v1339 = vsel %vm1322, %v1306, %v809
      %v1340 = vsel %vm1322, %v1307, %v811
      %v1341 = vsel %vm1322, %v1308, %v813
      %v1342 = vsel %vm1322, %v1309, %v815
      %v1343 = vsel %vm1322, %v1310, %v817
      %v1344 = vsel %vm1322, %v1311, %v819
      %v1345 = vsel %vm1322, %v1312, %v821
      %v1346 = vsel %vm1322, %v1313, %v823
      %v1347 = vsel %vm1322, %v1314, %v825
      %v1348 = vsel %vm1322, %v1315, %v827
      %v1349 = vsel %vm1322, %v1316, %v829
      %v1350 = vsel %vm1322, %v1317, %v831
      %v1351 = vsel %vm1322, %v1318, %v833
      %v1352 = vsel %vm1322, %v1319, %v835
      %v1353 = vsel %vm1322, %v1320, %v837
      %v1354 = vsel %vm1322, %v1321, %v839
      %v1355 = vsel %vm1256, %v327, %v905
      %v1356 = vsel %vm1256, %v328, %v907
      %v1357 = vsel %vm1256, %v329, %v909
      %v1358 = vsel %vm1256, %v330, %v911
      %v1359 = vsel %vm1256, %v331, %v913
      %v1360 = vsel %vm1256, %v332, %v915
      %v1361 = vsel %vm1256, %v333, %v917
      %v1362 = vsel %vm1256, %v334, %v919
      %v1363 = vsel %vm1256, %v335, %v921
      %v1364 = vsel %vm1256, %v336, %v923
      %v1365 = vsel %vm1256, %v337, %v925
      %v1366 = vsel %vm1256, %v338, %v927
      %v1367 = vsel %vm1256, %v339, %v929
      %v1368 = vsel %vm1256, %v340, %v931
      %v1369 = vsel %vm1256, %v341, %v933
      %v1370 = vsel %vm1256, %v342, %v935
      %v1371 = vsel %vm1256, %v343, %v937
      %v1372 = vsel %vm1256, %v344, %v939
      %v1373 = vsel %vm1256, %v345, %v941
      %v1374 = vsel %vm1256, %v346, %v943
      %v1375 = vsel %vm1256, %v347, %v945
      %v1376 = vsel %vm1256, %v348, %v947
      %v1377 = vsel %vm1256, %v349, %v949
      %v1378 = vsel %vm1256, %v350, %v951
      %v1379 = vsel %vm1256, %v351, %v953
      %v1380 = vsel %vm1256, %v352, %v955
      %v1381 = vsel %vm1256, %v353, %v957
      %v1382 = vsel %vm1256, %v354, %v959
      %v1383 = vsel %vm1256, %v355, %v961
      %v1384 = vsel %vm1256, %v356, %v963
      %v1385 = vsel %vm1256, %v357, %v965
      %v1386 = vsel %vm1256, %v358, %v967
      %v1387 = vsel %vm1289, %v1355, %v1033
      %v1388 = vsel %vm1289, %v1356, %v1035
      %v1389 = vsel %vm1289, %v1357, %v1037
      %v1390 = vsel %vm1289, %v1358, %v1039
      %v1391 = vsel %vm1289, %v1359, %v1041
      %v1392 = vsel %vm1289, %v1360, %v1043
      %v1393 = vsel %vm1289, %v1361, %v1045
      %v1394 = vsel %vm1289, %v1362, %v1047
      %v1395 = vsel %vm1289, %v1363, %v1049
      %v1396 = vsel %vm1289, %v1364, %v1051
      %v1397 = vsel %vm1289, %v1365, %v1053
      %v1398 = vsel %vm1289, %v1366, %v1055
      %v1399 = vsel %vm1289, %v1367, %v1057
      %v1400 = vsel %vm1289, %v1368, %v1059
      %v1401 = vsel %vm1289, %v1369, %v1061
      %v1402 = vsel %vm1289, %v1370, %v1063
      %v1403 = vsel %vm1289, %v1371, %v1065
      %v1404 = vsel %vm1289, %v1372, %v1067
      %v1405 = vsel %vm1289, %v1373, %v1069
      %v1406 = vsel %vm1289, %v1374, %v1071
      %v1407 = vsel %vm1289, %v1375, %v1073
      %v1408 = vsel %vm1289, %v1376, %v1075
      %v1409 = vsel %vm1289, %v1377, %v1077
      %v1410 = vsel %vm1289, %v1378, %v1079
      %v1411 = vsel %vm1289, %v1379, %v1081
      %v1412 = vsel %vm1289, %v1380, %v1083
      %v1413 = vsel %vm1289, %v1381, %v1085
      %v1414 = vsel %vm1289, %v1382, %v1087
      %v1415 = vsel %vm1289, %v1383, %v1089
      %v1416 = vsel %vm1289, %v1384, %v1091
      %v1417 = vsel %vm1289, %v1385, %v1093
      %v1418 = vsel %vm1289, %v1386, %v1095
      %v1419 = vsel %vm1322, %v1387, %v1161
      %v1420 = vsel %vm1322, %v1388, %v1163
      %v1421 = vsel %vm1322, %v1389, %v1165
      %v1422 = vsel %vm1322, %v1390, %v1167
      %v1423 = vsel %vm1322, %v1391, %v1169
      %v1424 = vsel %vm1322, %v1392, %v1171
      %v1425 = vsel %vm1322, %v1393, %v1173
      %v1426 = vsel %vm1322, %v1394, %v1175
      %v1427 = vsel %vm1322, %v1395, %v1177
      %v1428 = vsel %vm1322, %v1396, %v1179
      %v1429 = vsel %vm1322, %v1397, %v1181
      %v1430 = vsel %vm1322, %v1398, %v1183
      %v1431 = vsel %vm1322, %v1399, %v1185
      %v1432 = vsel %vm1322, %v1400, %v1187
      %v1433 = vsel %vm1322, %v1401, %v1189
      %v1434 = vsel %vm1322, %v1402, %v1191
      %v1435 = vsel %vm1322, %v1403, %v1193
      %v1436 = vsel %vm1322, %v1404, %v1195
      %v1437 = vsel %vm1322, %v1405, %v1197
      %v1438 = vsel %vm1322, %v1406, %v1199
      %v1439 = vsel %vm1322, %v1407, %v1201
      %v1440 = vsel %vm1322, %v1408, %v1203
      %v1441 = vsel %vm1322, %v1409, %v1205
      %v1442 = vsel %vm1322, %v1410, %v1207
      %v1443 = vsel %vm1322, %v1411, %v1209
      %v1444 = vsel %vm1322, %v1412, %v1211
      %v1445 = vsel %vm1322, %v1413, %v1213
      %v1446 = vsel %vm1322, %v1414, %v1215
      %v1447 = vsel %vm1322, %v1415, %v1217
      %v1448 = vsel %vm1322, %v1416, %v1219
      %v1449 = vsel %vm1322, %v1417, %v1221
      %v1450 = vsel %vm1322, %v1418, %v1223
      %v1451 = vld [vmem:[%s1] sm:$0xff]
      %v1452 = vld [vmem:[%s1 + $0x8] sm:$0xff]
      %v1453 = vld [vmem:[%s1 + $0x10] sm:$0xff]
      %v1454 = vld [vmem:[%s1 + $0x18] sm:$0xff]
      %v1455 = vld [vmem:[%s1 + $0x20] sm:$0xff]
      %v1456 = vld [vmem:[%s1 + $0x28] sm:$0xff]
      %v1457 = vld [vmem:[%s1 + $0x30] sm:$0xff]
      %v1458 = vld [vmem:[%s1 + $0x38] sm:$0xff]
      %v1459 = vld [vmem:[%s1 + $0x40] sm:$0xff]
      %v1460 = vld [vmem:[%s1 + $0x48] sm:$0xff]
      %v1461 = vld [vmem:[%s1 + $0x50] sm:$0xff]
      %v1462 = vld [vmem:[%s1 + $0x58] sm:$0xff]
      %v1463 = vld [vmem:[%s1 + $0x60] sm:$0xff]
      %v1464 = vld [vmem:[%s1 + $0x68] sm:$0xff]
      %v1465 = vld [vmem:[%s1 + $0x70] sm:$0xff]
      %v1466 = vld [vmem:[%s1 + $0x78] sm:$0xff]
      %v1467 = vld [vmem:[%s1 + $0x80] sm:$0xff]
      %v1468 = vld [vmem:[%s1 + $0x88] sm:$0xff]
      %v1469 = vld [vmem:[%s1 + $0x90] sm:$0xff]
      %v1470 = vld [vmem:[%s1 + $0x98] sm:$0xff]
      %v1471 = vld [vmem:[%s1 + $0xa0] sm:$0xff]
      %v1472 = vld [vmem:[%s1 + $0xa8] sm:$0xff]
      %v1473 = vld [vmem:[%s1 + $0xb0] sm:$0xff]
      %v1474 = vld [vmem:[%s1 + $0xb8] sm:$0xff]
      %v1475 = vld [vmem:[%s1 + $0xc0] sm:$0xff]
      %v1476 = vld [vmem:[%s1 + $0xc8] sm:$0xff]
      %v1477 = vld [vmem:[%s1 + $0xd0] sm:$0xff]
      %v1478 = vld [vmem:[%s1 + $0xd8] sm:$0xff]
      %v1479 = vld [vmem:[%s1 + $0xe0] sm:$0xff]
      %v1480 = vld [vmem:[%s1 + $0xe8] sm:$0xff]
      %v1481 = vld [vmem:[%s1 + $0xf0] sm:$0xff]
      %v1482 = vld [vmem:[%s1 + $0xf8] sm:$0xff]
      %v1483 = vld [vmem:[%s1 + $0x100] sm:$0xff]
      %v1484 = vld [vmem:[%s1 + $0x108] sm:$0xff]
      %v1485 = vld [vmem:[%s1 + $0x110] sm:$0xff]
      %v1486 = vld [vmem:[%s1 + $0x118] sm:$0xff]
      %v1488 = vsel %vm1256, %v456, 0
      %v1491 = vsel %vm1256, %v457, 0
      %v1494 = vsel %vm1256, %v458, 0
      %v1497 = vsel %vm1256, %v459, 0
      %v1500 = vsel %vm1256, %v460, 0
      %v1503 = vsel %vm1256, %v461, 0
      %v1506 = vsel %vm1256, %v462, 0
      %v1509 = vsel %vm1256, %v463, 0
      %v1512 = vsel %vm1256, %v464, 0
      %v1515 = vsel %vm1256, %v465, 0
      %v1518 = vsel %vm1256, %v466, 0
      %v1521 = vsel %vm1256, %v467, 0
      %v1524 = vsel %vm1256, %v468, 0
      %v1527 = vsel %vm1256, %v469, 0
      %v1530 = vsel %vm1256, %v470, 0
      %v1533 = vsel %vm1256, %v471, 0
      %v1536 = vsel %vm1256, %v472, 0
      %v1539 = vsel %vm1256, %v473, 0
      %v1542 = vsel %vm1256, %v474, 0
      %v1545 = vsel %vm1256, %v475, 0
      %v1548 = vsel %vm1256, %v476, 0
      %v1551 = vsel %vm1256, %v477, 0
      %v1554 = vsel %vm1256, %v478, 0
      %v1557 = vsel %vm1256, %v479, 0
      %v1560 = vsel %vm1256, %v480, 0
      %v1563 = vsel %vm1256, %v481, 0
      %v1566 = vsel %vm1256, %v482, 0
      %v1569 = vsel %vm1256, %v483, 0
      %v1572 = vsel %vm1256, %v484, 0
      %v1575 = vsel %vm1256, %v485, 0
      %v1578 = vsel %vm1256, %v486, 0
      %v1581 = vsel %vm1256, %v487, 0
      %1583 = vmatprep.subr.mxu0 0.0
      %1584 = vmatpush1.msra.mxu0 %v1451
      %1585 = vmatprep.subr.mxu0 0.0
      %1586 = vmatpush1.msra.mxu0 %v1452
      %1587 = vmatprep.subr.mxu0 0.0
      %1588 = vmatpush1.msra.mxu0 %v1453
      %1589 = vmatprep.subr.mxu0 0.0
      %1590 = vmatpush1.msra.mxu0 %v1454
      %1591 = vmatprep.subr.mxu0 0.0
      %1592 = vmatpush1.msra.mxu0 %v1455
      %1593 = vmatprep.subr.mxu0 0.0
      %1594 = vmatpush1.msra.mxu0 %v1456
      %1595 = vmatprep.subr.mxu0 0.0
      %1596 = vmatpush1.msra.mxu0 %v1457
      %1597 = vmatprep.subr.mxu0 0.0
      %1598 = vmatpush1.msra.mxu0 %v1458
      %1599 = vmatprep.subr.mxu0 0.0
      %1600 = vmatpush1.msra.mxu0 %v1459
      %1601 = vmatprep.subr.mxu0 0.0
      %1602 = vmatpush1.msra.mxu0 %v1460
      %1603 = vmatprep.subr.mxu0 0.0
      %1604 = vmatpush1.msra.mxu0 %v1461
      %1605 = vmatprep.subr.mxu0 0.0
      %1606 = vmatpush1.msra.mxu0 %v1462
      %1607 = vmatprep.subr.mxu0 0.0
      %1608 = vmatpush1.msra.mxu0 %v1463
      %1609 = vmatprep.subr.mxu0 0.0
      %1610 = vmatpush1.msra.mxu0 %v1464
      %1611 = vmatprep.subr.mxu0 0.0
      %1612 = vmatpush1.msra.mxu0 %v1465
      %1613 = vmatprep.subr.mxu0 0.0
      %1614 = vmatpush1.msra.mxu0 %v1466
      %1615 = vmatprep.subr.mxu0 0.0
      %1616 = vmatpush1.msra.mxu0 %v1467
      %1617 = vmatprep.subr.mxu0 0.0
      %1618 = vmatpush1.msra.mxu0 %v1468
      %1619 = vmatprep.subr.mxu0 0.0
      %1620 = vmatpush1.msra.mxu0 %v1469
      %1621 = vmatprep.subr.mxu0 0.0
      %1622 = vmatpush1.msra.mxu0 %v1470
      %1623 = vmatprep.subr.mxu0 0.0
      %1624 = vmatpush1.msra.mxu0 %v1471
      %1625 = vmatprep.subr.mxu0 0.0
      %1626 = vmatpush1.msra.mxu0 %v1472
      %1627 = vmatprep.subr.mxu0 0.0
      %1628 = vmatpush1.msra.mxu0 %v1473
      %1629 = vmatprep.subr.mxu0 0.0
      %1630 = vmatpush1.msra.mxu0 %v1474
      %1631 = vmatprep.subr.mxu0 0.0
      %1632 = vmatpush1.msra.mxu0 %v1475
      %1633 = vmatprep.subr.mxu0 0.0
      %1634 = vmatpush1.msra.mxu0 %v1476
      %1635 = vmatprep.subr.mxu0 0.0
      %1636 = vmatpush1.msra.mxu0 %v1477
      %1637 = vmatprep.subr.mxu0 0.0
      %1638 = vmatpush1.msra.mxu0 %v1478
      %1639 = vmatprep.subr.mxu0 0.0
      %1640 = vmatpush1.msra.mxu0 %v1479
      %1641 = vmatprep.subr.mxu0 0.0
      %1642 = vmatpush1.msra.mxu0 %v1480
      %1643 = vmatprep.subr.mxu0 0.0
      %1644 = vmatpush1.msra.mxu0 %v1481
      %1645 = vmatprep.subr.mxu0 0.0
      %1646 = vmatpush1.msra.mxu0 %v1482
      %1647 = vmatprep.mubr.f32.mxu0 %v1419
      %1648 = vmatmul.mubr.f32.gmra.mrb[0].mxu0 %v1323
      %v1649 = vpop.f32.mrb[0].mxu0
      %v1650 = vadd.f32 0.0, %v1649
      %v1651 = vpop.f32.mrb[0].mxu0
      %1652 = vmatprep.mubr.f32.mxu0 %v1420
      %1653 = vmatmul.mubr.f32.gmra.mrb[0].mxu0 %v1324
      %v1654 = vpop.f32.mrb[0].mxu0
      %v1655 = vadd.f32 0.0, %v1654
      %v1656 = vpop.f32.mrb[0].mxu0
      %1657 = vmatprep.mubr.f32.mxu0 %v1421
      %1658 = vmatmul.mubr.f32.gmra.mrb[0].mxu0 %v1325
      %v1659 = vpop.f32.mrb[0].mxu0
      %v1660 = vadd.f32 0.0, %v1659
      %v1661 = vpop.f32.mrb[0].mxu0
      %1662 = vmatprep.mubr.f32.mxu0 %v1422
      %1663 = vmatmul.mubr.f32.gmra.mrb[0].mxu0 %v1326
      %v1664 = vpop.f32.mrb[0].mxu0
      %v1665 = vadd.f32 0.0, %v1664
      %v1666 = vpop.f32.mrb[0].mxu0
      %1667 = vmatprep.mubr.f32.mxu0 %v1423
      %1668 = vmatmul.mubr.f32.gmra.mrb[0].mxu0 %v1327
      %v1669 = vpop.f32.mrb[0].mxu0
      %v1670 = vadd.f32 0.0, %v1669
      %v1671 = vpop.f32.mrb[0].mxu0
      %1672 = vmatprep.mubr.f32.mxu0 %v1424
      %1673 = vmatmul.mubr.f32.gmra.mrb[0].mxu0 %v1328
      %v1674 = vpop.f32.mrb[0].mxu0
      %v1675 = vadd.f32 0.0, %v1674
      %v1676 = vpop.f32.mrb[0].mxu0
      %1677 = vmatprep.mubr.f32.mxu0 %v1425
      %1678 = vmatmul.mubr.f32.gmra.mrb[0].mxu0 %v1329
      %v1679 = vpop.f32.mrb[0].mxu0
      %v1680 = vadd.f32 0.0, %v1679
      %v1681 = vpop.f32.mrb[0].mxu0
      %1682 = vmatprep.mubr.f32.mxu0 %v1426
      %1683 = vmatmul.mubr.f32.gmra.mrb[0].mxu0 %v1330
      %v1684 = vpop.f32.mrb[0].mxu0
      %v1685 = vadd.f32 0.0, %v1684
      %v1686 = vpop.f32.mrb[0].mxu0
      %1687 = vmatprep.mubr.f32.mxu0 %v1427
      %1688 = vmatmul.mubr.f32.gmra.mrb[0].mxu0 %v1331
      %v1689 = vpop.f32.mrb[0].mxu0
      %v1690 = vadd.f32 0.0, %v1689
      %v1691 = vpop.f32.mrb[0].mxu0
      %1692 = vmatprep.mubr.f32.mxu0 %v1428
      %1693 = vmatmul.mubr.f32.gmra.mrb[0].mxu0 %v1332
      %v1694 = vpop.f32.mrb[0].mxu0
      %v1695 = vadd.f32 0.0, %v1694
      %v1696 = vpop.f32.mrb[0].mxu0
      %1697 = vmatprep.mubr.f32.mxu0 %v1429
      %1698 = vmatmul.mubr.f32.gmra.mrb[0].mxu0 %v1333
      %v1699 = vpop.f32.mrb[0].mxu0
      %v1700 = vadd.f32 0.0, %v1699
      %v1701 = vpop.f32.mrb[0].mxu0
      %1702 = vmatprep.mubr.f32.mxu0 %v1430
      %1703 = vmatmul.mubr.f32.gmra.mrb[0].mxu0 %v1334
      %v1704 = vpop.f32.mrb[0].mxu0
      %v1705 = vadd.f32 0.0, %v1704
      %v1706 = vpop.f32.mrb[0].mxu0
      %1707 = vmatprep.mubr.f32.mxu0 %v1431
      %1708 = vmatmul.mubr.f32.gmra.mrb[0].mxu0 %v1335
      %v1709 = vpop.f32.mrb[0].mxu0
      %v1710 = vadd.f32 0.0, %v1709
      %v1711 = vpop.f32.mrb[0].mxu0
      %1712 = vmatprep.mubr.f32.mxu0 %v1432
      %1713 = vmatmul.mubr.f32.gmra.mrb[0].mxu0 %v1336
      %v1714 = vpop.f32.mrb[0].mxu0
      %v1715 = vadd.f32 0.0, %v1714
      %v1716 = vpop.f32.mrb[0].mxu0
      %1717 = vmatprep.mubr.f32.mxu0 %v1433
      %1718 = vmatmul.mubr.f32.gmra.mrb[0].mxu0 %v1337
      %v1719 = vpop.f32.mrb[0].mxu0
      %v1720 = vadd.f32 0.0, %v1719
      %v1721 = vpop.f32.mrb[0].mxu0
      %1722 = vmatprep.mubr.f32.mxu0 %v1434
      %1723 = vmatmul.mubr.f32.gmra.mrb[0].mxu0 %v1338
      %v1724 = vpop.f32.mrb[0].mxu0
      %v1725 = vadd.f32 0.0, %v1724
      %v1726 = vpop.f32.mrb[0].mxu0
      %1727 = vmatprep.mubr.f32.mxu0 %v1435
      %1728 = vmatmul.mubr.f32.gmra.mrb[0].mxu0 %v1339
      %v1729 = vpop.f32.mrb[0].mxu0
      %v1730 = vadd.f32 0.0, %v1729
      %v1731 = vpop.f32.mrb[0].mxu0
      %1732 = vmatprep.mubr.f32.mxu0 %v1436
      %1733 = vmatmul.mubr.f32.gmra.mrb[0].mxu0 %v1340
      %v1734 = vpop.f32.mrb[0].mxu0
      %v1735 = vadd.f32 0.0, %v1734
      %v1736 = vpop.f32.mrb[0].mxu0
      %1737 = vmatprep.mubr.f32.mxu0 %v1437
      %1738 = vmatmul.mubr.f32.gmra.mrb[0].mxu0 %v1341
      %v1739 = vpop.f32.mrb[0].mxu0
      %v1740 = vadd.f32 0.0, %v1739
      %v1741 = vpop.f32.mrb[0].mxu0
      %1742 = vmatprep.mubr.f32.mxu0 %v1438
      %1743 = vmatmul.mubr.f32.gmra.mrb[0].mxu0 %v1342
      %v1744 = vpop.f32.mrb[0].mxu0
      %v1745 = vadd.f32 0.0, %v1744
      %v1746 = vpop.f32.mrb[0].mxu0
      %1747 = vmatprep.mubr.f32.mxu0 %v1439
      %1748 = vmatmul.mubr.f32.gmra.mrb[0].mxu0 %v1343
      %v1749 = vpop.f32.mrb[0].mxu0
      %v1750 = vadd.f32 0.0, %v1749
      %v1751 = vpop.f32.mrb[0].mxu0
      %1752 = vmatprep.mubr.f32.mxu0 %v1440
      %1753 = vmatmul.mubr.f32.gmra.mrb[0].mxu0 %v1344
      %v1754 = vpop.f32.mrb[0].mxu0
      %v1755 = vadd.f32 0.0, %v1754
      %v1756 = vpop.f32.mrb[0].mxu0
      %1757 = vmatprep.mubr.f32.mxu0 %v1441
      %1758 = vmatmul.mubr.f32.gmra.mrb[0].mxu0 %v1345
      %v1759 = vpop.f32.mrb[0].mxu0
      %v1760 = vadd.f32 0.0, %v1759
      %v1761 = vpop.f32.mrb[0].mxu0
      %1762 = vmatprep.mubr.f32.mxu0 %v1442
      %1763 = vmatmul.mubr.f32.gmra.mrb[0].mxu0 %v1346
      %v1764 = vpop.f32.mrb[0].mxu0
      %v1765 = vadd.f32 0.0, %v1764
      %v1766 = vpop.f32.mrb[0].mxu0
      %1767 = vmatprep.mubr.f32.mxu0 %v1443
      %1768 = vmatmul.mubr.f32.gmra.mrb[0].mxu0 %v1347
      %v1769 = vpop.f32.mrb[0].mxu0
      %v1770 = vadd.f32 0.0, %v1769
      %v1771 = vpop.f32.mrb[0].mxu0
      %1772 = vmatprep.mubr.f32.mxu0 %v1444
      %1773 = vmatmul.mubr.f32.gmra.mrb[0].mxu0 %v1348
      %v1774 = vpop.f32.mrb[0].mxu0
      %v1775 = vadd.f32 0.0, %v1774
      %v1776 = vpop.f32.mrb[0].mxu0
      %1777 = vmatprep.mubr.f32.mxu0 %v1445
      %1778 = vmatmul.mubr.f32.gmra.mrb[0].mxu0 %v1349
      %v1779 = vpop.f32.mrb[0].mxu0
      %v1780 = vadd.f32 0.0, %v1779
      %v1781 = vpop.f32.mrb[0].mxu0
      %1782 = vmatprep.mubr.f32.mxu0 %v1446
      %1783 = vmatmul.mubr.f32.gmra.mrb[0].mxu0 %v1350
      %v1784 = vpop.f32.mrb[0].mxu0
      %v1785 = vadd.f32 0.0, %v1784
      %v1786 = vpop.f32.mrb[0].mxu0
      %1787 = vmatprep.mubr.f32.mxu0 %v1447
      %1788 = vmatmul.mubr.f32.gmra.mrb[0].mxu0 %v1351
      %v1789 = vpop.f32.mrb[0].mxu0
      %v1790 = vadd.f32 0.0, %v1789
      %v1791 = vpop.f32.mrb[0].mxu0
      %1792 = vmatprep.mubr.f32.mxu0 %v1448
      %1793 = vmatmul.mubr.f32.gmra.mrb[0].mxu0 %v1352
      %v1794 = vpop.f32.mrb[0].mxu0
      %v1795 = vadd.f32 0.0, %v1794
      %v1796 = vpop.f32.mrb[0].mxu0
      %1797 = vmatprep.mubr.f32.mxu0 %v1449
      %1798 = vmatmul.mubr.f32.gmra.mrb[0].mxu0 %v1353
      %v1799 = vpop.f32.mrb[0].mxu0
      %v1800 = vadd.f32 0.0, %v1799
      %v1801 = vpop.f32.mrb[0].mxu0
      %1802 = vmatprep.mubr.f32.mxu0 %v1450
      %1803 = vmatmul.mubr.f32.gmra.mrb[0].mxu0 %v1354
      %v1804 = vpop.f32.mrb[0].mxu0
      %v1805 = vadd.f32 0.0, %v1804
      %v1806 = vpop.f32.mrb[0].mxu0
      %1807 = vdwg.mxu0
      %1808 = vmatprep.subr.mxu0 0.0
      %1809 = vmatpush1.msra.mxu0 %v1483
      %1810 = vmatprep.subr.mxu0 0.0
      %1811 = vmatpush1.msra.mxu0 %v1484
      %1812 = vmatprep.subr.mxu0 0.0
      %1813 = vmatpush1.msra.mxu0 %v1485
      %1814 = vmatprep.subr.mxu0 0.0
      %1815 = vmatpush1.msra.mxu0 %v1486
      %1816 = vmatprep.subr.mxu0 0.0
      %1817 = vmatpush1.msra.mxu0 0.0
      %1818 = vmatprep.subr.mxu0 0.0
      %1819 = vmatpush1.msra.mxu0 0.0
      %1820 = vmatprep.subr.mxu0 0.0
      %1821 = vmatpush1.msra.mxu0 0.0
      %1822 = vmatprep.subr.mxu0 0.0
      %1823 = vmatpush1.msra.mxu0 0.0
      %1824 = vmatprep.subr.mxu0 0.0
      %1825 = vmatpush1.msra.mxu0 0.0
      %1826 = vmatprep.subr.mxu0 0.0
      %1827 = vmatpush1.msra.mxu0 0.0
      %1828 = vmatprep.subr.mxu0 0.0
      %1829 = vmatpush1.msra.mxu0 0.0
      %1830 = vmatprep.subr.mxu0 0.0
      %1831 = vmatpush1.msra.mxu0 0.0
      %1832 = vmatprep.subr.mxu0 0.0
      %1833 = vmatpush1.msra.mxu0 0.0
      %1834 = vmatprep.subr.mxu0 0.0
      %1835 = vmatpush1.msra.mxu0 0.0
      %1836 = vmatprep.subr.mxu0 0.0
      %1837 = vmatpush1.msra.mxu0 0.0
      %1838 = vmatprep.subr.mxu0 0.0
      %1839 = vmatpush1.msra.mxu0 0.0
      %1840 = vmatprep.subr.mxu0 0.0
      %1841 = vmatpush1.msra.mxu0 0.0
      %1842 = vmatprep.subr.mxu0 0.0
      %1843 = vmatpush1.msra.mxu0 0.0
      %1844 = vmatprep.subr.mxu0 0.0
      %1845 = vmatpush1.msra.mxu0 0.0
      %1846 = vmatprep.subr.mxu0 0.0
      %1847 = vmatpush1.msra.mxu0 0.0
      %1848 = vmatprep.subr.mxu0 0.0
      %1849 = vmatpush1.msra.mxu0 0.0
      %1850 = vmatprep.subr.mxu0 0.0
      %1851 = vmatpush1.msra.mxu0 0.0
      %1852 = vmatprep.subr.mxu0 0.0
      %1853 = vmatpush1.msra.mxu0 0.0
      %1854 = vmatprep.subr.mxu0 0.0
      %1855 = vmatpush1.msra.mxu0 0.0
      %1856 = vmatprep.subr.mxu0 0.0
      %1857 = vmatpush1.msra.mxu0 0.0
      %1858 = vmatprep.subr.mxu0 0.0
      %1859 = vmatpush1.msra.mxu0 0.0
      %1860 = vmatprep.subr.mxu0 0.0
      %1861 = vmatpush1.msra.mxu0 0.0
      %1862 = vmatprep.subr.mxu0 0.0
      %1863 = vmatpush1.msra.mxu0 0.0
      %1864 = vmatprep.subr.mxu0 0.0
      %1865 = vmatpush1.msra.mxu0 0.0
      %1866 = vmatprep.subr.mxu0 0.0
      %1867 = vmatpush1.msra.mxu0 0.0
      %1868 = vmatprep.subr.mxu0 0.0
      %1869 = vmatpush1.msra.mxu0 0.0
      %1870 = vmatprep.subr.mxu0 0.0
      %1871 = vmatpush1.msra.mxu0 0.0
      %1872 = vmatprep.mubr.f32.mxu0 0.0
      %1873 = vmatmul.mubr.f32.gmra.mrb[0].mxu0 %v1488
      %v1874 = vpop.f32.mrb[0].mxu0
      %v1875 = vadd.f32 %v1650, %v1874
      %v1876 = vpop.f32.mrb[0].mxu0
      %1877 = vmatprep.mubr.f32.mxu0 0.0
      %1878 = vmatmul.mubr.f32.gmra.mrb[0].mxu0 %v1491
      %v1879 = vpop.f32.mrb[0].mxu0
      %v1880 = vadd.f32 %v1655, %v1879
      %v1881 = vpop.f32.mrb[0].mxu0
      %1882 = vmatprep.mubr.f32.mxu0 0.0
      %1883 = vmatmul.mubr.f32.gmra.mrb[0].mxu0 %v1494
      %v1884 = vpop.f32.mrb[0].mxu0
      %v1885 = vadd.f32 %v1660, %v1884
      %v1886 = vpop.f32.mrb[0].mxu0
      %1887 = vmatprep.mubr.f32.mxu0 0.0
      %1888 = vmatmul.mubr.f32.gmra.mrb[0].mxu0 %v1497
      %v1889 = vpop.f32.mrb[0].mxu0
      %v1890 = vadd.f32 %v1665, %v1889
      %v1891 = vpop.f32.mrb[0].mxu0
      %1892 = vmatprep.mubr.f32.mxu0 0.0
      %1893 = vmatmul.mubr.f32.gmra.mrb[0].mxu0 %v1500
      %v1894 = vpop.f32.mrb[0].mxu0
      %v1895 = vadd.f32 %v1670, %v1894
      %v1896 = vpop.f32.mrb[0].mxu0
      %1897 = vmatprep.mubr.f32.mxu0 0.0
      %1898 = vmatmul.mubr.f32.gmra.mrb[0].mxu0 %v1503
      %v1899 = vpop.f32.mrb[0].mxu0
      %v1900 = vadd.f32 %v1675, %v1899
      %v1901 = vpop.f32.mrb[0].mxu0
      %1902 = vmatprep.mubr.f32.mxu0 0.0
      %1903 = vmatmul.mubr.f32.gmra.mrb[0].mxu0 %v1506
      %v1904 = vpop.f32.mrb[0].mxu0
      %v1905 = vadd.f32 %v1680, %v1904
      %v1906 = vpop.f32.mrb[0].mxu0
      %1907 = vmatprep.mubr.f32.mxu0 0.0
      %1908 = vmatmul.mubr.f32.gmra.mrb[0].mxu0 %v1509
      %v1909 = vpop.f32.mrb[0].mxu0
      %v1910 = vadd.f32 %v1685, %v1909
      %v1911 = vpop.f32.mrb[0].mxu0
      %1912 = vmatprep.mubr.f32.mxu0 0.0
      %1913 = vmatmul.mubr.f32.gmra.mrb[0].mxu0 %v1512
      %v1914 = vpop.f32.mrb[0].mxu0
      %v1915 = vadd.f32 %v1690, %v1914
      %v1916 = vpop.f32.mrb[0].mxu0
      %1917 = vmatprep.mubr.f32.mxu0 0.0
      %1918 = vmatmul.mubr.f32.gmra.mrb[0].mxu0 %v1515
      %v1919 = vpop.f32.mrb[0].mxu0
      %v1920 = vadd.f32 %v1695, %v1919
      %v1921 = vpop.f32.mrb[0].mxu0
      %1922 = vmatprep.mubr.f32.mxu0 0.0
      %1923 = vmatmul.mubr.f32.gmra.mrb[0].mxu0 %v1518
      %v1924 = vpop.f32.mrb[0].mxu0
      %v1925 = vadd.f32 %v1700, %v1924
      %v1926 = vpop.f32.mrb[0].mxu0
      %1927 = vmatprep.mubr.f32.mxu0 0.0
      %1928 = vmatmul.mubr.f32.gmra.mrb[0].mxu0 %v1521
      %v1929 = vpop.f32.mrb[0].mxu0
      %v1930 = vadd.f32 %v1705, %v1929
      %v1931 = vpop.f32.mrb[0].mxu0
      %1932 = vmatprep.mubr.f32.mxu0 0.0
      %1933 = vmatmul.mubr.f32.gmra.mrb[0].mxu0 %v1524
      %v1934 = vpop.f32.mrb[0].mxu0
      %v1935 = vadd.f32 %v1710, %v1934
      %v1936 = vpop.f32.mrb[0].mxu0
      %1937 = vmatprep.mubr.f32.mxu0 0.0
      %1938 = vmatmul.mubr.f32.gmra.mrb[0].mxu0 %v1527
      %v1939 = vpop.f32.mrb[0].mxu0
      %v1940 = vadd.f32 %v1715, %v1939
      %v1941 = vpop.f32.mrb[0].mxu0
      %1942 = vmatprep.mubr.f32.mxu0 0.0
      %1943 = vmatmul.mubr.f32.gmra.mrb[0].mxu0 %v1530
      %v1944 = vpop.f32.mrb[0].mxu0
      %v1945 = vadd.f32 %v1720, %v1944
      %v1946 = vpop.f32.mrb[0].mxu0
      %1947 = vmatprep.mubr.f32.mxu0 0.0
      %1948 = vmatmul.mubr.f32.gmra.mrb[0].mxu0 %v1533
      %v1949 = vpop.f32.mrb[0].mxu0
      %v1950 = vadd.f32 %v1725, %v1949
      %v1951 = vpop.f32.mrb[0].mxu0
      %1952 = vmatprep.mubr.f32.mxu0 0.0
      %1953 = vmatmul.mubr.f32.gmra.mrb[0].mxu0 %v1536
      %v1954 = vpop.f32.mrb[0].mxu0
      %v1955 = vadd.f32 %v1730, %v1954
      %v1956 = vpop.f32.mrb[0].mxu0
      %1957 = vmatprep.mubr.f32.mxu0 0.0
      %1958 = vmatmul.mubr.f32.gmra.mrb[0].mxu0 %v1539
      %v1959 = vpop.f32.mrb[0].mxu0
      %v1960 = vadd.f32 %v1735, %v1959
      %v1961 = vpop.f32.mrb[0].mxu0
      %1962 = vmatprep.mubr.f32.mxu0 0.0
      %1963 = vmatmul.mubr.f32.gmra.mrb[0].mxu0 %v1542
      %v1964 = vpop.f32.mrb[0].mxu0
      %v1965 = vadd.f32 %v1740, %v1964
      %v1966 = vpop.f32.mrb[0].mxu0
      %1967 = vmatprep.mubr.f32.mxu0 0.0
      %1968 = vmatmul.mubr.f32.gmra.mrb[0].mxu0 %v1545
      %v1969 = vpop.f32.mrb[0].mxu0
      %v1970 = vadd.f32 %v1745, %v1969
      %v1971 = vpop.f32.mrb[0].mxu0
      %1972 = vmatprep.mubr.f32.mxu0 0.0
      %1973 = vmatmul.mubr.f32.gmra.mrb[0].mxu0 %v1548
      %v1974 = vpop.f32.mrb[0].mxu0
      %v1975 = vadd.f32 %v1750, %v1974
      %v1976 = vpop.f32.mrb[0].mxu0
      %1977 = vmatprep.mubr.f32.mxu0 0.0
      %1978 = vmatmul.mubr.f32.gmra.mrb[0].mxu0 %v1551
      %v1979 = vpop.f32.mrb[0].mxu0
      %v1980 = vadd.f32 %v1755, %v1979
      %v1981 = vpop.f32.mrb[0].mxu0
      %1982 = vmatprep.mubr.f32.mxu0 0.0
      %1983 = vmatmul.mubr.f32.gmra.mrb[0].mxu0 %v1554
      %v1984 = vpop.f32.mrb[0].mxu0
      %v1985 = vadd.f32 %v1760, %v1984
      %v1986 = vpop.f32.mrb[0].mxu0
      %1987 = vmatprep.mubr.f32.mxu0 0.0
      %1988 = vmatmul.mubr.f32.gmra.mrb[0].mxu0 %v1557
      %v1989 = vpop.f32.mrb[0].mxu0
      %v1990 = vadd.f32 %v1765, %v1989
      %v1991 = vpop.f32.mrb[0].mxu0
      %1992 = vmatprep.mubr.f32.mxu0 0.0
      %1993 = vmatmul.mubr.f32.gmra.mrb[0].mxu0 %v1560
      %v1994 = vpop.f32.mrb[0].mxu0
      %v1995 = vadd.f32 %v1770, %v1994
      %v1996 = vpop.f32.mrb[0].mxu0
      %1997 = vmatprep.mubr.f32.mxu0 0.0
      %1998 = vmatmul.mubr.f32.gmra.mrb[0].mxu0 %v1563
      %v1999 = vpop.f32.mrb[0].mxu0
      %v2000 = vadd.f32 %v1775, %v1999
      %v2001 = vpop.f32.mrb[0].mxu0
      %2002 = vmatprep.mubr.f32.mxu0 0.0
      %2003 = vmatmul.mubr.f32.gmra.mrb[0].mxu0 %v1566
      %v2004 = vpop.f32.mrb[0].mxu0
      %v2005 = vadd.f32 %v1780, %v2004
      %v2006 = vpop.f32.mrb[0].mxu0
      %2007 = vmatprep.mubr.f32.mxu0 0.0
      %2008 = vmatmul.mubr.f32.gmra.mrb[0].mxu0 %v1569
      %v2009 = vpop.f32.mrb[0].mxu0
      %v2010 = vadd.f32 %v1785, %v2009
      %v2011 = vpop.f32.mrb[0].mxu0
      %2012 = vmatprep.mubr.f32.mxu0 0.0
      %2013 = vmatmul.mubr.f32.gmra.mrb[0].mxu0 %v1572
      %v2014 = vpop.f32.mrb[0].mxu0
      %v2015 = vadd.f32 %v1790, %v2014
      %v2016 = vpop.f32.mrb[0].mxu0
      %2017 = vmatprep.mubr.f32.mxu0 0.0
      %2018 = vmatmul.mubr.f32.gmra.mrb[0].mxu0 %v1575
      %v2019 = vpop.f32.mrb[0].mxu0
      %v2020 = vadd.f32 %v1795, %v2019
      %v2021 = vpop.f32.mrb[0].mxu0
      %2022 = vmatprep.mubr.f32.mxu0 0.0
      %2023 = vmatmul.mubr.f32.gmra.mrb[0].mxu0 %v1578
      %v2024 = vpop.f32.mrb[0].mxu0
      %v2025 = vadd.f32 %v1800, %v2024
      %v2026 = vpop.f32.mrb[0].mxu0
      %2027 = vmatprep.mubr.f32.mxu0 0.0
      %2028 = vmatmul.mubr.f32.gmra.mrb[0].mxu0 %v1581
      %v2029 = vpop.f32.mrb[0].mxu0
      %v2030 = vadd.f32 %v1805, %v2029
      %v2031 = vpop.f32.mrb[0].mxu0
      %2032 = vdwg.mxu0
      %v2033 = vld [vmem:[%s2] sm:$0x1]
      %v2035 = vlaneseq
      %v2036 = vshrl.u32 %v2035, 7
      %v2037 = vsub.s32 0, %v2036
      %v2038 = vrot.slane %v2033, %v2037
      %v2040 = vmul.f32 %v1875, %v2038
      %v2041 = vmul.f32 %v1880, %v2038
      %v2042 = vmul.f32 %v1885, %v2038
      %v2043 = vmul.f32 %v1890, %v2038
      %v2044 = vmul.f32 %v1895, %v2038
      %v2045 = vmul.f32 %v1900, %v2038
      %v2046 = vmul.f32 %v1905, %v2038
      %v2047 = vmul.f32 %v1910, %v2038
      %v2048 = vmul.f32 %v1915, %v2038
      %v2049 = vmul.f32 %v1920, %v2038
      %v2050 = vmul.f32 %v1925, %v2038
      %v2051 = vmul.f32 %v1930, %v2038
      %v2052 = vmul.f32 %v1935, %v2038
      %v2053 = vmul.f32 %v1940, %v2038
      %v2054 = vmul.f32 %v1945, %v2038
      %v2055 = vmul.f32 %v1950, %v2038
      %v2056 = vmul.f32 %v1955, %v2038
      %v2057 = vmul.f32 %v1960, %v2038
      %v2058 = vmul.f32 %v1965, %v2038
      %v2059 = vmul.f32 %v1970, %v2038
      %v2060 = vmul.f32 %v1975, %v2038
      %v2061 = vmul.f32 %v1980, %v2038
      %v2062 = vmul.f32 %v1985, %v2038
      %v2063 = vmul.f32 %v1990, %v2038
      %v2064 = vmul.f32 %v1995, %v2038
      %v2065 = vmul.f32 %v2000, %v2038
      %v2066 = vmul.f32 %v2005, %v2038
      %v2067 = vmul.f32 %v2010, %v2038
      %v2068 = vmul.f32 %v2015, %v2038
      %v2069 = vmul.f32 %v2020, %v2038
      %v2070 = vmul.f32 %v2025, %v2038
      %v2071 = vmul.f32 %v2030, %v2038
      %v2072 = vld [vmem:[%s3] sm:$0x1]
      %v2074 = vlaneseq
      %v2075 = vshrl.u32 %v2074, 7
      %v2076 = vsub.s32 0, %v2075
      %v2077 = vrot.slane %v2072, %v2076
      %v2079 = vadd.f32 %v2040, %v2077
      %v2080 = vadd.f32 %v2041, %v2077
      %v2081 = vadd.f32 %v2042, %v2077
      %v2082 = vadd.f32 %v2043, %v2077
      %v2083 = vadd.f32 %v2044, %v2077
      %v2084 = vadd.f32 %v2045, %v2077
      %v2085 = vadd.f32 %v2046, %v2077
      %v2086 = vadd.f32 %v2047, %v2077
      %v2087 = vadd.f32 %v2048, %v2077
      %v2088 = vadd.f32 %v2049, %v2077
      %v2089 = vadd.f32 %v2050, %v2077
      %v2090 = vadd.f32 %v2051, %v2077
      %v2091 = vadd.f32 %v2052, %v2077
      %v2092 = vadd.f32 %v2053, %v2077
      %v2093 = vadd.f32 %v2054, %v2077
      %v2094 = vadd.f32 %v2055, %v2077
      %v2095 = vadd.f32 %v2056, %v2077
      %v2096 = vadd.f32 %v2057, %v2077
      %v2097 = vadd.f32 %v2058, %v2077
      %v2098 = vadd.f32 %v2059, %v2077
      %v2099 = vadd.f32 %v2060, %v2077
      %v2100 = vadd.f32 %v2061, %v2077
      %v2101 = vadd.f32 %v2062, %v2077
      %v2102 = vadd.f32 %v2063, %v2077
      %v2103 = vadd.f32 %v2064, %v2077
      %v2104 = vadd.f32 %v2065, %v2077
      %v2105 = vadd.f32 %v2066, %v2077
      %v2106 = vadd.f32 %v2067, %v2077
      %v2107 = vadd.f32 %v2068, %v2077
      %v2108 = vadd.f32 %v2069, %v2077
      %v2109 = vadd.f32 %v2070, %v2077
      %v2110 = vadd.f32 %v2071, %v2077
      %vm2111 = vcmp.ge.f32.partialorder %v2079, 0.0
      %vm2112 = vcmp.ge.f32.partialorder %v2080, 0.0
      %vm2113 = vcmp.ge.f32.partialorder %v2081, 0.0
      %vm2114 = vcmp.ge.f32.partialorder %v2082, 0.0
      %vm2115 = vcmp.ge.f32.partialorder %v2083, 0.0
      %vm2116 = vcmp.ge.f32.partialorder %v2084, 0.0
      %vm2117 = vcmp.ge.f32.partialorder %v2085, 0.0
      %vm2118 = vcmp.ge.f32.partialorder %v2086, 0.0
      %vm2119 = vcmp.ge.f32.partialorder %v2087, 0.0
      %vm2120 = vcmp.ge.f32.partialorder %v2088, 0.0
      %vm2121 = vcmp.ge.f32.partialorder %v2089, 0.0
      %vm2122 = vcmp.ge.f32.partialorder %v2090, 0.0
      %vm2123 = vcmp.ge.f32.partialorder %v2091, 0.0
      %vm2124 = vcmp.ge.f32.partialorder %v2092, 0.0
      %vm2125 = vcmp.ge.f32.partialorder %v2093, 0.0
      %vm2126 = vcmp.ge.f32.partialorder %v2094, 0.0
      %vm2127 = vcmp.ge.f32.partialorder %v2095, 0.0
      %vm2128 = vcmp.ge.f32.partialorder %v2096, 0.0
      %vm2129 = vcmp.ge.f32.partialorder %v2097, 0.0
      %vm2130 = vcmp.ge.f32.partialorder %v2098, 0.0
      %vm2131 = vcmp.ge.f32.partialorder %v2099, 0.0
      %vm2132 = vcmp.ge.f32.partialorder %v2100, 0.0
      %vm2133 = vcmp.ge.f32.partialorder %v2101, 0.0
      %vm2134 = vcmp.ge.f32.partialorder %v2102, 0.0
      %vm2135 = vcmp.ge.f32.partialorder %v2103, 0.0
      %vm2136 = vcmp.ge.f32.partialorder %v2104, 0.0
      %vm2137 = vcmp.ge.f32.partialorder %v2105, 0.0
      %vm2138 = vcmp.ge.f32.partialorder %v2106, 0.0
      %vm2139 = vcmp.ge.f32.partialorder %v2107, 0.0
      %vm2140 = vcmp.ge.f32.partialorder %v2108, 0.0
      %vm2141 = vcmp.ge.f32.partialorder %v2109, 0.0
      %vm2142 = vcmp.ge.f32.partialorder %v2110, 0.0
      %v2143 = vmul.f32 %v2079, 0.01
      %v2144 = vmul.f32 %v2080, 0.01
      %v2145 = vmul.f32 %v2081, 0.01
      %v2146 = vmul.f32 %v2082, 0.01
      %v2147 = vmul.f32 %v2083, 0.01
      %v2148 = vmul.f32 %v2084, 0.01
      %v2149 = vmul.f32 %v2085, 0.01
      %v2150 = vmul.f32 %v2086, 0.01
      %v2151 = vmul.f32 %v2087, 0.01
      %v2152 = vmul.f32 %v2088, 0.01
      %v2153 = vmul.f32 %v2089, 0.01
      %v2154 = vmul.f32 %v2090, 0.01
      %v2155 = vmul.f32 %v2091, 0.01
      %v2156 = vmul.f32 %v2092, 0.01
      %v2157 = vmul.f32 %v2093, 0.01
      %v2158 = vmul.f32 %v2094, 0.01
      %v2159 = vmul.f32 %v2095, 0.01
      %v2160 = vmul.f32 %v2096, 0.01
      %v2161 = vmul.f32 %v2097, 0.01
      %v2162 = vmul.f32 %v2098, 0.01
      %v2163 = vmul.f32 %v2099, 0.01
      %v2164 = vmul.f32 %v2100, 0.01
      %v2165 = vmul.f32 %v2101, 0.01
      %v2166 = vmul.f32 %v2102, 0.01
      %v2167 = vmul.f32 %v2103, 0.01
      %v2168 = vmul.f32 %v2104, 0.01
      %v2169 = vmul.f32 %v2105, 0.01
      %v2170 = vmul.f32 %v2106, 0.01
      %v2171 = vmul.f32 %v2107, 0.01
      %v2172 = vmul.f32 %v2108, 0.01
      %v2173 = vmul.f32 %v2109, 0.01
      %v2174 = vmul.f32 %v2110, 0.01
      %v2175 = vsel %vm2111, %v2079, %v2143
      %v2176 = vsel %vm2112, %v2080, %v2144
      %v2177 = vsel %vm2113, %v2081, %v2145
      %v2178 = vsel %vm2114, %v2082, %v2146
      %v2179 = vsel %vm2115, %v2083, %v2147
      %v2180 = vsel %vm2116, %v2084, %v2148
      %v2181 = vsel %vm2117, %v2085, %v2149
      %v2182 = vsel %vm2118, %v2086, %v2150
      %v2183 = vsel %vm2119, %v2087, %v2151
      %v2184 = vsel %vm2120, %v2088, %v2152
      %v2185 = vsel %vm2121, %v2089, %v2153
      %v2186 = vsel %vm2122, %v2090, %v2154
      %v2187 = vsel %vm2123, %v2091, %v2155
      %v2188 = vsel %vm2124, %v2092, %v2156
      %v2189 = vsel %vm2125, %v2093, %v2157
      %v2190 = vsel %vm2126, %v2094, %v2158
      %v2191 = vsel %vm2127, %v2095, %v2159
      %v2192 = vsel %vm2128, %v2096, %v2160
      %v2193 = vsel %vm2129, %v2097, %v2161
      %v2194 = vsel %vm2130, %v2098, %v2162
      %v2195 = vsel %vm2131, %v2099, %v2163
      %v2196 = vsel %vm2132, %v2100, %v2164
      %v2197 = vsel %vm2133, %v2101, %v2165
      %v2198 = vsel %vm2134, %v2102, %v2166
      %v2199 = vsel %vm2135, %v2103, %v2167
      %v2200 = vsel %vm2136, %v2104, %v2168
      %v2201 = vsel %vm2137, %v2105, %v2169
      %v2202 = vsel %vm2138, %v2106, %v2170
      %v2203 = vsel %vm2139, %v2107, %v2171
      %v2204 = vsel %vm2140, %v2108, %v2172
      %v2205 = vsel %vm2141, %v2109, %v2173
      %v2206 = vsel %vm2142, %v2110, %v2174
      %2207 = vst.msk [vmem:[%s197] sm:$0xff] %vm1256, %v2175
      %2208 = vst.msk [vmem:[%s197 + $0x8] sm:$0xff] %vm1256, %v2176
      %2209 = vst.msk [vmem:[%s197 + $0x10] sm:$0xff] %vm1256, %v2177
      %2210 = vst.msk [vmem:[%s197 + $0x18] sm:$0xff] %vm1256, %v2178
      %2211 = vst.msk [vmem:[%s197 + $0x20] sm:$0xff] %vm1256, %v2179
      %2212 = vst.msk [vmem:[%s197 + $0x28] sm:$0xff] %vm1256, %v2180
      %2213 = vst.msk [vmem:[%s197 + $0x30] sm:$0xff] %vm1256, %v2181
      %2214 = vst.msk [vmem:[%s197 + $0x38] sm:$0xff] %vm1256, %v2182
      %2215 = vst.msk [vmem:[%s197 + $0x40] sm:$0xff] %vm1256, %v2183
      %2216 = vst.msk [vmem:[%s197 + $0x48] sm:$0xff] %vm1256, %v2184
      %2217 = vst.msk [vmem:[%s197 + $0x50] sm:$0xff] %vm1256, %v2185
      %2218 = vst.msk [vmem:[%s197 + $0x58] sm:$0xff] %vm1256, %v2186
      %2219 = vst.msk [vmem:[%s197 + $0x60] sm:$0xff] %vm1256, %v2187
      %2220 = vst.msk [vmem:[%s197 + $0x68] sm:$0xff] %vm1256, %v2188
      %2221 = vst.msk [vmem:[%s197 + $0x70] sm:$0xff] %vm1256, %v2189
      %2222 = vst.msk [vmem:[%s197 + $0x78] sm:$0xff] %vm1256, %v2190
      %2223 = vst.msk [vmem:[%s197 + $0x80] sm:$0xff] %vm1256, %v2191
      %2224 = vst.msk [vmem:[%s197 + $0x88] sm:$0xff] %vm1256, %v2192
      %2225 = vst.msk [vmem:[%s197 + $0x90] sm:$0xff] %vm1256, %v2193
      %2226 = vst.msk [vmem:[%s197 + $0x98] sm:$0xff] %vm1256, %v2194
      %2227 = vst.msk [vmem:[%s197 + $0xa0] sm:$0xff] %vm1256, %v2195
      %2228 = vst.msk [vmem:[%s197 + $0xa8] sm:$0xff] %vm1256, %v2196
      %2229 = vst.msk [vmem:[%s197 + $0xb0] sm:$0xff] %vm1256, %v2197
      %2230 = vst.msk [vmem:[%s197 + $0xb8] sm:$0xff] %vm1256, %v2198
      %2231 = vst.msk [vmem:[%s197 + $0xc0] sm:$0xff] %vm1256, %v2199
      %2232 = vst.msk [vmem:[%s197 + $0xc8] sm:$0xff] %vm1256, %v2200
      %2233 = vst.msk [vmem:[%s197 + $0xd0] sm:$0xff] %vm1256, %v2201
      %2234 = vst.msk [vmem:[%s197 + $0xd8] sm:$0xff] %vm1256, %v2202
      %2235 = vst.msk [vmem:[%s197 + $0xe0] sm:$0xff] %vm1256, %v2203
      %2236 = vst.msk [vmem:[%s197 + $0xe8] sm:$0xff] %vm1256, %v2204
      %2237 = vst.msk [vmem:[%s197 + $0xf0] sm:$0xff] %vm1256, %v2205
      %2238 = vst.msk [vmem:[%s197 + $0xf8] sm:$0xff] %vm1256, %v2206
      %p2239 = scmp.lt.s32.totalorder %s15, 1
      %s2240 = scalar_select %p2239, %s15, 1
      %s2241 = smul.addr %s2240, 32
      %s2242 = smul.addr %s2241, 8
      %s2243 = scalar_lea.vmem %s4, %s2242
      // Predicated region
      $region37: #{cqcc_forward.22} parent=35 // pred_check
        %p2244 = pneg %p122
      $region38: #{cqcc_forward.22} parent=35 // pred_check_branch
        %2246 = sbr.rel (%p2244) target = $region40
      $region39: #{cqcc_forward.22} parent=35 // pred_region
        _
      $region40: #{cqcc_forward.22} parent=35 // pred_fallthru
        _
    $region36: #{cqcc_forward.22} parent=5 // pred_fallthru
      _
    %p2247 = scmp.le.s32.totalorder 2, %s10
    // Predicated region
    $region41: #{cqcc_forward.22} parent=5 // pred_check
      %p2248 = pneg %p2247
    $region42: #{cqcc_forward.22} parent=5 // pred_check_branch
      %2250 = sbr.rel (%p2248) target = $region44
    $region43: #{cqcc_forward.22} parent=5 // pred_region
      %s2251 = ssub.s32 %s10, 2
      // Predicated region
      $region45: #{cqcc_forward.22} parent=43 // pred_check
        %p2252 = pneg %p128
      $region46: #{cqcc_forward.22} parent=43 // pred_check_branch
        %2254 = sbr.rel (%p2252) target = $region48
      $region47: #{cqcc_forward.22} parent=43 // pred_region
        %p2255 = scmp.lt.s32.totalorder %s16, 1
        %s2256 = scalar_select %p2255, %s16, 1
        %s2257 = smul.addr %s2256, 32
        %s2258 = smul.addr %s2257, 8
        %s2259 = scalar_lea.vmem %s4, %s2258
      $region48: #{cqcc_forward.22} parent=43 // pred_fallthru
        _
    $region44: #{cqcc_forward.22} parent=5 // pred_fallthru
      _
  $region6: #{cqcc_forward.22} parent=0 // loop_footer
    %s14 = sadd.s32 1, %s10
  $region7: #{cqcc_forward.22} parent=0 // loop_footer_branch
    %9 = sbr.rel target = $region3
  $region8: #{cqcc_forward.22} parent=0 // loop_exit
    _

// kernel: cqcc_forward.24
$region0: #{cqcc_forward.24}
  #allocation0 [shape = 'u32[]', space=smem, size = 0x4, offset = 0x4, fixed_abs, tag = 'smem constant byte address 0x4 - core index']
  #allocation1 [shape = 'u32[144,128]{1,0:T(1,128)}', space=vmem, size = 0x12000, scoped, tag = 'internal scratch']
  %s0 = inlined_call_operand.vmem [shape: f32[8,288], index: 0, kind: input, shape index: {}]
  %s1 = inlined_call_operand.vmem [shape: f32[288,32], index: 1, kind: input, shape index: {}]
  %s2 = inlined_call_operand.vmem [shape: f32[1,32], index: 2, kind: input, shape index: {}]
  %s3 = inlined_call_operand.vmem [shape: f32[8,32], index: 3, kind: output, shape index: {}]
  %s4 = sld [smem:[#allocation0]]
  $region22: #{cqcc_forward.24} parent=0
    _
  %s6 = ssub.s32 1, %s4
  %s7 = scalar_select 0, %s6, %s4
  // Predicated region
  $region2: #{cqcc_forward.24} parent=0 // pred_check
    _
  $region3: #{cqcc_forward.24} parent=0 // pred_check_branch
    %9 = sbr.rel (0) target = $region5
  $region4: #{cqcc_forward.24} parent=0 // pred_region
    _
  $region5: #{cqcc_forward.24} parent=0 // pred_fallthru
    _
  // Predicated region
  $region6: #{cqcc_forward.24} parent=0 // pred_check
    _
  $region7: #{cqcc_forward.24} parent=0 // pred_check_branch
    %11 = sbr.rel (0) target = $region9
  $region8: #{cqcc_forward.24} parent=0 // pred_region
    _
  $region9: #{cqcc_forward.24} parent=0 // pred_fallthru
    _
  // Predicated region
  $region10: #{cqcc_forward.24} parent=0 // pred_check
    _
  $region11: #{cqcc_forward.24} parent=0 // pred_check_branch
    %13 = sbr.rel (0) target = $region13
  $region12: #{cqcc_forward.24} parent=0 // pred_region
    _
  $region13: #{cqcc_forward.24} parent=0 // pred_fallthru
    _
  %v14 = vld [vmem:[%s0] sm:$0xff]
  %v15 = vld [vmem:[%s0 + $0x8] sm:$0xff]
  %v16 = vld [vmem:[%s0 + $0x10] sm:$0xff]
  %v17 = vld [vmem:[%s1] sm:$0xff]
  %v18 = vld [vmem:[%s1 + $0x8] sm:$0xff]
  %v19 = vld [vmem:[%s1 + $0x10] sm:$0xff]
  %v20 = vld [vmem:[%s1 + $0x18] sm:$0xff]
  %v21 = vld [vmem:[%s1 + $0x20] sm:$0xff]
  %v22 = vld [vmem:[%s1 + $0x28] sm:$0xff]
  %v23 = vld [vmem:[%s1 + $0x30] sm:$0xff]
  %v24 = vld [vmem:[%s1 + $0x38] sm:$0xff]
  %v25 = vld [vmem:[%s1 + $0x40] sm:$0xff]
  %v26 = vld [vmem:[%s1 + $0x48] sm:$0xff]
  %v27 = vld [vmem:[%s1 + $0x50] sm:$0xff]
  %v28 = vld [vmem:[%s1 + $0x58] sm:$0xff]
  %v29 = vld [vmem:[%s1 + $0x60] sm:$0xff]
  %v30 = vld [vmem:[%s1 + $0x68] sm:$0xff]
  %v31 = vld [vmem:[%s1 + $0x70] sm:$0xff]
  %v32 = vld [vmem:[%s1 + $0x78] sm:$0xff]
  %v33 = vld [vmem:[%s1 + $0x80] sm:$0xff]
  %v34 = vld [vmem:[%s1 + $0x88] sm:$0xff]
  %v35 = vld [vmem:[%s1 + $0x90] sm:$0xff]
  %v36 = vld [vmem:[%s1 + $0x98] sm:$0xff]
  %v37 = vld [vmem:[%s1 + $0xa0] sm:$0xff]
  %v38 = vld [vmem:[%s1 + $0xa8] sm:$0xff]
  %v39 = vld [vmem:[%s1 + $0xb0] sm:$0xff]
  %v40 = vld [vmem:[%s1 + $0xb8] sm:$0xff]
  %v41 = vld [vmem:[%s1 + $0xc0] sm:$0xff]
  %v42 = vld [vmem:[%s1 + $0xc8] sm:$0xff]
  %v43 = vld [vmem:[%s1 + $0xd0] sm:$0xff]
  %v44 = vld [vmem:[%s1 + $0xd8] sm:$0xff]
  %v45 = vld [vmem:[%s1 + $0xe0] sm:$0xff]
  %v46 = vld [vmem:[%s1 + $0xe8] sm:$0xff]
  %v47 = vld [vmem:[%s1 + $0xf0] sm:$0xff]
  %v48 = vld [vmem:[%s1 + $0xf8] sm:$0xff]
  %v49 = vld [vmem:[%s1 + $0x100] sm:$0xff]
  %v50 = vld [vmem:[%s1 + $0x108] sm:$0xff]
  %v51 = vld [vmem:[%s1 + $0x110] sm:$0xff]
  %v52 = vld [vmem:[%s1 + $0x118] sm:$0xff]
  %v53 = vld [vmem:[%s2] sm:$0x1]
  %v55 = vlaneseq
  %v56 = vshrl.u32 %v55, 7
  %v57 = vsub.s32 0, %v56
  %v58 = vrot.slane %v53, %v57
  %vm60 = vcmask 261120
  %v62 = vsel %vm60, %v16, 0
  %64 = vmatprep.subr.mxu0 0.0
  %65 = vmatpush1.msra.mxu0 %v17
  %66 = vmatprep.subr.mxu0 0.0
  %67 = vmatpush1.msra.mxu0 %v18
  %68 = vmatprep.subr.mxu0 0.0
  %69 = vmatpush1.msra.mxu0 %v19
  %70 = vmatprep.subr.mxu0 0.0
  %71 = vmatpush1.msra.mxu0 %v20
  %72 = vmatprep.subr.mxu0 0.0
  %73 = vmatpush1.msra.mxu0 %v21
  %74 = vmatprep.subr.mxu0 0.0
  %75 = vmatpush1.msra.mxu0 %v22
  %76 = vmatprep.subr.mxu0 0.0
  %77 = vmatpush1.msra.mxu0 %v23
  %78 = vmatprep.subr.mxu0 0.0
  %79 = vmatpush1.msra.mxu0 %v24
  %80 = vmatprep.subr.mxu0 0.0
  %81 = vmatpush1.msra.mxu0 %v25
  %82 = vmatprep.subr.mxu0 0.0
  %83 = vmatpush1.msra.mxu0 %v26
  %84 = vmatprep.subr.mxu0 0.0
  %85 = vmatpush1.msra.mxu0 %v27
  %86 = vmatprep.subr.mxu0 0.0
  %87 = vmatpush1.msra.mxu0 %v28
  %88 = vmatprep.subr.mxu0 0.0
  %89 = vmatpush1.msra.mxu0 %v29
  %90 = vmatprep.subr.mxu0 0.0
  %91 = vmatpush1.msra.mxu0 %v30
  %92 = vmatprep.subr.mxu0 0.0
  %93 = vmatpush1.msra.mxu0 %v31
  %94 = vmatprep.subr.mxu0 0.0
  %95 = vmatpush1.msra.mxu0 %v32
  %96 = vmatprep.subr.mxu0 0.0
  %97 = vmatpush1.msra.mxu0 %v33
  %98 = vmatprep.subr.mxu0 0.0
  %99 = vmatpush1.msra.mxu0 %v34
  %100 = vmatprep.subr.mxu0 0.0
  %101 = vmatpush1.msra.mxu0 %v35
  %102 = vmatprep.subr.mxu0 0.0
  %103 = vmatpush1.msra.mxu0 %v36
  %104 = vmatprep.subr.mxu0 0.0
  %105 = vmatpush1.msra.mxu0 %v37
  %106 = vmatprep.subr.mxu0 0.0
  %107 = vmatpush1.msra.mxu0 %v38
  %108 = vmatprep.subr.mxu0 0.0
  %109 = vmatpush1.msra.mxu0 %v39
  %110 = vmatprep.subr.mxu0 0.0
  %111 = vmatpush1.msra.mxu0 %v40
  %112 = vmatprep.subr.mxu0 0.0
  %113 = vmatpush1.msra.mxu0 %v41
  %114 = vmatprep.subr.mxu0 0.0
  %115 = vmatpush1.msra.mxu0 %v42
  %116 = vmatprep.subr.mxu0 0.0
  %117 = vmatpush1.msra.mxu0 %v43
  %118 = vmatprep.subr.mxu0 0.0
  %119 = vmatpush1.msra.mxu0 %v44
  %120 = vmatprep.subr.mxu0 0.0
  %121 = vmatpush1.msra.mxu0 %v45
  %122 = vmatprep.subr.mxu0 0.0
  %123 = vmatpush1.msra.mxu0 %v46
  %124 = vmatprep.subr.mxu0 0.0
  %125 = vmatpush1.msra.mxu0 %v47
  %126 = vmatprep.subr.mxu0 0.0
  %127 = vmatpush1.msra.mxu0 %v48
  %128 = vmatprep.mubr.f32.mxu0 %v15
  %129 = vmatmul.mubr.f32.gmra.mrb[0].mxu0 %v14
  %v130 = vpop.f32.mrb[0].mxu0
  %v131 = vadd.f32 %v58, %v130
  %v132 = vpop.f32.mrb[0].mxu0
  %133 = vdwg.mxu0
  %134 = vmatprep.subr.mxu0 0.0
  %135 = vmatpush1.msra.mxu0 %v49
  %136 = vmatprep.subr.mxu0 0.0
  %137 = vmatpush1.msra.mxu0 %v50
  %138 = vmatprep.subr.mxu0 0.0
  %139 = vmatpush1.msra.mxu0 %v51
  %140 = vmatprep.subr.mxu0 0.0
  %141 = vmatpush1.msra.mxu0 %v52
  %142 = vmatprep.subr.mxu0 0.0
  %143 = vmatpush1.msra.mxu0 0.0
  %144 = vmatprep.subr.mxu0 0.0
  %145 = vmatpush1.msra.mxu0 0.0
  %146 = vmatprep.subr.mxu0 0.0
  %147 = vmatpush1.msra.mxu0 0.0
  %148 = vmatprep.subr.mxu0 0.0
  %149 = vmatpush1.msra.mxu0 0.0
  %150 = vmatprep.subr.mxu0 0.0
  %151 = vmatpush1.msra.mxu0 0.0
  %152 = vmatprep.subr.mxu0 0.0
  %153 = vmatpush1.msra.mxu0 0.0
  %154 = vmatprep.subr.mxu0 0.0
  %155 = vmatpush1.msra.mxu0 0.0
  %156 = vmatprep.subr.mxu0 0.0
  %157 = vmatpush1.msra.mxu0 0.0
  %158 = vmatprep.subr.mxu0 0.0
  %159 = vmatpush1.msra.mxu0 0.0
  %160 = vmatprep.subr.mxu0 0.0
  %161 = vmatpush1.msra.mxu0 0.0
  %162 = vmatprep.subr.mxu0 0.0
  %163 = vmatpush1.msra.mxu0 0.0
  %164 = vmatprep.subr.mxu0 0.0
  %165 = vmatpush1.msra.mxu0 0.0
  %166 = vmatprep.subr.mxu0 0.0
  %167 = vmatpush1.msra.mxu0 0.0
  %168 = vmatprep.subr.mxu0 0.0
  %169 = vmatpush1.msra.mxu0 0.0
  %170 = vmatprep.subr.mxu0 0.0
  %171 = vmatpush1.msra.mxu0 0.0
  %172 = vmatprep.subr.mxu0 0.0
  %173 = vmatpush1.msra.mxu0 0.0
  %174 = vmatprep.subr.mxu0 0.0
  %175 = vmatpush1.msra.mxu0 0.0
  %176 = vmatprep.subr.mxu0 0.0
  %177 = vmatpush1.msra.mxu0 0.0
  %178 = vmatprep.subr.mxu0 0.0
  %179 = vmatpush1.msra.mxu0 0.0
  %180 = vmatprep.subr.mxu0 0.0
  %181 = vmatpush1.msra.mxu0 0.0
  %182 = vmatprep.subr.mxu0 0.0
  %183 = vmatpush1.msra.mxu0 0.0
  %184 = vmatprep.subr.mxu0 0.0
  %185 = vmatpush1.msra.mxu0 0.0
  %186 = vmatprep.subr.mxu0 0.0
  %187 = vmatpush1.msra.mxu0 0.0
  %188 = vmatprep.subr.mxu0 0.0
  %189 = vmatpush1.msra.mxu0 0.0
  %190 = vmatprep.subr.mxu0 0.0
  %191 = vmatpush1.msra.mxu0 0.0
  %192 = vmatprep.subr.mxu0 0.0
  %193 = vmatpush1.msra.mxu0 0.0
  %194 = vmatprep.subr.mxu0 0.0
  %195 = vmatpush1.msra.mxu0 0.0
  %196 = vmatprep.subr.mxu0 0.0
  %197 = vmatpush1.msra.mxu0 0.0
  %198 = vmatprep.mubr.f32.mxu0 0.0
  %199 = vmatmul.mubr.f32.gmra.mrb[0].mxu0 %v62
  %v200 = vpop.f32.mrb[0].mxu0
  %v201 = vadd.f32 %v131, %v200
  %v202 = vpop.f32.mrb[0].mxu0
  %203 = vdwg.mxu0
  %204 = vst.msk [vmem:[%s3] sm:$0xff] %vm60, %v201
  // Predicated region
  $region14: #{cqcc_forward.24} parent=0 // pred_check
    _
  $region15: #{cqcc_forward.24} parent=0 // pred_check_branch
    %206 = sbr.rel (0) target = $region17
  $region16: #{cqcc_forward.24} parent=0 // pred_region
    _
  $region17: #{cqcc_forward.24} parent=0 // pred_fallthru
    _
  // Predicated region
  $region18: #{cqcc_forward.24} parent=0 // pred_check
    _
  $region19: #{cqcc_forward.24} parent=0 // pred_check_branch
    %208 = sbr.rel (0) target = $region21
  $region20: #{cqcc_forward.24} parent=0 // pred_region
    _
  $region21: #{cqcc_forward.24} parent=0 // pred_fallthru
    _

// kernel: cqcc_forward.26
$region0: #{cqcc_forward.26}
  #allocation0 [shape = 'u32[]', space=smem, size = 0x4, offset = 0x4, fixed_abs, tag = 'smem constant byte address 0x4 - core index']
  #allocation1 [shape = 'u32[144,128]{1,0:T(1,128)}', space=vmem, size = 0x12000, scoped, tag = 'internal scratch']
  %s0 = inlined_call_operand.vmem [shape: f32[8,288], index: 0, kind: input, shape index: {}]
  %s1 = inlined_call_operand.vmem [shape: f32[288,32], index: 1, kind: input, shape index: {}]
  %s2 = inlined_call_operand.vmem [shape: f32[1,32], index: 2, kind: input, shape index: {}]
  %s3 = inlined_call_operand.vmem [shape: f32[8,32], index: 3, kind: input, shape index: {}]
  %s4 = inlined_call_operand.vmem [shape: f32[8,32], index: 4, kind: output, shape index: {}]
  %s5 = sld [smem:[#allocation0]]
  $region26: #{cqcc_forward.26} parent=0
    _
  %s7 = ssub.s32 1, %s5
  %s8 = scalar_select 0, %s7, %s5
  // Predicated region
  $region2: #{cqcc_forward.26} parent=0 // pred_check
    _
  $region3: #{cqcc_forward.26} parent=0 // pred_check_branch
    %10 = sbr.rel (0) target = $region5
  $region4: #{cqcc_forward.26} parent=0 // pred_region
    _
  $region5: #{cqcc_forward.26} parent=0 // pred_fallthru
    _
  // Predicated region
  $region6: #{cqcc_forward.26} parent=0 // pred_check
    _
  $region7: #{cqcc_forward.26} parent=0 // pred_check_branch
    %12 = sbr.rel (0) target = $region9
  $region8: #{cqcc_forward.26} parent=0 // pred_region
    _
  $region9: #{cqcc_forward.26} parent=0 // pred_fallthru
    _
  // Predicated region
  $region10: #{cqcc_forward.26} parent=0 // pred_check
    _
  $region11: #{cqcc_forward.26} parent=0 // pred_check_branch
    %14 = sbr.rel (0) target = $region13
  $region12: #{cqcc_forward.26} parent=0 // pred_region
    _
  $region13: #{cqcc_forward.26} parent=0 // pred_fallthru
    _
  // Predicated region
  $region14: #{cqcc_forward.26} parent=0 // pred_check
    _
  $region15: #{cqcc_forward.26} parent=0 // pred_check_branch
    %16 = sbr.rel (0) target = $region17
  $region16: #{cqcc_forward.26} parent=0 // pred_region
    _
  $region17: #{cqcc_forward.26} parent=0 // pred_fallthru
    _
  %v17 = vld [vmem:[%s0] sm:$0xff]
  %v18 = vld [vmem:[%s0 + $0x8] sm:$0xff]
  %v19 = vld [vmem:[%s0 + $0x10] sm:$0xff]
  %v20 = vld [vmem:[%s1] sm:$0xff]
  %v21 = vld [vmem:[%s1 + $0x8] sm:$0xff]
  %v22 = vld [vmem:[%s1 + $0x10] sm:$0xff]
  %v23 = vld [vmem:[%s1 + $0x18] sm:$0xff]
  %v24 = vld [vmem:[%s1 + $0x20] sm:$0xff]
  %v25 = vld [vmem:[%s1 + $0x28] sm:$0xff]
  %v26 = vld [vmem:[%s1 + $0x30] sm:$0xff]
  %v27 = vld [vmem:[%s1 + $0x38] sm:$0xff]
  %v28 = vld [vmem:[%s1 + $0x40] sm:$0xff]
  %v29 = vld [vmem:[%s1 + $0x48] sm:$0xff]
  %v30 = vld [vmem:[%s1 + $0x50] sm:$0xff]
  %v31 = vld [vmem:[%s1 + $0x58] sm:$0xff]
  %v32 = vld [vmem:[%s1 + $0x60] sm:$0xff]
  %v33 = vld [vmem:[%s1 + $0x68] sm:$0xff]
  %v34 = vld [vmem:[%s1 + $0x70] sm:$0xff]
  %v35 = vld [vmem:[%s1 + $0x78] sm:$0xff]
  %v36 = vld [vmem:[%s1 + $0x80] sm:$0xff]
  %v37 = vld [vmem:[%s1 + $0x88] sm:$0xff]
  %v38 = vld [vmem:[%s1 + $0x90] sm:$0xff]
  %v39 = vld [vmem:[%s1 + $0x98] sm:$0xff]
  %v40 = vld [vmem:[%s1 + $0xa0] sm:$0xff]
  %v41 = vld [vmem:[%s1 + $0xa8] sm:$0xff]
  %v42 = vld [vmem:[%s1 + $0xb0] sm:$0xff]
  %v43 = vld [vmem:[%s1 + $0xb8] sm:$0xff]
  %v44 = vld [vmem:[%s1 + $0xc0] sm:$0xff]
  %v45 = vld [vmem:[%s1 + $0xc8] sm:$0xff]
  %v46 = vld [vmem:[%s1 + $0xd0] sm:$0xff]
  %v47 = vld [vmem:[%s1 + $0xd8] sm:$0xff]
  %v48 = vld [vmem:[%s1 + $0xe0] sm:$0xff]
  %v49 = vld [vmem:[%s1 + $0xe8] sm:$0xff]
  %v50 = vld [vmem:[%s1 + $0xf0] sm:$0xff]
  %v51 = vld [vmem:[%s1 + $0xf8] sm:$0xff]
  %v52 = vld [vmem:[%s1 + $0x100] sm:$0xff]
  %v53 = vld [vmem:[%s1 + $0x108] sm:$0xff]
  %v54 = vld [vmem:[%s1 + $0x110] sm:$0xff]
  %v55 = vld [vmem:[%s1 + $0x118] sm:$0xff]
  %v56 = vld [vmem:[%s2] sm:$0x1]
  %v58 = vlaneseq
  %v59 = vshrl.u32 %v58, 7
  %v60 = vsub.s32 0, %v59
  %v61 = vrot.slane %v56, %v60
  %vm63 = vcmask 261120
  %v65 = vsel %vm63, %v19, 0
  %67 = vmatprep.subr.mxu0 0.0
  %68 = vmatpush1.msra.mxu0 %v20
  %69 = vmatprep.subr.mxu0 0.0
  %70 = vmatpush1.msra.mxu0 %v21
  %71 = vmatprep.subr.mxu0 0.0
  %72 = vmatpush1.msra.mxu0 %v22
  %73 = vmatprep.subr.mxu0 0.0
  %74 = vmatpush1.msra.mxu0 %v23
  %75 = vmatprep.subr.mxu0 0.0
  %76 = vmatpush1.msra.mxu0 %v24
  %77 = vmatprep.subr.mxu0 0.0
  %78 = vmatpush1.msra.mxu0 %v25
  %79 = vmatprep.subr.mxu0 0.0
  %80 = vmatpush1.msra.mxu0 %v26
  %81 = vmatprep.subr.mxu0 0.0
  %82 = vmatpush1.msra.mxu0 %v27
  %83 = vmatprep.subr.mxu0 0.0
  %84 = vmatpush1.msra.mxu0 %v28
  %85 = vmatprep.subr.mxu0 0.0
  %86 = vmatpush1.msra.mxu0 %v29
  %87 = vmatprep.subr.mxu0 0.0
  %88 = vmatpush1.msra.mxu0 %v30
  %89 = vmatprep.subr.mxu0 0.0
  %90 = vmatpush1.msra.mxu0 %v31
  %91 = vmatprep.subr.mxu0 0.0
  %92 = vmatpush1.msra.mxu0 %v32
  %93 = vmatprep.subr.mxu0 0.0
  %94 = vmatpush1.msra.mxu0 %v33
  %95 = vmatprep.subr.mxu0 0.0
  %96 = vmatpush1.msra.mxu0 %v34
  %97 = vmatprep.subr.mxu0 0.0
  %98 = vmatpush1.msra.mxu0 %v35
  %99 = vmatprep.subr.mxu0 0.0
  %100 = vmatpush1.msra.mxu0 %v36
  %101 = vmatprep.subr.mxu0 0.0
  %102 = vmatpush1.msra.mxu0 %v37
  %103 = vmatprep.subr.mxu0 0.0
  %104 = vmatpush1.msra.mxu0 %v38
  %105 = vmatprep.subr.mxu0 0.0
  %106 = vmatpush1.msra.mxu0 %v39
  %107 = vmatprep.subr.mxu0 0.0
  %108 = vmatpush1.msra.mxu0 %v40
  %109 = vmatprep.subr.mxu0 0.0
  %110 = vmatpush1.msra.mxu0 %v41
  %111 = vmatprep.subr.mxu0 0.0
  %112 = vmatpush1.msra.mxu0 %v42
  %113 = vmatprep.subr.mxu0 0.0
  %114 = vmatpush1.msra.mxu0 %v43
  %115 = vmatprep.subr.mxu0 0.0
  %116 = vmatpush1.msra.mxu0 %v44
  %117 = vmatprep.subr.mxu0 0.0
  %118 = vmatpush1.msra.mxu0 %v45
  %119 = vmatprep.subr.mxu0 0.0
  %120 = vmatpush1.msra.mxu0 %v46
  %121 = vmatprep.subr.mxu0 0.0
  %122 = vmatpush1.msra.mxu0 %v47
  %123 = vmatprep.subr.mxu0 0.0
  %124 = vmatpush1.msra.mxu0 %v48
  %125 = vmatprep.subr.mxu0 0.0
  %126 = vmatpush1.msra.mxu0 %v49
  %127 = vmatprep.subr.mxu0 0.0
  %128 = vmatpush1.msra.mxu0 %v50
  %129 = vmatprep.subr.mxu0 0.0
  %130 = vmatpush1.msra.mxu0 %v51
  %131 = vmatprep.mubr.f32.mxu0 %v18
  %132 = vmatmul.mubr.f32.gmra.mrb[0].mxu0 %v17
  %v133 = vpop.f32.mrb[0].mxu0
  %v134 = vadd.f32 %v61, %v133
  %v135 = vpop.f32.mrb[0].mxu0
  %136 = vdwg.mxu0
  %137 = vmatprep.subr.mxu0 0.0
  %138 = vmatpush1.msra.mxu0 %v52
  %139 = vmatprep.subr.mxu0 0.0
  %140 = vmatpush1.msra.mxu0 %v53
  %141 = vmatprep.subr.mxu0 0.0
  %142 = vmatpush1.msra.mxu0 %v54
  %143 = vmatprep.subr.mxu0 0.0
  %144 = vmatpush1.msra.mxu0 %v55
  %145 = vmatprep.subr.mxu0 0.0
  %146 = vmatpush1.msra.mxu0 0.0
  %147 = vmatprep.subr.mxu0 0.0
  %148 = vmatpush1.msra.mxu0 0.0
  %149 = vmatprep.subr.mxu0 0.0
  %150 = vmatpush1.msra.mxu0 0.0
  %151 = vmatprep.subr.mxu0 0.0
  %152 = vmatpush1.msra.mxu0 0.0
  %153 = vmatprep.subr.mxu0 0.0
  %154 = vmatpush1.msra.mxu0 0.0
  %155 = vmatprep.subr.mxu0 0.0
  %156 = vmatpush1.msra.mxu0 0.0
  %157 = vmatprep.subr.mxu0 0.0
  %158 = vmatpush1.msra.mxu0 0.0
  %159 = vmatprep.subr.mxu0 0.0
  %160 = vmatpush1.msra.mxu0 0.0
  %161 = vmatprep.subr.mxu0 0.0
  %162 = vmatpush1.msra.mxu0 0.0
  %163 = vmatprep.subr.mxu0 0.0
  %164 = vmatpush1.msra.mxu0 0.0
  %165 = vmatprep.subr.mxu0 0.0
  %166 = vmatpush1.msra.mxu0 0.0
  %167 = vmatprep.subr.mxu0 0.0
  %168 = vmatpush1.msra.mxu0 0.0
  %169 = vmatprep.subr.mxu0 0.0
  %170 = vmatpush1.msra.mxu0 0.0
  %171 = vmatprep.subr.mxu0 0.0
  %172 = vmatpush1.msra.mxu0 0.0
  %173 = vmatprep.subr.mxu0 0.0
  %174 = vmatpush1.msra.mxu0 0.0
  %175 = vmatprep.subr.mxu0 0.0
  %176 = vmatpush1.msra.mxu0 0.0
  %177 = vmatprep.subr.mxu0 0.0
  %178 = vmatpush1.msra.mxu0 0.0
  %179 = vmatprep.subr.mxu0 0.0
  %180 = vmatpush1.msra.mxu0 0.0
  %181 = vmatprep.subr.mxu0 0.0
  %182 = vmatpush1.msra.mxu0 0.0
  %183 = vmatprep.subr.mxu0 0.0
  %184 = vmatpush1.msra.mxu0 0.0
  %185 = vmatprep.subr.mxu0 0.0
  %186 = vmatpush1.msra.mxu0 0.0
  %187 = vmatprep.subr.mxu0 0.0
  %188 = vmatpush1.msra.mxu0 0.0
  %189 = vmatprep.subr.mxu0 0.0
  %190 = vmatpush1.msra.mxu0 0.0
  %191 = vmatprep.subr.mxu0 0.0
  %192 = vmatpush1.msra.mxu0 0.0
  %193 = vmatprep.subr.mxu0 0.0
  %194 = vmatpush1.msra.mxu0 0.0
  %195 = vmatprep.subr.mxu0 0.0
  %196 = vmatpush1.msra.mxu0 0.0
  %197 = vmatprep.subr.mxu0 0.0
  %198 = vmatpush1.msra.mxu0 0.0
  %199 = vmatprep.subr.mxu0 0.0
  %200 = vmatpush1.msra.mxu0 0.0
  %201 = vmatprep.mubr.f32.mxu0 0.0
  %202 = vmatmul.mubr.f32.gmra.mrb[0].mxu0 %v65
  %v203 = vpop.f32.mrb[0].mxu0
  %v204 = vadd.f32 %v134, %v203
  %v205 = vpop.f32.mrb[0].mxu0
  %206 = vdwg.mxu0
  %v207 = vld [vmem:[%s3] sm:$0xff]
  %v208 = vadd.f32 %v204, %v207
  %209 = vst.msk [vmem:[%s4] sm:$0xff] %vm63, %v208
  // Predicated region
  $region18: #{cqcc_forward.26} parent=0 // pred_check
    _
  $region19: #{cqcc_forward.26} parent=0 // pred_check_branch
    %211 = sbr.rel (0) target = $region21
  $region20: #{cqcc_forward.26} parent=0 // pred_region
    _
  $region21: #{cqcc_forward.26} parent=0 // pred_fallthru
    _
  // Predicated region
  $region22: #{cqcc_forward.26} parent=0 // pred_check
    _
  $region23: #{cqcc_forward.26} parent=0 // pred_check_branch
    %213 = sbr.rel (0) target = $region25
  $region24: #{cqcc_forward.26} parent=0 // pred_region
    _
  $region25: #{cqcc_forward.26} parent=0 // pred_fallthru
    _

// kernel: cqcc_forward.25
$region0: #{cqcc_forward.25}
  #allocation0 [shape = 'u32[]', space=smem, size = 0x4, offset = 0x4, fixed_abs, tag = 'smem constant byte address 0x4 - core index']
  #allocation1 [shape = 'u32[144,128]{1,0:T(1,128)}', space=vmem, size = 0x12000, scoped, tag = 'internal scratch']
  %s0 = inlined_call_operand.vmem [shape: f32[2,8,8,32], index: 0, kind: input, shape index: {}]
  %s1 = inlined_call_operand.vmem [shape: f32[288,32], index: 1, kind: input, shape index: {}]
  %s2 = inlined_call_operand.vmem [shape: f32[1,32], index: 2, kind: input, shape index: {}]
  %s3 = inlined_call_operand.vmem [shape: f32[1,32], index: 3, kind: input, shape index: {}]
  %s4 = inlined_call_operand.vmem [shape: f32[2,6,6,32], index: 4, kind: output, shape index: {}]
  %s5 = sld [smem:[#allocation0]]
  $region49: #{cqcc_forward.25} parent=0
    _
  %s7 = ssub.s32 1, %s5
  %s8 = scalar_select 0, %s7, %s5
  loop: start=0, step=1, limit=4
  $region2: #{cqcc_forward.25} parent=0 // loop_pre_header
    _
  $region3: #{cqcc_forward.25} parent=0 // loop_header
    %s10 = sphi 0, %s14
    %p11 = scmp.ge.s32.totalorder %s10, 4
    %s20 = sphi 0, %s22
    %s23 = sphi 0, %s20
    %s24 = sphi 0, %s23
    %s40 = sphi 0, %s24
    %s44 = sphi 0, %s44
    %s46 = sphi 0, %s44
    %s47 = sphi 0, %s46
    %s61 = sphi 0, %s47
    %s65 = sphi 0, %s65
    %s67 = sphi 0, %s65
    %s68 = sphi 0, %s67
    %s82 = sphi 0, %s68
    %s86 = sphi 0, %s86
    %s88 = sphi 0, %s86
    %s89 = sphi 0, %s88
    %s103 = sphi 0, %s89
    %s109 = sphi 0, %s111
    %s112 = sphi 0, %s109
    %s113 = sphi 0, %s112
    %s129 = sphi 0, %s113
  $region4: #{cqcc_forward.25} parent=0 // loop_header_branch
    %13 = sbr.rel (%p11) target = $region8
  $region5: #{cqcc_forward.25} parent=0 // loop_body
    %s15 = ssub.s32 %s10, 1
    %s16 = ssub.s32 %s10, 2
    %s17 = sadd.s32 %s10, 1
    %s18 = ssub.s32 %s10, %s17
    %p19 = scmp.eq.s32.totalorder %s18, 0
    %s21 = sadd.s32 %s20, 1
    %s22 = scalar_select %p19, %s20, %s21
    %p25 = pneg %p19
    %p26 = scmp.eq.s32.totalorder %s10, 1
    %p27 = por %p25, %p26
    %p28 = scmp.ne.s32.totalorder %s20, %s23
    %p29 = scmp.eq.s32.totalorder %s10, 0
    %p30 = por %p28, %p29
    %p31 = scmp.ne.s32.totalorder %s20, %s23
    %p32 = scmp.eq.s32.totalorder %s15, 1
    %p33 = por %p31, %p32
    %p34 = scmp.ne.s32.totalorder %s23, %s24
    %p35 = scmp.eq.s32.totalorder %s15, 0
    %p36 = por %p34, %p35
    %p37 = scmp.ne.s32.totalorder %s23, %s24
    %p38 = scmp.eq.s32.totalorder %s16, 1
    %p39 = por %p37, %p38
    %p41 = scmp.ne.s32.totalorder %s24, %s40
    %p42 = scmp.eq.s32.totalorder %s16, 0
    %p43 = por %p41, %p42
    %s45 = sadd.s32 %s44, 1
    %p48 = scmp.eq.s32.totalorder %s10, 1
    %p49 = scmp.ne.s32.totalorder %s44, %s46
    %p50 = scmp.eq.s32.totalorder %s10, 0
    %p51 = por %p49, %p50
    %p52 = scmp.ne.s32.totalorder %s44, %s46
    %p53 = scmp.eq.s32.totalorder %s15, 1
    %p54 = por %p52, %p53
    %p55 = scmp.ne.s32.totalorder %s46, %s47
    %p56 = scmp.eq.s32.totalorder %s15, 0
    %p57 = por %p55, %p56
    %p58 = scmp.ne.s32.totalorder %s46, %s47
    %p59 = scmp.eq.s32.totalorder %s16, 1
    %p60 = por %p58, %p59
    %p62 = scmp.ne.s32.totalorder %s47, %s61
    %p63 = scmp.eq.s32.totalorder %s16, 0
    %p64 = por %p62, %p63
    %s66 = sadd.s32 %s65, 1
    %p69 = scmp.eq.s32.totalorder %s10, 1
    %p70 = scmp.ne.s32.totalorder %s65, %s67
    %p71 = scmp.eq.s32.totalorder %s10, 0
    %p72 = por %p70, %p71
    %p73 = scmp.ne.s32.totalorder %s65, %s67
    %p74 = scmp.eq.s32.totalorder %s15, 1
    %p75 = por %p73, %p74
    %p76 = scmp.ne.s32.totalorder %s67, %s68
    %p77 = scmp.eq.s32.totalorder %s15, 0
    %p78 = por %p76, %p77
    %p79 = scmp.ne.s32.totalorder %s67, %s68
    %p80 = scmp.eq.s32.totalorder %s16, 1
    %p81 = por %p79, %p80
    %p83 = scmp.ne.s32.totalorder %s68, %s82
    %p84 = scmp.eq.s32.totalorder %s16, 0
    %p85 = por %p83, %p84
    %s87 = sadd.s32 %s86, 1
    %p90 = scmp.eq.s32.totalorder %s10, 1
    %p91 = scmp.ne.s32.totalorder %s86, %s88
    %p92 = scmp.eq.s32.totalorder %s10, 0
    %p93 = por %p91, %p92
    %p94 = scmp.ne.s32.totalorder %s86, %s88
    %p95 = scmp.eq.s32.totalorder %s15, 1
    %p96 = por %p94, %p95
    %p97 = scmp.ne.s32.totalorder %s88, %s89
    %p98 = scmp.eq.s32.totalorder %s15, 0
    %p99 = por %p97, %p98
    %p100 = scmp.ne.s32.totalorder %s88, %s89
    %p101 = scmp.eq.s32.totalorder %s16, 1
    %p102 = por %p100, %p101
    %p104 = scmp.ne.s32.totalorder %s89, %s103
    %p105 = scmp.eq.s32.totalorder %s16, 0
    %p106 = por %p104, %p105
    %s107 = ssub.s32 %s10, %s17
    %p108 = scmp.eq.s32.totalorder %s107, 0
    %s110 = sadd.s32 %s109, 1
    %s111 = scalar_select %p108, %s109, %s110
    %p114 = pneg %p108
    %p115 = scmp.eq.s32.totalorder %s10, 1
    %p116 = por %p114, %p115
    %p117 = scmp.ne.s32.totalorder %s109, %s112
    %p118 = scmp.eq.s32.totalorder %s10, 0
    %p119 = por %p117, %p118
    %p120 = scmp.ne.s32.totalorder %s109, %s112
    %p121 = scmp.eq.s32.totalorder %s15, 1
    %p122 = por %p120, %p121
    %p123 = scmp.ne.s32.totalorder %s112, %s113
    %p124 = scmp.eq.s32.totalorder %s15, 0
    %p125 = por %p123, %p124
    %p126 = scmp.ne.s32.totalorder %s112, %s113
    %p127 = scmp.eq.s32.totalorder %s16, 1
    %p128 = por %p126, %p127
    %p130 = scmp.ne.s32.totalorder %s113, %s129
    %p131 = scmp.eq.s32.totalorder %s16, 0
    %p132 = por %p130, %p131
    %p133 = scmp.le.s32.totalorder 1, %s10
    %p134 = scmp.lt.s32.totalorder %s10, 3
    %p135 = pnand %p133, %p134
    %p136 = pneg %p135
    // Predicated region
    $region9: #{cqcc_forward.25} parent=5 // pred_check
      _
    $region10: #{cqcc_forward.25} parent=5 // pred_check_branch
      %138 = sbr.rel (%p135) target = $region12
    $region11: #{cqcc_forward.25} parent=5 // pred_region
      %s139 = ssub.s32 %s10, 1
      // Predicated region
      $region13: #{cqcc_forward.25} parent=11 // pred_check
        %p140 = pneg %p57
      $region14: #{cqcc_forward.25} parent=11 // pred_check_branch
        %142 = sbr.rel (%p140) target = $region16
      $region15: #{cqcc_forward.25} parent=11 // pred_region
        _
      $region16: #{cqcc_forward.25} parent=11 // pred_fallthru
        _
      // Predicated region
      $region17: #{cqcc_forward.25} parent=11 // pred_check
        %p143 = pneg %p78
      $region18: #{cqcc_forward.25} parent=11 // pred_check_branch
        %145 = sbr.rel (%p143) target = $region20
      $region19: #{cqcc_forward.25} parent=11 // pred_region
        _
      $region20: #{cqcc_forward.25} parent=11 // pred_fallthru
        _
      // Predicated region
      $region21: #{cqcc_forward.25} parent=11 // pred_check
        %p146 = pneg %p99
      $region22: #{cqcc_forward.25} parent=11 // pred_check_branch
        %148 = sbr.rel (%p146) target = $region24
      $region23: #{cqcc_forward.25} parent=11 // pred_region
        _
      $region24: #{cqcc_forward.25} parent=11 // pred_fallthru
        _
    $region12: #{cqcc_forward.25} parent=5 // pred_fallthru
      _
    %p149 = scmp.lt.s32.totalorder %s10, 2
    // Predicated region
    $region25: #{cqcc_forward.25} parent=5 // pred_check
      %p150 = pneg %p149
    $region26: #{cqcc_forward.25} parent=5 // pred_check_branch
      %152 = sbr.rel (%p150) target = $region28
    $region27: #{cqcc_forward.25} parent=5 // pred_region
      // Predicated region
      $region29: #{cqcc_forward.25} parent=27 // pred_check
        %p153 = pneg %p30
      $region30: #{cqcc_forward.25} parent=27 // pred_check_branch
        %155 = sbr.rel (%p153) target = $region32
      $region31: #{cqcc_forward.25} parent=27 // pred_region
        %p156 = scmp.lt.s32.totalorder %s10, 1
        %s157 = scalar_select %p156, %s10, 1
        %s158 = smul.addr %s157, 8
        %s159 = smul.addr %s158, 8
        %s160 = scalar_lea.vmem %s0, %s159
      $region32: #{cqcc_forward.25} parent=27 // pred_fallthru
        _
    $region28: #{cqcc_forward.25} parent=5 // pred_fallthru
      _
    %p161 = scmp.le.s32.totalorder 1, %s10
    %p162 = scmp.lt.s32.totalorder %s10, 3
    %p163 = pnand %p161, %p162
    %p164 = pneg %p163
    // Predicated region
    $region33: #{cqcc_forward.25} parent=5 // pred_check
      _
    $region34: #{cqcc_forward.25} parent=5 // pred_check_branch
      %166 = sbr.rel (%p163) target = $region36
    $region35: #{cqcc_forward.25} parent=5 // pred_region
      %s167 = ssub.s32 %s10, 1
      %p168 = scmp.lt.s32.totalorder %s15, 1
      %s169 = scalar_select %p168, %s15, 1
      %s170 = smul.addr %s169, 8
      %s171 = smul.addr %s170, 8
      %s172 = scalar_lea.vmem %s0, %s171
      %p173 = pneg %p36
      %p174 = pneg %p33
      %p175 = pneg %p57
      %p176 = pneg %p54
      %p177 = pneg %p78
      %p178 = pneg %p75
      %p179 = pneg %p99
      %p180 = pneg %p96
      %p181 = pneg %p125
      %p182 = pneg %p122
      %p183 = scmp.lt.s32.totalorder %s15, 1
      %s184 = scalar_select %p183, %s15, 1
      %s185 = smul.addr %s184, 6
      %s186 = smul.addr %s185, 8
      %s187 = scalar_lea.vmem %s4, %s186
      %p188 = scmp.lt.s32.totalorder %s15, 1
      %s189 = scalar_select %p188, %s15, 1
      %s190 = smul.addr %s189, 8
      %s191 = smul.addr %s190, 8
      %s192 = scalar_lea.vmem %s0, %s191
      %p193 = scmp.lt.s32.totalorder %s15, 1
      %s194 = scalar_select %p193, %s15, 1
      %s195 = smul.addr %s194, 6
      %s196 = smul.addr %s195, 8
      %s197 = scalar_lea.vmem %s4, %s196
      %v198 = vld [vmem:[%s192] sm:$0x3f]
      %v199 = vld [vmem:[%s192 + $0x8] sm:$0x3f]
      %v200 = vld [vmem:[%s192 + $0x10] sm:$0x3f]
      %v201 = vld [vmem:[%s192 + $0x18] sm:$0x3f]
      %v202 = vld [vmem:[%s192 + $0x20] sm:$0x3f]
      %v203 = vld [vmem:[%s192 + $0x28] sm:$0x3f]
      %v210 = vcombine.high %v198, %v198
      %v212 = vunpack.c.l.s4 1983009808
      %v213 = vunpack.c.0.s8 %v212
      %v214 = vlaneseq
      %v215 = vshrl.u32 %v214, 7
      %v216 = vsub.s32 %v213, %v215
      %v217 = vrot.slane %v198, %v216
      %v219 = vunpack.c.l.s4 1983009808
      %v220 = vunpack.c.0.s8 %v219
      %v221 = vlaneseq
      %v222 = vshrl.u32 %v221, 7
      %v223 = vsub.s32 %v220, %v222
      %v224 = vrot.slane %v210, %v223
      %v225 = vcombine.high %v217, %v217
      %v226 = vcombine.high %v199, %v199
      %v228 = vunpack.c.l.s4 1983009808
      %v229 = vunpack.c.0.s8 %v228
      %v230 = vlaneseq
      %v231 = vshrl.u32 %v230, 7
      %v232 = vsub.s32 %v229, %v231
      %v233 = vrot.slane %v199, %v232
      %v235 = vunpack.c.l.s4 1983009808
      %v236 = vunpack.c.0.s8 %v235
      %v237 = vlaneseq
      %v238 = vshrl.u32 %v237, 7
      %v239 = vsub.s32 %v236, %v238
      %v240 = vrot.slane %v226, %v239
      %v241 = vcombine.high %v233, %v233
      %v242 = vcombine.high %v200, %v200
      %v244 = vunpack.c.l.s4 1983009808
      %v245 = vunpack.c.0.s8 %v244
      %v246 = vlaneseq
      %v247 = vshrl.u32 %v246, 7
      %v248 = vsub.s32 %v245, %v247
      %v249 = vrot.slane %v200, %v248
      %v251 = vunpack.c.l.s4 1983009808
      %v252 = vunpack.c.0.s8 %v251
      %v253 = vlaneseq
      %v254 = vshrl.u32 %v253, 7
      %v255 = vsub.s32 %v252, %v254
      %v256 = vrot.slane %v242, %v255
      %v257 = vcombine.high %v249, %v249
      %v258 = vcombine.high %v201, %v201
      %v260 = vunpack.c.l.s4 1983009808
      %v261 = vunpack.c.0.s8 %v260
      %v262 = vlaneseq
      %v263 = vshrl.u32 %v262, 7
      %v264 = vsub.s32 %v261, %v263
      %v265 = vrot.slane %v201, %v264
      %v267 = vunpack.c.l.s4 1983009808
      %v268 = vunpack.c.0.s8 %v267
      %v269 = vlaneseq
      %v270 = vshrl.u32 %v269, 7
      %v271 = vsub.s32 %v268, %v270
      %v272 = vrot.slane %v258, %v271
      %v273 = vcombine.high %v265, %v265
      %v274 = vcombine.high %v202, %v202
      %v276 = vunpack.c.l.s4 1983009808
      %v277 = vunpack.c.0.s8 %v276
      %v278 = vlaneseq
      %v279 = vshrl.u32 %v278, 7
      %v280 = vsub.s32 %v277, %v279
      %v281 = vrot.slane %v202, %v280
      %v283 = vunpack.c.l.s4 1983009808
      %v284 = vunpack.c.0.s8 %v283
      %v285 = vlaneseq
      %v286 = vshrl.u32 %v285, 7
      %v287 = vsub.s32 %v284, %v286
      %v288 = vrot.slane %v274, %v287
      %v289 = vcombine.high %v281, %v281
      %v290 = vcombine.high %v203, %v203
      %v292 = vunpack.c.l.s4 1983009808
      %v293 = vunpack.c.0.s8 %v292
      %v294 = vlaneseq
      %v295 = vshrl.u32 %v294, 7
      %v296 = vsub.s32 %v293, %v295
      %v297 = vrot.slane %v203, %v296
      %v299 = vunpack.c.l.s4 1983009808
      %v300 = vunpack.c.0.s8 %v299
      %v301 = vlaneseq
      %v302 = vshrl.u32 %v301, 7
      %v303 = vsub.s32 %v300, %v302
      %v304 = vrot.slane %v290, %v303
      %v305 = vcombine.high %v297, %v297
      %v306 = vld [vmem:[%s192 + $0x1] sm:$0x3f]
      %v307 = vld [vmem:[%s192 + $0x9] sm:$0x3f]
      %v308 = vld [vmem:[%s192 + $0x11] sm:$0x3f]
      %v309 = vld [vmem:[%s192 + $0x19] sm:$0x3f]
      %v310 = vld [vmem:[%s192 + $0x21] sm:$0x3f]
      %v311 = vld [vmem:[%s192 + $0x29] sm:$0x3f]
      %v318 = vcombine.high %v306, %v306
      %v320 = vunpack.c.l.s4 1983009808
      %v321 = vunpack.c.0.s8 %v320
      %v322 = vlaneseq
      %v323 = vshrl.u32 %v322, 7
      %v324 = vsub.s32 %v321, %v323
      %v325 = vrot.slane %v306, %v324
      %v327 = vunpack.c.l.s4 1983009808
      %v328 = vunpack.c.0.s8 %v327
      %v329 = vlaneseq
      %v330 = vshrl.u32 %v329, 7
      %v331 = vsub.s32 %v328, %v330
      %v332 = vrot.slane %v318, %v331
      %v333 = vcombine.high %v325, %v325
      %v334 = vcombine.high %v307, %v307
      %v336 = vunpack.c.l.s4 1983009808
      %v337 = vunpack.c.0.s8 %v336
      %v338 = vlaneseq
      %v339 = vshrl.u32 %v338, 7
      %v340 = vsub.s32 %v337, %v339
      %v341 = vrot.slane %v307, %v340
      %v343 = vunpack.c.l.s4 1983009808
      %v344 = vunpack.c.0.s8 %v343
      %v345 = vlaneseq
      %v346 = vshrl.u32 %v345, 7
      %v347 = vsub.s32 %v344, %v346
      %v348 = vrot.slane %v334, %v347
      %v349 = vcombine.high %v341, %v341
      %v350 = vcombine.high %v308, %v308
      %v352 = vunpack.c.l.s4 1983009808
      %v353 = vunpack.c.0.s8 %v352
      %v354 = vlaneseq
      %v355 = vshrl.u32 %v354, 7
      %v356 = vsub.s32 %v353, %v355
      %v357 = vrot.slane %v308, %v356
      %v359 = vunpack.c.l.s4 1983009808
      %v360 = vunpack.c.0.s8 %v359
      %v361 = vlaneseq
      %v362 = vshrl.u32 %v361, 7
      %v363 = vsub.s32 %v360, %v362
      %v364 = vrot.slane %v350, %v363
      %v365 = vcombine.high %v357, %v357
      %v366 = vcombine.high %v309, %v309
      %v368 = vunpack.c.l.s4 1983009808
      %v369 = vunpack.c.0.s8 %v368
      %v370 = vlaneseq
      %v371 = vshrl.u32 %v370, 7
      %v372 = vsub.s32 %v369, %v371
      %v373 = vrot.slane %v309, %v372
      %v375 = vunpack.c.l.s4 1983009808
      %v376 = vunpack.c.0.s8 %v375
      %v377 = vlaneseq
      %v378 = vshrl.u32 %v377, 7
      %v379 = vsub.s32 %v376, %v378
      %v380 = vrot.slane %v366, %v379
      %v381 = vcombine.high %v373, %v373
      %v382 = vcombine.high %v310, %v310
      %v384 = vunpack.c.l.s4 1983009808
      %v385 = vunpack.c.0.s8 %v384
      %v386 = vlaneseq
      %v387 = vshrl.u32 %v386, 7
      %v388 = vsub.s32 %v385, %v387
      %v389 = vrot.slane %v310, %v388
      %v391 = vunpack.c.l.s4 1983009808
      %v392 = vunpack.c.0.s8 %v391
      %v393 = vlaneseq
      %v394 = vshrl.u32 %v393, 7
      %v395 = vsub.s32 %v392, %v394
      %v396 = vrot.slane %v382, %v395
      %v397 = vcombine.high %v389, %v389
      %v398 = vcombine.high %v311, %v311
      %v400 = vunpack.c.l.s4 1983009808
      %v401 = vunpack.c.0.s8 %v400
      %v402 = vlaneseq
      %v403 = vshrl.u32 %v402, 7
      %v404 = vsub.s32 %v401, %v403
      %v405 = vrot.slane %v311, %v404
      %v407 = vunpack.c.l.s4 1983009808
      %v408 = vunpack.c.0.s8 %v407
      %v409 = vlaneseq
      %v410 = vshrl.u32 %v409, 7
      %v411 = vsub.s32 %v408, %v410
      %v412 = vrot.slane %v398, %v411
      %v413 = vcombine.high %v405, %v405
      %v414 = vld [vmem:[%s192 + $0x2] sm:$0x3f]
      %v415 = vld [vmem:[%s192 + $0xa] sm:$0x3f]
      %v416 = vld [vmem:[%s192 + $0x12] sm:$0x3f]
      %v417 = vld [vmem:[%s192 + $0x1a] sm:$0x3f]
      %v418 = vld [vmem:[%s192 + $0x22] sm:$0x3f]
      %v419 = vld [vmem:[%s192 + $0x2a] sm:$0x3f]
      %v426 = vcombine.high %v414, %v414
      %v428 = vunpack.c.l.s4 1983009808
      %v429 = vunpack.c.0.s8 %v428
      %v430 = vlaneseq
      %v431 = vshrl.u32 %v430, 7
      %v432 = vsub.s32 %v429, %v431
      %v433 = vrot.slane %v414, %v432
      %v435 = vunpack.c.l.s4 1983009808
      %v436 = vunpack.c.0.s8 %v435
      %v437 = vlaneseq
      %v438 = vshrl.u32 %v437, 7
      %v439 = vsub.s32 %v436, %v438
      %v440 = vrot.slane %v426, %v439
      %v441 = vcombine.high %v433, %v433
      %v442 = vcombine.high %v415, %v415
      %v444 = vunpack.c.l.s4 1983009808
      %v445 = vunpack.c.0.s8 %v444
      %v446 = vlaneseq
      %v447 = vshrl.u32 %v446, 7
      %v448 = vsub.s32 %v445, %v447
      %v449 = vrot.slane %v415, %v448
      %v451 = vunpack.c.l.s4 1983009808
      %v452 = vunpack.c.0.s8 %v451
      %v453 = vlaneseq
      %v454 = vshrl.u32 %v453, 7
      %v455 = vsub.s32 %v452, %v454
      %v456 = vrot.slane %v442, %v455
      %v457 = vcombine.high %v449, %v449
      %v458 = vcombine.high %v416, %v416
      %v460 = vunpack.c.l.s4 1983009808
      %v461 = vunpack.c.0.s8 %v460
      %v462 = vlaneseq
      %v463 = vshrl.u32 %v462, 7
      %v464 = vsub.s32 %v461, %v463
      %v465 = vrot.slane %v416, %v464
      %v467 = vunpack.c.l.s4 1983009808
      %v468 = vunpack.c.0.s8 %v467
      %v469 = vlaneseq
      %v470 = vshrl.u32 %v469, 7
      %v471 = vsub.s32 %v468, %v470
      %v472 = vrot.slane %v458, %v471
      %v473 = vcombine.high %v465, %v465
      %v474 = vcombine.high %v417, %v417
      %v476 = vunpack.c.l.s4 1983009808
      %v477 = vunpack.c.0.s8 %v476
      %v478 = vlaneseq
      %v479 = vshrl.u32 %v478, 7
      %v480 = vsub.s32 %v477, %v479
      %v481 = vrot.slane %v417, %v480
      %v483 = vunpack.c.l.s4 1983009808
      %v484 = vunpack.c.0.s8 %v483
      %v485 = vlaneseq
      %v486 = vshrl.u32 %v485, 7
      %v487 = vsub.s32 %v484, %v486
      %v488 = vrot.slane %v474, %v487
      %v489 = vcombine.high %v481, %v481
      %v490 = vcombine.high %v418, %v418
      %v492 = vunpack.c.l.s4 1983009808
      %v493 = vunpack.c.0.s8 %v492
      %v494 = vlaneseq
      %v495 = vshrl.u32 %v494, 7
      %v496 = vsub.s32 %v493, %v495
      %v497 = vrot.slane %v418, %v496
      %v499 = vunpack.c.l.s4 1983009808
      %v500 = vunpack.c.0.s8 %v499
      %v501 = vlaneseq
      %v502 = vshrl.u32 %v501, 7
      %v503 = vsub.s32 %v500, %v502
      %v504 = vrot.slane %v490, %v503
      %v505 = vcombine.high %v497, %v497
      %v506 = vcombine.high %v419, %v419
      %v508 = vunpack.c.l.s4 1983009808
      %v509 = vunpack.c.0.s8 %v508
      %v510 = vlaneseq
      %v511 = vshrl.u32 %v510, 7
      %v512 = vsub.s32 %v509, %v511
      %v513 = vrot.slane %v419, %v512
      %v515 = vunpack.c.l.s4 1983009808
      %v516 = vunpack.c.0.s8 %v515
      %v517 = vlaneseq
      %v518 = vshrl.u32 %v517, 7
      %v519 = vsub.s32 %v516, %v518
      %v520 = vrot.slane %v506, %v519
      %v521 = vcombine.high %v513, %v513
      %s522 = scalar_lea.vmem %s192, 8
      %v523 = vld [vmem:[%s522] sm:$0x3f]
      %v524 = vld [vmem:[%s522 + $0x8] sm:$0x3f]
      %v525 = vld [vmem:[%s522 + $0x10] sm:$0x3f]
      %v526 = vld [vmem:[%s522 + $0x18] sm:$0x3f]
      %v527 = vld [vmem:[%s522 + $0x20] sm:$0x3f]
      %v528 = vld [vmem:[%s522 + $0x28] sm:$0x3f]
      %v535 = vcombine.high %v523, %v523
      %v537 = vunpack.c.l.s4 1983009808
      %v538 = vunpack.c.0.s8 %v537
      %v539 = vlaneseq
      %v540 = vshrl.u32 %v539, 7
      %v541 = vsub.s32 %v538, %v540
      %v542 = vrot.slane %v523, %v541
      %v544 = vunpack.c.l.s4 1983009808
      %v545 = vunpack.c.0.s8 %v544
      %v546 = vlaneseq
      %v547 = vshrl.u32 %v546, 7
      %v548 = vsub.s32 %v545, %v547
      %v549 = vrot.slane %v535, %v548
      %v550 = vcombine.high %v542, %v542
      %v551 = vcombine.high %v524, %v524
      %v553 = vunpack.c.l.s4 1983009808
      %v554 = vunpack.c.0.s8 %v553
      %v555 = vlaneseq
      %v556 = vshrl.u32 %v555, 7
      %v557 = vsub.s32 %v554, %v556
      %v558 = vrot.slane %v524, %v557
      %v560 = vunpack.c.l.s4 1983009808
      %v561 = vunpack.c.0.s8 %v560
      %v562 = vlaneseq
      %v563 = vshrl.u32 %v562, 7
      %v564 = vsub.s32 %v561, %v563
      %v565 = vrot.slane %v551, %v564
      %v566 = vcombine.high %v558, %v558
      %v567 = vcombine.high %v525, %v525
      %v569 = vunpack.c.l.s4 1983009808
      %v570 = vunpack.c.0.s8 %v569
      %v571 = vlaneseq
      %v572 = vshrl.u32 %v571, 7
      %v573 = vsub.s32 %v570, %v572
      %v574 = vrot.slane %v525, %v573
      %v576 = vunpack.c.l.s4 1983009808
      %v577 = vunpack.c.0.s8 %v576
      %v578 = vlaneseq
      %v579 = vshrl.u32 %v578, 7
      %v580 = vsub.s32 %v577, %v579
      %v581 = vrot.slane %v567, %v580
      %v582 = vcombine.high %v574, %v574
      %v583 = vcombine.high %v526, %v526
      %v585 = vunpack.c.l.s4 1983009808
      %v586 = vunpack.c.0.s8 %v585
      %v587 = vlaneseq
      %v588 = vshrl.u32 %v587, 7
      %v589 = vsub.s32 %v586, %v588
      %v590 = vrot.slane %v526, %v589
      %v592 = vunpack.c.l.s4 1983009808
      %v593 = vunpack.c.0.s8 %v592
      %v594 = vlaneseq
      %v595 = vshrl.u32 %v594, 7
      %v596 = vsub.s32 %v593, %v595
      %v597 = vrot.slane %v583, %v596
      %v598 = vcombine.high %v590, %v590
      %v599 = vcombine.high %v527, %v527
      %v601 = vunpack.c.l.s4 1983009808
      %v602 = vunpack.c.0.s8 %v601
      %v603 = vlaneseq
      %v604 = vshrl.u32 %v603, 7
      %v605 = vsub.s32 %v602, %v604
      %v606 = vrot.slane %v527, %v605
      %v608 = vunpack.c.l.s4 1983009808
      %v609 = vunpack.c.0.s8 %v608
      %v610 = vlaneseq
      %v611 = vshrl.u32 %v610, 7
      %v612 = vsub.s32 %v609, %v611
      %v613 = vrot.slane %v599, %v612
      %v614 = vcombine.high %v606, %v606
      %v615 = vcombine.high %v528, %v528
      %v617 = vunpack.c.l.s4 1983009808
      %v618 = vunpack.c.0.s8 %v617
      %v619 = vlaneseq
      %v620 = vshrl.u32 %v619, 7
      %v621 = vsub.s32 %v618, %v620
      %v622 = vrot.slane %v528, %v621
      %v624 = vunpack.c.l.s4 1983009808
      %v625 = vunpack.c.0.s8 %v624
      %v626 = vlaneseq
      %v627 = vshrl.u32 %v626, 7
      %v628 = vsub.s32 %v625, %v627
      %v629 = vrot.slane %v615, %v628
      %v630 = vcombine.high %v622, %v622
      %v631 = vld [vmem:[%s522 + $0x1] sm:$0x3f]
      %v632 = vld [vmem:[%s522 + $0x9] sm:$0x3f]
      %v633 = vld [vmem:[%s522 + $0x11] sm:$0x3f]
      %v634 = vld [vmem:[%s522 + $0x19] sm:$0x3f]
      %v635 = vld [vmem:[%s522 + $0x21] sm:$0x3f]
      %v636 = vld [vmem:[%s522 + $0x29] sm:$0x3f]
      %v643 = vcombine.high %v631, %v631
      %v645 = vunpack.c.l.s4 1983009808
      %v646 = vunpack.c.0.s8 %v645
      %v647 = vlaneseq
      %v648 = vshrl.u32 %v647, 7
      %v649 = vsub.s32 %v646, %v648
      %v650 = vrot.slane %v631, %v649
      %v652 = vunpack.c.l.s4 1983009808
      %v653 = vunpack.c.0.s8 %v652
      %v654 = vlaneseq
      %v655 = vshrl.u32 %v654, 7
      %v656 = vsub.s32 %v653, %v655
      %v657 = vrot.slane %v643, %v656
      %v658 = vcombine.high %v650, %v650
      %v659 = vcombine.high %v632, %v632
      %v661 = vunpack.c.l.s4 1983009808
      %v662 = vunpack.c.0.s8 %v661
      %v663 = vlaneseq
      %v664 = vshrl.u32 %v663, 7
      %v665 = vsub.s32 %v662, %v664
      %v666 = vrot.slane %v632, %v665
      %v668 = vunpack.c.l.s4 1983009808
      %v669 = vunpack.c.0.s8 %v668
      %v670 = vlaneseq
      %v671 = vshrl.u32 %v670, 7
      %v672 = vsub.s32 %v669, %v671
      %v673 = vrot.slane %v659, %v672
      %v674 = vcombine.high %v666, %v666
      %v675 = vcombine.high %v633, %v633
      %v677 = vunpack.c.l.s4 1983009808
      %v678 = vunpack.c.0.s8 %v677
      %v679 = vlaneseq
      %v680 = vshrl.u32 %v679, 7
      %v681 = vsub.s32 %v678, %v680
      %v682 = vrot.slane %v633, %v681
      %v684 = vunpack.c.l.s4 1983009808
      %v685 = vunpack.c.0.s8 %v684
      %v686 = vlaneseq
      %v687 = vshrl.u32 %v686, 7
      %v688 = vsub.s32 %v685, %v687
      %v689 = vrot.slane %v675, %v688
      %v690 = vcombine.high %v682, %v682
      %v691 = vcombine.high %v634, %v634
      %v693 = vunpack.c.l.s4 1983009808
      %v694 = vunpack.c.0.s8 %v693
      %v695 = vlaneseq
      %v696 = vshrl.u32 %v695, 7
      %v697 = vsub.s32 %v694, %v696
      %v698 = vrot.slane %v634, %v697
      %v700 = vunpack.c.l.s4 1983009808
      %v701 = vunpack.c.0.s8 %v700
      %v702 = vlaneseq
      %v703 = vshrl.u32 %v702, 7
      %v704 = vsub.s32 %v701, %v703
      %v705 = vrot.slane %v691, %v704
      %v706 = vcombine.high %v698, %v698
      %v707 = vcombine.high %v635, %v635
      %v709 = vunpack.c.l.s4 1983009808
      %v710 = vunpack.c.0.s8 %v709
      %v711 = vlaneseq
      %v712 = vshrl.u32 %v711, 7
      %v713 = vsub.s32 %v710, %v712
      %v714 = vrot.slane %v635, %v713
      %v716 = vunpack.c.l.s4 1983009808
      %v717 = vunpack.c.0.s8 %v716
      %v718 = vlaneseq
      %v719 = vshrl.u32 %v718, 7
      %v720 = vsub.s32 %v717, %v719
      %v721 = vrot.slane %v707, %v720
      %v722 = vcombine.high %v714, %v714
      %v723 = vcombine.high %v636, %v636
      %v725 = vunpack.c.l.s4 1983009808
      %v726 = vunpack.c.0.s8 %v725
      %v727 = vlaneseq
      %v728 = vshrl.u32 %v727, 7
      %v729 = vsub.s32 %v726, %v728
      %v730 = vrot.slane %v636, %v729
      %v732 = vunpack.c.l.s4 1983009808
      %v733 = vunpack.c.0.s8 %v732
      %v734 = vlaneseq
      %v735 = vshrl.u32 %v734, 7
      %v736 = vsub.s32 %v733, %v735
      %v737 = vrot.slane %v723, %v736
      %v738 = vcombine.high %v730, %v730
      %v739 = vld [vmem:[%s522 + $0x2] sm:$0x3f]
      %v740 = vld [vmem:[%s522 + $0xa] sm:$0x3f]
      %v741 = vld [vmem:[%s522 + $0x12] sm:$0x3f]
      %v742 = vld [vmem:[%s522 + $0x1a] sm:$0x3f]
      %v743 = vld [vmem:[%s522 + $0x22] sm:$0x3f]
      %v744 = vld [vmem:[%s522 + $0x2a] sm:$0x3f]
      %v751 = vcombine.high %v739, %v739
      %v753 = vunpack.c.l.s4 1983009808
      %v754 = vunpack.c.0.s8 %v753
      %v755 = vlaneseq
      %v756 = vshrl.u32 %v755, 7
      %v757 = vsub.s32 %v754, %v756
      %v758 = vrot.slane %v739, %v757
      %v760 = vunpack.c.l.s4 1983009808
      %v761 = vunpack.c.0.s8 %v760
      %v762 = vlaneseq
      %v763 = vshrl.u32 %v762, 7
      %v764 = vsub.s32 %v761, %v763
      %v765 = vrot.slane %v751, %v764
      %v766 = vcombine.high %v758, %v758
      %v767 = vcombine.high %v740, %v740
      %v769 = vunpack.c.l.s4 1983009808
      %v770 = vunpack.c.0.s8 %v769
      %v771 = vlaneseq
      %v772 = vshrl.u32 %v771, 7
      %v773 = vsub.s32 %v770, %v772
      %v774 = vrot.slane %v740, %v773
      %v776 = vunpack.c.l.s4 1983009808
      %v777 = vunpack.c.0.s8 %v776
      %v778 = vlaneseq
      %v779 = vshrl.u32 %v778, 7
      %v780 = vsub.s32 %v777, %v779
      %v781 = vrot.slane %v767, %v780
      %v782 = vcombine.high %v774, %v774
      %v783 = vcombine.high %v741, %v741
      %v785 = vunpack.c.l.s4 1983009808
      %v786 = vunpack.c.0.s8 %v785
      %v787 = vlaneseq
      %v788 = vshrl.u32 %v787, 7
      %v789 = vsub.s32 %v786, %v788
      %v790 = vrot.slane %v741, %v789
      %v792 = vunpack.c.l.s4 1983009808
      %v793 = vunpack.c.0.s8 %v792
      %v794 = vlaneseq
      %v795 = vshrl.u32 %v794, 7
      %v796 = vsub.s32 %v793, %v795
      %v797 = vrot.slane %v783, %v796
      %v798 = vcombine.high %v790, %v790
      %v799 = vcombine.high %v742, %v742
      %v801 = vunpack.c.l.s4 1983009808
      %v802 = vunpack.c.0.s8 %v801
      %v803 = vlaneseq
      %v804 = vshrl.u32 %v803, 7
      %v805 = vsub.s32 %v802, %v804
      %v806 = vrot.slane %v742, %v805
      %v808 = vunpack.c.l.s4 1983009808
      %v809 = vunpack.c.0.s8 %v808
      %v810 = vlaneseq
      %v811 = vshrl.u32 %v810, 7
      %v812 = vsub.s32 %v809, %v811
      %v813 = vrot.slane %v799, %v812
      %v814 = vcombine.high %v806, %v806
      %v815 = vcombine.high %v743, %v743
      %v817 = vunpack.c.l.s4 1983009808
      %v818 = vunpack.c.0.s8 %v817
      %v819 = vlaneseq
      %v820 = vshrl.u32 %v819, 7
      %v821 = vsub.s32 %v818, %v820
      %v822 = vrot.slane %v743, %v821
      %v824 = vunpack.c.l.s4 1983009808
      %v825 = vunpack.c.0.s8 %v824
      %v826 = vlaneseq
      %v827 = vshrl.u32 %v826, 7
      %v828 = vsub.s32 %v825, %v827
      %v829 = vrot.slane %v815, %v828
      %v830 = vcombine.high %v822, %v822
      %v831 = vcombine.high %v744, %v744
      %v833 = vunpack.c.l.s4 1983009808
      %v834 = vunpack.c.0.s8 %v833
      %v835 = vlaneseq
      %v836 = vshrl.u32 %v835, 7
      %v837 = vsub.s32 %v834, %v836
      %v838 = vrot.slane %v744, %v837
      %v840 = vunpack.c.l.s4 1983009808
      %v841 = vunpack.c.0.s8 %v840
      %v842 = vlaneseq
      %v843 = vshrl.u32 %v842, 7
      %v844 = vsub.s32 %v841, %v843
      %v845 = vrot.slane %v831, %v844
      %v846 = vcombine.high %v838, %v838
      %s847 = scalar_lea.vmem %s192, 16
      %v848 = vld [vmem:[%s847] sm:$0x3f]
      %v849 = vld [vmem:[%s847 + $0x8] sm:$0x3f]
      %v850 = vld [vmem:[%s847 + $0x10] sm:$0x3f]
      %v851 = vld [vmem:[%s847 + $0x18] sm:$0x3f]
      %v852 = vld [vmem:[%s847 + $0x20] sm:$0x3f]
      %v853 = vld [vmem:[%s847 + $0x28] sm:$0x3f]
      %v860 = vcombine.high %v848, %v848
      %v862 = vunpack.c.l.s4 1983009808
      %v863 = vunpack.c.0.s8 %v862
      %v864 = vlaneseq
      %v865 = vshrl.u32 %v864, 7
      %v866 = vsub.s32 %v863, %v865
      %v867 = vrot.slane %v848, %v866
      %v869 = vunpack.c.l.s4 1983009808
      %v870 = vunpack.c.0.s8 %v869
      %v871 = vlaneseq
      %v872 = vshrl.u32 %v871, 7
      %v873 = vsub.s32 %v870, %v872
      %v874 = vrot.slane %v860, %v873
      %v875 = vcombine.high %v867, %v867
      %v876 = vcombine.high %v849, %v849
      %v878 = vunpack.c.l.s4 1983009808
      %v879 = vunpack.c.0.s8 %v878
      %v880 = vlaneseq
      %v881 = vshrl.u32 %v880, 7
      %v882 = vsub.s32 %v879, %v881
      %v883 = vrot.slane %v849, %v882
      %v885 = vunpack.c.l.s4 1983009808
      %v886 = vunpack.c.0.s8 %v885
      %v887 = vlaneseq
      %v888 = vshrl.u32 %v887, 7
      %v889 = vsub.s32 %v886, %v888
      %v890 = vrot.slane %v876, %v889
      %v891 = vcombine.high %v883, %v883
      %v892 = vcombine.high %v850, %v850
      %v894 = vunpack.c.l.s4 1983009808
      %v895 = vunpack.c.0.s8 %v894
      %v896 = vlaneseq
      %v897 = vshrl.u32 %v896, 7
      %v898 = vsub.s32 %v895, %v897
      %v899 = vrot.slane %v850, %v898
      %v901 = vunpack.c.l.s4 1983009808
      %v902 = vunpack.c.0.s8 %v901
      %v903 = vlaneseq
      %v904 = vshrl.u32 %v903, 7
      %v905 = vsub.s32 %v902, %v904
      %v906 = vrot.slane %v892, %v905
      %v907 = vcombine.high %v899, %v899
      %v908 = vcombine.high %v851, %v851
      %v910 = vunpack.c.l.s4 1983009808
      %v911 = vunpack.c.0.s8 %v910
      %v912 = vlaneseq
      %v913 = vshrl.u32 %v912, 7
      %v914 = vsub.s32 %v911, %v913
      %v915 = vrot.slane %v851, %v914
      %v917 = vunpack.c.l.s4 1983009808
      %v918 = vunpack.c.0.s8 %v917
      %v919 = vlaneseq
      %v920 = vshrl.u32 %v919, 7
      %v921 = vsub.s32 %v918, %v920
      %v922 = vrot.slane %v908, %v921
      %v923 = vcombine.high %v915, %v915
      %v924 = vcombine.high %v852, %v852
      %v926 = vunpack.c.l.s4 1983009808
      %v927 = vunpack.c.0.s8 %v926
      %v928 = vlaneseq
      %v929 = vshrl.u32 %v928, 7
      %v930 = vsub.s32 %v927, %v929
      %v931 = vrot.slane %v852, %v930
      %v933 = vunpack.c.l.s4 1983009808
      %v934 = vunpack.c.0.s8 %v933
      %v935 = vlaneseq
      %v936 = vshrl.u32 %v935, 7
      %v937 = vsub.s32 %v934, %v936
      %v938 = vrot.slane %v924, %v937
      %v939 = vcombine.high %v931, %v931
      %v940 = vcombine.high %v853, %v853
      %v942 = vunpack.c.l.s4 1983009808
      %v943 = vunpack.c.0.s8 %v942
      %v944 = vlaneseq
      %v945 = vshrl.u32 %v944, 7
      %v946 = vsub.s32 %v943, %v945
      %v947 = vrot.slane %v853, %v946
      %v949 = vunpack.c.l.s4 1983009808
      %v950 = vunpack.c.0.s8 %v949
      %v951 = vlaneseq
      %v952 = vshrl.u32 %v951, 7
      %v953 = vsub.s32 %v950, %v952
      %v954 = vrot.slane %v940, %v953
      %v955 = vcombine.high %v947, %v947
      %v956 = vld [vmem:[%s847 + $0x1] sm:$0x3f]
      %v957 = vld [vmem:[%s847 + $0x9] sm:$0x3f]
      %v958 = vld [vmem:[%s847 + $0x11] sm:$0x3f]
      %v959 = vld [vmem:[%s847 + $0x19] sm:$0x3f]
      %v960 = vld [vmem:[%s847 + $0x21] sm:$0x3f]
      %v961 = vld [vmem:[%s847 + $0x29] sm:$0x3f]
      %v968 = vcombine.high %v956, %v956
      %v970 = vunpack.c.l.s4 1983009808
      %v971 = vunpack.c.0.s8 %v970
      %v972 = vlaneseq
      %v973 = vshrl.u32 %v972, 7
      %v974 = vsub.s32 %v971, %v973
      %v975 = vrot.slane %v956, %v974
      %v977 = vunpack.c.l.s4 1983009808
      %v978 = vunpack.c.0.s8 %v977
      %v979 = vlaneseq
      %v980 = vshrl.u32 %v979, 7
      %v981 = vsub.s32 %v978, %v980
      %v982 = vrot.slane %v968, %v981
      %v983 = vcombine.high %v975, %v975
      %v984 = vcombine.high %v957, %v957
      %v986 = vunpack.c.l.s4 1983009808
      %v987 = vunpack.c.0.s8 %v986
      %v988 = vlaneseq
      %v989 = vshrl.u32 %v988, 7
      %v990 = vsub.s32 %v987, %v989
      %v991 = vrot.slane %v957, %v990
      %v993 = vunpack.c.l.s4 1983009808
      %v994 = vunpack.c.0.s8 %v993
      %v995 = vlaneseq
      %v996 = vshrl.u32 %v995, 7
      %v997 = vsub.s32 %v994, %v996
      %v998 = vrot.slane %v984, %v997
      %v999 = vcombine.high %v991, %v991
      %v1000 = vcombine.high %v958, %v958
      %v1002 = vunpack.c.l.s4 1983009808
      %v1003 = vunpack.c.0.s8 %v1002
      %v1004 = vlaneseq
      %v1005 = vshrl.u32 %v1004, 7
      %v1006 = vsub.s32 %v1003, %v1005
      %v1007 = vrot.slane %v958, %v1006
      %v1009 = vunpack.c.l.s4 1983009808
      %v1010 = vunpack.c.0.s8 %v1009
      %v1011 = vlaneseq
      %v1012 = vshrl.u32 %v1011, 7
      %v1013 = vsub.s32 %v1010, %v1012
      %v1014 = vrot.slane %v1000, %v1013
      %v1015 = vcombine.high %v1007, %v1007
      %v1016 = vcombine.high %v959, %v959
      %v1018 = vunpack.c.l.s4 1983009808
      %v1019 = vunpack.c.0.s8 %v1018
      %v1020 = vlaneseq
      %v1021 = vshrl.u32 %v1020, 7
      %v1022 = vsub.s32 %v1019, %v1021
      %v1023 = vrot.slane %v959, %v1022
      %v1025 = vunpack.c.l.s4 1983009808
      %v1026 = vunpack.c.0.s8 %v1025
      %v1027 = vlaneseq
      %v1028 = vshrl.u32 %v1027, 7
      %v1029 = vsub.s32 %v1026, %v1028
      %v1030 = vrot.slane %v1016, %v1029
      %v1031 = vcombine.high %v1023, %v1023
      %v1032 = vcombine.high %v960, %v960
      %v1034 = vunpack.c.l.s4 1983009808
      %v1035 = vunpack.c.0.s8 %v1034
      %v1036 = vlaneseq
      %v1037 = vshrl.u32 %v1036, 7
      %v1038 = vsub.s32 %v1035, %v1037
      %v1039 = vrot.slane %v960, %v1038
      %v1041 = vunpack.c.l.s4 1983009808
      %v1042 = vunpack.c.0.s8 %v1041
      %v1043 = vlaneseq
      %v1044 = vshrl.u32 %v1043, 7
      %v1045 = vsub.s32 %v1042, %v1044
      %v1046 = vrot.slane %v1032, %v1045
      %v1047 = vcombine.high %v1039, %v1039
      %v1048 = vcombine.high %v961, %v961
      %v1050 = vunpack.c.l.s4 1983009808
      %v1051 = vunpack.c.0.s8 %v1050
      %v1052 = vlaneseq
      %v1053 = vshrl.u32 %v1052, 7
      %v1054 = vsub.s32 %v1051, %v1053
      %v1055 = vrot.slane %v961, %v1054
      %v1057 = vunpack.c.l.s4 1983009808
      %v1058 = vunpack.c.0.s8 %v1057
      %v1059 = vlaneseq
      %v1060 = vshrl.u32 %v1059, 7
      %v1061 = vsub.s32 %v1058, %v1060
      %v1062 = vrot.slane %v1048, %v1061
      %v1063 = vcombine.high %v1055, %v1055
      %v1064 = vld [vmem:[%s847 + $0x2] sm:$0x3f]
      %v1065 = vld [vmem:[%s847 + $0xa] sm:$0x3f]
      %v1066 = vld [vmem:[%s847 + $0x12] sm:$0x3f]
      %v1067 = vld [vmem:[%s847 + $0x1a] sm:$0x3f]
      %v1068 = vld [vmem:[%s847 + $0x22] sm:$0x3f]
      %v1069 = vld [vmem:[%s847 + $0x2a] sm:$0x3f]
      %v1076 = vcombine.high %v1064, %v1064
      %v1078 = vunpack.c.l.s4 1983009808
      %v1079 = vunpack.c.0.s8 %v1078
      %v1080 = vlaneseq
      %v1081 = vshrl.u32 %v1080, 7
      %v1082 = vsub.s32 %v1079, %v1081
      %v1083 = vrot.slane %v1064, %v1082
      %v1085 = vunpack.c.l.s4 1983009808
      %v1086 = vunpack.c.0.s8 %v1085
      %v1087 = vlaneseq
      %v1088 = vshrl.u32 %v1087, 7
      %v1089 = vsub.s32 %v1086, %v1088
      %v1090 = vrot.slane %v1076, %v1089
      %v1091 = vcombine.high %v1083, %v1083
      %v1092 = vcombine.high %v1065, %v1065
      %v1094 = vunpack.c.l.s4 1983009808
      %v1095 = vunpack.c.0.s8 %v1094
      %v1096 = vlaneseq
      %v1097 = vshrl.u32 %v1096, 7
      %v1098 = vsub.s32 %v1095, %v1097
      %v1099 = vrot.slane %v1065, %v1098
      %v1101 = vunpack.c.l.s4 1983009808
      %v1102 = vunpack.c.0.s8 %v1101
      %v1103 = vlaneseq
      %v1104 = vshrl.u32 %v1103, 7
      %v1105 = vsub.s32 %v1102, %v1104
      %v1106 = vrot.slane %v1092, %v1105
      %v1107 = vcombine.high %v1099, %v1099
      %v1108 = vcombine.high %v1066, %v1066
      %v1110 = vunpack.c.l.s4 1983009808
      %v1111 = vunpack.c.0.s8 %v1110
      %v1112 = vlaneseq
      %v1113 = vshrl.u32 %v1112, 7
      %v1114 = vsub.s32 %v1111, %v1113
      %v1115 = vrot.slane %v1066, %v1114
      %v1117 = vunpack.c.l.s4 1983009808
      %v1118 = vunpack.c.0.s8 %v1117
      %v1119 = vlaneseq
      %v1120 = vshrl.u32 %v1119, 7
      %v1121 = vsub.s32 %v1118, %v1120
      %v1122 = vrot.slane %v1108, %v1121
      %v1123 = vcombine.high %v1115, %v1115
      %v1124 = vcombine.high %v1067, %v1067
      %v1126 = vunpack.c.l.s4 1983009808
      %v1127 = vunpack.c.0.s8 %v1126
      %v1128 = vlaneseq
      %v1129 = vshrl.u32 %v1128, 7
      %v1130 = vsub.s32 %v1127, %v1129
      %v1131 = vrot.slane %v1067, %v1130
      %v1133 = vunpack.c.l.s4 1983009808
      %v1134 = vunpack.c.0.s8 %v1133
      %v1135 = vlaneseq
      %v1136 = vshrl.u32 %v1135, 7
      %v1137 = vsub.s32 %v1134, %v1136
      %v1138 = vrot.slane %v1124, %v1137
      %v1139 = vcombine.high %v1131, %v1131
      %v1140 = vcombine.high %v1068, %v1068
      %v1142 = vunpack.c.l.s4 1983009808
      %v1143 = vunpack.c.0.s8 %v1142
      %v1144 = vlaneseq
      %v1145 = vshrl.u32 %v1144, 7
      %v1146 = vsub.s32 %v1143, %v1145
      %v1147 = vrot.slane %v1068, %v1146
      %v1149 = vunpack.c.l.s4 1983009808
      %v1150 = vunpack.c.0.s8 %v1149
      %v1151 = vlaneseq
      %v1152 = vshrl.u32 %v1151, 7
      %v1153 = vsub.s32 %v1150, %v1152
      %v1154 = vrot.slane %v1140, %v1153
      %v1155 = vcombine.high %v1147, %v1147
      %v1156 = vcombine.high %v1069, %v1069
      %v1158 = vunpack.c.l.s4 1983009808
      %v1159 = vunpack.c.0.s8 %v1158
      %v1160 = vlaneseq
      %v1161 = vshrl.u32 %v1160, 7
      %v1162 = vsub.s32 %v1159, %v1161
      %v1163 = vrot.slane %v1069, %v1162
      %v1165 = vunpack.c.l.s4 1983009808
      %v1166 = vunpack.c.0.s8 %v1165
      %v1167 = vlaneseq
      %v1168 = vshrl.u32 %v1167, 7
      %v1169 = vsub.s32 %v1166, %v1168
      %v1170 = vrot.slane %v1156, %v1169
      %v1171 = vcombine.high %v1163, %v1163
      %v1172 = vcombine.low %v217, %v225
      %v1173 = vcombine.low %v224, %v233
      %v1175 = vunpack.c.l.s4 1983009808
      %v1176 = vunpack.c.0.s8 %v1175
      %v1177 = vlaneseq
      %v1178 = vshrl.u32 %v1177, 7
      %v1179 = vsub.s32 %v1176, %v1178
      %v1180 = vrot.slane %v1172, %v1179
      %v1182 = vunpack.c.l.s4 1983009808
      %v1183 = vunpack.c.0.s8 %v1182
      %v1184 = vlaneseq
      %v1185 = vshrl.u32 %v1184, 7
      %v1186 = vsub.s32 %v1183, %v1185
      %v1187 = vrot.slane %v1173, %v1186
      %v1188 = vcombine.low %v1180, %v1187
      %v1189 = vcombine.low %v241, %v240
      %v1190 = vcombine.low %v249, %v257
      %v1192 = vunpack.c.l.s4 1983009808
      %v1193 = vunpack.c.0.s8 %v1192
      %v1194 = vlaneseq
      %v1195 = vshrl.u32 %v1194, 7
      %v1196 = vsub.s32 %v1193, %v1195
      %v1197 = vrot.slane %v1189, %v1196
      %v1199 = vunpack.c.l.s4 1983009808
      %v1200 = vunpack.c.0.s8 %v1199
      %v1201 = vlaneseq
      %v1202 = vshrl.u32 %v1201, 7
      %v1203 = vsub.s32 %v1200, %v1202
      %v1204 = vrot.slane %v1190, %v1203
      %v1205 = vcombine.low %v1197, %v1204
      %v1206 = vcombine.low %v256, %v265
      %v1207 = vcombine.low %v273, %v272
      %v1209 = vunpack.c.l.s4 1983009808
      %v1210 = vunpack.c.0.s8 %v1209
      %v1211 = vlaneseq
      %v1212 = vshrl.u32 %v1211, 7
      %v1213 = vsub.s32 %v1210, %v1212
      %v1214 = vrot.slane %v1206, %v1213
      %v1216 = vunpack.c.l.s4 1983009808
      %v1217 = vunpack.c.0.s8 %v1216
      %v1218 = vlaneseq
      %v1219 = vshrl.u32 %v1218, 7
      %v1220 = vsub.s32 %v1217, %v1219
      %v1221 = vrot.slane %v1207, %v1220
      %v1222 = vcombine.low %v1214, %v1221
      %v1223 = vcombine.low %v281, %v289
      %v1224 = vcombine.low %v288, %v297
      %v1226 = vunpack.c.l.s4 1983009808
      %v1227 = vunpack.c.0.s8 %v1226
      %v1228 = vlaneseq
      %v1229 = vshrl.u32 %v1228, 7
      %v1230 = vsub.s32 %v1227, %v1229
      %v1231 = vrot.slane %v1223, %v1230
      %v1233 = vunpack.c.l.s4 1983009808
      %v1234 = vunpack.c.0.s8 %v1233
      %v1235 = vlaneseq
      %v1236 = vshrl.u32 %v1235, 7
      %v1237 = vsub.s32 %v1234, %v1236
      %v1238 = vrot.slane %v1224, %v1237
      %v1239 = vcombine.low %v1231, %v1238
      %v1240 = vcombine.low %v305, %v304
      %v1242 = vunpack.c.l.s4 1983009808
      %v1243 = vunpack.c.0.s8 %v1242
      %v1244 = vlaneseq
      %v1245 = vshrl.u32 %v1244, 7
      %v1246 = vsub.s32 %v1243, %v1245
      %v1247 = vrot.slane %v1240, %v1246
      %v1253 = vcombine.low %v325, %v333
      %v1254 = vcombine.low %v332, %v341
      %v1256 = vunpack.c.l.s4 1983009808
      %v1257 = vunpack.c.0.s8 %v1256
      %v1258 = vlaneseq
      %v1259 = vshrl.u32 %v1258, 7
      %v1260 = vsub.s32 %v1257, %v1259
      %v1261 = vrot.slane %v1253, %v1260
      %v1263 = vunpack.c.l.s4 1983009808
      %v1264 = vunpack.c.0.s8 %v1263
      %v1265 = vlaneseq
      %v1266 = vshrl.u32 %v1265, 7
      %v1267 = vsub.s32 %v1264, %v1266
      %v1268 = vrot.slane %v1254, %v1267
      %v1269 = vcombine.low %v1261, %v1268
      %v1270 = vcombine.low %v349, %v348
      %v1271 = vcombine.low %v357, %v365
      %v1273 = vunpack.c.l.s4 1983009808
      %v1274 = vunpack.c.0.s8 %v1273
      %v1275 = vlaneseq
      %v1276 = vshrl.u32 %v1275, 7
      %v1277 = vsub.s32 %v1274, %v1276
      %v1278 = vrot.slane %v1270, %v1277
      %v1280 = vunpack.c.l.s4 1983009808
      %v1281 = vunpack.c.0.s8 %v1280
      %v1282 = vlaneseq
      %v1283 = vshrl.u32 %v1282, 7
      %v1284 = vsub.s32 %v1281, %v1283
      %v1285 = vrot.slane %v1271, %v1284
      %v1286 = vcombine.low %v1278, %v1285
      %v1287 = vcombine.low %v364, %v373
      %v1288 = vcombine.low %v381, %v380
      %v1290 = vunpack.c.l.s4 1983009808
      %v1291 = vunpack.c.0.s8 %v1290
      %v1292 = vlaneseq
      %v1293 = vshrl.u32 %v1292, 7
      %v1294 = vsub.s32 %v1291, %v1293
      %v1295 = vrot.slane %v1287, %v1294
      %v1297 = vunpack.c.l.s4 1983009808
      %v1298 = vunpack.c.0.s8 %v1297
      %v1299 = vlaneseq
      %v1300 = vshrl.u32 %v1299, 7
      %v1301 = vsub.s32 %v1298, %v1300
      %v1302 = vrot.slane %v1288, %v1301
      %v1303 = vcombine.low %v1295, %v1302
      %v1304 = vcombine.low %v389, %v397
      %v1305 = vcombine.low %v396, %v405
      %v1307 = vunpack.c.l.s4 1983009808
      %v1308 = vunpack.c.0.s8 %v1307
      %v1309 = vlaneseq
      %v1310 = vshrl.u32 %v1309, 7
      %v1311 = vsub.s32 %v1308, %v1310
      %v1312 = vrot.slane %v1304, %v1311
      %v1314 = vunpack.c.l.s4 1983009808
      %v1315 = vunpack.c.0.s8 %v1314
      %v1316 = vlaneseq
      %v1317 = vshrl.u32 %v1316, 7
      %v1318 = vsub.s32 %v1315, %v1317
      %v1319 = vrot.slane %v1305, %v1318
      %v1320 = vcombine.low %v1312, %v1319
      %v1321 = vcombine.low %v413, %v412
      %v1323 = vunpack.c.l.s4 1983009808
      %v1324 = vunpack.c.0.s8 %v1323
      %v1325 = vlaneseq
      %v1326 = vshrl.u32 %v1325, 7
      %v1327 = vsub.s32 %v1324, %v1326
      %v1328 = vrot.slane %v1321, %v1327
      %1329 = vrot.lane.b32.xlu0 %v1269, 32
      %v1330 = vpop.permute.xlu0 %1329
      %1331 = vrot.lane.b32.xlu0 %v1286, 32
      %v1332 = vpop.permute.xlu0 %1331
      %1333 = vrot.lane.b32.xlu0 %v1303, 32
      %v1334 = vpop.permute.xlu0 %1333
      %1335 = vrot.lane.b32.xlu0 %v1320, 32
      %v1336 = vpop.permute.xlu0 %1335
      %1337 = vrot.lane.b32.xlu0 %v1328, 32
      %v1338 = vpop.permute.xlu0 %1337
      %v1344 = vcombine.low %v433, %v441
      %v1345 = vcombine.low %v440, %v449
      %v1347 = vunpack.c.l.s4 1983009808
      %v1348 = vunpack.c.0.s8 %v1347
      %v1349 = vlaneseq
      %v1350 = vshrl.u32 %v1349, 7
      %v1351 = vsub.s32 %v1348, %v1350
      %v1352 = vrot.slane %v1344, %v1351
      %v1354 = vunpack.c.l.s4 1983009808
      %v1355 = vunpack.c.0.s8 %v1354
      %v1356 = vlaneseq
      %v1357 = vshrl.u32 %v1356, 7
      %v1358 = vsub.s32 %v1355, %v1357
      %v1359 = vrot.slane %v1345, %v1358
      %v1360 = vcombine.low %v1352, %v1359
      %v1361 = vcombine.low %v457, %v456
      %v1362 = vcombine.low %v465, %v473
      %v1364 = vunpack.c.l.s4 1983009808
      %v1365 = vunpack.c.0.s8 %v1364
      %v1366 = vlaneseq
      %v1367 = vshrl.u32 %v1366, 7
      %v1368 = vsub.s32 %v1365, %v1367
      %v1369 = vrot.slane %v1361, %v1368
      %v1371 = vunpack.c.l.s4 1983009808
      %v1372 = vunpack.c.0.s8 %v1371
      %v1373 = vlaneseq
      %v1374 = vshrl.u32 %v1373, 7
      %v1375 = vsub.s32 %v1372, %v1374
      %v1376 = vrot.slane %v1362, %v1375
      %v1377 = vcombine.low %v1369, %v1376
      %v1378 = vcombine.low %v472, %v481
      %v1379 = vcombine.low %v489, %v488
      %v1381 = vunpack.c.l.s4 1983009808
      %v1382 = vunpack.c.0.s8 %v1381
      %v1383 = vlaneseq
      %v1384 = vshrl.u32 %v1383, 7
      %v1385 = vsub.s32 %v1382, %v1384
      %v1386 = vrot.slane %v1378, %v1385
      %v1388 = vunpack.c.l.s4 1983009808
      %v1389 = vunpack.c.0.s8 %v1388
      %v1390 = vlaneseq
      %v1391 = vshrl.u32 %v1390, 7
      %v1392 = vsub.s32 %v1389, %v1391
      %v1393 = vrot.slane %v1379, %v1392
      %v1394 = vcombine.low %v1386, %v1393
      %v1395 = vcombine.low %v497, %v505
      %v1396 = vcombine.low %v504, %v513
      %v1398 = vunpack.c.l.s4 1983009808
      %v1399 = vunpack.c.0.s8 %v1398
      %v1400 = vlaneseq
      %v1401 = vshrl.u32 %v1400, 7
      %v1402 = vsub.s32 %v1399, %v1401
      %v1403 = vrot.slane %v1395, %v1402
      %v1405 = vunpack.c.l.s4 1983009808
      %v1406 = vunpack.c.0.s8 %v1405
      %v1407 = vlaneseq
      %v1408 = vshrl.u32 %v1407, 7
      %v1409 = vsub.s32 %v1406, %v1408
      %v1410 = vrot.slane %v1396, %v1409
      %v1411 = vcombine.low %v1403, %v1410
      %v1412 = vcombine.low %v521, %v520
      %v1414 = vunpack.c.l.s4 1983009808
      %v1415 = vunpack.c.0.s8 %v1414
      %v1416 = vlaneseq
      %v1417 = vshrl.u32 %v1416, 7
      %v1418 = vsub.s32 %v1415, %v1417
      %v1419 = vrot.slane %v1412, %v1418
      %1420 = vrot.lane.b32.xlu0 %v1360, 64
      %v1421 = vpop.permute.xlu0 %1420
      %1422 = vrot.lane.b32.xlu0 %v1377, 64
      %v1423 = vpop.permute.xlu0 %1422
      %1424 = vrot.lane.b32.xlu0 %v1394, 64
      %v1425 = vpop.permute.xlu0 %1424
      %1426 = vrot.lane.b32.xlu0 %v1411, 64
      %v1427 = vpop.permute.xlu0 %1426
      %1428 = vrot.lane.b32.xlu0 %v1419, 64
      %v1429 = vpop.permute.xlu0 %1428
      %v1435 = vcombine.low %v542, %v550
      %v1436 = vcombine.low %v549, %v558
      %v1438 = vunpack.c.l.s4 1983009808
      %v1439 = vunpack.c.0.s8 %v1438
      %v1440 = vlaneseq
      %v1441 = vshrl.u32 %v1440, 7
      %v1442 = vsub.s32 %v1439, %v1441
      %v1443 = vrot.slane %v1435, %v1442
      %v1445 = vunpack.c.l.s4 1983009808
      %v1446 = vunpack.c.0.s8 %v1445
      %v1447 = vlaneseq
      %v1448 = vshrl.u32 %v1447, 7
      %v1449 = vsub.s32 %v1446, %v1448
      %v1450 = vrot.slane %v1436, %v1449
      %v1451 = vcombine.low %v1443, %v1450
      %v1452 = vcombine.low %v566, %v565
      %v1453 = vcombine.low %v574, %v582
      %v1455 = vunpack.c.l.s4 1983009808
      %v1456 = vunpack.c.0.s8 %v1455
      %v1457 = vlaneseq
      %v1458 = vshrl.u32 %v1457, 7
      %v1459 = vsub.s32 %v1456, %v1458
      %v1460 = vrot.slane %v1452, %v1459
      %v1462 = vunpack.c.l.s4 1983009808
      %v1463 = vunpack.c.0.s8 %v1462
      %v1464 = vlaneseq
      %v1465 = vshrl.u32 %v1464, 7
      %v1466 = vsub.s32 %v1463, %v1465
      %v1467 = vrot.slane %v1453, %v1466
      %v1468 = vcombine.low %v1460, %v1467
      %v1469 = vcombine.low %v581, %v590
      %v1470 = vcombine.low %v598, %v597
      %v1472 = vunpack.c.l.s4 1983009808
      %v1473 = vunpack.c.0.s8 %v1472
      %v1474 = vlaneseq
      %v1475 = vshrl.u32 %v1474, 7
      %v1476 = vsub.s32 %v1473, %v1475
      %v1477 = vrot.slane %v1469, %v1476
      %v1479 = vunpack.c.l.s4 1983009808
      %v1480 = vunpack.c.0.s8 %v1479
      %v1481 = vlaneseq
      %v1482 = vshrl.u32 %v1481, 7
      %v1483 = vsub.s32 %v1480, %v1482
      %v1484 = vrot.slane %v1470, %v1483
      %v1485 = vcombine.low %v1477, %v1484
      %v1486 = vcombine.low %v606, %v614
      %v1487 = vcombine.low %v613, %v622
      %v1489 = vunpack.c.l.s4 1983009808
      %v1490 = vunpack.c.0.s8 %v1489
      %v1491 = vlaneseq
      %v1492 = vshrl.u32 %v1491, 7
      %v1493 = vsub.s32 %v1490, %v1492
      %v1494 = vrot.slane %v1486, %v1493
      %v1496 = vunpack.c.l.s4 1983009808
      %v1497 = vunpack.c.0.s8 %v1496
      %v1498 = vlaneseq
      %v1499 = vshrl.u32 %v1498, 7
      %v1500 = vsub.s32 %v1497, %v1499
      %v1501 = vrot.slane %v1487, %v1500
      %v1502 = vcombine.low %v1494, %v1501
      %v1503 = vcombine.low %v630, %v629
      %v1505 = vunpack.c.l.s4 1983009808
      %v1506 = vunpack.c.0.s8 %v1505
      %v1507 = vlaneseq
      %v1508 = vshrl.u32 %v1507, 7
      %v1509 = vsub.s32 %v1506, %v1508
      %v1510 = vrot.slane %v1503, %v1509
      %1511 = vrot.lane.b32.xlu0 %v1451, 96
      %v1512 = vpop.permute.xlu0 %1511
      %1513 = vrot.lane.b32.xlu0 %v1468, 96
      %v1514 = vpop.permute.xlu0 %1513
      %1515 = vrot.lane.b32.xlu0 %v1485, 96
      %v1516 = vpop.permute.xlu0 %1515
      %1517 = vrot.lane.b32.xlu0 %v1502, 96
      %v1518 = vpop.permute.xlu0 %1517
      %1519 = vrot.lane.b32.xlu0 %v1510, 96
      %v1520 = vpop.permute.xlu0 %1519
      %v1526 = vcombine.low %v650, %v658
      %v1527 = vcombine.low %v657, %v666
      %v1529 = vunpack.c.l.s4 1983009808
      %v1530 = vunpack.c.0.s8 %v1529
      %v1531 = vlaneseq
      %v1532 = vshrl.u32 %v1531, 7
      %v1533 = vsub.s32 %v1530, %v1532
      %v1534 = vrot.slane %v1526, %v1533
      %v1536 = vunpack.c.l.s4 1983009808
      %v1537 = vunpack.c.0.s8 %v1536
      %v1538 = vlaneseq
      %v1539 = vshrl.u32 %v1538, 7
      %v1540 = vsub.s32 %v1537, %v1539
      %v1541 = vrot.slane %v1527, %v1540
      %v1542 = vcombine.low %v1534, %v1541
      %v1543 = vcombine.low %v674, %v673
      %v1544 = vcombine.low %v682, %v690
      %v1546 = vunpack.c.l.s4 1983009808
      %v1547 = vunpack.c.0.s8 %v1546
      %v1548 = vlaneseq
      %v1549 = vshrl.u32 %v1548, 7
      %v1550 = vsub.s32 %v1547, %v1549
      %v1551 = vrot.slane %v1543, %v1550
      %v1553 = vunpack.c.l.s4 1983009808
      %v1554 = vunpack.c.0.s8 %v1553
      %v1555 = vlaneseq
      %v1556 = vshrl.u32 %v1555, 7
      %v1557 = vsub.s32 %v1554, %v1556
      %v1558 = vrot.slane %v1544, %v1557
      %v1559 = vcombine.low %v1551, %v1558
      %v1560 = vcombine.low %v689, %v698
      %v1561 = vcombine.low %v706, %v705
      %v1563 = vunpack.c.l.s4 1983009808
      %v1564 = vunpack.c.0.s8 %v1563
      %v1565 = vlaneseq
      %v1566 = vshrl.u32 %v1565, 7
      %v1567 = vsub.s32 %v1564, %v1566
      %v1568 = vrot.slane %v1560, %v1567
      %v1570 = vunpack.c.l.s4 1983009808
      %v1571 = vunpack.c.0.s8 %v1570
      %v1572 = vlaneseq
      %v1573 = vshrl.u32 %v1572, 7
      %v1574 = vsub.s32 %v1571, %v1573
      %v1575 = vrot.slane %v1561, %v1574
      %v1576 = vcombine.low %v1568, %v1575
      %v1577 = vcombine.low %v714, %v722
      %v1578 = vcombine.low %v721, %v730
      %v1580 = vunpack.c.l.s4 1983009808
      %v1581 = vunpack.c.0.s8 %v1580
      %v1582 = vlaneseq
      %v1583 = vshrl.u32 %v1582, 7
      %v1584 = vsub.s32 %v1581, %v1583
      %v1585 = vrot.slane %v1577, %v1584
      %v1587 = vunpack.c.l.s4 1983009808
      %v1588 = vunpack.c.0.s8 %v1587
      %v1589 = vlaneseq
      %v1590 = vshrl.u32 %v1589, 7
      %v1591 = vsub.s32 %v1588, %v1590
      %v1592 = vrot.slane %v1578, %v1591
      %v1593 = vcombine.low %v1585, %v1592
      %v1594 = vcombine.low %v738, %v737
      %v1596 = vunpack.c.l.s4 1983009808
      %v1597 = vunpack.c.0.s8 %v1596
      %v1598 = vlaneseq
      %v1599 = vshrl.u32 %v1598, 7
      %v1600 = vsub.s32 %v1597, %v1599
      %v1601 = vrot.slane %v1594, %v1600
      %v1607 = vcombine.low %v758, %v766
      %v1608 = vcombine.low %v765, %v774
      %v1610 = vunpack.c.l.s4 1983009808
      %v1611 = vunpack.c.0.s8 %v1610
      %v1612 = vlaneseq
      %v1613 = vshrl.u32 %v1612, 7
      %v1614 = vsub.s32 %v1611, %v1613
      %v1615 = vrot.slane %v1607, %v1614
      %v1617 = vunpack.c.l.s4 1983009808
      %v1618 = vunpack.c.0.s8 %v1617
      %v1619 = vlaneseq
      %v1620 = vshrl.u32 %v1619, 7
      %v1621 = vsub.s32 %v1618, %v1620
      %v1622 = vrot.slane %v1608, %v1621
      %v1623 = vcombine.low %v1615, %v1622
      %v1624 = vcombine.low %v782, %v781
      %v1625 = vcombine.low %v790, %v798
      %v1627 = vunpack.c.l.s4 1983009808
      %v1628 = vunpack.c.0.s8 %v1627
      %v1629 = vlaneseq
      %v1630 = vshrl.u32 %v1629, 7
      %v1631 = vsub.s32 %v1628, %v1630
      %v1632 = vrot.slane %v1624, %v1631
      %v1634 = vunpack.c.l.s4 1983009808
      %v1635 = vunpack.c.0.s8 %v1634
      %v1636 = vlaneseq
      %v1637 = vshrl.u32 %v1636, 7
      %v1638 = vsub.s32 %v1635, %v1637
      %v1639 = vrot.slane %v1625, %v1638
      %v1640 = vcombine.low %v1632, %v1639
      %v1641 = vcombine.low %v797, %v806
      %v1642 = vcombine.low %v814, %v813
      %v1644 = vunpack.c.l.s4 1983009808
      %v1645 = vunpack.c.0.s8 %v1644
      %v1646 = vlaneseq
      %v1647 = vshrl.u32 %v1646, 7
      %v1648 = vsub.s32 %v1645, %v1647
      %v1649 = vrot.slane %v1641, %v1648
      %v1651 = vunpack.c.l.s4 1983009808
      %v1652 = vunpack.c.0.s8 %v1651
      %v1653 = vlaneseq
      %v1654 = vshrl.u32 %v1653, 7
      %v1655 = vsub.s32 %v1652, %v1654
      %v1656 = vrot.slane %v1642, %v1655
      %v1657 = vcombine.low %v1649, %v1656
      %v1658 = vcombine.low %v822, %v830
      %v1659 = vcombine.low %v829, %v838
      %v1661 = vunpack.c.l.s4 1983009808
      %v1662 = vunpack.c.0.s8 %v1661
      %v1663 = vlaneseq
      %v1664 = vshrl.u32 %v1663, 7
      %v1665 = vsub.s32 %v1662, %v1664
      %v1666 = vrot.slane %v1658, %v1665
      %v1668 = vunpack.c.l.s4 1983009808
      %v1669 = vunpack.c.0.s8 %v1668
      %v1670 = vlaneseq
      %v1671 = vshrl.u32 %v1670, 7
      %v1672 = vsub.s32 %v1669, %v1671
      %v1673 = vrot.slane %v1659, %v1672
      %v1674 = vcombine.low %v1666, %v1673
      %v1675 = vcombine.low %v846, %v845
      %v1677 = vunpack.c.l.s4 1983009808
      %v1678 = vunpack.c.0.s8 %v1677
      %v1679 = vlaneseq
      %v1680 = vshrl.u32 %v1679, 7
      %v1681 = vsub.s32 %v1678, %v1680
      %v1682 = vrot.slane %v1675, %v1681
      %1683 = vrot.lane.b32.xlu0 %v1623, 32
      %v1684 = vpop.permute.xlu0 %1683
      %1685 = vrot.lane.b32.xlu0 %v1640, 32
      %v1686 = vpop.permute.xlu0 %1685
      %1687 = vrot.lane.b32.xlu0 %v1657, 32
      %v1688 = vpop.permute.xlu0 %1687
      %1689 = vrot.lane.b32.xlu0 %v1674, 32
      %v1690 = vpop.permute.xlu0 %1689
      %1691 = vrot.lane.b32.xlu0 %v1682, 32
      %v1692 = vpop.permute.xlu0 %1691
      %v1698 = vcombine.low %v867, %v875
      %v1699 = vcombine.low %v874, %v883
      %v1701 = vunpack.c.l.s4 1983009808
      %v1702 = vunpack.c.0.s8 %v1701
      %v1703 = vlaneseq
      %v1704 = vshrl.u32 %v1703, 7
      %v1705 = vsub.s32 %v1702, %v1704
      %v1706 = vrot.slane %v1698, %v1705
      %v1708 = vunpack.c.l.s4 1983009808
      %v1709 = vunpack.c.0.s8 %v1708
      %v1710 = vlaneseq
      %v1711 = vshrl.u32 %v1710, 7
      %v1712 = vsub.s32 %v1709, %v1711
      %v1713 = vrot.slane %v1699, %v1712
      %v1714 = vcombine.low %v1706, %v1713
      %v1715 = vcombine.low %v891, %v890
      %v1716 = vcombine.low %v899, %v907
      %v1718 = vunpack.c.l.s4 1983009808
      %v1719 = vunpack.c.0.s8 %v1718
      %v1720 = vlaneseq
      %v1721 = vshrl.u32 %v1720, 7
      %v1722 = vsub.s32 %v1719, %v1721
      %v1723 = vrot.slane %v1715, %v1722
      %v1725 = vunpack.c.l.s4 1983009808
      %v1726 = vunpack.c.0.s8 %v1725
      %v1727 = vlaneseq
      %v1728 = vshrl.u32 %v1727, 7
      %v1729 = vsub.s32 %v1726, %v1728
      %v1730 = vrot.slane %v1716, %v1729
      %v1731 = vcombine.low %v1723, %v1730
      %v1732 = vcombine.low %v906, %v915
      %v1733 = vcombine.low %v923, %v922
      %v1735 = vunpack.c.l.s4 1983009808
      %v1736 = vunpack.c.0.s8 %v1735
      %v1737 = vlaneseq
      %v1738 = vshrl.u32 %v1737, 7
      %v1739 = vsub.s32 %v1736, %v1738
      %v1740 = vrot.slane %v1732, %v1739
      %v1742 = vunpack.c.l.s4 1983009808
      %v1743 = vunpack.c.0.s8 %v1742
      %v1744 = vlaneseq
      %v1745 = vshrl.u32 %v1744, 7
      %v1746 = vsub.s32 %v1743, %v1745
      %v1747 = vrot.slane %v1733, %v1746
      %v1748 = vcombine.low %v1740, %v1747
      %v1749 = vcombine.low %v931, %v939
      %v1750 = vcombine.low %v938, %v947
      %v1752 = vunpack.c.l.s4 1983009808
      %v1753 = vunpack.c.0.s8 %v1752
      %v1754 = vlaneseq
      %v1755 = vshrl.u32 %v1754, 7
      %v1756 = vsub.s32 %v1753, %v1755
      %v1757 = vrot.slane %v1749, %v1756
      %v1759 = vunpack.c.l.s4 1983009808
      %v1760 = vunpack.c.0.s8 %v1759
      %v1761 = vlaneseq
      %v1762 = vshrl.u32 %v1761, 7
      %v1763 = vsub.s32 %v1760, %v1762
      %v1764 = vrot.slane %v1750, %v1763
      %v1765 = vcombine.low %v1757, %v1764
      %v1766 = vcombine.low %v955, %v954
      %v1768 = vunpack.c.l.s4 1983009808
      %v1769 = vunpack.c.0.s8 %v1768
      %v1770 = vlaneseq
      %v1771 = vshrl.u32 %v1770, 7
      %v1772 = vsub.s32 %v1769, %v1771
      %v1773 = vrot.slane %v1766, %v1772
      %1774 = vrot.lane.b32.xlu0 %v1714, 64
      %v1775 = vpop.permute.xlu0 %1774
      %1776 = vrot.lane.b32.xlu0 %v1731, 64
      %v1777 = vpop.permute.xlu0 %1776
      %1778 = vrot.lane.b32.xlu0 %v1748, 64
      %v1779 = vpop.permute.xlu0 %1778
      %1780 = vrot.lane.b32.xlu0 %v1765, 64
      %v1781 = vpop.permute.xlu0 %1780
      %1782 = vrot.lane.b32.xlu0 %v1773, 64
      %v1783 = vpop.permute.xlu0 %1782
      %v1789 = vcombine.low %v975, %v983
      %v1790 = vcombine.low %v982, %v991
      %v1792 = vunpack.c.l.s4 1983009808
      %v1793 = vunpack.c.0.s8 %v1792
      %v1794 = vlaneseq
      %v1795 = vshrl.u32 %v1794, 7
      %v1796 = vsub.s32 %v1793, %v1795
      %v1797 = vrot.slane %v1789, %v1796
      %v1799 = vunpack.c.l.s4 1983009808
      %v1800 = vunpack.c.0.s8 %v1799
      %v1801 = vlaneseq
      %v1802 = vshrl.u32 %v1801, 7
      %v1803 = vsub.s32 %v1800, %v1802
      %v1804 = vrot.slane %v1790, %v1803
      %v1805 = vcombine.low %v1797, %v1804
      %v1806 = vcombine.low %v999, %v998
      %v1807 = vcombine.low %v1007, %v1015
      %v1809 = vunpack.c.l.s4 1983009808
      %v1810 = vunpack.c.0.s8 %v1809
      %v1811 = vlaneseq
      %v1812 = vshrl.u32 %v1811, 7
      %v1813 = vsub.s32 %v1810, %v1812
      %v1814 = vrot.slane %v1806, %v1813
      %v1816 = vunpack.c.l.s4 1983009808
      %v1817 = vunpack.c.0.s8 %v1816
      %v1818 = vlaneseq
      %v1819 = vshrl.u32 %v1818, 7
      %v1820 = vsub.s32 %v1817, %v1819
      %v1821 = vrot.slane %v1807, %v1820
      %v1822 = vcombine.low %v1814, %v1821
      %v1823 = vcombine.low %v1014, %v1023
      %v1824 = vcombine.low %v1031, %v1030
      %v1826 = vunpack.c.l.s4 1983009808
      %v1827 = vunpack.c.0.s8 %v1826
      %v1828 = vlaneseq
      %v1829 = vshrl.u32 %v1828, 7
      %v1830 = vsub.s32 %v1827, %v1829
      %v1831 = vrot.slane %v1823, %v1830
      %v1833 = vunpack.c.l.s4 1983009808
      %v1834 = vunpack.c.0.s8 %v1833
      %v1835 = vlaneseq
      %v1836 = vshrl.u32 %v1835, 7
      %v1837 = vsub.s32 %v1834, %v1836
      %v1838 = vrot.slane %v1824, %v1837
      %v1839 = vcombine.low %v1831, %v1838
      %v1840 = vcombine.low %v1039, %v1047
      %v1841 = vcombine.low %v1046, %v1055
      %v1843 = vunpack.c.l.s4 1983009808
      %v1844 = vunpack.c.0.s8 %v1843
      %v1845 = vlaneseq
      %v1846 = vshrl.u32 %v1845, 7
      %v1847 = vsub.s32 %v1844, %v1846
      %v1848 = vrot.slane %v1840, %v1847
      %v1850 = vunpack.c.l.s4 1983009808
      %v1851 = vunpack.c.0.s8 %v1850
      %v1852 = vlaneseq
      %v1853 = vshrl.u32 %v1852, 7
      %v1854 = vsub.s32 %v1851, %v1853
      %v1855 = vrot.slane %v1841, %v1854
      %v1856 = vcombine.low %v1848, %v1855
      %v1857 = vcombine.low %v1063, %v1062
      %v1859 = vunpack.c.l.s4 1983009808
      %v1860 = vunpack.c.0.s8 %v1859
      %v1861 = vlaneseq
      %v1862 = vshrl.u32 %v1861, 7
      %v1863 = vsub.s32 %v1860, %v1862
      %v1864 = vrot.slane %v1857, %v1863
      %1865 = vrot.lane.b32.xlu0 %v1805, 96
      %v1866 = vpop.permute.xlu0 %1865
      %1867 = vrot.lane.b32.xlu0 %v1822, 96
      %v1868 = vpop.permute.xlu0 %1867
      %1869 = vrot.lane.b32.xlu0 %v1839, 96
      %v1870 = vpop.permute.xlu0 %1869
      %1871 = vrot.lane.b32.xlu0 %v1856, 96
      %v1872 = vpop.permute.xlu0 %1871
      %1873 = vrot.lane.b32.xlu0 %v1864, 96
      %v1874 = vpop.permute.xlu0 %1873
      %v1880 = vcombine.low %v1083, %v1091
      %v1881 = vcombine.low %v1090, %v1099
      %v1883 = vunpack.c.l.s4 1983009808
      %v1884 = vunpack.c.0.s8 %v1883
      %v1885 = vlaneseq
      %v1886 = vshrl.u32 %v1885, 7
      %v1887 = vsub.s32 %v1884, %v1886
      %v1888 = vrot.slane %v1880, %v1887
      %v1890 = vunpack.c.l.s4 1983009808
      %v1891 = vunpack.c.0.s8 %v1890
      %v1892 = vlaneseq
      %v1893 = vshrl.u32 %v1892, 7
      %v1894 = vsub.s32 %v1891, %v1893
      %v1895 = vrot.slane %v1881, %v1894
      %v1896 = vcombine.low %v1888, %v1895
      %v1897 = vcombine.low %v1107, %v1106
      %v1898 = vcombine.low %v1115, %v1123
      %v1900 = vunpack.c.l.s4 1983009808
      %v1901 = vunpack.c.0.s8 %v1900
      %v1902 = vlaneseq
      %v1903 = vshrl.u32 %v1902, 7
      %v1904 = vsub.s32 %v1901, %v1903
      %v1905 = vrot.slane %v1897, %v1904
      %v1907 = vunpack.c.l.s4 1983009808
      %v1908 = vunpack.c.0.s8 %v1907
      %v1909 = vlaneseq
      %v1910 = vshrl.u32 %v1909, 7
      %v1911 = vsub.s32 %v1908, %v1910
      %v1912 = vrot.slane %v1898, %v1911
      %v1913 = vcombine.low %v1905, %v1912
      %v1914 = vcombine.low %v1122, %v1131
      %v1915 = vcombine.low %v1139, %v1138
      %v1917 = vunpack.c.l.s4 1983009808
      %v1918 = vunpack.c.0.s8 %v1917
      %v1919 = vlaneseq
      %v1920 = vshrl.u32 %v1919, 7
      %v1921 = vsub.s32 %v1918, %v1920
      %v1922 = vrot.slane %v1914, %v1921
      %v1924 = vunpack.c.l.s4 1983009808
      %v1925 = vunpack.c.0.s8 %v1924
      %v1926 = vlaneseq
      %v1927 = vshrl.u32 %v1926, 7
      %v1928 = vsub.s32 %v1925, %v1927
      %v1929 = vrot.slane %v1915, %v1928
      %v1930 = vcombine.low %v1922, %v1929
      %v1931 = vcombine.low %v1147, %v1155
      %v1932 = vcombine.low %v1154, %v1163
      %v1934 = vunpack.c.l.s4 1983009808
      %v1935 = vunpack.c.0.s8 %v1934
      %v1936 = vlaneseq
      %v1937 = vshrl.u32 %v1936, 7
      %v1938 = vsub.s32 %v1935, %v1937
      %v1939 = vrot.slane %v1931, %v1938
      %v1941 = vunpack.c.l.s4 1983009808
      %v1942 = vunpack.c.0.s8 %v1941
      %v1943 = vlaneseq
      %v1944 = vshrl.u32 %v1943, 7
      %v1945 = vsub.s32 %v1942, %v1944
      %v1946 = vrot.slane %v1932, %v1945
      %v1947 = vcombine.low %v1939, %v1946
      %v1948 = vcombine.low %v1171, %v1170
      %v1950 = vunpack.c.l.s4 1983009808
      %v1951 = vunpack.c.0.s8 %v1950
      %v1952 = vlaneseq
      %v1953 = vshrl.u32 %v1952, 7
      %v1954 = vsub.s32 %v1951, %v1953
      %v1955 = vrot.slane %v1948, %v1954
      %vm1956 = vcmask 261120
      %v1957 = vsel %vm1956, %v1188, %v1330
      %v1958 = vsel %vm1956, %v1205, %v1332
      %v1959 = vsel %vm1956, %v1222, %v1334
      %v1960 = vsel %vm1956, %v1239, %v1336
      %v1961 = vsel %vm1956, %v1247, %v1338
      %vm1962 = vcmask 523264
      %v1963 = vsel %vm1962, %v1957, %v1421
      %v1964 = vsel %vm1962, %v1958, %v1423
      %v1965 = vsel %vm1962, %v1959, %v1425
      %v1966 = vsel %vm1962, %v1960, %v1427
      %v1967 = vsel %vm1962, %v1961, %v1429
      %vm1968 = vcmask 785408
      %v1969 = vsel %vm1968, %v1963, %v1512
      %v1970 = vsel %vm1968, %v1964, %v1514
      %v1971 = vsel %vm1968, %v1965, %v1516
      %v1972 = vsel %vm1968, %v1966, %v1518
      %v1973 = vsel %vm1968, %v1967, %v1520
      %v1974 = vsel %vm1956, %v1542, %v1684
      %v1975 = vsel %vm1956, %v1559, %v1686
      %v1976 = vsel %vm1956, %v1576, %v1688
      %v1977 = vsel %vm1956, %v1593, %v1690
      %v1978 = vsel %vm1956, %v1601, %v1692
      %v1979 = vsel %vm1962, %v1974, %v1775
      %v1980 = vsel %vm1962, %v1975, %v1777
      %v1981 = vsel %vm1962, %v1976, %v1779
      %v1982 = vsel %vm1962, %v1977, %v1781
      %v1983 = vsel %vm1962, %v1978, %v1783
      %v1984 = vsel %vm1968, %v1979, %v1866
      %v1985 = vsel %vm1968, %v1980, %v1868
      %v1986 = vsel %vm1968, %v1981, %v1870
      %v1987 = vsel %vm1968, %v1982, %v1872
      %v1988 = vsel %vm1968, %v1983, %v1874
      %v1989 = vld [vmem:[%s1] sm:$0xff]
      %v1990 = vld [vmem:[%s1 + $0x8] sm:$0xff]
      %v1991 = vld [vmem:[%s1 + $0x10] sm:$0xff]
      %v1992 = vld [vmem:[%s1 + $0x18] sm:$0xff]
      %v1993 = vld [vmem:[%s1 + $0x20] sm:$0xff]
      %v1994 = vld [vmem:[%s1 + $0x28] sm:$0xff]
      %v1995 = vld [vmem:[%s1 + $0x30] sm:$0xff]
      %v1996 = vld [vmem:[%s1 + $0x38] sm:$0xff]
      %v1997 = vld [vmem:[%s1 + $0x40] sm:$0xff]
      %v1998 = vld [vmem:[%s1 + $0x48] sm:$0xff]
      %v1999 = vld [vmem:[%s1 + $0x50] sm:$0xff]
      %v2000 = vld [vmem:[%s1 + $0x58] sm:$0xff]
      %v2001 = vld [vmem:[%s1 + $0x60] sm:$0xff]
      %v2002 = vld [vmem:[%s1 + $0x68] sm:$0xff]
      %v2003 = vld [vmem:[%s1 + $0x70] sm:$0xff]
      %v2004 = vld [vmem:[%s1 + $0x78] sm:$0xff]
      %v2005 = vld [vmem:[%s1 + $0x80] sm:$0xff]
      %v2006 = vld [vmem:[%s1 + $0x88] sm:$0xff]
      %v2007 = vld [vmem:[%s1 + $0x90] sm:$0xff]
      %v2008 = vld [vmem:[%s1 + $0x98] sm:$0xff]
      %v2009 = vld [vmem:[%s1 + $0xa0] sm:$0xff]
      %v2010 = vld [vmem:[%s1 + $0xa8] sm:$0xff]
      %v2011 = vld [vmem:[%s1 + $0xb0] sm:$0xff]
      %v2012 = vld [vmem:[%s1 + $0xb8] sm:$0xff]
      %v2013 = vld [vmem:[%s1 + $0xc0] sm:$0xff]
      %v2014 = vld [vmem:[%s1 + $0xc8] sm:$0xff]
      %v2015 = vld [vmem:[%s1 + $0xd0] sm:$0xff]
      %v2016 = vld [vmem:[%s1 + $0xd8] sm:$0xff]
      %v2017 = vld [vmem:[%s1 + $0xe0] sm:$0xff]
      %v2018 = vld [vmem:[%s1 + $0xe8] sm:$0xff]
      %v2019 = vld [vmem:[%s1 + $0xf0] sm:$0xff]
      %v2020 = vld [vmem:[%s1 + $0xf8] sm:$0xff]
      %v2021 = vld [vmem:[%s1 + $0x100] sm:$0xff]
      %v2022 = vld [vmem:[%s1 + $0x108] sm:$0xff]
      %v2023 = vld [vmem:[%s1 + $0x110] sm:$0xff]
      %v2024 = vld [vmem:[%s1 + $0x118] sm:$0xff]
      %v2025 = vsel %vm1956, %v1896, 0
      %v2027 = vsel %vm1956, %v1913, 0
      %v2029 = vsel %vm1956, %v1930, 0
      %v2031 = vsel %vm1956, %v1947, 0
      %v2033 = vsel %vm1956, %v1955, 0
      %2035 = vmatprep.subr.mxu0 0.0
      %2036 = vmatpush1.msra.mxu0 %v1989
      %2037 = vmatprep.subr.mxu0 0.0
      %2038 = vmatpush1.msra.mxu0 %v1990
      %2039 = vmatprep.subr.mxu0 0.0
      %2040 = vmatpush1.msra.mxu0 %v1991
      %2041 = vmatprep.subr.mxu0 0.0
      %2042 = vmatpush1.msra.mxu0 %v1992
      %2043 = vmatprep.subr.mxu0 0.0
      %2044 = vmatpush1.msra.mxu0 %v1993
      %2045 = vmatprep.subr.mxu0 0.0
      %2046 = vmatpush1.msra.mxu0 %v1994
      %2047 = vmatprep.subr.mxu0 0.0
      %2048 = vmatpush1.msra.mxu0 %v1995
      %2049 = vmatprep.subr.mxu0 0.0
      %2050 = vmatpush1.msra.mxu0 %v1996
      %2051 = vmatprep.subr.mxu0 0.0
      %2052 = vmatpush1.msra.mxu0 %v1997
      %2053 = vmatprep.subr.mxu0 0.0
      %2054 = vmatpush1.msra.mxu0 %v1998
      %2055 = vmatprep.subr.mxu0 0.0
      %2056 = vmatpush1.msra.mxu0 %v1999
      %2057 = vmatprep.subr.mxu0 0.0
      %2058 = vmatpush1.msra.mxu0 %v2000
      %2059 = vmatprep.subr.mxu0 0.0
      %2060 = vmatpush1.msra.mxu0 %v2001
      %2061 = vmatprep.subr.mxu0 0.0
      %2062 = vmatpush1.msra.mxu0 %v2002
      %2063 = vmatprep.subr.mxu0 0.0
      %2064 = vmatpush1.msra.mxu0 %v2003
      %2065 = vmatprep.subr.mxu0 0.0
      %2066 = vmatpush1.msra.mxu0 %v2004
      %2067 = vmatprep.subr.mxu0 0.0
      %2068 = vmatpush1.msra.mxu0 %v2005
      %2069 = vmatprep.subr.mxu0 0.0
      %2070 = vmatpush1.msra.mxu0 %v2006
      %2071 = vmatprep.subr.mxu0 0.0
      %2072 = vmatpush1.msra.mxu0 %v2007
      %2073 = vmatprep.subr.mxu0 0.0
      %2074 = vmatpush1.msra.mxu0 %v2008
      %2075 = vmatprep.subr.mxu0 0.0
      %2076 = vmatpush1.msra.mxu0 %v2009
      %2077 = vmatprep.subr.mxu0 0.0
      %2078 = vmatpush1.msra.mxu0 %v2010
      %2079 = vmatprep.subr.mxu0 0.0
      %2080 = vmatpush1.msra.mxu0 %v2011
      %2081 = vmatprep.subr.mxu0 0.0
      %2082 = vmatpush1.msra.mxu0 %v2012
      %2083 = vmatprep.subr.mxu0 0.0
      %2084 = vmatpush1.msra.mxu0 %v2013
      %2085 = vmatprep.subr.mxu0 0.0
      %2086 = vmatpush1.msra.mxu0 %v2014
      %2087 = vmatprep.subr.mxu0 0.0
      %2088 = vmatpush1.msra.mxu0 %v2015
      %2089 = vmatprep.subr.mxu0 0.0
      %2090 = vmatpush1.msra.mxu0 %v2016
      %2091 = vmatprep.subr.mxu0 0.0
      %2092 = vmatpush1.msra.mxu0 %v2017
      %2093 = vmatprep.subr.mxu0 0.0
      %2094 = vmatpush1.msra.mxu0 %v2018
      %2095 = vmatprep.subr.mxu0 0.0
      %2096 = vmatpush1.msra.mxu0 %v2019
      %2097 = vmatprep.subr.mxu0 0.0
      %2098 = vmatpush1.msra.mxu0 %v2020
      %2099 = vmatprep.mubr.f32.mxu0 %v1984
      %2100 = vmatmul.mubr.f32.gmra.mrb[0].mxu0 %v1969
      %v2101 = vpop.f32.mrb[0].mxu0
      %v2102 = vadd.f32 0.0, %v2101
      %v2103 = vpop.f32.mrb[0].mxu0
      %2104 = vmatprep.mubr.f32.mxu0 %v1985
      %2105 = vmatmul.mubr.f32.gmra.mrb[0].mxu0 %v1970
      %v2106 = vpop.f32.mrb[0].mxu0
      %v2107 = vadd.f32 0.0, %v2106
      %v2108 = vpop.f32.mrb[0].mxu0
      %2109 = vmatprep.mubr.f32.mxu0 %v1986
      %2110 = vmatmul.mubr.f32.gmra.mrb[0].mxu0 %v1971
      %v2111 = vpop.f32.mrb[0].mxu0
      %v2112 = vadd.f32 0.0, %v2111
      %v2113 = vpop.f32.mrb[0].mxu0
      %2114 = vmatprep.mubr.f32.mxu0 %v1987
      %2115 = vmatmul.mubr.f32.gmra.mrb[0].mxu0 %v1972
      %v2116 = vpop.f32.mrb[0].mxu0
      %v2117 = vadd.f32 0.0, %v2116
      %v2118 = vpop.f32.mrb[0].mxu0
      %2119 = vmatprep.mubr.f32.mxu0 %v1988
      %2120 = vmatmul.mubr.f32.gmra.mrb[0].mxu0 %v1973
      %v2121 = vpop.f32.mrb[0].mxu0
      %v2122 = vadd.f32 0.0, %v2121
      %v2123 = vpop.f32.mrb[0].mxu0
      %2124 = vdwg.mxu0
      %2125 = vmatprep.subr.mxu0 0.0
      %2126 = vmatpush1.msra.mxu0 %v2021
      %2127 = vmatprep.subr.mxu0 0.0
      %2128 = vmatpush1.msra.mxu0 %v2022
      %2129 = vmatprep.subr.mxu0 0.0
      %2130 = vmatpush1.msra.mxu0 %v2023
      %2131 = vmatprep.subr.mxu0 0.0
      %2132 = vmatpush1.msra.mxu0 %v2024
      %2133 = vmatprep.subr.mxu0 0.0
      %2134 = vmatpush1.msra.mxu0 0.0
      %2135 = vmatprep.subr.mxu0 0.0
      %2136 = vmatpush1.msra.mxu0 0.0
      %2137 = vmatprep.subr.mxu0 0.0
      %2138 = vmatpush1.msra.mxu0 0.0
      %2139 = vmatprep.subr.mxu0 0.0
      %2140 = vmatpush1.msra.mxu0 0.0
      %2141 = vmatprep.subr.mxu0 0.0
      %2142 = vmatpush1.msra.mxu0 0.0
      %2143 = vmatprep.subr.mxu0 0.0
      %2144 = vmatpush1.msra.mxu0 0.0
      %2145 = vmatprep.subr.mxu0 0.0
      %2146 = vmatpush1.msra.mxu0 0.0
      %2147 = vmatprep.subr.mxu0 0.0
      %2148 = vmatpush1.msra.mxu0 0.0
      %2149 = vmatprep.subr.mxu0 0.0
      %2150 = vmatpush1.msra.mxu0 0.0
      %2151 = vmatprep.subr.mxu0 0.0
      %2152 = vmatpush1.msra.mxu0 0.0
      %2153 = vmatprep.subr.mxu0 0.0
      %2154 = vmatpush1.msra.mxu0 0.0
      %2155 = vmatprep.subr.mxu0 0.0
      %2156 = vmatpush1.msra.mxu0 0.0
      %2157 = vmatprep.subr.mxu0 0.0
      %2158 = vmatpush1.msra.mxu0 0.0
      %2159 = vmatprep.subr.mxu0 0.0
      %2160 = vmatpush1.msra.mxu0 0.0
      %2161 = vmatprep.subr.mxu0 0.0
      %2162 = vmatpush1.msra.mxu0 0.0
      %2163 = vmatprep.subr.mxu0 0.0
      %2164 = vmatpush1.msra.mxu0 0.0
      %2165 = vmatprep.subr.mxu0 0.0
      %2166 = vmatpush1.msra.mxu0 0.0
      %2167 = vmatprep.subr.mxu0 0.0
      %2168 = vmatpush1.msra.mxu0 0.0
      %2169 = vmatprep.subr.mxu0 0.0
      %2170 = vmatpush1.msra.mxu0 0.0
      %2171 = vmatprep.subr.mxu0 0.0
      %2172 = vmatpush1.msra.mxu0 0.0
      %2173 = vmatprep.subr.mxu0 0.0
      %2174 = vmatpush1.msra.mxu0 0.0
      %2175 = vmatprep.subr.mxu0 0.0
      %2176 = vmatpush1.msra.mxu0 0.0
      %2177 = vmatprep.subr.mxu0 0.0
      %2178 = vmatpush1.msra.mxu0 0.0
      %2179 = vmatprep.subr.mxu0 0.0
      %2180 = vmatpush1.msra.mxu0 0.0
      %2181 = vmatprep.subr.mxu0 0.0
      %2182 = vmatpush1.msra.mxu0 0.0
      %2183 = vmatprep.subr.mxu0 0.0
      %2184 = vmatpush1.msra.mxu0 0.0
      %2185 = vmatprep.subr.mxu0 0.0
      %2186 = vmatpush1.msra.mxu0 0.0
      %2187 = vmatprep.subr.mxu0 0.0
      %2188 = vmatpush1.msra.mxu0 0.0
      %2189 = vmatprep.mubr.f32.mxu0 0.0
      %2190 = vmatmul.mubr.f32.gmra.mrb[0].mxu0 %v2025
      %v2191 = vpop.f32.mrb[0].mxu0
      %v2192 = vadd.f32 %v2102, %v2191
      %v2193 = vpop.f32.mrb[0].mxu0
      %2194 = vmatprep.mubr.f32.mxu0 0.0
      %2195 = vmatmul.mubr.f32.gmra.mrb[0].mxu0 %v2027
      %v2196 = vpop.f32.mrb[0].mxu0
      %v2197 = vadd.f32 %v2107, %v2196
      %v2198 = vpop.f32.mrb[0].mxu0
      %2199 = vmatprep.mubr.f32.mxu0 0.0
      %2200 = vmatmul.mubr.f32.gmra.mrb[0].mxu0 %v2029
      %v2201 = vpop.f32.mrb[0].mxu0
      %v2202 = vadd.f32 %v2112, %v2201
      %v2203 = vpop.f32.mrb[0].mxu0
      %2204 = vmatprep.mubr.f32.mxu0 0.0
      %2205 = vmatmul.mubr.f32.gmra.mrb[0].mxu0 %v2031
      %v2206 = vpop.f32.mrb[0].mxu0
      %v2207 = vadd.f32 %v2117, %v2206
      %v2208 = vpop.f32.mrb[0].mxu0
      %2209 = vmatprep.mubr.f32.mxu0 0.0
      %2210 = vmatmul.mubr.f32.gmra.mrb[0].mxu0 %v2033
      %v2211 = vpop.f32.mrb[0].mxu0
      %v2212 = vadd.f32 %v2122, %v2211
      %v2213 = vpop.f32.mrb[0].mxu0
      %2214 = vdwg.mxu0
      %v2215 = vld [vmem:[%s2] sm:$0x1]
      %v2217 = vlaneseq
      %v2218 = vshrl.u32 %v2217, 7
      %v2219 = vsub.s32 0, %v2218
      %v2220 = vrot.slane %v2215, %v2219
      %v2222 = vmul.f32 %v2192, %v2220
      %v2223 = vmul.f32 %v2197, %v2220
      %v2224 = vmul.f32 %v2202, %v2220
      %v2225 = vmul.f32 %v2207, %v2220
      %v2226 = vmul.f32 %v2212, %v2220
      %v2227 = vld [vmem:[%s3] sm:$0x1]
      %v2229 = vlaneseq
      %v2230 = vshrl.u32 %v2229, 7
      %v2231 = vsub.s32 0, %v2230
      %v2232 = vrot.slane %v2227, %v2231
      %v2234 = vadd.f32 %v2222, %v2232
      %v2235 = vadd.f32 %v2223, %v2232
      %v2236 = vadd.f32 %v2224, %v2232
      %v2237 = vadd.f32 %v2225, %v2232
      %v2238 = vadd.f32 %v2226, %v2232
      %vm2239 = vcmp.ge.f32.partialorder %v2234, 0.0
      %vm2240 = vcmp.ge.f32.partialorder %v2235, 0.0
      %vm2241 = vcmp.ge.f32.partialorder %v2236, 0.0
      %vm2242 = vcmp.ge.f32.partialorder %v2237, 0.0
      %vm2243 = vcmp.ge.f32.partialorder %v2238, 0.0
      %v2244 = vmul.f32 %v2234, 0.01
      %v2245 = vmul.f32 %v2235, 0.01
      %v2246 = vmul.f32 %v2236, 0.01
      %v2247 = vmul.f32 %v2237, 0.01
      %v2248 = vmul.f32 %v2238, 0.01
      %v2249 = vsel %vm2239, %v2234, %v2244
      %v2250 = vsel %vm2240, %v2235, %v2245
      %v2251 = vsel %vm2241, %v2236, %v2246
      %v2252 = vsel %vm2242, %v2237, %v2247
      %v2253 = vsel %vm2243, %v2238, %v2248
      %v2259 = vcombine.high %v2249, %v2249
      %v2261 = vunpack.c.l.s4 1983009808
      %v2262 = vunpack.c.0.s8 %v2261
      %v2263 = vlaneseq
      %v2264 = vshrl.u32 %v2263, 7
      %v2265 = vsub.s32 %v2262, %v2264
      %v2266 = vrot.slane %v2249, %v2265
      %v2268 = vunpack.c.l.s4 1983009808
      %v2269 = vunpack.c.0.s8 %v2268
      %v2270 = vlaneseq
      %v2271 = vshrl.u32 %v2270, 7
      %v2272 = vsub.s32 %v2269, %v2271
      %v2273 = vrot.slane %v2259, %v2272
      %v2274 = vcombine.high %v2266, %v2266
      %v2275 = vcombine.high %v2273, %v2273
      %v2276 = vcombine.high %v2250, %v2250
      %v2278 = vunpack.c.l.s4 1983009808
      %v2279 = vunpack.c.0.s8 %v2278
      %v2280 = vlaneseq
      %v2281 = vshrl.u32 %v2280, 7
      %v2282 = vsub.s32 %v2279, %v2281
      %v2283 = vrot.slane %v2250, %v2282
      %v2285 = vunpack.c.l.s4 1983009808
      %v2286 = vunpack.c.0.s8 %v2285
      %v2287 = vlaneseq
      %v2288 = vshrl.u32 %v2287, 7
      %v2289 = vsub.s32 %v2286, %v2288
      %v2290 = vrot.slane %v2276, %v2289
      %v2291 = vcombine.high %v2283, %v2283
      %v2292 = vcombine.high %v2290, %v2290
      %v2293 = vcombine.high %v2251, %v2251
      %v2295 = vunpack.c.l.s4 1983009808
      %v2296 = vunpack.c.0.s8 %v2295
      %v2297 = vlaneseq
      %v2298 = vshrl.u32 %v2297, 7
      %v2299 = vsub.s32 %v2296, %v2298
      %v2300 = vrot.slane %v2251, %v2299
      %v2302 = vunpack.c.l.s4 1983009808
      %v2303 = vunpack.c.0.s8 %v2302
      %v2304 = vlaneseq
      %v2305 = vshrl.u32 %v2304, 7
      %v2306 = vsub.s32 %v2303, %v2305
      %v2307 = vrot.slane %v2293, %v2306
      %v2308 = vcombine.high %v2300, %v2300
      %v2309 = vcombine.high %v2307, %v2307
      %v2310 = vcombine.high %v2252, %v2252
      %v2312 = vunpack.c.l.s4 1983009808
      %v2313 = vunpack.c.0.s8 %v2312
      %v2314 = vlaneseq
      %v2315 = vshrl.u32 %v2314, 7
      %v2316 = vsub.s32 %v2313, %v2315
      %v2317 = vrot.slane %v2252, %v2316
      %v2319 = vunpack.c.l.s4 1983009808
      %v2320 = vunpack.c.0.s8 %v2319
      %v2321 = vlaneseq
      %v2322 = vshrl.u32 %v2321, 7
      %v2323 = vsub.s32 %v2320, %v2322
      %v2324 = vrot.slane %v2310, %v2323
      %v2325 = vcombine.high %v2317, %v2317
      %v2326 = vcombine.high %v2324, %v2324
      %v2328 = vunpack.c.l.s4 1983009808
      %v2329 = vunpack.c.0.s8 %v2328
      %v2330 = vlaneseq
      %v2331 = vshrl.u32 %v2330, 7
      %v2332 = vsub.s32 %v2329, %v2331
      %v2333 = vrot.slane %v2253, %v2332
      %v2334 = vcombine.high %v2333, %v2333
      %v2335 = vcombine.low %v2266, %v2274
      %v2337 = vunpack.c.l.s4 1983009808
      %v2338 = vunpack.c.0.s8 %v2337
      %v2339 = vlaneseq
      %v2340 = vshrl.u32 %v2339, 7
      %v2341 = vsub.s32 %v2338, %v2340
      %v2342 = vrot.slane %v2335, %v2341
      %v2344 = vunpack.c.l.s4 1983009808
      %v2345 = vunpack.c.0.s8 %v2344
      %v2346 = vlaneseq
      %v2347 = vshrl.u32 %v2346, 7
      %v2348 = vsub.s32 %v2345, %v2347
      %v2349 = vrot.slane %v2273, %v2348
      %v2350 = vcombine.low %v2342, %v2349
      %v2351 = vcombine.low %v2275, %v2283
      %v2353 = vunpack.c.l.s4 1983009808
      %v2354 = vunpack.c.0.s8 %v2353
      %v2355 = vlaneseq
      %v2356 = vshrl.u32 %v2355, 7
      %v2357 = vsub.s32 %v2354, %v2356
      %v2358 = vrot.slane %v2351, %v2357
      %v2360 = vunpack.c.l.s4 1983009808
      %v2361 = vunpack.c.0.s8 %v2360
      %v2362 = vlaneseq
      %v2363 = vshrl.u32 %v2362, 7
      %v2364 = vsub.s32 %v2361, %v2363
      %v2365 = vrot.slane %v2291, %v2364
      %v2366 = vcombine.low %v2358, %v2365
      %v2367 = vcombine.low %v2290, %v2292
      %v2369 = vunpack.c.l.s4 1983009808
      %v2370 = vunpack.c.0.s8 %v2369
      %v2371 = vlaneseq
      %v2372 = vshrl.u32 %v2371, 7
      %v2373 = vsub.s32 %v2370, %v2372
      %v2374 = vrot.slane %v2367, %v2373
      %v2376 = vunpack.c.l.s4 1983009808
      %v2377 = vunpack.c.0.s8 %v2376
      %v2378 = vlaneseq
      %v2379 = vshrl.u32 %v2378, 7
      %v2380 = vsub.s32 %v2377, %v2379
      %v2381 = vrot.slane %v2300, %v2380
      %v2382 = vcombine.low %v2374, %v2381
      %v2383 = vcombine.low %v2308, %v2307
      %v2385 = vunpack.c.l.s4 1983009808
      %v2386 = vunpack.c.0.s8 %v2385
      %v2387 = vlaneseq
      %v2388 = vshrl.u32 %v2387, 7
      %v2389 = vsub.s32 %v2386, %v2388
      %v2390 = vrot.slane %v2383, %v2389
      %v2392 = vunpack.c.l.s4 1983009808
      %v2393 = vunpack.c.0.s8 %v2392
      %v2394 = vlaneseq
      %v2395 = vshrl.u32 %v2394, 7
      %v2396 = vsub.s32 %v2393, %v2395
      %v2397 = vrot.slane %v2309, %v2396
      %v2398 = vcombine.low %v2390, %v2397
      %v2399 = vcombine.low %v2317, %v2325
      %v2401 = vunpack.c.l.s4 1983009808
      %v2402 = vunpack.c.0.s8 %v2401
      %v2403 = vlaneseq
      %v2404 = vshrl.u32 %v2403, 7
      %v2405 = vsub.s32 %v2402, %v2404
      %v2406 = vrot.slane %v2399, %v2405
      %v2408 = vunpack.c.l.s4 1983009808
      %v2409 = vunpack.c.0.s8 %v2408
      %v2410 = vlaneseq
      %v2411 = vshrl.u32 %v2410, 7
      %v2412 = vsub.s32 %v2409, %v2411
      %v2413 = vrot.slane %v2324, %v2412
      %v2414 = vcombine.low %v2406, %v2413
      %v2415 = vcombine.low %v2326, %v2333
      %v2417 = vunpack.c.l.s4 1983009808
      %v2418 = vunpack.c.0.s8 %v2417
      %v2419 = vlaneseq
      %v2420 = vshrl.u32 %v2419, 7
      %v2421 = vsub.s32 %v2418, %v2420
      %v2422 = vrot.slane %v2415, %v2421
      %v2424 = vunpack.c.l.s4 1983009808
      %v2425 = vunpack.c.0.s8 %v2424
      %v2426 = vlaneseq
      %v2427 = vshrl.u32 %v2426, 7
      %v2428 = vsub.s32 %v2425, %v2427
      %v2429 = vrot.slane %v2334, %v2428
      %v2430 = vcombine.low %v2422, %v2429
      %vm2437 = vcmask 259072
      %2438 = vst.msk [vmem:[%s197] sm:$0x3f] %vm2437, %v2350
      %2439 = vst.msk [vmem:[%s197 + $0x8] sm:$0x3f] %vm2437, %v2366
      %2440 = vst.msk [vmem:[%s197 + $0x10] sm:$0x3f] %vm2437, %v2382
      %2441 = vst.msk [vmem:[%s197 + $0x18] sm:$0x3f] %vm2437, %v2398
      %2442 = vst.msk [vmem:[%s197 + $0x20] sm:$0x3f] %vm2437, %v2414
      %2443 = vst.msk [vmem:[%s197 + $0x28] sm:$0x3f] %vm2437, %v2430
      %p2444 = scmp.lt.s32.totalorder %s15, 1
      %s2445 = scalar_select %p2444, %s15, 1
      %s2446 = smul.addr %s2445, 6
      %s2447 = smul.addr %s2446, 8
      %s2448 = scalar_lea.vmem %s4, %s2447
      // Predicated region
      $region37: #{cqcc_forward.25} parent=35 // pred_check
        %p2449 = pneg %p122
      $region38: #{cqcc_forward.25} parent=35 // pred_check_branch
        %2451 = sbr.rel (%p2449) target = $region40
      $region39: #{cqcc_forward.25} parent=35 // pred_region
        _
      $region40: #{cqcc_forward.25} parent=35 // pred_fallthru
        _
    $region36: #{cqcc_forward.25} parent=5 // pred_fallthru
      _
    %p2452 = scmp.le.s32.totalorder 2, %s10
    // Predicated region
    $region41: #{cqcc_forward.25} parent=5 // pred_check
      %p2453 = pneg %p2452
    $region42: #{cqcc_forward.25} parent=5 // pred_check_branch
      %2455 = sbr.rel (%p2453) target = $region44
    $region43: #{cqcc_forward.25} parent=5 // pred_region
      %s2456 = ssub.s32 %s10, 2
      // Predicated region
      $region45: #{cqcc_forward.25} parent=43 // pred_check
        %p2457 = pneg %p128
      $region46: #{cqcc_forward.25} parent=43 // pred_check_branch
        %2459 = sbr.rel (%p2457) target = $region48
      $region47: #{cqcc_forward.25} parent=43 // pred_region
        %p2460 = scmp.lt.s32.totalorder %s16, 1
        %s2461 = scalar_select %p2460, %s16, 1
        %s2462 = smul.addr %s2461, 6
        %s2463 = smul.addr %s2462, 8
        %s2464 = scalar_lea.vmem %s4, %s2463
      $region48: #{cqcc_forward.25} parent=43 // pred_fallthru
        _
    $region44: #{cqcc_forward.25} parent=5 // pred_fallthru
      _
  $region6: #{cqcc_forward.25} parent=0 // loop_footer
    %s14 = sadd.s32 1, %s10
  $region7: #{cqcc_forward.25} parent=0 // loop_footer_branch
    %9 = sbr.rel target = $region3
  $region8: #{cqcc_forward.25} parent=0 // loop_exit
    _

// kernel: cqcc_forward.28
$region0: #{cqcc_forward.28}
  #allocation0 [shape = 'u32[]', space=smem, size = 0x4, offset = 0x4, fixed_abs, tag = 'smem constant byte address 0x4 - core index']
  #allocation1 [shape = 'u32[144,128]{1,0:T(1,128)}', space=vmem, size = 0x12000, scoped, tag = 'internal scratch']
  %s0 = inlined_call_operand.vmem [shape: f32[2,3,3,32], index: 0, kind: input, shape index: {}]
  %s1 = inlined_call_operand.vmem [shape: f32[288,32], index: 1, kind: input, shape index: {}]
  %s2 = inlined_call_operand.vmem [shape: f32[1,32], index: 2, kind: input, shape index: {}]
  %s3 = inlined_call_operand.vmem [shape: f32[1,32], index: 3, kind: input, shape index: {}]
  %s4 = inlined_call_operand.vmem [shape: f32[2,1,1,32], index: 4, kind: output, shape index: {}]
  %s5 = sld [smem:[#allocation0]]
  $region49: #{cqcc_forward.28} parent=0
    _
  %s7 = ssub.s32 1, %s5
  %s8 = scalar_select 0, %s7, %s5
  loop: start=0, step=1, limit=4
  $region2: #{cqcc_forward.28} parent=0 // loop_pre_header
    _
  $region3: #{cqcc_forward.28} parent=0 // loop_header
    %s10 = sphi 0, %s14
    %p11 = scmp.ge.s32.totalorder %s10, 4
    %s20 = sphi 0, %s22
    %s23 = sphi 0, %s20
    %s24 = sphi 0, %s23
    %s40 = sphi 0, %s24
    %s44 = sphi 0, %s44
    %s46 = sphi 0, %s44
    %s47 = sphi 0, %s46
    %s61 = sphi 0, %s47
    %s65 = sphi 0, %s65
    %s67 = sphi 0, %s65
    %s68 = sphi 0, %s67
    %s82 = sphi 0, %s68
    %s86 = sphi 0, %s86
    %s88 = sphi 0, %s86
    %s89 = sphi 0, %s88
    %s103 = sphi 0, %s89
    %s109 = sphi 0, %s111
    %s112 = sphi 0, %s109
    %s113 = sphi 0, %s112
    %s129 = sphi 0, %s113
  $region4: #{cqcc_forward.28} parent=0 // loop_header_branch
    %13 = sbr.rel (%p11) target = $region8
  $region5: #{cqcc_forward.28} parent=0 // loop_body
    %s15 = ssub.s32 %s10, 1
    %s16 = ssub.s32 %s10, 2
    %s17 = sadd.s32 %s10, 1
    %s18 = ssub.s32 %s10, %s17
    %p19 = scmp.eq.s32.totalorder %s18, 0
    %s21 = sadd.s32 %s20, 1
    %s22 = scalar_select %p19, %s20, %s21
    %p25 = pneg %p19
    %p26 = scmp.eq.s32.totalorder %s10, 1
    %p27 = por %p25, %p26
    %p28 = scmp.ne.s32.totalorder %s20, %s23
    %p29 = scmp.eq.s32.totalorder %s10, 0
    %p30 = por %p28, %p29
    %p31 = scmp.ne.s32.totalorder %s20, %s23
    %p32 = scmp.eq.s32.totalorder %s15, 1
    %p33 = por %p31, %p32
    %p34 = scmp.ne.s32.totalorder %s23, %s24
    %p35 = scmp.eq.s32.totalorder %s15, 0
    %p36 = por %p34, %p35
    %p37 = scmp.ne.s32.totalorder %s23, %s24
    %p38 = scmp.eq.s32.totalorder %s16, 1
    %p39 = por %p37, %p38
    %p41 = scmp.ne.s32.totalorder %s24, %s40
    %p42 = scmp.eq.s32.totalorder %s16, 0
    %p43 = por %p41, %p42
    %s45 = sadd.s32 %s44, 1
    %p48 = scmp.eq.s32.totalorder %s10, 1
    %p49 = scmp.ne.s32.totalorder %s44, %s46
    %p50 = scmp.eq.s32.totalorder %s10, 0
    %p51 = por %p49, %p50
    %p52 = scmp.ne.s32.totalorder %s44, %s46
    %p53 = scmp.eq.s32.totalorder %s15, 1
    %p54 = por %p52, %p53
    %p55 = scmp.ne.s32.totalorder %s46, %s47
    %p56 = scmp.eq.s32.totalorder %s15, 0
    %p57 = por %p55, %p56
    %p58 = scmp.ne.s32.totalorder %s46, %s47
    %p59 = scmp.eq.s32.totalorder %s16, 1
    %p60 = por %p58, %p59
    %p62 = scmp.ne.s32.totalorder %s47, %s61
    %p63 = scmp.eq.s32.totalorder %s16, 0
    %p64 = por %p62, %p63
    %s66 = sadd.s32 %s65, 1
    %p69 = scmp.eq.s32.totalorder %s10, 1
    %p70 = scmp.ne.s32.totalorder %s65, %s67
    %p71 = scmp.eq.s32.totalorder %s10, 0
    %p72 = por %p70, %p71
    %p73 = scmp.ne.s32.totalorder %s65, %s67
    %p74 = scmp.eq.s32.totalorder %s15, 1
    %p75 = por %p73, %p74
    %p76 = scmp.ne.s32.totalorder %s67, %s68
    %p77 = scmp.eq.s32.totalorder %s15, 0
    %p78 = por %p76, %p77
    %p79 = scmp.ne.s32.totalorder %s67, %s68
    %p80 = scmp.eq.s32.totalorder %s16, 1
    %p81 = por %p79, %p80
    %p83 = scmp.ne.s32.totalorder %s68, %s82
    %p84 = scmp.eq.s32.totalorder %s16, 0
    %p85 = por %p83, %p84
    %s87 = sadd.s32 %s86, 1
    %p90 = scmp.eq.s32.totalorder %s10, 1
    %p91 = scmp.ne.s32.totalorder %s86, %s88
    %p92 = scmp.eq.s32.totalorder %s10, 0
    %p93 = por %p91, %p92
    %p94 = scmp.ne.s32.totalorder %s86, %s88
    %p95 = scmp.eq.s32.totalorder %s15, 1
    %p96 = por %p94, %p95
    %p97 = scmp.ne.s32.totalorder %s88, %s89
    %p98 = scmp.eq.s32.totalorder %s15, 0
    %p99 = por %p97, %p98
    %p100 = scmp.ne.s32.totalorder %s88, %s89
    %p101 = scmp.eq.s32.totalorder %s16, 1
    %p102 = por %p100, %p101
    %p104 = scmp.ne.s32.totalorder %s89, %s103
    %p105 = scmp.eq.s32.totalorder %s16, 0
    %p106 = por %p104, %p105
    %s107 = ssub.s32 %s10, %s17
    %p108 = scmp.eq.s32.totalorder %s107, 0
    %s110 = sadd.s32 %s109, 1
    %s111 = scalar_select %p108, %s109, %s110
    %p114 = pneg %p108
    %p115 = scmp.eq.s32.totalorder %s10, 1
    %p116 = por %p114, %p115
    %p117 = scmp.ne.s32.totalorder %s109, %s112
    %p118 = scmp.eq.s32.totalorder %s10, 0
    %p119 = por %p117, %p118
    %p120 = scmp.ne.s32.totalorder %s109, %s112
    %p121 = scmp.eq.s32.totalorder %s15, 1
    %p122 = por %p120, %p121
    %p123 = scmp.ne.s32.totalorder %s112, %s113
    %p124 = scmp.eq.s32.totalorder %s15, 0
    %p125 = por %p123, %p124
    %p126 = scmp.ne.s32.totalorder %s112, %s113
    %p127 = scmp.eq.s32.totalorder %s16, 1
    %p128 = por %p126, %p127
    %p130 = scmp.ne.s32.totalorder %s113, %s129
    %p131 = scmp.eq.s32.totalorder %s16, 0
    %p132 = por %p130, %p131
    %p133 = scmp.le.s32.totalorder 1, %s10
    %p134 = scmp.lt.s32.totalorder %s10, 3
    %p135 = pnand %p133, %p134
    %p136 = pneg %p135
    // Predicated region
    $region9: #{cqcc_forward.28} parent=5 // pred_check
      _
    $region10: #{cqcc_forward.28} parent=5 // pred_check_branch
      %138 = sbr.rel (%p135) target = $region12
    $region11: #{cqcc_forward.28} parent=5 // pred_region
      %s139 = ssub.s32 %s10, 1
      // Predicated region
      $region13: #{cqcc_forward.28} parent=11 // pred_check
        %p140 = pneg %p57
      $region14: #{cqcc_forward.28} parent=11 // pred_check_branch
        %142 = sbr.rel (%p140) target = $region16
      $region15: #{cqcc_forward.28} parent=11 // pred_region
        _
      $region16: #{cqcc_forward.28} parent=11 // pred_fallthru
        _
      // Predicated region
      $region17: #{cqcc_forward.28} parent=11 // pred_check
        %p143 = pneg %p78
      $region18: #{cqcc_forward.28} parent=11 // pred_check_branch
        %145 = sbr.rel (%p143) target = $region20
      $region19: #{cqcc_forward.28} parent=11 // pred_region
        _
      $region20: #{cqcc_forward.28} parent=11 // pred_fallthru
        _
      // Predicated region
      $region21: #{cqcc_forward.28} parent=11 // pred_check
        %p146 = pneg %p99
      $region22: #{cqcc_forward.28} parent=11 // pred_check_branch
        %148 = sbr.rel (%p146) target = $region24
      $region23: #{cqcc_forward.28} parent=11 // pred_region
        _
      $region24: #{cqcc_forward.28} parent=11 // pred_fallthru
        _
    $region12: #{cqcc_forward.28} parent=5 // pred_fallthru
      _
    %p149 = scmp.lt.s32.totalorder %s10, 2
    // Predicated region
    $region25: #{cqcc_forward.28} parent=5 // pred_check
      %p150 = pneg %p149
    $region26: #{cqcc_forward.28} parent=5 // pred_check_branch
      %152 = sbr.rel (%p150) target = $region28
    $region27: #{cqcc_forward.28} parent=5 // pred_region
      // Predicated region
      $region29: #{cqcc_forward.28} parent=27 // pred_check
        %p153 = pneg %p30
      $region30: #{cqcc_forward.28} parent=27 // pred_check_branch
        %155 = sbr.rel (%p153) target = $region32
      $region31: #{cqcc_forward.28} parent=27 // pred_region
        %p156 = scmp.lt.s32.totalorder %s10, 1
        %s157 = scalar_select %p156, %s10, 1
        %s158 = smul.addr %s157, 3
        %s159 = smul.addr %s158, 4
        %s160 = scalar_lea.vmem %s0, %s159
      $region32: #{cqcc_forward.28} parent=27 // pred_fallthru
        _
    $region28: #{cqcc_forward.28} parent=5 // pred_fallthru
      _
    %p161 = scmp.le.s32.totalorder 1, %s10
    %p162 = scmp.lt.s32.totalorder %s10, 3
    %p163 = pnand %p161, %p162
    %p164 = pneg %p163
    // Predicated region
    $region33: #{cqcc_forward.28} parent=5 // pred_check
      _
    $region34: #{cqcc_forward.28} parent=5 // pred_check_branch
      %166 = sbr.rel (%p163) target = $region36
    $region35: #{cqcc_forward.28} parent=5 // pred_region
      %s167 = ssub.s32 %s10, 1
      %p168 = scmp.lt.s32.totalorder %s15, 1
      %s169 = scalar_select %p168, %s15, 1
      %s170 = smul.addr %s169, 3
      %s171 = smul.addr %s170, 4
      %s172 = scalar_lea.vmem %s0, %s171
      %p173 = pneg %p36
      %p174 = pneg %p33
      %p175 = pneg %p57
      %p176 = pneg %p54
      %p177 = pneg %p78
      %p178 = pneg %p75
      %p179 = pneg %p99
      %p180 = pneg %p96
      %p181 = pneg %p125
      %p182 = pneg %p122
      %p183 = scmp.lt.s32.totalorder %s15, 1
      %s184 = scalar_select %p183, %s15, 1
      %s185 = scalar_lea.vmem %s4, %s184
      %p186 = scmp.lt.s32.totalorder %s15, 1
      %s187 = scalar_select %p186, %s15, 1
      %s188 = smul.addr %s187, 3
      %s189 = smul.addr %s188, 4
      %s190 = scalar_lea.vmem %s0, %s189
      %p191 = scmp.lt.s32.totalorder %s15, 1
      %s192 = scalar_select %p191, %s15, 1
      %s193 = scalar_lea.vmem %s4, %s192
      %v194 = vld [vmem:[%s190] sm:$0x1]
      %v195 = vld [vmem:[%s190 + $0x1] sm:$0x1]
      %v196 = vld [vmem:[%s190 + $0x2] sm:$0x1]
      %s197 = scalar_lea.vmem %s190, 4
      %v198 = vld [vmem:[%s197] sm:$0x1]
      %v199 = vld [vmem:[%s197 + $0x1] sm:$0x1]
      %v200 = vld [vmem:[%s197 + $0x2] sm:$0x1]
      %s201 = scalar_lea.vmem %s190, 8
      %v202 = vld [vmem:[%s201] sm:$0x1]
      %v203 = vld [vmem:[%s201 + $0x1] sm:$0x1]
      %v204 = vld [vmem:[%s201 + $0x2] sm:$0x1]
      %206 = vrot.lane.b32.xlu0 %v195, 32
      %v207 = vpop.permute.xlu0 %206
      %210 = vrot.lane.b32.xlu0 %v196, 64
      %v211 = vpop.permute.xlu0 %210
      %214 = vrot.lane.b32.xlu0 %v198, 96
      %v215 = vpop.permute.xlu0 %214
      %218 = vrot.lane.b32.xlu0 %v200, 32
      %v219 = vpop.permute.xlu0 %218
      %222 = vrot.lane.b32.xlu0 %v202, 64
      %v223 = vpop.permute.xlu0 %222
      %226 = vrot.lane.b32.xlu0 %v203, 96
      %v227 = vpop.permute.xlu0 %226
      %vm229 = vcmask 261120
      %v230 = vsel %vm229, %v194, %v207
      %vm231 = vcmask 523264
      %v232 = vsel %vm231, %v230, %v211
      %vm233 = vcmask 785408
      %v234 = vsel %vm233, %v232, %v215
      %v235 = vsel %vm229, %v199, %v219
      %v236 = vsel %vm231, %v235, %v223
      %v237 = vsel %vm233, %v236, %v227
      %v238 = vld [vmem:[%s1] sm:$0xff]
      %v239 = vld [vmem:[%s1 + $0x8] sm:$0xff]
      %v240 = vld [vmem:[%s1 + $0x10] sm:$0xff]
      %v241 = vld [vmem:[%s1 + $0x18] sm:$0xff]
      %v242 = vld [vmem:[%s1 + $0x20] sm:$0xff]
      %v243 = vld [vmem:[%s1 + $0x28] sm:$0xff]
      %v244 = vld [vmem:[%s1 + $0x30] sm:$0xff]
      %v245 = vld [vmem:[%s1 + $0x38] sm:$0xff]
      %v246 = vld [vmem:[%s1 + $0x40] sm:$0xff]
      %v247 = vld [vmem:[%s1 + $0x48] sm:$0xff]
      %v248 = vld [vmem:[%s1 + $0x50] sm:$0xff]
      %v249 = vld [vmem:[%s1 + $0x58] sm:$0xff]
      %v250 = vld [vmem:[%s1 + $0x60] sm:$0xff]
      %v251 = vld [vmem:[%s1 + $0x68] sm:$0xff]
      %v252 = vld [vmem:[%s1 + $0x70] sm:$0xff]
      %v253 = vld [vmem:[%s1 + $0x78] sm:$0xff]
      %v254 = vld [vmem:[%s1 + $0x80] sm:$0xff]
      %v255 = vld [vmem:[%s1 + $0x88] sm:$0xff]
      %v256 = vld [vmem:[%s1 + $0x90] sm:$0xff]
      %v257 = vld [vmem:[%s1 + $0x98] sm:$0xff]
      %v258 = vld [vmem:[%s1 + $0xa0] sm:$0xff]
      %v259 = vld [vmem:[%s1 + $0xa8] sm:$0xff]
      %v260 = vld [vmem:[%s1 + $0xb0] sm:$0xff]
      %v261 = vld [vmem:[%s1 + $0xb8] sm:$0xff]
      %v262 = vld [vmem:[%s1 + $0xc0] sm:$0xff]
      %v263 = vld [vmem:[%s1 + $0xc8] sm:$0xff]
      %v264 = vld [vmem:[%s1 + $0xd0] sm:$0xff]
      %v265 = vld [vmem:[%s1 + $0xd8] sm:$0xff]
      %v266 = vld [vmem:[%s1 + $0xe0] sm:$0xff]
      %v267 = vld [vmem:[%s1 + $0xe8] sm:$0xff]
      %v268 = vld [vmem:[%s1 + $0xf0] sm:$0xff]
      %v269 = vld [vmem:[%s1 + $0xf8] sm:$0xff]
      %v270 = vld [vmem:[%s1 + $0x100] sm:$0xff]
      %v271 = vld [vmem:[%s1 + $0x108] sm:$0xff]
      %v272 = vld [vmem:[%s1 + $0x110] sm:$0xff]
      %v273 = vld [vmem:[%s1 + $0x118] sm:$0xff]
      %v275 = vsel %vm229, %v204, 0
      %277 = vmatprep.subr.mxu0 0.0
      %278 = vmatpush1.msra.mxu0 %v238
      %279 = vmatprep.subr.mxu0 0.0
      %280 = vmatpush1.msra.mxu0 %v239
      %281 = vmatprep.subr.mxu0 0.0
      %282 = vmatpush1.msra.mxu0 %v240
      %283 = vmatprep.subr.mxu0 0.0
      %284 = vmatpush1.msra.mxu0 %v241
      %285 = vmatprep.subr.mxu0 0.0
      %286 = vmatpush1.msra.mxu0 %v242
      %287 = vmatprep.subr.mxu0 0.0
      %288 = vmatpush1.msra.mxu0 %v243
      %289 = vmatprep.subr.mxu0 0.0
      %290 = vmatpush1.msra.mxu0 %v244
      %291 = vmatprep.subr.mxu0 0.0
      %292 = vmatpush1.msra.mxu0 %v245
      %293 = vmatprep.subr.mxu0 0.0
      %294 = vmatpush1.msra.mxu0 %v246
      %295 = vmatprep.subr.mxu0 0.0
      %296 = vmatpush1.msra.mxu0 %v247
      %297 = vmatprep.subr.mxu0 0.0
      %298 = vmatpush1.msra.mxu0 %v248
      %299 = vmatprep.subr.mxu0 0.0
      %300 = vmatpush1.msra.mxu0 %v249
      %301 = vmatprep.subr.mxu0 0.0
      %302 = vmatpush1.msra.mxu0 %v250
      %303 = vmatprep.subr.mxu0 0.0
      %304 = vmatpush1.msra.mxu0 %v251
      %305 = vmatprep.subr.mxu0 0.0
      %306 = vmatpush1.msra.mxu0 %v252
      %307 = vmatprep.subr.mxu0 0.0
      %308 = vmatpush1.msra.mxu0 %v253
      %309 = vmatprep.subr.mxu0 0.0
      %310 = vmatpush1.msra.mxu0 %v254
      %311 = vmatprep.subr.mxu0 0.0
      %312 = vmatpush1.msra.mxu0 %v255
      %313 = vmatprep.subr.mxu0 0.0
      %314 = vmatpush1.msra.mxu0 %v256
      %315 = vmatprep.subr.mxu0 0.0
      %316 = vmatpush1.msra.mxu0 %v257
      %317 = vmatprep.subr.mxu0 0.0
      %318 = vmatpush1.msra.mxu0 %v258
      %319 = vmatprep.subr.mxu0 0.0
      %320 = vmatpush1.msra.mxu0 %v259
      %321 = vmatprep.subr.mxu0 0.0
      %322 = vmatpush1.msra.mxu0 %v260
      %323 = vmatprep.subr.mxu0 0.0
      %324 = vmatpush1.msra.mxu0 %v261
      %325 = vmatprep.subr.mxu0 0.0
      %326 = vmatpush1.msra.mxu0 %v262
      %327 = vmatprep.subr.mxu0 0.0
      %328 = vmatpush1.msra.mxu0 %v263
      %329 = vmatprep.subr.mxu0 0.0
      %330 = vmatpush1.msra.mxu0 %v264
      %331 = vmatprep.subr.mxu0 0.0
      %332 = vmatpush1.msra.mxu0 %v265
      %333 = vmatprep.subr.mxu0 0.0
      %334 = vmatpush1.msra.mxu0 %v266
      %335 = vmatprep.subr.mxu0 0.0
      %336 = vmatpush1.msra.mxu0 %v267
      %337 = vmatprep.subr.mxu0 0.0
      %338 = vmatpush1.msra.mxu0 %v268
      %339 = vmatprep.subr.mxu0 0.0
      %340 = vmatpush1.msra.mxu0 %v269
      %341 = vmatprep.mubr.f32.mxu0 %v237
      %342 = vmatmul.mubr.f32.gmra.mrb[0].mxu0 %v234
      %v343 = vpop.f32.mrb[0].mxu0
      %v344 = vadd.f32 0.0, %v343
      %v345 = vpop.f32.mrb[0].mxu0
      %346 = vdwg.mxu0
      %347 = vmatprep.subr.mxu0 0.0
      %348 = vmatpush1.msra.mxu0 %v270
      %349 = vmatprep.subr.mxu0 0.0
      %350 = vmatpush1.msra.mxu0 %v271
      %351 = vmatprep.subr.mxu0 0.0
      %352 = vmatpush1.msra.mxu0 %v272
      %353 = vmatprep.subr.mxu0 0.0
      %354 = vmatpush1.msra.mxu0 %v273
      %355 = vmatprep.subr.mxu0 0.0
      %356 = vmatpush1.msra.mxu0 0.0
      %357 = vmatprep.subr.mxu0 0.0
      %358 = vmatpush1.msra.mxu0 0.0
      %359 = vmatprep.subr.mxu0 0.0
      %360 = vmatpush1.msra.mxu0 0.0
      %361 = vmatprep.subr.mxu0 0.0
      %362 = vmatpush1.msra.mxu0 0.0
      %363 = vmatprep.subr.mxu0 0.0
      %364 = vmatpush1.msra.mxu0 0.0
      %365 = vmatprep.subr.mxu0 0.0
      %366 = vmatpush1.msra.mxu0 0.0
      %367 = vmatprep.subr.mxu0 0.0
      %368 = vmatpush1.msra.mxu0 0.0
      %369 = vmatprep.subr.mxu0 0.0
      %370 = vmatpush1.msra.mxu0 0.0
      %371 = vmatprep.subr.mxu0 0.0
      %372 = vmatpush1.msra.mxu0 0.0
      %373 = vmatprep.subr.mxu0 0.0
      %374 = vmatpush1.msra.mxu0 0.0
      %375 = vmatprep.subr.mxu0 0.0
      %376 = vmatpush1.msra.mxu0 0.0
      %377 = vmatprep.subr.mxu0 0.0
      %378 = vmatpush1.msra.mxu0 0.0
      %379 = vmatprep.subr.mxu0 0.0
      %380 = vmatpush1.msra.mxu0 0.0
      %381 = vmatprep.subr.mxu0 0.0
      %382 = vmatpush1.msra.mxu0 0.0
      %383 = vmatprep.subr.mxu0 0.0
      %384 = vmatpush1.msra.mxu0 0.0
      %385 = vmatprep.subr.mxu0 0.0
      %386 = vmatpush1.msra.mxu0 0.0
      %387 = vmatprep.subr.mxu0 0.0
      %388 = vmatpush1.msra.mxu0 0.0
      %389 = vmatprep.subr.mxu0 0.0
      %390 = vmatpush1.msra.mxu0 0.0
      %391 = vmatprep.subr.mxu0 0.0
      %392 = vmatpush1.msra.mxu0 0.0
      %393 = vmatprep.subr.mxu0 0.0
      %394 = vmatpush1.msra.mxu0 0.0
      %395 = vmatprep.subr.mxu0 0.0
      %396 = vmatpush1.msra.mxu0 0.0
      %397 = vmatprep.subr.mxu0 0.0
      %398 = vmatpush1.msra.mxu0 0.0
      %399 = vmatprep.subr.mxu0 0.0
      %400 = vmatpush1.msra.mxu0 0.0
      %401 = vmatprep.subr.mxu0 0.0
      %402 = vmatpush1.msra.mxu0 0.0
      %403 = vmatprep.subr.mxu0 0.0
      %404 = vmatpush1.msra.mxu0 0.0
      %405 = vmatprep.subr.mxu0 0.0
      %406 = vmatpush1.msra.mxu0 0.0
      %407 = vmatprep.subr.mxu0 0.0
      %408 = vmatpush1.msra.mxu0 0.0
      %409 = vmatprep.subr.mxu0 0.0
      %410 = vmatpush1.msra.mxu0 0.0
      %411 = vmatprep.mubr.f32.mxu0 0.0
      %412 = vmatmul.mubr.f32.gmra.mrb[0].mxu0 %v275
      %v413 = vpop.f32.mrb[0].mxu0
      %v414 = vadd.f32 %v344, %v413
      %v415 = vpop.f32.mrb[0].mxu0
      %416 = vdwg.mxu0
      %v417 = vld [vmem:[%s2] sm:$0x1]
      %v418 = vmul.f32 %v414, %v417
      %v419 = vld [vmem:[%s3] sm:$0x1]
      %v420 = vadd.f32 %v418, %v419
      %vm421 = vcmp.ge.f32.partialorder %v420, 0.0
      %v422 = vmul.f32 %v420, 0.01
      %v423 = vsel %vm421, %v420, %v422
      %vm424 = vcmask 253952
      %425 = vst.msk [vmem:[%s193] sm:$0x1] %vm424, %v423
      %p426 = scmp.lt.s32.totalorder %s15, 1
      %s427 = scalar_select %p426, %s15, 1
      %s428 = scalar_lea.vmem %s4, %s427
      // Predicated region
      $region37: #{cqcc_forward.28} parent=35 // pred_check
        %p429 = pneg %p122
      $region38: #{cqcc_forward.28} parent=35 // pred_check_branch
        %431 = sbr.rel (%p429) target = $region40
      $region39: #{cqcc_forward.28} parent=35 // pred_region
        _
      $region40: #{cqcc_forward.28} parent=35 // pred_fallthru
        _
    $region36: #{cqcc_forward.28} parent=5 // pred_fallthru
      _
    %p432 = scmp.le.s32.totalorder 2, %s10
    // Predicated region
    $region41: #{cqcc_forward.28} parent=5 // pred_check
      %p433 = pneg %p432
    $region42: #{cqcc_forward.28} parent=5 // pred_check_branch
      %435 = sbr.rel (%p433) target = $region44
    $region43: #{cqcc_forward.28} parent=5 // pred_region
      %s436 = ssub.s32 %s10, 2
      // Predicated region
      $region45: #{cqcc_forward.28} parent=43 // pred_check
        %p437 = pneg %p128
      $region46: #{cqcc_forward.28} parent=43 // pred_check_branch
        %439 = sbr.rel (%p437) target = $region48
      $region47: #{cqcc_forward.28} parent=43 // pred_region
        %p440 = scmp.lt.s32.totalorder %s16, 1
        %s441 = scalar_select %p440, %s16, 1
        %s442 = scalar_lea.vmem %s4, %s441
      $region48: #{cqcc_forward.28} parent=43 // pred_fallthru
        _
    $region44: #{cqcc_forward.28} parent=5 // pred_fallthru
      _
  $region6: #{cqcc_forward.28} parent=0 // loop_footer
    %s14 = sadd.s32 1, %s10
  $region7: #{cqcc_forward.28} parent=0 // loop_footer_branch
    %9 = sbr.rel target = $region3
  $region8: #{cqcc_forward.28} parent=0 // loop_exit
    _

// kernel: cqcc_forward.38
$region0: #{cqcc_forward.38}
  #allocation0 [shape = 'u32[]', space=smem, size = 0x4, offset = 0x4, fixed_abs, tag = 'smem constant byte address 0x4 - core index']
  #allocation1 [shape = 'u32[144,128]{1,0:T(1,128)}', space=vmem, size = 0x12000, scoped, tag = 'internal scratch']
  %s0 = inlined_call_operand.vmem [shape: f32[8,288], index: 0, kind: input, shape index: {}]
  %s1 = inlined_call_operand.vmem [shape: f32[288,32], index: 1, kind: input, shape index: {}]
  %s2 = inlined_call_operand.vmem [shape: f32[1,32], index: 2, kind: input, shape index: {}]
  %s3 = inlined_call_operand.vmem [shape: f32[8,32], index: 3, kind: input, shape index: {}]
  %s4 = inlined_call_operand.vmem [shape: f32[1,32], index: 4, kind: input, shape index: {}]
  %s5 = inlined_call_operand.vmem [shape: f32[1,32], index: 5, kind: input, shape index: {}]
  %s6 = inlined_call_operand.vmem [shape: f32[8,32], index: 6, kind: output, shape index: {}]
  %s7 = sld [smem:[#allocation0]]
  $region34: #{cqcc_forward.38} parent=0
    _
  %s9 = ssub.s32 1, %s7
  %s10 = scalar_select 0, %s9, %s7
  // Predicated region
  $region2: #{cqcc_forward.38} parent=0 // pred_check
    _
  $region3: #{cqcc_forward.38} parent=0 // pred_check_branch
    %12 = sbr.rel (0) target = $region5
  $region4: #{cqcc_forward.38} parent=0 // pred_region
    _
  $region5: #{cqcc_forward.38} parent=0 // pred_fallthru
    _
  // Predicated region
  $region6: #{cqcc_forward.38} parent=0 // pred_check
    _
  $region7: #{cqcc_forward.38} parent=0 // pred_check_branch
    %14 = sbr.rel (0) target = $region9
  $region8: #{cqcc_forward.38} parent=0 // pred_region
    _
  $region9: #{cqcc_forward.38} parent=0 // pred_fallthru
    _
  // Predicated region
  $region10: #{cqcc_forward.38} parent=0 // pred_check
    _
  $region11: #{cqcc_forward.38} parent=0 // pred_check_branch
    %16 = sbr.rel (0) target = $region13
  $region12: #{cqcc_forward.38} parent=0 // pred_region
    _
  $region13: #{cqcc_forward.38} parent=0 // pred_fallthru
    _
  // Predicated region
  $region14: #{cqcc_forward.38} parent=0 // pred_check
    _
  $region15: #{cqcc_forward.38} parent=0 // pred_check_branch
    %18 = sbr.rel (0) target = $region17
  $region16: #{cqcc_forward.38} parent=0 // pred_region
    _
  $region17: #{cqcc_forward.38} parent=0 // pred_fallthru
    _
  // Predicated region
  $region18: #{cqcc_forward.38} parent=0 // pred_check
    _
  $region19: #{cqcc_forward.38} parent=0 // pred_check_branch
    %20 = sbr.rel (0) target = $region21
  $region20: #{cqcc_forward.38} parent=0 // pred_region
    _
  $region21: #{cqcc_forward.38} parent=0 // pred_fallthru
    _
  // Predicated region
  $region22: #{cqcc_forward.38} parent=0 // pred_check
    _
  $region23: #{cqcc_forward.38} parent=0 // pred_check_branch
    %22 = sbr.rel (0) target = $region25
  $region24: #{cqcc_forward.38} parent=0 // pred_region
    _
  $region25: #{cqcc_forward.38} parent=0 // pred_fallthru
    _
  %v23 = vld [vmem:[%s0] sm:$0xff]
  %v24 = vld [vmem:[%s0 + $0x8] sm:$0xff]
  %v25 = vld [vmem:[%s0 + $0x10] sm:$0xff]
  %v26 = vld [vmem:[%s1] sm:$0xff]
  %v27 = vld [vmem:[%s1 + $0x8] sm:$0xff]
  %v28 = vld [vmem:[%s1 + $0x10] sm:$0xff]
  %v29 = vld [vmem:[%s1 + $0x18] sm:$0xff]
  %v30 = vld [vmem:[%s1 + $0x20] sm:$0xff]
  %v31 = vld [vmem:[%s1 + $0x28] sm:$0xff]
  %v32 = vld [vmem:[%s1 + $0x30] sm:$0xff]
  %v33 = vld [vmem:[%s1 + $0x38] sm:$0xff]
  %v34 = vld [vmem:[%s1 + $0x40] sm:$0xff]
  %v35 = vld [vmem:[%s1 + $0x48] sm:$0xff]
  %v36 = vld [vmem:[%s1 + $0x50] sm:$0xff]
  %v37 = vld [vmem:[%s1 + $0x58] sm:$0xff]
  %v38 = vld [vmem:[%s1 + $0x60] sm:$0xff]
  %v39 = vld [vmem:[%s1 + $0x68] sm:$0xff]
  %v40 = vld [vmem:[%s1 + $0x70] sm:$0xff]
  %v41 = vld [vmem:[%s1 + $0x78] sm:$0xff]
  %v42 = vld [vmem:[%s1 + $0x80] sm:$0xff]
  %v43 = vld [vmem:[%s1 + $0x88] sm:$0xff]
  %v44 = vld [vmem:[%s1 + $0x90] sm:$0xff]
  %v45 = vld [vmem:[%s1 + $0x98] sm:$0xff]
  %v46 = vld [vmem:[%s1 + $0xa0] sm:$0xff]
  %v47 = vld [vmem:[%s1 + $0xa8] sm:$0xff]
  %v48 = vld [vmem:[%s1 + $0xb0] sm:$0xff]
  %v49 = vld [vmem:[%s1 + $0xb8] sm:$0xff]
  %v50 = vld [vmem:[%s1 + $0xc0] sm:$0xff]
  %v51 = vld [vmem:[%s1 + $0xc8] sm:$0xff]
  %v52 = vld [vmem:[%s1 + $0xd0] sm:$0xff]
  %v53 = vld [vmem:[%s1 + $0xd8] sm:$0xff]
  %v54 = vld [vmem:[%s1 + $0xe0] sm:$0xff]
  %v55 = vld [vmem:[%s1 + $0xe8] sm:$0xff]
  %v56 = vld [vmem:[%s1 + $0xf0] sm:$0xff]
  %v57 = vld [vmem:[%s1 + $0xf8] sm:$0xff]
  %v58 = vld [vmem:[%s1 + $0x100] sm:$0xff]
  %v59 = vld [vmem:[%s1 + $0x108] sm:$0xff]
  %v60 = vld [vmem:[%s1 + $0x110] sm:$0xff]
  %v61 = vld [vmem:[%s1 + $0x118] sm:$0xff]
  %v62 = vld [vmem:[%s2] sm:$0x1]
  %v64 = vlaneseq
  %v65 = vshrl.u32 %v64, 7
  %v66 = vsub.s32 0, %v65
  %v67 = vrot.slane %v62, %v66
  %vm69 = vcmask 261120
  %v71 = vsel %vm69, %v25, 0
  %73 = vmatprep.subr.mxu0 0.0
  %74 = vmatpush1.msra.mxu0 %v26
  %75 = vmatprep.subr.mxu0 0.0
  %76 = vmatpush1.msra.mxu0 %v27
  %77 = vmatprep.subr.mxu0 0.0
  %78 = vmatpush1.msra.mxu0 %v28
  %79 = vmatprep.subr.mxu0 0.0
  %80 = vmatpush1.msra.mxu0 %v29
  %81 = vmatprep.subr.mxu0 0.0
  %82 = vmatpush1.msra.mxu0 %v30
  %83 = vmatprep.subr.mxu0 0.0
  %84 = vmatpush1.msra.mxu0 %v31
  %85 = vmatprep.subr.mxu0 0.0
  %86 = vmatpush1.msra.mxu0 %v32
  %87 = vmatprep.subr.mxu0 0.0
  %88 = vmatpush1.msra.mxu0 %v33
  %89 = vmatprep.subr.mxu0 0.0
  %90 = vmatpush1.msra.mxu0 %v34
  %91 = vmatprep.subr.mxu0 0.0
  %92 = vmatpush1.msra.mxu0 %v35
  %93 = vmatprep.subr.mxu0 0.0
  %94 = vmatpush1.msra.mxu0 %v36
  %95 = vmatprep.subr.mxu0 0.0
  %96 = vmatpush1.msra.mxu0 %v37
  %97 = vmatprep.subr.mxu0 0.0
  %98 = vmatpush1.msra.mxu0 %v38
  %99 = vmatprep.subr.mxu0 0.0
  %100 = vmatpush1.msra.mxu0 %v39
  %101 = vmatprep.subr.mxu0 0.0
  %102 = vmatpush1.msra.mxu0 %v40
  %103 = vmatprep.subr.mxu0 0.0
  %104 = vmatpush1.msra.mxu0 %v41
  %105 = vmatprep.subr.mxu0 0.0
  %106 = vmatpush1.msra.mxu0 %v42
  %107 = vmatprep.subr.mxu0 0.0
  %108 = vmatpush1.msra.mxu0 %v43
  %109 = vmatprep.subr.mxu0 0.0
  %110 = vmatpush1.msra.mxu0 %v44
  %111 = vmatprep.subr.mxu0 0.0
  %112 = vmatpush1.msra.mxu0 %v45
  %113 = vmatprep.subr.mxu0 0.0
  %114 = vmatpush1.msra.mxu0 %v46
  %115 = vmatprep.subr.mxu0 0.0
  %116 = vmatpush1.msra.mxu0 %v47
  %117 = vmatprep.subr.mxu0 0.0
  %118 = vmatpush1.msra.mxu0 %v48
  %119 = vmatprep.subr.mxu0 0.0
  %120 = vmatpush1.msra.mxu0 %v49
  %121 = vmatprep.subr.mxu0 0.0
  %122 = vmatpush1.msra.mxu0 %v50
  %123 = vmatprep.subr.mxu0 0.0
  %124 = vmatpush1.msra.mxu0 %v51
  %125 = vmatprep.subr.mxu0 0.0
  %126 = vmatpush1.msra.mxu0 %v52
  %127 = vmatprep.subr.mxu0 0.0
  %128 = vmatpush1.msra.mxu0 %v53
  %129 = vmatprep.subr.mxu0 0.0
  %130 = vmatpush1.msra.mxu0 %v54
  %131 = vmatprep.subr.mxu0 0.0
  %132 = vmatpush1.msra.mxu0 %v55
  %133 = vmatprep.subr.mxu0 0.0
  %134 = vmatpush1.msra.mxu0 %v56
  %135 = vmatprep.subr.mxu0 0.0
  %136 = vmatpush1.msra.mxu0 %v57
  %137 = vmatprep.mubr.f32.mxu0 %v24
  %138 = vmatmul.mubr.f32.gmra.mrb[0].mxu0 %v23
  %v139 = vpop.f32.mrb[0].mxu0
  %v140 = vadd.f32 %v67, %v139
  %v141 = vpop.f32.mrb[0].mxu0
  %142 = vdwg.mxu0
  %143 = vmatprep.subr.mxu0 0.0
  %144 = vmatpush1.msra.mxu0 %v58
  %145 = vmatprep.subr.mxu0 0.0
  %146 = vmatpush1.msra.mxu0 %v59
  %147 = vmatprep.subr.mxu0 0.0
  %148 = vmatpush1.msra.mxu0 %v60
  %149 = vmatprep.subr.mxu0 0.0
  %150 = vmatpush1.msra.mxu0 %v61
  %151 = vmatprep.subr.mxu0 0.0
  %152 = vmatpush1.msra.mxu0 0.0
  %153 = vmatprep.subr.mxu0 0.0
  %154 = vmatpush1.msra.mxu0 0.0
  %155 = vmatprep.subr.mxu0 0.0
  %156 = vmatpush1.msra.mxu0 0.0
  %157 = vmatprep.subr.mxu0 0.0
  %158 = vmatpush1.msra.mxu0 0.0
  %159 = vmatprep.subr.mxu0 0.0
  %160 = vmatpush1.msra.mxu0 0.0
  %161 = vmatprep.subr.mxu0 0.0
  %162 = vmatpush1.msra.mxu0 0.0
  %163 = vmatprep.subr.mxu0 0.0
  %164 = vmatpush1.msra.mxu0 0.0
  %165 = vmatprep.subr.mxu0 0.0
  %166 = vmatpush1.msra.mxu0 0.0
  %167 = vmatprep.subr.mxu0 0.0
  %168 = vmatpush1.msra.mxu0 0.0
  %169 = vmatprep.subr.mxu0 0.0
  %170 = vmatpush1.msra.mxu0 0.0
  %171 = vmatprep.subr.mxu0 0.0
  %172 = vmatpush1.msra.mxu0 0.0
  %173 = vmatprep.subr.mxu0 0.0
  %174 = vmatpush1.msra.mxu0 0.0
  %175 = vmatprep.subr.mxu0 0.0
  %176 = vmatpush1.msra.mxu0 0.0
  %177 = vmatprep.subr.mxu0 0.0
  %178 = vmatpush1.msra.mxu0 0.0
  %179 = vmatprep.subr.mxu0 0.0
  %180 = vmatpush1.msra.mxu0 0.0
  %181 = vmatprep.subr.mxu0 0.0
  %182 = vmatpush1.msra.mxu0 0.0
  %183 = vmatprep.subr.mxu0 0.0
  %184 = vmatpush1.msra.mxu0 0.0
  %185 = vmatprep.subr.mxu0 0.0
  %186 = vmatpush1.msra.mxu0 0.0
  %187 = vmatprep.subr.mxu0 0.0
  %188 = vmatpush1.msra.mxu0 0.0
  %189 = vmatprep.subr.mxu0 0.0
  %190 = vmatpush1.msra.mxu0 0.0
  %191 = vmatprep.subr.mxu0 0.0
  %192 = vmatpush1.msra.mxu0 0.0
  %193 = vmatprep.subr.mxu0 0.0
  %194 = vmatpush1.msra.mxu0 0.0
  %195 = vmatprep.subr.mxu0 0.0
  %196 = vmatpush1.msra.mxu0 0.0
  %197 = vmatprep.subr.mxu0 0.0
  %198 = vmatpush1.msra.mxu0 0.0
  %199 = vmatprep.subr.mxu0 0.0
  %200 = vmatpush1.msra.mxu0 0.0
  %201 = vmatprep.subr.mxu0 0.0
  %202 = vmatpush1.msra.mxu0 0.0
  %203 = vmatprep.subr.mxu0 0.0
  %204 = vmatpush1.msra.mxu0 0.0
  %205 = vmatprep.subr.mxu0 0.0
  %206 = vmatpush1.msra.mxu0 0.0
  %207 = vmatprep.mubr.f32.mxu0 0.0
  %208 = vmatmul.mubr.f32.gmra.mrb[0].mxu0 %v71
  %v209 = vpop.f32.mrb[0].mxu0
  %v210 = vadd.f32 %v140, %v209
  %v211 = vpop.f32.mrb[0].mxu0
  %212 = vdwg.mxu0
  %v213 = vld [vmem:[%s3] sm:$0xff]
  %v214 = vadd.f32 %v210, %v213
  %v215 = vld [vmem:[%s4] sm:$0x1]
  %v217 = vlaneseq
  %v218 = vshrl.u32 %v217, 7
  %v219 = vsub.s32 0, %v218
  %v220 = vrot.slane %v215, %v219
  %v222 = vmul.f32 %v214, %v220
  %v223 = vld [vmem:[%s5] sm:$0x1]
  %v225 = vlaneseq
  %v226 = vshrl.u32 %v225, 7
  %v227 = vsub.s32 0, %v226
  %v228 = vrot.slane %v223, %v227
  %v230 = vadd.f32 %v222, %v228
  %vm231 = vcmp.ge.f32.partialorder %v230, 0.0
  %v232 = vmul.f32 %v230, 0.01
  %v233 = vsel %vm231, %v230, %v232
  %234 = vst.msk [vmem:[%s6] sm:$0xff] %vm69, %v233
  // Predicated region
  $region26: #{cqcc_forward.38} parent=0 // pred_check
    _
  $region27: #{cqcc_forward.38} parent=0 // pred_check_branch
    %236 = sbr.rel (0) target = $region29
  $region28: #{cqcc_forward.38} parent=0 // pred_region
    _
  $region29: #{cqcc_forward.38} parent=0 // pred_fallthru
    _
  // Predicated region
  $region30: #{cqcc_forward.38} parent=0 // pred_check
    _
  $region31: #{cqcc_forward.38} parent=0 // pred_check_branch
    %238 = sbr.rel (0) target = $region33
  $region32: #{cqcc_forward.38} parent=0 // pred_region
    _
  $region33: #{cqcc_forward.38} parent=0 // pred_fallthru
    _

// kernel: cqcc_forward.39
$region0: #{cqcc_forward.39}
  #allocation0 [shape = 'u32[]', space=smem, size = 0x4, offset = 0x4, fixed_abs, tag = 'smem constant byte address 0x4 - core index']
  #allocation1 [shape = 'u32[144,128]{1,0:T(1,128)}', space=vmem, size = 0x12000, scoped, tag = 'internal scratch']
  %s0 = inlined_call_operand.vmem [shape: f32[2,32], index: 0, kind: input, shape index: {}]
  %s1 = inlined_call_operand.vmem [shape: f32[32,128], index: 1, kind: input, shape index: {}]
  %s2 = inlined_call_operand.vmem [shape: f32[1,128], index: 2, kind: input, shape index: {}]
  %s3 = inlined_call_operand.vmem [shape: f32[128,2], index: 3, kind: input, shape index: {}]
  %s4 = inlined_call_operand.vmem [shape: f32[1,2], index: 4, kind: input, shape index: {}]
  %s5 = inlined_call_operand.hbm [shape: f32[2,2], index: 5, kind: output, shape index: {}]
  %s6 = sld [smem:[#allocation0]]
  $region30: #{cqcc_forward.39} parent=0
    _
  %s8 = ssub.s32 1, %s6
  %s9 = scalar_select 0, %s8, %s6
  $region1: #{cqcc_forward.39} parent=0
    #allocation2 [shape = 'u8[1024]{0}', space=vmem, size = 0x400, scoped, tag = 'output window, operand 0, single buffered']
    #allocation3 [shape = 's32[1]{0}', space=sflag, size = 0x4, scoped, tag = 'scoped memory for cqcc_forward.39']
    %10 = vsyncpa [#allocation3], 0
    // Predicated region
    $region2: #{cqcc_forward.39} parent=1 // pred_check
      _
    $region3: #{cqcc_forward.39} parent=1 // pred_check_branch
      %12 = sbr.rel (0) target = $region5
    $region4: #{cqcc_forward.39} parent=1 // pred_region
      _
    $region5: #{cqcc_forward.39} parent=1 // pred_fallthru
      _
    // Predicated region
    $region6: #{cqcc_forward.39} parent=1 // pred_check
      _
    $region7: #{cqcc_forward.39} parent=1 // pred_check_branch
      %14 = sbr.rel (0) target = $region9
    $region8: #{cqcc_forward.39} parent=1 // pred_region
      _
    $region9: #{cqcc_forward.39} parent=1 // pred_fallthru
      _
    // Predicated region
    $region10: #{cqcc_forward.39} parent=1 // pred_check
      _
    $region11: #{cqcc_forward.39} parent=1 // pred_check_branch
      %16 = sbr.rel (0) target = $region13
    $region12: #{cqcc_forward.39} parent=1 // pred_region
      _
    $region13: #{cqcc_forward.39} parent=1 // pred_fallthru
      _
    // Predicated region
    $region14: #{cqcc_forward.39} parent=1 // pred_check
      _
    $region15: #{cqcc_forward.39} parent=1 // pred_check_branch
      %18 = sbr.rel (0) target = $region17
    $region16: #{cqcc_forward.39} parent=1 // pred_region
      _
    $region17: #{cqcc_forward.39} parent=1 // pred_fallthru
      _
    // Predicated region
    $region18: #{cqcc_forward.39} parent=1 // pred_check
      _
    $region19: #{cqcc_forward.39} parent=1 // pred_check_branch
      %20 = sbr.rel (0) target = $region21
    $region20: #{cqcc_forward.39} parent=1 // pred_region
      _
    $region21: #{cqcc_forward.39} parent=1 // pred_fallthru
      _
    %v21 = vld [vmem:[%s0] sm:$0x3]
    %v22 = vld [vmem:[%s1] sm:$0xff]
    %v23 = vld [vmem:[%s1 + $0x8] sm:$0xff]
    %v24 = vld [vmem:[%s1 + $0x10] sm:$0xff]
    %v25 = vld [vmem:[%s1 + $0x18] sm:$0xff]
    %v26 = vld [vmem:[%s2] sm:$0x1]
    %v28 = vlaneseq
    %v29 = vshrl.u32 %v28, 7
    %v30 = vsub.s32 0, %v29
    %v31 = vrot.slane %v26, %v30
    %vm33 = vcmask 261120
    %v35 = vsel %vm33, %v21, 0
    %37 = vmatprep.subr.mxu0 0.0
    %38 = vmatpush1.msra.mxu0 %v22
    %39 = vmatprep.subr.mxu0 0.0
    %40 = vmatpush1.msra.mxu0 %v23
    %41 = vmatprep.subr.mxu0 0.0
    %42 = vmatpush1.msra.mxu0 %v24
    %43 = vmatprep.subr.mxu0 0.0
    %44 = vmatpush1.msra.mxu0 %v25
    %45 = vmatprep.subr.mxu0 0.0
    %46 = vmatpush1.msra.mxu0 0.0
    %47 = vmatprep.subr.mxu0 0.0
    %48 = vmatpush1.msra.mxu0 0.0
    %49 = vmatprep.subr.mxu0 0.0
    %50 = vmatpush1.msra.mxu0 0.0
    %51 = vmatprep.subr.mxu0 0.0
    %52 = vmatpush1.msra.mxu0 0.0
    %53 = vmatprep.subr.mxu0 0.0
    %54 = vmatpush1.msra.mxu0 0.0
    %55 = vmatprep.subr.mxu0 0.0
    %56 = vmatpush1.msra.mxu0 0.0
    %57 = vmatprep.subr.mxu0 0.0
    %58 = vmatpush1.msra.mxu0 0.0
    %59 = vmatprep.subr.mxu0 0.0
    %60 = vmatpush1.msra.mxu0 0.0
    %61 = vmatprep.subr.mxu0 0.0
    %62 = vmatpush1.msra.mxu0 0.0
    %63 = vmatprep.subr.mxu0 0.0
    %64 = vmatpush1.msra.mxu0 0.0
    %65 = vmatprep.subr.mxu0 0.0
    %66 = vmatpush1.msra.mxu0 0.0
    %67 = vmatprep.subr.mxu0 0.0
    %68 = vmatpush1.msra.mxu0 0.0
    %69 = vmatprep.subr.mxu0 0.0
    %70 = vmatpush1.msra.mxu0 0.0
    %71 = vmatprep.subr.mxu0 0.0
    %72 = vmatpush1.msra.mxu0 0.0
    %73 = vmatprep.subr.mxu0 0.0
    %74 = vmatpush1.msra.mxu0 0.0
    %75 = vmatprep.subr.mxu0 0.0
    %76 = vmatpush1.msra.mxu0 0.0
    %77 = vmatprep.subr.mxu0 0.0
    %78 = vmatpush1.msra.mxu0 0.0
    %79 = vmatprep.subr.mxu0 0.0
    %80 = vmatpush1.msra.mxu0 0.0
    %81 = vmatprep.subr.mxu0 0.0
    %82 = vmatpush1.msra.mxu0 0.0
    %83 = vmatprep.subr.mxu0 0.0
    %84 = vmatpush1.msra.mxu0 0.0
    %85 = vmatprep.subr.mxu0 0.0
    %86 = vmatpush1.msra.mxu0 0.0
    %87 = vmatprep.subr.mxu0 0.0
    %88 = vmatpush1.msra.mxu0 0.0
    %89 = vmatprep.subr.mxu0 0.0
    %90 = vmatpush1.msra.mxu0 0.0
    %91 = vmatprep.subr.mxu0 0.0
    %92 = vmatpush1.msra.mxu0 0.0
    %93 = vmatprep.subr.mxu0 0.0
    %94 = vmatpush1.msra.mxu0 0.0
    %95 = vmatprep.subr.mxu0 0.0
    %96 = vmatpush1.msra.mxu0 0.0
    %97 = vmatprep.subr.mxu0 0.0
    %98 = vmatpush1.msra.mxu0 0.0
    %99 = vmatprep.subr.mxu0 0.0
    %100 = vmatpush1.msra.mxu0 0.0
    %101 = vmatprep.mubr.f32.mxu0 0.0
    %102 = vmatmul.mubr.f32.gmra.mrb[0].mxu0 %v35
    %v103 = vpop.f32.mrb[0].mxu0
    %v104 = vadd.f32 %v31, %v103
    %v105 = vpop.f32.mrb[0].mxu0
    %106 = vdwg.mxu0
    %vm107 = vcmp.ge.f32.partialorder %v104, 0.0
    %v108 = vmul.f32 %v104, 0.01
    %v109 = vsel %vm107, %v104, %v108
    %v110 = vld [vmem:[%s3] sm:$0xff]
    %v111 = vld [vmem:[%s3 + $0x8] sm:$0xff]
    %v112 = vld [vmem:[%s3 + $0x10] sm:$0xff]
    %v113 = vld [vmem:[%s3 + $0x18] sm:$0xff]
    %v114 = vld [vmem:[%s3 + $0x20] sm:$0xff]
    %v115 = vld [vmem:[%s3 + $0x28] sm:$0xff]
    %v116 = vld [vmem:[%s3 + $0x30] sm:$0xff]
    %v117 = vld [vmem:[%s3 + $0x38] sm:$0xff]
    %v118 = vld [vmem:[%s3 + $0x40] sm:$0xff]
    %v119 = vld [vmem:[%s3 + $0x48] sm:$0xff]
    %v120 = vld [vmem:[%s3 + $0x50] sm:$0xff]
    %v121 = vld [vmem:[%s3 + $0x58] sm:$0xff]
    %v122 = vld [vmem:[%s3 + $0x60] sm:$0xff]
    %v123 = vld [vmem:[%s3 + $0x68] sm:$0xff]
    %v124 = vld [vmem:[%s3 + $0x70] sm:$0xff]
    %v125 = vld [vmem:[%s3 + $0x78] sm:$0xff]
    %v126 = vld [vmem:[%s4] sm:$0x1]
    %v128 = vlaneseq
    %v129 = vshrl.u32 %v128, 7
    %v130 = vsub.s32 0, %v129
    %v131 = vrot.slane %v126, %v130
    %133 = vmatprep.subr.mxu0 0.0
    %134 = vmatpush1.msra.mxu0 %v110
    %135 = vmatprep.subr.mxu0 0.0
    %136 = vmatpush1.msra.mxu0 %v111
    %137 = vmatprep.subr.mxu0 0.0
    %138 = vmatpush1.msra.mxu0 %v112
    %139 = vmatprep.subr.mxu0 0.0
    %140 = vmatpush1.msra.mxu0 %v113
    %141 = vmatprep.subr.mxu0 0.0
    %142 = vmatpush1.msra.mxu0 %v114
    %143 = vmatprep.subr.mxu0 0.0
    %144 = vmatpush1.msra.mxu0 %v115
    %145 = vmatprep.subr.mxu0 0.0
    %146 = vmatpush1.msra.mxu0 %v116
    %147 = vmatprep.subr.mxu0 0.0
    %148 = vmatpush1.msra.mxu0 %v117
    %149 = vmatprep.subr.mxu0 0.0
    %150 = vmatpush1.msra.mxu0 %v118
    %151 = vmatprep.subr.mxu0 0.0
    %152 = vmatpush1.msra.mxu0 %v119
    %153 = vmatprep.subr.mxu0 0.0
    %154 = vmatpush1.msra.mxu0 %v120
    %155 = vmatprep.subr.mxu0 0.0
    %156 = vmatpush1.msra.mxu0 %v121
    %157 = vmatprep.subr.mxu0 0.0
    %158 = vmatpush1.msra.mxu0 %v122
    %159 = vmatprep.subr.mxu0 0.0
    %160 = vmatpush1.msra.mxu0 %v123
    %161 = vmatprep.subr.mxu0 0.0
    %162 = vmatpush1.msra.mxu0 %v124
    %163 = vmatprep.subr.mxu0 0.0
    %164 = vmatpush1.msra.mxu0 %v125
    %165 = vmatprep.subr.mxu0 0.0
    %166 = vmatpush1.msra.mxu0 0.0
    %167 = vmatprep.subr.mxu0 0.0
    %168 = vmatpush1.msra.mxu0 0.0
    %169 = vmatprep.subr.mxu0 0.0
    %170 = vmatpush1.msra.mxu0 0.0
    %171 = vmatprep.subr.mxu0 0.0
    %172 = vmatpush1.msra.mxu0 0.0
    %173 = vmatprep.subr.mxu0 0.0
    %174 = vmatpush1.msra.mxu0 0.0
    %175 = vmatprep.subr.mxu0 0.0
    %176 = vmatpush1.msra.mxu0 0.0
    %177 = vmatprep.subr.mxu0 0.0
    %178 = vmatpush1.msra.mxu0 0.0
    %179 = vmatprep.subr.mxu0 0.0
    %180 = vmatpush1.msra.mxu0 0.0
    %181 = vmatprep.subr.mxu0 0.0
    %182 = vmatpush1.msra.mxu0 0.0
    %183 = vmatprep.subr.mxu0 0.0
    %184 = vmatpush1.msra.mxu0 0.0
    %185 = vmatprep.subr.mxu0 0.0
    %186 = vmatpush1.msra.mxu0 0.0
    %187 = vmatprep.subr.mxu0 0.0
    %188 = vmatpush1.msra.mxu0 0.0
    %189 = vmatprep.subr.mxu0 0.0
    %190 = vmatpush1.msra.mxu0 0.0
    %191 = vmatprep.subr.mxu0 0.0
    %192 = vmatpush1.msra.mxu0 0.0
    %193 = vmatprep.subr.mxu0 0.0
    %194 = vmatpush1.msra.mxu0 0.0
    %195 = vmatprep.subr.mxu0 0.0
    %196 = vmatpush1.msra.mxu0 0.0
    %197 = vmatprep.mubr.f32.mxu0 0.0
    %198 = vmatmul.mubr.f32.gmra.mrb[0].mxu0 %v109
    %v199 = vpop.f32.mrb[0].mxu0
    %v200 = vadd.f32 %v131, %v199
    %v201 = vpop.f32.mrb[0].mxu0
    %202 = vdwg.mxu0
    %vm203 = vcmask 9216
    %v204 = vsel %vm203, %v200, -inf
    %205 = vmax.xlane.f32.xlu0 %v204
    %v206 = vpop.xlane.xlu0 %205
    %v207 = vsub.f32 %v200, %v206
    %v208 = vmul.f32 %v207, 1.442695
    %v209 = vpow.pop %v208
    %v210 = vsel %vm203, %v209, 0.0
    %211 = vadd.xlane.f32.xlu0 %v210
    %v212 = vpop.xlane.xlu0 %211
    %v213 = vlog2.pop %v212
    %v214 = vmul.f32 %v213, 0.6931472
    %v215 = vsub.f32 %v207, %v214
    %216 = vst.msk [vmem:[#allocation2] sm:$0x3] %vm203, %v215
    // Predicated region
    $region22: #{cqcc_forward.39} parent=1 // pred_check
      _
    $region23: #{cqcc_forward.39} parent=1 // pred_check_branch
      %218 = sbr.rel (0) target = $region25
    $region24: #{cqcc_forward.39} parent=1 // pred_region
      %s220 = ssub.s32 32, 32
      %221 = vsyncadd [#allocation3], %s220
      %s223 = sshll.u32 [#allocation2], 4
      %s224 = int_to_ptr.vmem [resolvable:$true] %s223
      %226 = dma.vmem_to_hbm [thread:$0]  %s224, 32, %s5, [#allocation3]
    $region25: #{cqcc_forward.39} parent=1 // pred_fallthru
      _
    // Predicated region
    $region26: #{cqcc_forward.39} parent=1 // pred_check
      _
    $region27: #{cqcc_forward.39} parent=1 // pred_check_branch
      %228 = sbr.rel (0) target = $region29
    $region28: #{cqcc_forward.39} parent=1 // pred_region
      %229 = dma.done [#allocation3], 32
    $region29: #{cqcc_forward.39} parent=1 // pred_fallthru
      _
    %230 = vsyncpa [#allocation3], 1

</llo_original>
